<compile_context>
chip_gen: v7x
topology: tpu7x:2x2x1
jax: 0.10.0
libtpu: 0.0.40
codegen_flags: <defaults>
</compile_context>

<pallas_src>
from functools import partial

import numpy as np
import jax
import jax.numpy as jnp
from jax.experimental import pallas as pl
from jax.experimental.pallas import tpu as pltpu


# Model hyper-parameters (firstLayerParams / residualBlockParams / lastLayerParams).
FIRST_OUT = 16      # firstLayerParams['out_channels']
FIRST_K = 7         # firstLayerParams['kernel_size']  (padding = 3)
MAXPOOL_K = 2       # firstLayerParams['maxPoolKernel']
RES_OUT = 32        # last residual block out_channels -> integrationChannels
LAST_POOL = 4       # lastLayerParams['maxPoolSize']
HIDDEN = 256        # finalLayer hidden width
EMBED_OUT = 128     # finalLayer output features (non-classification head)
BN_EPS = 1e-5

# Packed conv-weight slab layout: each conv's (K*Cin, Cout) block lives at a fixed row
# offset.  All offsets / chunk sizes are multiples of 8 -> clean static sublane slices.
_CONV_ROWS = (("stem", 8),          # 7 stem taps (padded to 8 rows), cols 0:16
              ("b0c1", 3 * 16),     # block0 conv1, temporal|spatial packed on Cout
              ("b0c2", 3 * 32),     # block0 conv2, block-diagonal
              ("b1r", 1 * 32),      # block1 1x1 resample, block-diagonal
              ("b1c1", 3 * 32),     # block1 conv1, block-diagonal
              ("b1c2", 3 * 64),     # block1 conv2, block-diagonal
              ("intc", 3 * 32))     # integration conv
_OFFS = {}
_row = 0
for _name, _n in _CONV_ROWS:
    _OFFS[_name] = _row
    _row += _n
WCONV_ROWS = _row                   # 568
WCONV_COLS = 64


# ----------------------------------------------------------------------------
# The fused forward kernel
# ----------------------------------------------------------------------------
def _ecg_fused_kernel(x_ref, pool_ref, wconv_ref, wlin_ref, bias_ref, o_ref, *, tn, l1):
    cdt = wconv_ref.dtype                      # bf16 (MXU-native) or f32 matmul operands
    M = tn * l1                                # merged rows: samples_per_block * positions

    def mm(a, b):
        return jnp.dot(a.astype(cdt), b.astype(cdt), preferred_element_type=jnp.float32)

    # Position of each merged row inside its sample (samples are contiguous row blocks).
    t_in_sample = jax.lax.broadcasted_iota(jnp.int32, (M, 1), 0) % l1

    def shifted(x, delta):
        """row m -> x[m + delta] within the SAME sample; zero across sample boundaries
        (== the Conv1d zero padding).  pltpu.roll is an XLU rotate: no O(M^2) shift
        matrices, no MXU work, no VMEM cliff at long sequence lengths."""
        if delta >= 0:
            valid = t_in_sample < (l1 - delta)
        else:
            valid = t_in_sample >= (-delta)
        return jnp.where(valid, pltpu.roll(x, (-delta) % M, axis=0), 0.0)

    def bias(i, c):
        return bias_ref[i:i + 1, 0:c]                                     # (1, c) f32

    def conv3(x, name, cin, cout, b_idx, relu, res=None):
        """Conv1d(k=3, stride=1, pad=1) + folded BN (+ residual) (+ ReLU)."""
        off = _OFFS[name]
        acc = mm(shifted(x, -1), wconv_ref[off:off + cin, 0:cout])
        acc = acc + mm(x, wconv_ref[off + cin:off + 2 * cin, 0:cout])
        acc = acc + mm(shifted(x, 1), wconv_ref[off + 2 * cin:off + 3 * cin, 0:cout])
        acc = acc + bias(b_idx, cout)
        if res is not None:
            acc = acc + res
        return jnp.maximum(acc, 0.0) if relu else acc

    def conv1(x, name, cin, cout, b_idx):
        """Conv1d(k=1) + folded BN (residual resample path)."""
        off = _OFFS[name]
        return mm(x, wconv_ref[off:off + cin, 0:cout]) + bias(b_idx, cout)

    # ---- firstLayer: Conv1d(1->16,k=7,pad=3)+BN+ReLU+MaxPool1d(2), built in-kernel ---
    # x_ref row m = (sample, pooled position t); column c = raw sample at position 2t+c.
    # The 7 taps of both pre-pool positions are sublane shifts of these two columns, so
    # the stem is 14 cheap VPU broadcast-MACs and the pool is an elementwise max.
    x2 = x_ref[0]                                                         # (M, 2) f32
    cols = {(0, 0): x2[:, 0:1], (0, 1): x2[:, 1:2]}
    for d in (-2, -1, 1, 2):
        sx = shifted(x2, d)
        cols[(d, 0)] = sx[:, 0:1]
        cols[(d, 1)] = sx[:, 1:2]

    def stem_w(k):                                                        # tap k -> (1,16)
        r = _OFFS["stem"] + k
        return wconv_ref[r:r + 1, 0:FIRST_OUT].astype(jnp.float32)

    # (row shift, parity column, tap index) for the even / odd pre-pool output positions.
    even_taps = ((-2, 1, 0), (-1, 0, 1), (-1, 1, 2), (0, 0, 3), (0, 1, 4), (1, 0, 5), (1, 1, 6))
    odd_taps = ((-1, 0, 0), (-1, 1, 1), (0, 0, 2), (0, 1, 3), (1, 0, 4), (1, 1, 5), (2, 0, 6))
    y_even = bias(0, FIRST_OUT)
    y_odd = bias(0, FIRST_OUT)
    for d, c, k in even_taps:
        y_even = y_even + cols[(d, c)] * stem_w(k)
    for d, c, k in odd_taps:
        y_odd = y_odd + cols[(d, c)] * stem_w(k)
    h = jnp.maximum(jnp.maximum(y_even, y_odd), 0.0)                      # (M, 16)

    # ---- residual trunk: temporal | spatial branches packed along the channel axis ---
    # block 0 (16 -> 16 per branch; identity = block input h)
    f = conv3(h, "b0c1", 16, 32, 1, relu=True)
    f = conv3(f, "b0c2", 32, 32, 2, relu=True, res=jnp.concatenate([h, h], axis=1))
    # block 1 (16 -> 32 per branch; identity via packed 1x1 resample conv + BN)
    ident1 = conv1(f, "b1r", 32, 64, 3)
    g = conv3(f, "b1c1", 32, 64, 4, relu=True)
    g = conv3(g, "b1c2", 64, 64, 5, relu=True, res=ident1)

    # integrationMethod='add': temporal half + spatial half.
    merged = g[:, 0:RES_OUT] + g[:, RES_OUT:2 * RES_OUT]                  # (M, 32)

    # integrationBlock: Conv1d + BN + Dropout(eval identity) + ReLU.
    # TODO(synk): nn.Dropout is treated as inference-mode identity (no RNG mask).
    gi = conv3(merged, "intc", 32, 32, 6, relu=True)                      # (M, 32)

    # ---- AdaptiveAvgPool1d(4) + Flatten + Linear(128->256) + Linear(256->128) --------
    pooled = mm(pool_ref[...], gi)                                        # (4*tn, 32)
    z = bias(7, HIDDEN)
    for p in range(LAST_POOL):
        z = z + mm(pooled[p * tn:(p + 1) * tn, :],
                   wlin_ref[p * RES_OUT:(p + 1) * RES_OUT, 0:HIDDEN])     # (tn, 256)
    out = mm(z, wlin_ref[LAST_POOL * RES_OUT:LAST_POOL * RES_OUT + HIDDEN, 0:EMBED_OUT])
    o_ref[0] = out + bias(8, EMBED_OUT)                                   # lane-dense store


# ----------------------------------------------------------------------------
# One-time parameter preparation (BN folding, branch packing, flat weight slabs)
# ----------------------------------------------------------------------------
def prepare_inference_params(params, compute_dtype=jnp.float32):
    """Done once, outside the per-call trace: fold eval-mode BN, pack temporal+spatial
    branches block-diagonally, regroup the Linear weights for the fused pool+flatten,
    and flatten everything into three constants (conv slab, linear slab, bias table)
    so the kernel prologue issues only a handful of DMA descriptors."""

    def fold(conv, bn):
        scale = bn["gamma"] / jnp.sqrt(bn["var"] + BN_EPS)
        w = conv["w"] * scale[:, None, None]                 # torch layout (Cout, Cin, K)
        b = (conv["b"] - bn["mean"]) * scale + bn["beta"]
        return jnp.transpose(w, (2, 1, 0)), b                # (K, Cin, Cout), (Cout,)

    def blockdiag(wa, wb):
        k, cai, cao = wa.shape
        _, cbi, cbo = wb.shape
        out = jnp.zeros((k, cai + cbi, cao + cbo), wa.dtype)
        out = out.at[:, :cai, :cao].set(wa)
        out = out.at[:, cai:, cao:].set(wb)
        return out

    def flat(w):                                             # (K, Cin, Cout) -> (K*Cin, Cout)
        k, ci, co = w.shape
        return w.reshape(k * ci, co)

    wf, bf = fold(params["first_conv"], params["first_bn"])  # (7,1,16), (16,)
    stem_w = jnp.pad(wf[:, 0, :], ((0, 1), (0, 0)))          # (8,16), row k = tap k

    t0, s0 = params["temporal"][0], params["spatial"][0]
    t1, s1 = params["temporal"][1], params["spatial"][1]
    w_t01, b_t01 = fold(t0["conv1"], t0["bn1"]); w_s01, b_s01 = fold(s0["conv1"], s0["bn1"])
    w_t02, b_t02 = fold(t0["conv2"], t0["bn2"]); w_s02, b_s02 = fold(s0["conv2"], s0["bn2"])
    w_t1r, b_t1r = fold(t1["res_conv"], t1["res_bn"]); w_s1r, b_s1r = fold(s1["res_conv"], s1["res_bn"])
    w_t11, b_t11 = fold(t1["conv1"], t1["bn1"]); w_s11, b_s11 = fold(s1["conv1"], s1["bn1"])
    w_t12, b_t12 = fold(t1["conv2"], t1["bn2"]); w_s12, b_s12 = fold(s1["conv2"], s1["bn2"])
    wi, bi = fold(params["int_conv"], params["int_bn"])

    conv_blocks = {
        "stem": stem_w,
        "b0c1": flat(jnp.concatenate([w_t01, w_s01], axis=2)),   # both branches read h
        "b0c2": flat(blockdiag(w_t02, w_s02)),
        "b1r":  flat(blockdiag(w_t1r, w_s1r)),
        "b1c1": flat(blockdiag(w_t11, w_s11)),
        "b1c2": flat(blockdiag(w_t12, w_s12)),
        "intc": flat(wi),
    }
    wconv = jnp.zeros((WCONV_ROWS, WCONV_COLS), jnp.float32)
    for name, blk in conv_blocks.items():
        r0 = _OFFS[name]
        wconv = wconv.at[r0:r0 + blk.shape[0], :blk.shape[1]].set(blk)

    # Linear-1 regrouped per pooling window so the torch channel-major Flatten order is
    # reproduced without any in-kernel transpose: wlin[p*32 + c, :] = lin1.w[:, c*4 + p].
    w1 = params["lin1"]["w"]                                  # (256, RES_OUT*LAST_POOL)
    l1_blocks = [jnp.transpose(w1[:, p::LAST_POOL]) for p in range(LAST_POOL)]
    l2t = jnp.pad(params["lin2"]["w"].T, ((0, 0), (0, HIDDEN - EMBED_OUT)))
    wlin = jnp.concatenate([jnp.concatenate(l1_blocks, axis=0), l2t], axis=0)

    def brow(b):
        return jnp.pad(b, (0, HIDDEN - b.shape[0]))
    bias = jnp.stack([
        brow(bf),
        brow(jnp.concatenate([b_t01, b_s01])),
        brow(jnp.concatenate([b_t02, b_s02])),
        brow(jnp.concatenate([b_t1r, b_s1r])),
        brow(jnp.concatenate([b_t11, b_s11])),
        brow(jnp.concatenate([b_t12, b_s12])),
        brow(bi),
        brow(params["lin1"]["b"]),
        brow(params["lin2"]["b"]),
    ]).astype(jnp.float32)                                    # (9, 256)

    return {"wconv": wconv.astype(compute_dtype),
            "wlin": wlin.astype(compute_dtype),
            "bias": bias}


# ----------------------------------------------------------------------------
# Pooling constant + grid selection
# ----------------------------------------------------------------------------
def _pool_matrix(tn, l1):
    """Stacked AdaptiveAvgPool1d(4) matrix: row p*tn + n averages window p of sample n."""
    w = l1 // LAST_POOL
    mat = np.zeros((LAST_POOL * tn, tn * l1), np.float32)
    for p in range(LAST_POOL):
        for n in range(tn):
            mat[p * tn + n, n * l1 + p * w:n * l1 + (p + 1) * w] = 1.0 / w
    return jnp.asarray(mat)


def _choose_grid(N, l1):
    """G=1 on single-TensorCore chips (v5e/v6e); G a multiple of the TC count on
    megacore parts; per-block rows capped so the working set fits scoped VMEM on all
    generations (v5e 16 MiB default ... v7x 64 MiB physical)."""
    n_tc = 1
    try:
        info = pltpu.get_tpu_info()
        for attr in ("num_cores", "tensorcore_count", "num_tensorcores"):
            v = getattr(info, attr, None)
            if v:
                n_tc = int(v)
                break
    except Exception:
        pass
    n_tc = max(1, min(n_tc, 2))
    max_rows = 2048                                  # merged rows per block
    tn_cap = max(1, max_rows // l1)
    g = max((N + tn_cap - 1) // tn_cap, n_tc if N >= n_tc else 1)
    while N % g:                                     # keep equal-size blocks
        g += 1
    return g, N // g


# ----------------------------------------------------------------------------
# Forward wrapper (one pallas_call)
# ----------------------------------------------------------------------------
def ecg_spatiotemporalnet1d_forward(prep, X):
    """X: (batch, nviews, samples) -> (batch, nviews, 128).
    integrationMethod='add', classification=False, avg_embeddings=False (eval mode)."""
    B, V, S = X.shape
    N = B * V
    assert S % MAXPOOL_K == 0
    l1 = S // MAXPOOL_K
    assert l1 % LAST_POOL == 0, "AdaptiveAvgPool1d windows assumed uniform (l1 % 4 == 0)"
    G, tn = _choose_grid(N, l1)
    M = tn * l1
    cdt = prep["wconv"].dtype

    # Raw signal, parity-split view (pure reshape, 1x HBM traffic; no wrapper im2col):
    # x2[g, n_local*l1 + t, c] == X_flat[g*tn + n_local, 2*t + c]
    x2 = X.astype(jnp.float32).reshape(G, M, 2)
    pool = _pool_matrix(tn, l1).astype(cdt)                       # (4*tn, M)

    out = pl.pallas_call(
        partial(_ecg_fused_kernel, tn=tn, l1=l1),
        grid=(G,),
        in_specs=[
            pl.BlockSpec((1, M, 2), lambda g: (g, 0, 0)),         # per-block raw signal
            pl.BlockSpec(pool.shape, lambda g: (0, 0)),           # constants: stay resident
            pl.BlockSpec(prep["wconv"].shape, lambda g: (0, 0)),
            pl.BlockSpec(prep["wlin"].shape, lambda g: (0, 0)),
            pl.BlockSpec(prep["bias"].shape, lambda g: (0, 0)),
        ],
        out_specs=pl.BlockSpec((1, tn, EMBED_OUT), lambda g: (g, 0, 0)),
        out_shape=jax.ShapeDtypeStruct((G, tn, EMBED_OUT), jnp.float32),
        compiler_params=pltpu.CompilerParams(dimension_semantics=("parallel",)),
    )(x2, pool, prep["wconv"], prep["wlin"], prep["bias"])

    return out.reshape(B, V, EMBED_OUT)


# ----------------------------------------------------------------------------
# Synthetic deterministic parameters (same config as the PyTorch module spec)
# ----------------------------------------------------------------------------
def _init_conv(key, cout, cin, k, scale=0.1):
    kw, kb = jax.random.split(key)
    return {"w": jax.random.normal(kw, (cout, cin, k), jnp.float32) * scale,
            "b": jax.random.normal(kb, (cout,), jnp.float32) * 0.01}


def _init_bn(key, c):
    k1, k2, k3 = jax.random.split(key, 3)
    return {"gamma": 1.0 + 0.1 * jax.random.normal(k1, (c,), jnp.float32),
            "beta": 0.05 * jax.random.normal(k2, (c,), jnp.float32),
            "mean": 0.02 * jax.random.normal(k3, (c,), jnp.float32),
            "var": jnp.full((c,), 0.9, jnp.float32)}


def _init_linear(key, fout, fin, scale=0.05):
    kw, kb = jax.random.split(key)
    return {"w": jax.random.normal(kw, (fout, fin), jnp.float32) * scale,
            "b": jax.random.normal(kb, (fout,), jnp.float32) * 0.01}


def init_params(key):
    keys = iter(jax.random.split(key, 32))
    p = {}
    p["first_conv"] = _init_conv(next(keys), FIRST_OUT, 1, FIRST_K)
    p["first_bn"] = _init_bn(next(keys), FIRST_OUT)

    def res_block(cin, cmid, cout, k):
        blk = {"conv1": _init_conv(next(keys), cmid, cin, k),
               "bn1": _init_bn(next(keys), cmid),
               "conv2": _init_conv(next(keys), cout, cmid, k),
               "bn2": _init_bn(next(keys), cout)}
        if cin != cout:   # resampleInput = 1x1 conv + BN
            blk["res_conv"] = _init_conv(next(keys), cout, cin, 1)
            blk["res_bn"] = _init_bn(next(keys), cout)
        return blk

    # temporal/spatial ResidualBlockParams: numLayers=2, kernel=3, padding=1,
    # in_channels=[(16,16),(16,32)], out_channels=[(16,16),(32,32)].
    p["temporal"] = [res_block(16, 16, 16, 3), res_block(16, 32, 32, 3)]
    p["spatial"] = [res_block(16, 16, 16, 3), res_block(16, 32, 32, 3)]

    p["int_conv"] = _init_conv(next(keys), RES_OUT, RES_OUT, 3)
    p["int_bn"] = _init_bn(next(keys), RES_OUT)

    p["lin1"] = _init_linear(next(keys), HIDDEN, LAST_POOL * RES_OUT)
    p["lin2"] = _init_linear(next(keys), EMBED_OUT, HIDDEN)
    return p


# ----------------------------------------------------------------------------
# Plain-JAX reference (eval-mode PyTorch semantics) for correctness checking
# ----------------------------------------------------------------------------
def _reference_forward(params, X, eps=BN_EPS):
    hp = jax.lax.Precision.HIGHEST

    def conv1d(x, p, pad):
        y = jax.lax.conv_general_dilated(
            x, p["w"], window_strides=(1,), padding=[(pad, pad)],
            dimension_numbers=("NCH", "OIH", "NCH"), precision=hp)
        return y + p["b"][None, :, None]

    def bn(x, p):
        scale = p["gamma"] / jnp.sqrt(p["var"] + eps)
        return (x - p["mean"][None, :, None]) * scale[None, :, None] + p["beta"][None, :, None]

    relu = lambda v: jnp.maximum(v, 0.0)

    B, V, S = X.shape
    h = X.reshape(B * V, 1, S)
    h = relu(bn(conv1d(h, params["first_conv"], FIRST_K // 2), params["first_bn"]))
    h = jnp.max(h.reshape(h.shape[0], h.shape[1], -1, MAXPOOL_K), axis=-1)

    def res_block(x, blk, pad=1):
        ident = bn(conv1d(x, blk["res_conv"], 0), blk["res_bn"]) if "res_conv" in blk else x
        f = relu(bn(conv1d(x, blk["conv1"], pad), blk["bn1"]))
        f = bn(conv1d(f, blk["conv2"], pad), blk["bn2"])
        return relu(f + ident)

    t = h
    for blk in params["temporal"]:
        t = res_block(t, blk)
    s = h
    for blk in params["spatial"]:
        s = res_block(s, blk)

    g = relu(bn(conv1d(s + t, params["int_conv"], 1), params["int_bn"]))
    n, c, length = g.shape
    g = jnp.mean(g.reshape(n, c, LAST_POOL, length // LAST_POOL), axis=-1)   # (N, C, 4)
    flat = g.reshape(n, -1)                                                  # torch Flatten
    z = jnp.dot(flat, params["lin1"]["w"].T, precision=hp) + params["lin1"]["b"]
    z = jnp.dot(z, params["lin2"]["w"].T, precision=hp) + params["lin2"]["b"]
    return z.reshape(B, V, -1)


if __name__ == "__main__":
    key = jax.random.PRNGKey(0)
    kp, kx = jax.random.split(key)
    params = init_params(kp)

    B, V, S = 2, 4, 64
    X = jax.random.normal(kx, (B, V, S), jnp.float32)

    ref = jax.block_until_ready(_reference_forward(params, X))
    fwd = jax.jit(ecg_spatiotemporalnet1d_forward)

    # f32-operand path: tight tolerance.
    prep32 = prepare_inference_params(params, compute_dtype=jnp.float32)
    out32 = jax.block_until_ready(fwd(prep32, X))
    assert out32.shape == (B, V, EMBED_OUT), out32.shape
    assert bool(jnp.all(jnp.isfinite(out32)))
    err32 = float(jnp.linalg.norm(out32 - ref) / jnp.maximum(jnp.linalg.norm(ref), 1e-6))
    assert err32 < 1e-4, f"f32 rel_err too large: {err32}"

    # bf16-operand path (MXU-native, f32 accumulation): loose tolerance.
    prep16 = prepare_inference_params(params, compute_dtype=jnp.bfloat16)
    out16 = jax.block_until_ready(fwd(prep16, X))
    err16 = float(jnp.linalg.norm(out16 - ref) / jnp.maximum(jnp.linalg.norm(ref), 1e-6))
    assert err16 < 5e-2, f"bf16 rel_err too large: {err16}"

    print("KERNEL_OK")
</pallas_src>

<mosaic_0001>
module attributes {stable_mosaic.version = 11 : i64} {
  func.func @_ecg_fused_kernel(%arg0: i32, %arg1: memref<1x256x2xf32, #tpu.memory_space<vmem>>, %arg2: memref<32x256xf32, #tpu.memory_space<vmem>>, %arg3: memref<568x64xf32, #tpu.memory_space<vmem>>, %arg4: memref<384x256xf32, #tpu.memory_space<vmem>>, %arg5: memref<9x256xf32, #tpu.memory_space<vmem>>, %arg6: memref<1x8x128xf32, #tpu.memory_space<vmem>>) attributes {dimension_semantics = [#tpu.dimension_semantics<parallel>], iteration_bounds = array<i64: 1>, scalar_prefetch = 0 : i64, scratch_operands = 0 : i64, tpu.core_type = #tpu.core_type<tc>, window_params = [{transform_indices = @transform_0, window_bounds = array<i64: 1, 256, 2>}, {pipeline_mode = #tpu.pipeline_mode<synchronous>, transform_indices = @transform_1, window_bounds = array<i64: 32, 256>}, {pipeline_mode = #tpu.pipeline_mode<synchronous>, transform_indices = @transform_2, window_bounds = array<i64: 568, 64>}, {pipeline_mode = #tpu.pipeline_mode<synchronous>, transform_indices = @transform_3, window_bounds = array<i64: 384, 256>}, {pipeline_mode = #tpu.pipeline_mode<synchronous>, transform_indices = @transform_4, window_bounds = array<i64: 9, 256>}, {transform_indices = @transform_5, window_bounds = array<i64: 1, 8, 128>}]} {
    %0 = tpu.iota {dimensions = array<i32: 0>} : vector<256x1xi32>
    %c32_i32 = arith.constant 32 : i32
    %c0_i32 = arith.constant 0 : i32
    %1 = arith.cmpi eq, %c32_i32, %c0_i32 : i32
    %c1_i32 = arith.constant 1 : i32
    %2 = arith.select %1, %c1_i32, %c32_i32 : i32
    %3 = vector.broadcast %2 : i32 to vector<256x1xi32>
    %4 = arith.remsi %0, %3 : vector<256x1xi32>
    %c0_i32_0 = arith.constant 0 : i32
    %5 = vector.broadcast %c0_i32_0 : i32 to vector<256x1xi32>
    %6 = arith.cmpi ne, %4, %5 : vector<256x1xi32>
    %c0_i32_1 = arith.constant 0 : i32
    %7 = vector.broadcast %c0_i32_1 : i32 to vector<256x1xi32>
    %8 = arith.cmpi slt, %4, %7 : vector<256x1xi32>
    %c0_i32_2 = arith.constant 0 : i32
    %9 = arith.cmpi slt, %2, %c0_i32_2 : i32
    %10 = vector.broadcast %9 : i1 to vector<256x1xi1>
    %11 = vector.broadcast %10 : vector<256x1xi1> to vector<256x1xi1>
    %12 = arith.xori %8, %11 : vector<256x1xi1>
    %13 = arith.andi %12, %6 : vector<256x1xi1>
    %14 = vector.broadcast %2 : i32 to vector<256x1xi32>
    %15 = arith.addi %4, %14 : vector<256x1xi32>
    %16 = arith.select %13, %15, %4 : vector<256x1xi1>, vector<256x1xi32>
    %c0 = arith.constant 0 : index
    %c0_3 = arith.constant 0 : index
    %c0_4 = arith.constant 0 : index
    %17 = vector.load %arg1[%c0, %c0_3, %c0_4] : memref<1x256x2xf32, #tpu.memory_space<vmem>>, vector<1x256x2xf32>
    %18 = vector.shape_cast %17 : vector<1x256x2xf32> to vector<256x2xf32>
    %19 = vector.extract_strided_slice %18 {offsets = [0, 0], sizes = [256, 1], strides = [1, 1]} : vector<256x2xf32> to vector<256x1xf32>
    %20 = vector.extract_strided_slice %18 {offsets = [0, 1], sizes = [256, 1], strides = [1, 1]} : vector<256x2xf32> to vector<256x1xf32>
    %c2_i32 = arith.constant 2 : i32
    %21 = vector.broadcast %c2_i32 : i32 to vector<256x1xi32>
    %22 = arith.cmpi sge, %16, %21 : vector<256x1xi32>
    %c2_i32_5 = arith.constant 2 : i32
    %23 = tpu.dynamic_rotate %18 by %c2_i32_5 dim 0 : vector<256x2xf32>, i32 -> vector<256x2xf32>
    %cst = arith.constant 0.000000e+00 : f32
    %24 = vector.shape_cast %22 : vector<256x1xi1> to vector<256x1xi1>
    %25 = vector.broadcast %24 : vector<256x1xi1> to vector<256x2xi1>
    %26 = vector.broadcast %cst : f32 to vector<256x2xf32>
    %27 = arith.select %25, %23, %26 : vector<256x2xi1>, vector<256x2xf32>
    %28 = vector.extract_strided_slice %27 {offsets = [0, 1], sizes = [256, 1], strides = [1, 1]} : vector<256x2xf32> to vector<256x1xf32>
    %c1_i32_6 = arith.constant 1 : i32
    %29 = vector.broadcast %c1_i32_6 : i32 to vector<256x1xi32>
    %30 = arith.cmpi sge, %16, %29 : vector<256x1xi32>
    %c1_i32_7 = arith.constant 1 : i32
    %31 = tpu.dynamic_rotate %18 by %c1_i32_7 dim 0 : vector<256x2xf32>, i32 -> vector<256x2xf32>
    %cst_8 = arith.constant 0.000000e+00 : f32
    %32 = vector.shape_cast %30 : vector<256x1xi1> to vector<256x1xi1>
    %33 = vector.broadcast %32 : vector<256x1xi1> to vector<256x2xi1>
    %34 = vector.broadcast %cst_8 : f32 to vector<256x2xf32>
    %35 = arith.select %33, %31, %34 : vector<256x2xi1>, vector<256x2xf32>
    %36 = vector.extract_strided_slice %35 {offsets = [0, 0], sizes = [256, 1], strides = [1, 1]} : vector<256x2xf32> to vector<256x1xf32>
    %37 = vector.extract_strided_slice %35 {offsets = [0, 1], sizes = [256, 1], strides = [1, 1]} : vector<256x2xf32> to vector<256x1xf32>
    %c31_i32 = arith.constant 31 : i32
    %38 = vector.broadcast %c31_i32 : i32 to vector<256x1xi32>
    %39 = arith.cmpi slt, %16, %38 : vector<256x1xi32>
    %c255_i32 = arith.constant 255 : i32
    %40 = tpu.dynamic_rotate %18 by %c255_i32 dim 0 : vector<256x2xf32>, i32 -> vector<256x2xf32>
    %cst_9 = arith.constant 0.000000e+00 : f32
    %41 = vector.shape_cast %39 : vector<256x1xi1> to vector<256x1xi1>
    %42 = vector.broadcast %41 : vector<256x1xi1> to vector<256x2xi1>
    %43 = vector.broadcast %cst_9 : f32 to vector<256x2xf32>
    %44 = arith.select %42, %40, %43 : vector<256x2xi1>, vector<256x2xf32>
    %45 = vector.extract_strided_slice %44 {offsets = [0, 0], sizes = [256, 1], strides = [1, 1]} : vector<256x2xf32> to vector<256x1xf32>
    %46 = vector.extract_strided_slice %44 {offsets = [0, 1], sizes = [256, 1], strides = [1, 1]} : vector<256x2xf32> to vector<256x1xf32>
    %c30_i32 = arith.constant 30 : i32
    %47 = vector.broadcast %c30_i32 : i32 to vector<256x1xi32>
    %48 = arith.cmpi slt, %16, %47 : vector<256x1xi32>
    %c254_i32 = arith.constant 254 : i32
    %49 = tpu.dynamic_rotate %18 by %c254_i32 dim 0 : vector<256x2xf32>, i32 -> vector<256x2xf32>
    %cst_10 = arith.constant 0.000000e+00 : f32
    %50 = vector.shape_cast %48 : vector<256x1xi1> to vector<256x1xi1>
    %51 = vector.broadcast %50 : vector<256x1xi1> to vector<256x2xi1>
    %52 = vector.broadcast %cst_10 : f32 to vector<256x2xf32>
    %53 = arith.select %51, %49, %52 : vector<256x2xi1>, vector<256x2xf32>
    %54 = vector.extract_strided_slice %53 {offsets = [0, 0], sizes = [256, 1], strides = [1, 1]} : vector<256x2xf32> to vector<256x1xf32>
    %c0_11 = arith.constant 0 : index
    %c0_12 = arith.constant 0 : index
    %55 = vector.load %arg5[%c0_11, %c0_12] : memref<9x256xf32, #tpu.memory_space<vmem>>, vector<1x16xf32>
    %c0_13 = arith.constant 0 : index
    %c0_14 = arith.constant 0 : index
    %56 = vector.load %arg5[%c0_13, %c0_14] : memref<9x256xf32, #tpu.memory_space<vmem>>, vector<1x16xf32>
    %c0_15 = arith.constant 0 : index
    %c0_16 = arith.constant 0 : index
    %57 = vector.load %arg3[%c0_15, %c0_16] : memref<568x64xf32, #tpu.memory_space<vmem>>, vector<1x16xf32>
    %58 = vector.broadcast %28 : vector<256x1xf32> to vector<256x16xf32>
    %59 = vector.broadcast %57 : vector<1x16xf32> to vector<256x16xf32>
    %60 = arith.mulf %58, %59 : vector<256x16xf32>
    %61 = vector.broadcast %55 : vector<1x16xf32> to vector<256x16xf32>
    %62 = arith.addf %61, %60 : vector<256x16xf32>
    %c1 = arith.constant 1 : index
    %c0_17 = arith.constant 0 : index
    %63 = vector.load %arg3[%c1, %c0_17] : memref<568x64xf32, #tpu.memory_space<vmem>>, vector<1x16xf32>
    %64 = vector.broadcast %36 : vector<256x1xf32> to vector<256x16xf32>
    %65 = vector.broadcast %63 : vector<1x16xf32> to vector<256x16xf32>
    %66 = arith.mulf %64, %65 : vector<256x16xf32>
    %67 = arith.addf %62, %66 : vector<256x16xf32>
    %c2 = arith.constant 2 : index
    %c0_18 = arith.constant 0 : index
    %68 = vector.load %arg3[%c2, %c0_18] : memref<568x64xf32, #tpu.memory_space<vmem>>, vector<1x16xf32>
    %69 = vector.broadcast %37 : vector<256x1xf32> to vector<256x16xf32>
    %70 = vector.broadcast %68 : vector<1x16xf32> to vector<256x16xf32>
    %71 = arith.mulf %69, %70 : vector<256x16xf32>
    %72 = arith.addf %67, %71 : vector<256x16xf32>
    %c3 = arith.constant 3 : index
    %c0_19 = arith.constant 0 : index
    %73 = vector.load %arg3[%c3, %c0_19] : memref<568x64xf32, #tpu.memory_space<vmem>>, vector<1x16xf32>
    %74 = vector.broadcast %19 : vector<256x1xf32> to vector<256x16xf32>
    %75 = vector.broadcast %73 : vector<1x16xf32> to vector<256x16xf32>
    %76 = arith.mulf %74, %75 : vector<256x16xf32>
    %77 = arith.addf %72, %76 : vector<256x16xf32>
    %c4 = arith.constant 4 : index
    %c0_20 = arith.constant 0 : index
    %78 = vector.load %arg3[%c4, %c0_20] : memref<568x64xf32, #tpu.memory_space<vmem>>, vector<1x16xf32>
    %79 = vector.broadcast %20 : vector<256x1xf32> to vector<256x16xf32>
    %80 = vector.broadcast %78 : vector<1x16xf32> to vector<256x16xf32>
    %81 = arith.mulf %79, %80 : vector<256x16xf32>
    %82 = arith.addf %77, %81 : vector<256x16xf32>
    %c5 = arith.constant 5 : index
    %c0_21 = arith.constant 0 : index
    %83 = vector.load %arg3[%c5, %c0_21] : memref<568x64xf32, #tpu.memory_space<vmem>>, vector<1x16xf32>
    %84 = vector.broadcast %45 : vector<256x1xf32> to vector<256x16xf32>
    %85 = vector.broadcast %83 : vector<1x16xf32> to vector<256x16xf32>
    %86 = arith.mulf %84, %85 : vector<256x16xf32>
    %87 = arith.addf %82, %86 : vector<256x16xf32>
    %c6 = arith.constant 6 : index
    %c0_22 = arith.constant 0 : index
    %88 = vector.load %arg3[%c6, %c0_22] : memref<568x64xf32, #tpu.memory_space<vmem>>, vector<1x16xf32>
    %89 = vector.broadcast %46 : vector<256x1xf32> to vector<256x16xf32>
    %90 = vector.broadcast %88 : vector<1x16xf32> to vector<256x16xf32>
    %91 = arith.mulf %89, %90 : vector<256x16xf32>
    %92 = arith.addf %87, %91 : vector<256x16xf32>
    %c0_23 = arith.constant 0 : index
    %c0_24 = arith.constant 0 : index
    %93 = vector.load %arg3[%c0_23, %c0_24] : memref<568x64xf32, #tpu.memory_space<vmem>>, vector<1x16xf32>
    %94 = vector.broadcast %36 : vector<256x1xf32> to vector<256x16xf32>
    %95 = vector.broadcast %93 : vector<1x16xf32> to vector<256x16xf32>
    %96 = arith.mulf %94, %95 : vector<256x16xf32>
    %97 = vector.broadcast %56 : vector<1x16xf32> to vector<256x16xf32>
    %98 = arith.addf %97, %96 : vector<256x16xf32>
    %c1_25 = arith.constant 1 : index
    %c0_26 = arith.constant 0 : index
    %99 = vector.load %arg3[%c1_25, %c0_26] : memref<568x64xf32, #tpu.memory_space<vmem>>, vector<1x16xf32>
    %100 = vector.broadcast %37 : vector<256x1xf32> to vector<256x16xf32>
    %101 = vector.broadcast %99 : vector<1x16xf32> to vector<256x16xf32>
    %102 = arith.mulf %100, %101 : vector<256x16xf32>
    %103 = arith.addf %98, %102 : vector<256x16xf32>
    %c2_27 = arith.constant 2 : index
    %c0_28 = arith.constant 0 : index
    %104 = vector.load %arg3[%c2_27, %c0_28] : memref<568x64xf32, #tpu.memory_space<vmem>>, vector<1x16xf32>
    %105 = vector.broadcast %19 : vector<256x1xf32> to vector<256x16xf32>
    %106 = vector.broadcast %104 : vector<1x16xf32> to vector<256x16xf32>
    %107 = arith.mulf %105, %106 : vector<256x16xf32>
    %108 = arith.addf %103, %107 : vector<256x16xf32>
    %c3_29 = arith.constant 3 : index
    %c0_30 = arith.constant 0 : index
    %109 = vector.load %arg3[%c3_29, %c0_30] : memref<568x64xf32, #tpu.memory_space<vmem>>, vector<1x16xf32>
    %110 = vector.broadcast %20 : vector<256x1xf32> to vector<256x16xf32>
    %111 = vector.broadcast %109 : vector<1x16xf32> to vector<256x16xf32>
    %112 = arith.mulf %110, %111 : vector<256x16xf32>
    %113 = arith.addf %108, %112 : vector<256x16xf32>
    %c4_31 = arith.constant 4 : index
    %c0_32 = arith.constant 0 : index
    %114 = vector.load %arg3[%c4_31, %c0_32] : memref<568x64xf32, #tpu.memory_space<vmem>>, vector<1x16xf32>
    %115 = vector.broadcast %45 : vector<256x1xf32> to vector<256x16xf32>
    %116 = vector.broadcast %114 : vector<1x16xf32> to vector<256x16xf32>
    %117 = arith.mulf %115, %116 : vector<256x16xf32>
    %118 = arith.addf %113, %117 : vector<256x16xf32>
    %c5_33 = arith.constant 5 : index
    %c0_34 = arith.constant 0 : index
    %119 = vector.load %arg3[%c5_33, %c0_34] : memref<568x64xf32, #tpu.memory_space<vmem>>, vector<1x16xf32>
    %120 = vector.broadcast %46 : vector<256x1xf32> to vector<256x16xf32>
    %121 = vector.broadcast %119 : vector<1x16xf32> to vector<256x16xf32>
    %122 = arith.mulf %120, %121 : vector<256x16xf32>
    %123 = arith.addf %118, %122 : vector<256x16xf32>
    %c6_35 = arith.constant 6 : index
    %c0_36 = arith.constant 0 : index
    %124 = vector.load %arg3[%c6_35, %c0_36] : memref<568x64xf32, #tpu.memory_space<vmem>>, vector<1x16xf32>
    %125 = vector.broadcast %54 : vector<256x1xf32> to vector<256x16xf32>
    %126 = vector.broadcast %124 : vector<1x16xf32> to vector<256x16xf32>
    %127 = arith.mulf %125, %126 : vector<256x16xf32>
    %128 = arith.addf %123, %127 : vector<256x16xf32>
    %129 = arith.maximumf %92, %128 : vector<256x16xf32>
    %cst_37 = arith.constant 0.000000e+00 : f32
    %130 = vector.broadcast %cst_37 : f32 to vector<256x16xf32>
    %131 = arith.maximumf %129, %130 : vector<256x16xf32>
    %c1_i32_38 = arith.constant 1 : i32
    %132 = vector.broadcast %c1_i32_38 : i32 to vector<256x1xi32>
    %133 = arith.cmpi sge, %16, %132 : vector<256x1xi32>
    %c1_i32_39 = arith.constant 1 : i32
    %134 = tpu.dynamic_rotate %131 by %c1_i32_39 dim 0 : vector<256x16xf32>, i32 -> vector<256x16xf32>
    %cst_40 = arith.constant 0.000000e+00 : f32
    %135 = vector.shape_cast %133 : vector<256x1xi1> to vector<256x1xi1>
    %136 = vector.broadcast %135 : vector<256x1xi1> to vector<256x16xi1>
    %137 = vector.broadcast %cst_40 : f32 to vector<256x16xf32>
    %138 = arith.select %136, %134, %137 : vector<256x16xi1>, vector<256x16xf32>
    %c8 = arith.constant 8 : index
    %c0_41 = arith.constant 0 : index
    %139 = vector.load %arg3[%c8, %c0_41] : memref<568x64xf32, #tpu.memory_space<vmem>>, vector<16x32xf32>
    %cst_42 = arith.constant dense<0.000000e+00> : vector<256x32xf32>
    %140 = tpu.matmul %138, %139, %cst_42 {dimension_numbers = #tpu.dot_dimension_numbers<[1], [0], [0], [1], [0, 0, 1, 1], [], []>} : vector<256x16xf32>, vector<16x32xf32>, vector<256x32xf32> -> vector<256x32xf32>
    %c24 = arith.constant 24 : index
    %c0_43 = arith.constant 0 : index
    %141 = vector.load %arg3[%c24, %c0_43] : memref<568x64xf32, #tpu.memory_space<vmem>>, vector<16x32xf32>
    %cst_44 = arith.constant dense<0.000000e+00> : vector<256x32xf32>
    %142 = tpu.matmul %131, %141, %cst_44 {dimension_numbers = #tpu.dot_dimension_numbers<[1], [0], [0], [1], [0, 0, 1, 1], [], []>} : vector<256x16xf32>, vector<16x32xf32>, vector<256x32xf32> -> vector<256x32xf32>
    %143 = arith.addf %140, %142 : vector<256x32xf32>
    %c31_i32_45 = arith.constant 31 : i32
    %144 = vector.broadcast %c31_i32_45 : i32 to vector<256x1xi32>
    %145 = arith.cmpi slt, %16, %144 : vector<256x1xi32>
    %c255_i32_46 = arith.constant 255 : i32
    %146 = tpu.dynamic_rotate %131 by %c255_i32_46 dim 0 : vector<256x16xf32>, i32 -> vector<256x16xf32>
    %cst_47 = arith.constant 0.000000e+00 : f32
    %147 = vector.shape_cast %145 : vector<256x1xi1> to vector<256x1xi1>
    %148 = vector.broadcast %147 : vector<256x1xi1> to vector<256x16xi1>
    %149 = vector.broadcast %cst_47 : f32 to vector<256x16xf32>
    %150 = arith.select %148, %146, %149 : vector<256x16xi1>, vector<256x16xf32>
    %c40 = arith.constant 40 : index
    %c0_48 = arith.constant 0 : index
    %151 = vector.load %arg3[%c40, %c0_48] : memref<568x64xf32, #tpu.memory_space<vmem>>, vector<16x32xf32>
    %cst_49 = arith.constant dense<0.000000e+00> : vector<256x32xf32>
    %152 = tpu.matmul %150, %151, %cst_49 {dimension_numbers = #tpu.dot_dimension_numbers<[1], [0], [0], [1], [0, 0, 1, 1], [], []>} : vector<256x16xf32>, vector<16x32xf32>, vector<256x32xf32> -> vector<256x32xf32>
    %153 = arith.addf %143, %152 : vector<256x32xf32>
    %c1_50 = arith.constant 1 : index
    %c0_51 = arith.constant 0 : index
    %154 = vector.load %arg5[%c1_50, %c0_51] : memref<9x256xf32, #tpu.memory_space<vmem>>, vector<1x32xf32>
    %155 = vector.broadcast %154 : vector<1x32xf32> to vector<256x32xf32>
    %156 = arith.addf %153, %155 : vector<256x32xf32>
    %cst_52 = arith.constant 0.000000e+00 : f32
    %157 = vector.broadcast %cst_52 : f32 to vector<256x32xf32>
    %158 = arith.maximumf %156, %157 : vector<256x32xf32>
    %159 = tpu.concatenate %131, %131 in 1 : vector<256x16xf32>, vector<256x16xf32> -> vector<256x32xf32>
    %c1_i32_53 = arith.constant 1 : i32
    %160 = vector.broadcast %c1_i32_53 : i32 to vector<256x1xi32>
    %161 = arith.cmpi sge, %16, %160 : vector<256x1xi32>
    %c1_i32_54 = arith.constant 1 : i32
    %162 = tpu.dynamic_rotate %158 by %c1_i32_54 dim 0 : vector<256x32xf32>, i32 -> vector<256x32xf32>
    %cst_55 = arith.constant 0.000000e+00 : f32
    %163 = vector.shape_cast %161 : vector<256x1xi1> to vector<256x1xi1>
    %164 = vector.broadcast %163 : vector<256x1xi1> to vector<256x32xi1>
    %165 = vector.broadcast %cst_55 : f32 to vector<256x32xf32>
    %166 = arith.select %164, %162, %165 : vector<256x32xi1>, vector<256x32xf32>
    %c56 = arith.constant 56 : index
    %c0_56 = arith.constant 0 : index
    %167 = vector.load %arg3[%c56, %c0_56] : memref<568x64xf32, #tpu.memory_space<vmem>>, vector<32x32xf32>
    %cst_57 = arith.constant dense<0.000000e+00> : vector<256x32xf32>
    %168 = tpu.matmul %166, %167, %cst_57 {dimension_numbers = #tpu.dot_dimension_numbers<[1], [0], [0], [1], [0, 0, 1, 1], [], []>} : vector<256x32xf32>, vector<32x32xf32>, vector<256x32xf32> -> vector<256x32xf32>
    %c88 = arith.constant 88 : index
    %c0_58 = arith.constant 0 : index
    %169 = vector.load %arg3[%c88, %c0_58] : memref<568x64xf32, #tpu.memory_space<vmem>>, vector<32x32xf32>
    %cst_59 = arith.constant dense<0.000000e+00> : vector<256x32xf32>
    %170 = tpu.matmul %158, %169, %cst_59 {dimension_numbers = #tpu.dot_dimension_numbers<[1], [0], [0], [1], [0, 0, 1, 1], [], []>} : vector<256x32xf32>, vector<32x32xf32>, vector<256x32xf32> -> vector<256x32xf32>
    %171 = arith.addf %168, %170 : vector<256x32xf32>
    %c31_i32_60 = arith.constant 31 : i32
    %172 = vector.broadcast %c31_i32_60 : i32 to vector<256x1xi32>
    %173 = arith.cmpi slt, %16, %172 : vector<256x1xi32>
    %c255_i32_61 = arith.constant 255 : i32
    %174 = tpu.dynamic_rotate %158 by %c255_i32_61 dim 0 : vector<256x32xf32>, i32 -> vector<256x32xf32>
    %cst_62 = arith.constant 0.000000e+00 : f32
    %175 = vector.shape_cast %173 : vector<256x1xi1> to vector<256x1xi1>
    %176 = vector.broadcast %175 : vector<256x1xi1> to vector<256x32xi1>
    %177 = vector.broadcast %cst_62 : f32 to vector<256x32xf32>
    %178 = arith.select %176, %174, %177 : vector<256x32xi1>, vector<256x32xf32>
    %c120 = arith.constant 120 : index
    %c0_63 = arith.constant 0 : index
    %179 = vector.load %arg3[%c120, %c0_63] : memref<568x64xf32, #tpu.memory_space<vmem>>, vector<32x32xf32>
    %cst_64 = arith.constant dense<0.000000e+00> : vector<256x32xf32>
    %180 = tpu.matmul %178, %179, %cst_64 {dimension_numbers = #tpu.dot_dimension_numbers<[1], [0], [0], [1], [0, 0, 1, 1], [], []>} : vector<256x32xf32>, vector<32x32xf32>, vector<256x32xf32> -> vector<256x32xf32>
    %181 = arith.addf %171, %180 : vector<256x32xf32>
    %c2_65 = arith.constant 2 : index
    %c0_66 = arith.constant 0 : index
    %182 = vector.load %arg5[%c2_65, %c0_66] : memref<9x256xf32, #tpu.memory_space<vmem>>, vector<1x32xf32>
    %183 = vector.broadcast %182 : vector<1x32xf32> to vector<256x32xf32>
    %184 = arith.addf %181, %183 : vector<256x32xf32>
    %185 = arith.addf %184, %159 : vector<256x32xf32>
    %cst_67 = arith.constant 0.000000e+00 : f32
    %186 = vector.broadcast %cst_67 : f32 to vector<256x32xf32>
    %187 = arith.maximumf %185, %186 : vector<256x32xf32>
    %c152 = arith.constant 152 : index
    %c0_68 = arith.constant 0 : index
    %188 = vector.load %arg3[%c152, %c0_68] : memref<568x64xf32, #tpu.memory_space<vmem>>, vector<32x64xf32>
    %cst_69 = arith.constant dense<0.000000e+00> : vector<256x64xf32>
    %189 = tpu.matmul %187, %188, %cst_69 {dimension_numbers = #tpu.dot_dimension_numbers<[1], [0], [0], [1], [0, 0, 1, 1], [], []>} : vector<256x32xf32>, vector<32x64xf32>, vector<256x64xf32> -> vector<256x64xf32>
    %c3_70 = arith.constant 3 : index
    %c0_71 = arith.constant 0 : index
    %190 = vector.load %arg5[%c3_70, %c0_71] : memref<9x256xf32, #tpu.memory_space<vmem>>, vector<1x64xf32>
    %191 = vector.broadcast %190 : vector<1x64xf32> to vector<256x64xf32>
    %192 = arith.addf %189, %191 : vector<256x64xf32>
    %c1_i32_72 = arith.constant 1 : i32
    %193 = vector.broadcast %c1_i32_72 : i32 to vector<256x1xi32>
    %194 = arith.cmpi sge, %16, %193 : vector<256x1xi32>
    %c1_i32_73 = arith.constant 1 : i32
    %195 = tpu.dynamic_rotate %187 by %c1_i32_73 dim 0 : vector<256x32xf32>, i32 -> vector<256x32xf32>
    %cst_74 = arith.constant 0.000000e+00 : f32
    %196 = vector.shape_cast %194 : vector<256x1xi1> to vector<256x1xi1>
    %197 = vector.broadcast %196 : vector<256x1xi1> to vector<256x32xi1>
    %198 = vector.broadcast %cst_74 : f32 to vector<256x32xf32>
    %199 = arith.select %197, %195, %198 : vector<256x32xi1>, vector<256x32xf32>
    %c184 = arith.constant 184 : index
    %c0_75 = arith.constant 0 : index
    %200 = vector.load %arg3[%c184, %c0_75] : memref<568x64xf32, #tpu.memory_space<vmem>>, vector<32x64xf32>
    %cst_76 = arith.constant dense<0.000000e+00> : vector<256x64xf32>
    %201 = tpu.matmul %199, %200, %cst_76 {dimension_numbers = #tpu.dot_dimension_numbers<[1], [0], [0], [1], [0, 0, 1, 1], [], []>} : vector<256x32xf32>, vector<32x64xf32>, vector<256x64xf32> -> vector<256x64xf32>
    %c216 = arith.constant 216 : index
    %c0_77 = arith.constant 0 : index
    %202 = vector.load %arg3[%c216, %c0_77] : memref<568x64xf32, #tpu.memory_space<vmem>>, vector<32x64xf32>
    %cst_78 = arith.constant dense<0.000000e+00> : vector<256x64xf32>
    %203 = tpu.matmul %187, %202, %cst_78 {dimension_numbers = #tpu.dot_dimension_numbers<[1], [0], [0], [1], [0, 0, 1, 1], [], []>} : vector<256x32xf32>, vector<32x64xf32>, vector<256x64xf32> -> vector<256x64xf32>
    %204 = arith.addf %201, %203 : vector<256x64xf32>
    %c31_i32_79 = arith.constant 31 : i32
    %205 = vector.broadcast %c31_i32_79 : i32 to vector<256x1xi32>
    %206 = arith.cmpi slt, %16, %205 : vector<256x1xi32>
    %c255_i32_80 = arith.constant 255 : i32
    %207 = tpu.dynamic_rotate %187 by %c255_i32_80 dim 0 : vector<256x32xf32>, i32 -> vector<256x32xf32>
    %cst_81 = arith.constant 0.000000e+00 : f32
    %208 = vector.shape_cast %206 : vector<256x1xi1> to vector<256x1xi1>
    %209 = vector.broadcast %208 : vector<256x1xi1> to vector<256x32xi1>
    %210 = vector.broadcast %cst_81 : f32 to vector<256x32xf32>
    %211 = arith.select %209, %207, %210 : vector<256x32xi1>, vector<256x32xf32>
    %c248 = arith.constant 248 : index
    %c0_82 = arith.constant 0 : index
    %212 = vector.load %arg3[%c248, %c0_82] : memref<568x64xf32, #tpu.memory_space<vmem>>, vector<32x64xf32>
    %cst_83 = arith.constant dense<0.000000e+00> : vector<256x64xf32>
    %213 = tpu.matmul %211, %212, %cst_83 {dimension_numbers = #tpu.dot_dimension_numbers<[1], [0], [0], [1], [0, 0, 1, 1], [], []>} : vector<256x32xf32>, vector<32x64xf32>, vector<256x64xf32> -> vector<256x64xf32>
    %214 = arith.addf %204, %213 : vector<256x64xf32>
    %c4_84 = arith.constant 4 : index
    %c0_85 = arith.constant 0 : index
    %215 = vector.load %arg5[%c4_84, %c0_85] : memref<9x256xf32, #tpu.memory_space<vmem>>, vector<1x64xf32>
    %216 = vector.broadcast %215 : vector<1x64xf32> to vector<256x64xf32>
    %217 = arith.addf %214, %216 : vector<256x64xf32>
    %cst_86 = arith.constant 0.000000e+00 : f32
    %218 = vector.broadcast %cst_86 : f32 to vector<256x64xf32>
    %219 = arith.maximumf %217, %218 : vector<256x64xf32>
    %c1_i32_87 = arith.constant 1 : i32
    %220 = vector.broadcast %c1_i32_87 : i32 to vector<256x1xi32>
    %221 = arith.cmpi sge, %16, %220 : vector<256x1xi32>
    %c1_i32_88 = arith.constant 1 : i32
    %222 = tpu.dynamic_rotate %219 by %c1_i32_88 dim 0 : vector<256x64xf32>, i32 -> vector<256x64xf32>
    %cst_89 = arith.constant 0.000000e+00 : f32
    %223 = vector.shape_cast %221 : vector<256x1xi1> to vector<256x1xi1>
    %224 = vector.broadcast %223 : vector<256x1xi1> to vector<256x64xi1>
    %225 = vector.broadcast %cst_89 : f32 to vector<256x64xf32>
    %226 = arith.select %224, %222, %225 : vector<256x64xi1>, vector<256x64xf32>
    %c280 = arith.constant 280 : index
    %c0_90 = arith.constant 0 : index
    %227 = vector.load %arg3[%c280, %c0_90] : memref<568x64xf32, #tpu.memory_space<vmem>>, vector<64x64xf32>
    %cst_91 = arith.constant dense<0.000000e+00> : vector<256x64xf32>
    %228 = tpu.matmul %226, %227, %cst_91 {dimension_numbers = #tpu.dot_dimension_numbers<[1], [0], [0], [1], [0, 0, 1, 1], [], []>} : vector<256x64xf32>, vector<64x64xf32>, vector<256x64xf32> -> vector<256x64xf32>
    %c344 = arith.constant 344 : index
    %c0_92 = arith.constant 0 : index
    %229 = vector.load %arg3[%c344, %c0_92] : memref<568x64xf32, #tpu.memory_space<vmem>>, vector<64x64xf32>
    %cst_93 = arith.constant dense<0.000000e+00> : vector<256x64xf32>
    %230 = tpu.matmul %219, %229, %cst_93 {dimension_numbers = #tpu.dot_dimension_numbers<[1], [0], [0], [1], [0, 0, 1, 1], [], []>} : vector<256x64xf32>, vector<64x64xf32>, vector<256x64xf32> -> vector<256x64xf32>
    %231 = arith.addf %228, %230 : vector<256x64xf32>
    %c31_i32_94 = arith.constant 31 : i32
    %232 = vector.broadcast %c31_i32_94 : i32 to vector<256x1xi32>
    %233 = arith.cmpi slt, %16, %232 : vector<256x1xi32>
    %c255_i32_95 = arith.constant 255 : i32
    %234 = tpu.dynamic_rotate %219 by %c255_i32_95 dim 0 : vector<256x64xf32>, i32 -> vector<256x64xf32>
    %cst_96 = arith.constant 0.000000e+00 : f32
    %235 = vector.shape_cast %233 : vector<256x1xi1> to vector<256x1xi1>
    %236 = vector.broadcast %235 : vector<256x1xi1> to vector<256x64xi1>
    %237 = vector.broadcast %cst_96 : f32 to vector<256x64xf32>
    %238 = arith.select %236, %234, %237 : vector<256x64xi1>, vector<256x64xf32>
    %c408 = arith.constant 408 : index
    %c0_97 = arith.constant 0 : index
    %239 = vector.load %arg3[%c408, %c0_97] : memref<568x64xf32, #tpu.memory_space<vmem>>, vector<64x64xf32>
    %cst_98 = arith.constant dense<0.000000e+00> : vector<256x64xf32>
    %240 = tpu.matmul %238, %239, %cst_98 {dimension_numbers = #tpu.dot_dimension_numbers<[1], [0], [0], [1], [0, 0, 1, 1], [], []>} : vector<256x64xf32>, vector<64x64xf32>, vector<256x64xf32> -> vector<256x64xf32>
    %241 = arith.addf %231, %240 : vector<256x64xf32>
    %c5_99 = arith.constant 5 : index
    %c0_100 = arith.constant 0 : index
    %242 = vector.load %arg5[%c5_99, %c0_100] : memref<9x256xf32, #tpu.memory_space<vmem>>, vector<1x64xf32>
    %243 = vector.broadcast %242 : vector<1x64xf32> to vector<256x64xf32>
    %244 = arith.addf %241, %243 : vector<256x64xf32>
    %245 = arith.addf %244, %192 : vector<256x64xf32>
    %cst_101 = arith.constant 0.000000e+00 : f32
    %246 = vector.broadcast %cst_101 : f32 to vector<256x64xf32>
    %247 = arith.maximumf %245, %246 : vector<256x64xf32>
    %248 = vector.extract_strided_slice %247 {offsets = [0, 0], sizes = [256, 32], strides = [1, 1]} : vector<256x64xf32> to vector<256x32xf32>
    %249 = vector.extract_strided_slice %247 {offsets = [0, 32], sizes = [256, 32], strides = [1, 1]} : vector<256x64xf32> to vector<256x32xf32>
    %250 = arith.addf %248, %249 : vector<256x32xf32>
    %c1_i32_102 = arith.constant 1 : i32
    %251 = vector.broadcast %c1_i32_102 : i32 to vector<256x1xi32>
    %252 = arith.cmpi sge, %16, %251 : vector<256x1xi32>
    %c1_i32_103 = arith.constant 1 : i32
    %253 = tpu.dynamic_rotate %250 by %c1_i32_103 dim 0 : vector<256x32xf32>, i32 -> vector<256x32xf32>
    %cst_104 = arith.constant 0.000000e+00 : f32
    %254 = vector.shape_cast %252 : vector<256x1xi1> to vector<256x1xi1>
    %255 = vector.broadcast %254 : vector<256x1xi1> to vector<256x32xi1>
    %256 = vector.broadcast %cst_104 : f32 to vector<256x32xf32>
    %257 = arith.select %255, %253, %256 : vector<256x32xi1>, vector<256x32xf32>
    %c472 = arith.constant 472 : index
    %c0_105 = arith.constant 0 : index
    %258 = vector.load %arg3[%c472, %c0_105] : memref<568x64xf32, #tpu.memory_space<vmem>>, vector<32x32xf32>
    %cst_106 = arith.constant dense<0.000000e+00> : vector<256x32xf32>
    %259 = tpu.matmul %257, %258, %cst_106 {dimension_numbers = #tpu.dot_dimension_numbers<[1], [0], [0], [1], [0, 0, 1, 1], [], []>} : vector<256x32xf32>, vector<32x32xf32>, vector<256x32xf32> -> vector<256x32xf32>
    %c504 = arith.constant 504 : index
    %c0_107 = arith.constant 0 : index
    %260 = vector.load %arg3[%c504, %c0_107] : memref<568x64xf32, #tpu.memory_space<vmem>>, vector<32x32xf32>
    %cst_108 = arith.constant dense<0.000000e+00> : vector<256x32xf32>
    %261 = tpu.matmul %250, %260, %cst_108 {dimension_numbers = #tpu.dot_dimension_numbers<[1], [0], [0], [1], [0, 0, 1, 1], [], []>} : vector<256x32xf32>, vector<32x32xf32>, vector<256x32xf32> -> vector<256x32xf32>
    %262 = arith.addf %259, %261 : vector<256x32xf32>
    %c31_i32_109 = arith.constant 31 : i32
    %263 = vector.broadcast %c31_i32_109 : i32 to vector<256x1xi32>
    %264 = arith.cmpi slt, %16, %263 : vector<256x1xi32>
    %c255_i32_110 = arith.constant 255 : i32
    %265 = tpu.dynamic_rotate %250 by %c255_i32_110 dim 0 : vector<256x32xf32>, i32 -> vector<256x32xf32>
    %cst_111 = arith.constant 0.000000e+00 : f32
    %266 = vector.shape_cast %264 : vector<256x1xi1> to vector<256x1xi1>
    %267 = vector.broadcast %266 : vector<256x1xi1> to vector<256x32xi1>
    %268 = vector.broadcast %cst_111 : f32 to vector<256x32xf32>
    %269 = arith.select %267, %265, %268 : vector<256x32xi1>, vector<256x32xf32>
    %c536 = arith.constant 536 : index
    %c0_112 = arith.constant 0 : index
    %270 = vector.load %arg3[%c536, %c0_112] : memref<568x64xf32, #tpu.memory_space<vmem>>, vector<32x32xf32>
    %cst_113 = arith.constant dense<0.000000e+00> : vector<256x32xf32>
    %271 = tpu.matmul %269, %270, %cst_113 {dimension_numbers = #tpu.dot_dimension_numbers<[1], [0], [0], [1], [0, 0, 1, 1], [], []>} : vector<256x32xf32>, vector<32x32xf32>, vector<256x32xf32> -> vector<256x32xf32>
    %272 = arith.addf %262, %271 : vector<256x32xf32>
    %c6_114 = arith.constant 6 : index
    %c0_115 = arith.constant 0 : index
    %273 = vector.load %arg5[%c6_114, %c0_115] : memref<9x256xf32, #tpu.memory_space<vmem>>, vector<1x32xf32>
    %274 = vector.broadcast %273 : vector<1x32xf32> to vector<256x32xf32>
    %275 = arith.addf %272, %274 : vector<256x32xf32>
    %cst_116 = arith.constant 0.000000e+00 : f32
    %276 = vector.broadcast %cst_116 : f32 to vector<256x32xf32>
    %277 = arith.maximumf %275, %276 : vector<256x32xf32>
    %c0_117 = arith.constant 0 : index
    %c0_118 = arith.constant 0 : index
    %278 = vector.load %arg2[%c0_117, %c0_118] : memref<32x256xf32, #tpu.memory_space<vmem>>, vector<32x256xf32>
    %cst_119 = arith.constant dense<0.000000e+00> : vector<32x32xf32>
    %279 = tpu.matmul %278, %277, %cst_119 {dimension_numbers = #tpu.dot_dimension_numbers<[1], [0], [0], [1], [0, 0, 1, 1], [], []>} : vector<32x256xf32>, vector<256x32xf32>, vector<32x32xf32> -> vector<32x32xf32>
    %c7 = arith.constant 7 : index
    %c0_120 = arith.constant 0 : index
    %280 = vector.load %arg5[%c7, %c0_120] : memref<9x256xf32, #tpu.memory_space<vmem>>, vector<1x256xf32>
    %281 = vector.extract_strided_slice %279 {offsets = [0, 0], sizes = [8, 32], strides = [1, 1]} : vector<32x32xf32> to vector<8x32xf32>
    %c0_121 = arith.constant 0 : index
    %c0_122 = arith.constant 0 : index
    %282 = vector.load %arg4[%c0_121, %c0_122] : memref<384x256xf32, #tpu.memory_space<vmem>>, vector<32x256xf32>
    %cst_123 = arith.constant dense<0.000000e+00> : vector<8x256xf32>
    %283 = tpu.matmul %281, %282, %cst_123 {dimension_numbers = #tpu.dot_dimension_numbers<[1], [0], [0], [1], [0, 0, 1, 1], [], []>} : vector<8x32xf32>, vector<32x256xf32>, vector<8x256xf32> -> vector<8x256xf32>
    %284 = vector.broadcast %280 : vector<1x256xf32> to vector<8x256xf32>
    %285 = arith.addf %284, %283 : vector<8x256xf32>
    %286 = vector.extract_strided_slice %279 {offsets = [8, 0], sizes = [8, 32], strides = [1, 1]} : vector<32x32xf32> to vector<8x32xf32>
    %c32 = arith.constant 32 : index
    %c0_124 = arith.constant 0 : index
    %287 = vector.load %arg4[%c32, %c0_124] : memref<384x256xf32, #tpu.memory_space<vmem>>, vector<32x256xf32>
    %cst_125 = arith.constant dense<0.000000e+00> : vector<8x256xf32>
    %288 = tpu.matmul %286, %287, %cst_125 {dimension_numbers = #tpu.dot_dimension_numbers<[1], [0], [0], [1], [0, 0, 1, 1], [], []>} : vector<8x32xf32>, vector<32x256xf32>, vector<8x256xf32> -> vector<8x256xf32>
    %289 = arith.addf %285, %288 : vector<8x256xf32>
    %290 = vector.extract_strided_slice %279 {offsets = [16, 0], sizes = [8, 32], strides = [1, 1]} : vector<32x32xf32> to vector<8x32xf32>
    %c64 = arith.constant 64 : index
    %c0_126 = arith.constant 0 : index
    %291 = vector.load %arg4[%c64, %c0_126] : memref<384x256xf32, #tpu.memory_space<vmem>>, vector<32x256xf32>
    %cst_127 = arith.constant dense<0.000000e+00> : vector<8x256xf32>
    %292 = tpu.matmul %290, %291, %cst_127 {dimension_numbers = #tpu.dot_dimension_numbers<[1], [0], [0], [1], [0, 0, 1, 1], [], []>} : vector<8x32xf32>, vector<32x256xf32>, vector<8x256xf32> -> vector<8x256xf32>
    %293 = arith.addf %289, %292 : vector<8x256xf32>
    %294 = vector.extract_strided_slice %279 {offsets = [24, 0], sizes = [8, 32], strides = [1, 1]} : vector<32x32xf32> to vector<8x32xf32>
    %c96 = arith.constant 96 : index
    %c0_128 = arith.constant 0 : index
    %295 = vector.load %arg4[%c96, %c0_128] : memref<384x256xf32, #tpu.memory_space<vmem>>, vector<32x256xf32>
    %cst_129 = arith.constant dense<0.000000e+00> : vector<8x256xf32>
    %296 = tpu.matmul %294, %295, %cst_129 {dimension_numbers = #tpu.dot_dimension_numbers<[1], [0], [0], [1], [0, 0, 1, 1], [], []>} : vector<8x32xf32>, vector<32x256xf32>, vector<8x256xf32> -> vector<8x256xf32>
    %297 = arith.addf %293, %296 : vector<8x256xf32>
    %c128 = arith.constant 128 : index
    %c0_130 = arith.constant 0 : index
    %298 = vector.load %arg4[%c128, %c0_130] : memref<384x256xf32, #tpu.memory_space<vmem>>, vector<256x128xf32>
    %cst_131 = arith.constant dense<0.000000e+00> : vector<8x128xf32>
    %299 = tpu.matmul %297, %298, %cst_131 {dimension_numbers = #tpu.dot_dimension_numbers<[1], [0], [0], [1], [0, 0, 1, 1], [], []>} : vector<8x256xf32>, vector<256x128xf32>, vector<8x128xf32> -> vector<8x128xf32>
    %c8_132 = arith.constant 8 : index
    %c0_133 = arith.constant 0 : index
    %300 = vector.load %arg5[%c8_132, %c0_133] : memref<9x256xf32, #tpu.memory_space<vmem>>, vector<1x128xf32>
    %301 = vector.broadcast %300 : vector<1x128xf32> to vector<8x128xf32>
    %302 = arith.addf %299, %301 : vector<8x128xf32>
    %c0_134 = arith.constant 0 : index
    %c0_135 = arith.constant 0 : index
    %c0_136 = arith.constant 0 : index
    %303 = vector.load %arg6[%c0_134, %c0_135, %c0_136] : memref<1x8x128xf32, #tpu.memory_space<vmem>>, vector<1x8x128xf32>
    %304 = vector.shape_cast %303 : vector<1x8x128xf32> to vector<8x128xf32>
    %305 = vector.shape_cast %302 : vector<8x128xf32> to vector<1x8x128xf32>
    tpu.vector_store %arg6[%c0_134, %c0_135, %c0_136], %305 {strides = array<i32>} : memref<1x8x128xf32, #tpu.memory_space<vmem>>, vector<1x8x128xf32>,
    return
  }
  func.func @transform_0(%arg0: i32) -> (i32, i32, i32) {
    %c0_i32 = arith.constant 0 : i32
    %c0_i32_0 = arith.constant 0 : i32
    %c0_i32_1 = arith.constant 0 : i32
    return %arg0, %c0_i32, %c0_i32_0 : i32, i32, i32
  }
  func.func @transform_1(%arg0: i32) -> (i32, i32) {
    %c0_i32 = arith.constant 0 : i32
    %c0_i32_0 = arith.constant 0 : i32
    %c0_i32_1 = arith.constant 0 : i32
    return %c0_i32, %c0_i32_0 : i32, i32
  }
  func.func @transform_2(%arg0: i32) -> (i32, i32) {
    %c0_i32 = arith.constant 0 : i32
    %c0_i32_0 = arith.constant 0 : i32
    %c0_i32_1 = arith.constant 0 : i32
    return %c0_i32, %c0_i32_0 : i32, i32
  }
  func.func @transform_3(%arg0: i32) -> (i32, i32) {
    %c0_i32 = arith.constant 0 : i32
    %c0_i32_0 = arith.constant 0 : i32
    %c0_i32_1 = arith.constant 0 : i32
    return %c0_i32, %c0_i32_0 : i32, i32
  }
  func.func @transform_4(%arg0: i32) -> (i32, i32) {
    %c0_i32 = arith.constant 0 : i32
    %c0_i32_0 = arith.constant 0 : i32
    %c0_i32_1 = arith.constant 0 : i32
    return %c0_i32, %c0_i32_0 : i32, i32
  }
  func.func @transform_5(%arg0: i32) -> (i32, i32, i32) {
    %c0_i32 = arith.constant 0 : i32
    %c0_i32_0 = arith.constant 0 : i32
    %c0_i32_1 = arith.constant 0 : i32
    return %arg0, %c0_i32, %c0_i32_0 : i32, i32, i32
  }
}

</mosaic_0001>

<llo_original>
// kernel: ecg_spatiotemporalnet1d_forward.1
$region0: #{ecg_spatiotemporalnet1d_forward.1}
  #allocation0 [shape = 'u32[]', space=smem, size = 0x4, offset = 0x4, fixed_abs, tag = 'smem constant byte address 0x4 - core index']
  #allocation1 [shape = 'u32[144,128]{1,0:T(1,128)}', space=vmem, size = 0x12000, scoped, tag = 'internal scratch']
  %s0 = inlined_call_operand.vmem [shape: f32[1,256,2], index: 0, kind: input, shape index: {}]
  %s1 = inlined_call_operand.vmem [shape: f32[32,256], index: 1, kind: input, shape index: {}]
  %s2 = inlined_call_operand.vmem [shape: f32[568,64], index: 2, kind: input, shape index: {}]
  %s3 = inlined_call_operand.vmem [shape: f32[384,256], index: 3, kind: input, shape index: {}]
  %s4 = inlined_call_operand.vmem [shape: f32[9,256], index: 4, kind: input, shape index: {}]
  %s5 = inlined_call_operand.hbm [shape: f32[1,8,128], index: 5, kind: output, shape index: {}]
  %s6 = sld [smem:[#allocation0]]
  $region30: #{ecg_spatiotemporalnet1d_forward.1} parent=0
    _
  %s8 = ssub.s32 1, %s6
  %s9 = scalar_select 0, %s8, %s6
  $region1: #{ecg_spatiotemporalnet1d_forward.1} parent=0
    #allocation2 [shape = 'u8[4096]{0}', space=vmem, size = 0x1000, scoped, tag = 'output window, operand 0, single buffered']
    #allocation3 [shape = 's32[1]{0}', space=sflag, size = 0x4, scoped, tag = 'scoped memory for ecg_spatiotemporalnet1d_forward.1']
    %10 = vsyncpa [#allocation3], 0
    // Predicated region
    $region2: #{ecg_spatiotemporalnet1d_forward.1} parent=1 // pred_check
      _
    $region3: #{ecg_spatiotemporalnet1d_forward.1} parent=1 // pred_check_branch
      %12 = sbr.rel (0) target = $region5
    $region4: #{ecg_spatiotemporalnet1d_forward.1} parent=1 // pred_region
      _
    $region5: #{ecg_spatiotemporalnet1d_forward.1} parent=1 // pred_fallthru
      _
    // Predicated region
    $region6: #{ecg_spatiotemporalnet1d_forward.1} parent=1 // pred_check
      _
    $region7: #{ecg_spatiotemporalnet1d_forward.1} parent=1 // pred_check_branch
      %14 = sbr.rel (0) target = $region9
    $region8: #{ecg_spatiotemporalnet1d_forward.1} parent=1 // pred_region
      _
    $region9: #{ecg_spatiotemporalnet1d_forward.1} parent=1 // pred_fallthru
      _
    // Predicated region
    $region10: #{ecg_spatiotemporalnet1d_forward.1} parent=1 // pred_check
      _
    $region11: #{ecg_spatiotemporalnet1d_forward.1} parent=1 // pred_check_branch
      %16 = sbr.rel (0) target = $region13
    $region12: #{ecg_spatiotemporalnet1d_forward.1} parent=1 // pred_region
      _
    $region13: #{ecg_spatiotemporalnet1d_forward.1} parent=1 // pred_fallthru
      _
    // Predicated region
    $region14: #{ecg_spatiotemporalnet1d_forward.1} parent=1 // pred_check
      _
    $region15: #{ecg_spatiotemporalnet1d_forward.1} parent=1 // pred_check_branch
      %18 = sbr.rel (0) target = $region17
    $region16: #{ecg_spatiotemporalnet1d_forward.1} parent=1 // pred_region
      _
    $region17: #{ecg_spatiotemporalnet1d_forward.1} parent=1 // pred_fallthru
      _
    // Predicated region
    $region18: #{ecg_spatiotemporalnet1d_forward.1} parent=1 // pred_check
      _
    $region19: #{ecg_spatiotemporalnet1d_forward.1} parent=1 // pred_check_branch
      %20 = sbr.rel (0) target = $region21
    $region20: #{ecg_spatiotemporalnet1d_forward.1} parent=1 // pred_region
      _
    $region21: #{ecg_spatiotemporalnet1d_forward.1} parent=1 // pred_fallthru
      _
    %v21 = vlaneseq
    %v22 = vshrl.u32 %v21, 7
    %v23 = vadd.s32 %v22, 8
    %v24 = vadd.s32 %v22, 16
    %v25 = vadd.s32 %v22, 24
    %v26 = vadd.s32 %v22, 32
    %v27 = vadd.s32 %v22, 40
    %v28 = vadd.s32 %v22, 48
    %v29 = vadd.s32 %v22, 56
    %v30 = vadd.s32 %v22, 64
    %v31 = vadd.s32 %v22, 72
    %v32 = vadd.s32 %v22, 80
    %v33 = vadd.s32 %v22, 88
    %v34 = vadd.s32 %v22, 96
    %v35 = vadd.s32 %v22, 104
    %v36 = vadd.s32 %v22, 112
    %v37 = vadd.s32 %v22, 120
    %v38 = vadd.s32 %v22, 128
    %v39 = vadd.s32 %v22, 136
    %v40 = vadd.s32 %v22, 144
    %v41 = vadd.s32 %v22, 152
    %v42 = vadd.s32 %v22, 160
    %v43 = vadd.s32 %v22, 168
    %v44 = vadd.s32 %v22, 176
    %v45 = vadd.s32 %v22, 184
    %v46 = vadd.s32 %v22, 192
    %v47 = vadd.s32 %v22, 200
    %v48 = vadd.s32 %v22, 208
    %v49 = vadd.s32 %v22, 216
    %v50 = vadd.s32 %v22, 224
    %v51 = vadd.s32 %v22, 232
    %v52 = vadd.s32 %v22, 240
    %v53 = vadd.s32 %v22, 248
    %vm54 = vcmp.lt.s32.totalorder %v22, 0
    %v55 = vsub.s32 0, %v22
    %v56 = vsel %vm54, %v55, %v22
    %v57 = vshrl.u32 %v56, 5
    %v58 = vand.u32 %v56, 31
    %v59 = vsub.s32 0, %v58
    %v60 = vsel %vm54, %v59, %v58
    %vm61 = vcmp.lt.s32.totalorder %v23, 0
    %v62 = vsub.s32 0, %v23
    %v63 = vsel %vm61, %v62, %v23
    %v64 = vshrl.u32 %v63, 5
    %v65 = vand.u32 %v63, 31
    %v66 = vsub.s32 0, %v65
    %v67 = vsel %vm61, %v66, %v65
    %vm68 = vcmp.lt.s32.totalorder %v24, 0
    %v69 = vsub.s32 0, %v24
    %v70 = vsel %vm68, %v69, %v24
    %v71 = vshrl.u32 %v70, 5
    %v72 = vand.u32 %v70, 31
    %v73 = vsub.s32 0, %v72
    %v74 = vsel %vm68, %v73, %v72
    %vm75 = vcmp.lt.s32.totalorder %v25, 0
    %v76 = vsub.s32 0, %v25
    %v77 = vsel %vm75, %v76, %v25
    %v78 = vshrl.u32 %v77, 5
    %v79 = vand.u32 %v77, 31
    %v80 = vsub.s32 0, %v79
    %v81 = vsel %vm75, %v80, %v79
    %vm82 = vcmp.lt.s32.totalorder %v26, 0
    %v83 = vsub.s32 0, %v26
    %v84 = vsel %vm82, %v83, %v26
    %v85 = vshrl.u32 %v84, 5
    %v86 = vand.u32 %v84, 31
    %v87 = vsub.s32 0, %v86
    %v88 = vsel %vm82, %v87, %v86
    %vm89 = vcmp.lt.s32.totalorder %v27, 0
    %v90 = vsub.s32 0, %v27
    %v91 = vsel %vm89, %v90, %v27
    %v92 = vshrl.u32 %v91, 5
    %v93 = vand.u32 %v91, 31
    %v94 = vsub.s32 0, %v93
    %v95 = vsel %vm89, %v94, %v93
    %vm96 = vcmp.lt.s32.totalorder %v28, 0
    %v97 = vsub.s32 0, %v28
    %v98 = vsel %vm96, %v97, %v28
    %v99 = vshrl.u32 %v98, 5
    %v100 = vand.u32 %v98, 31
    %v101 = vsub.s32 0, %v100
    %v102 = vsel %vm96, %v101, %v100
    %vm103 = vcmp.lt.s32.totalorder %v29, 0
    %v104 = vsub.s32 0, %v29
    %v105 = vsel %vm103, %v104, %v29
    %v106 = vshrl.u32 %v105, 5
    %v107 = vand.u32 %v105, 31
    %v108 = vsub.s32 0, %v107
    %v109 = vsel %vm103, %v108, %v107
    %vm110 = vcmp.lt.s32.totalorder %v30, 0
    %v111 = vsub.s32 0, %v30
    %v112 = vsel %vm110, %v111, %v30
    %v113 = vshrl.u32 %v112, 5
    %v114 = vand.u32 %v112, 31
    %v115 = vsub.s32 0, %v114
    %v116 = vsel %vm110, %v115, %v114
    %vm117 = vcmp.lt.s32.totalorder %v31, 0
    %v118 = vsub.s32 0, %v31
    %v119 = vsel %vm117, %v118, %v31
    %v120 = vshrl.u32 %v119, 5
    %v121 = vand.u32 %v119, 31
    %v122 = vsub.s32 0, %v121
    %v123 = vsel %vm117, %v122, %v121
    %vm124 = vcmp.lt.s32.totalorder %v32, 0
    %v125 = vsub.s32 0, %v32
    %v126 = vsel %vm124, %v125, %v32
    %v127 = vshrl.u32 %v126, 5
    %v128 = vand.u32 %v126, 31
    %v129 = vsub.s32 0, %v128
    %v130 = vsel %vm124, %v129, %v128
    %vm131 = vcmp.lt.s32.totalorder %v33, 0
    %v132 = vsub.s32 0, %v33
    %v133 = vsel %vm131, %v132, %v33
    %v134 = vshrl.u32 %v133, 5
    %v135 = vand.u32 %v133, 31
    %v136 = vsub.s32 0, %v135
    %v137 = vsel %vm131, %v136, %v135
    %vm138 = vcmp.lt.s32.totalorder %v34, 0
    %v139 = vsub.s32 0, %v34
    %v140 = vsel %vm138, %v139, %v34
    %v141 = vshrl.u32 %v140, 5
    %v142 = vand.u32 %v140, 31
    %v143 = vsub.s32 0, %v142
    %v144 = vsel %vm138, %v143, %v142
    %vm145 = vcmp.lt.s32.totalorder %v35, 0
    %v146 = vsub.s32 0, %v35
    %v147 = vsel %vm145, %v146, %v35
    %v148 = vshrl.u32 %v147, 5
    %v149 = vand.u32 %v147, 31
    %v150 = vsub.s32 0, %v149
    %v151 = vsel %vm145, %v150, %v149
    %vm152 = vcmp.lt.s32.totalorder %v36, 0
    %v153 = vsub.s32 0, %v36
    %v154 = vsel %vm152, %v153, %v36
    %v155 = vshrl.u32 %v154, 5
    %v156 = vand.u32 %v154, 31
    %v157 = vsub.s32 0, %v156
    %v158 = vsel %vm152, %v157, %v156
    %vm159 = vcmp.lt.s32.totalorder %v37, 0
    %v160 = vsub.s32 0, %v37
    %v161 = vsel %vm159, %v160, %v37
    %v162 = vshrl.u32 %v161, 5
    %v163 = vand.u32 %v161, 31
    %v164 = vsub.s32 0, %v163
    %v165 = vsel %vm159, %v164, %v163
    %vm166 = vcmp.lt.s32.totalorder %v38, 0
    %v167 = vsub.s32 0, %v38
    %v168 = vsel %vm166, %v167, %v38
    %v169 = vshrl.u32 %v168, 5
    %v170 = vand.u32 %v168, 31
    %v171 = vsub.s32 0, %v170
    %v172 = vsel %vm166, %v171, %v170
    %vm173 = vcmp.lt.s32.totalorder %v39, 0
    %v174 = vsub.s32 0, %v39
    %v175 = vsel %vm173, %v174, %v39
    %v176 = vshrl.u32 %v175, 5
    %v177 = vand.u32 %v175, 31
    %v178 = vsub.s32 0, %v177
    %v179 = vsel %vm173, %v178, %v177
    %vm180 = vcmp.lt.s32.totalorder %v40, 0
    %v181 = vsub.s32 0, %v40
    %v182 = vsel %vm180, %v181, %v40
    %v183 = vshrl.u32 %v182, 5
    %v184 = vand.u32 %v182, 31
    %v185 = vsub.s32 0, %v184
    %v186 = vsel %vm180, %v185, %v184
    %vm187 = vcmp.lt.s32.totalorder %v41, 0
    %v188 = vsub.s32 0, %v41
    %v189 = vsel %vm187, %v188, %v41
    %v190 = vshrl.u32 %v189, 5
    %v191 = vand.u32 %v189, 31
    %v192 = vsub.s32 0, %v191
    %v193 = vsel %vm187, %v192, %v191
    %vm194 = vcmp.lt.s32.totalorder %v42, 0
    %v195 = vsub.s32 0, %v42
    %v196 = vsel %vm194, %v195, %v42
    %v197 = vshrl.u32 %v196, 5
    %v198 = vand.u32 %v196, 31
    %v199 = vsub.s32 0, %v198
    %v200 = vsel %vm194, %v199, %v198
    %vm201 = vcmp.lt.s32.totalorder %v43, 0
    %v202 = vsub.s32 0, %v43
    %v203 = vsel %vm201, %v202, %v43
    %v204 = vshrl.u32 %v203, 5
    %v205 = vand.u32 %v203, 31
    %v206 = vsub.s32 0, %v205
    %v207 = vsel %vm201, %v206, %v205
    %vm208 = vcmp.lt.s32.totalorder %v44, 0
    %v209 = vsub.s32 0, %v44
    %v210 = vsel %vm208, %v209, %v44
    %v211 = vshrl.u32 %v210, 5
    %v212 = vand.u32 %v210, 31
    %v213 = vsub.s32 0, %v212
    %v214 = vsel %vm208, %v213, %v212
    %vm215 = vcmp.lt.s32.totalorder %v45, 0
    %v216 = vsub.s32 0, %v45
    %v217 = vsel %vm215, %v216, %v45
    %v218 = vshrl.u32 %v217, 5
    %v219 = vand.u32 %v217, 31
    %v220 = vsub.s32 0, %v219
    %v221 = vsel %vm215, %v220, %v219
    %vm222 = vcmp.lt.s32.totalorder %v46, 0
    %v223 = vsub.s32 0, %v46
    %v224 = vsel %vm222, %v223, %v46
    %v225 = vshrl.u32 %v224, 5
    %v226 = vand.u32 %v224, 31
    %v227 = vsub.s32 0, %v226
    %v228 = vsel %vm222, %v227, %v226
    %vm229 = vcmp.lt.s32.totalorder %v47, 0
    %v230 = vsub.s32 0, %v47
    %v231 = vsel %vm229, %v230, %v47
    %v232 = vshrl.u32 %v231, 5
    %v233 = vand.u32 %v231, 31
    %v234 = vsub.s32 0, %v233
    %v235 = vsel %vm229, %v234, %v233
    %vm236 = vcmp.lt.s32.totalorder %v48, 0
    %v237 = vsub.s32 0, %v48
    %v238 = vsel %vm236, %v237, %v48
    %v239 = vshrl.u32 %v238, 5
    %v240 = vand.u32 %v238, 31
    %v241 = vsub.s32 0, %v240
    %v242 = vsel %vm236, %v241, %v240
    %vm243 = vcmp.lt.s32.totalorder %v49, 0
    %v244 = vsub.s32 0, %v49
    %v245 = vsel %vm243, %v244, %v49
    %v246 = vshrl.u32 %v245, 5
    %v247 = vand.u32 %v245, 31
    %v248 = vsub.s32 0, %v247
    %v249 = vsel %vm243, %v248, %v247
    %vm250 = vcmp.lt.s32.totalorder %v50, 0
    %v251 = vsub.s32 0, %v50
    %v252 = vsel %vm250, %v251, %v50
    %v253 = vshrl.u32 %v252, 5
    %v254 = vand.u32 %v252, 31
    %v255 = vsub.s32 0, %v254
    %v256 = vsel %vm250, %v255, %v254
    %vm257 = vcmp.lt.s32.totalorder %v51, 0
    %v258 = vsub.s32 0, %v51
    %v259 = vsel %vm257, %v258, %v51
    %v260 = vshrl.u32 %v259, 5
    %v261 = vand.u32 %v259, 31
    %v262 = vsub.s32 0, %v261
    %v263 = vsel %vm257, %v262, %v261
    %vm264 = vcmp.lt.s32.totalorder %v52, 0
    %v265 = vsub.s32 0, %v52
    %v266 = vsel %vm264, %v265, %v52
    %v267 = vshrl.u32 %v266, 5
    %v268 = vand.u32 %v266, 31
    %v269 = vsub.s32 0, %v268
    %v270 = vsel %vm264, %v269, %v268
    %vm271 = vcmp.lt.s32.totalorder %v53, 0
    %v272 = vsub.s32 0, %v53
    %v273 = vsel %vm271, %v272, %v53
    %v274 = vshrl.u32 %v273, 5
    %v275 = vand.u32 %v273, 31
    %v276 = vsub.s32 0, %v275
    %v277 = vsel %vm271, %v276, %v275
    %vm278 = vcmp.ne.s32.totalorder %v60, 0
    %vm279 = vcmp.ne.s32.totalorder %v67, 0
    %vm280 = vcmp.ne.s32.totalorder %v74, 0
    %vm281 = vcmp.ne.s32.totalorder %v81, 0
    %vm282 = vcmp.ne.s32.totalorder %v88, 0
    %vm283 = vcmp.ne.s32.totalorder %v95, 0
    %vm284 = vcmp.ne.s32.totalorder %v102, 0
    %vm285 = vcmp.ne.s32.totalorder %v109, 0
    %vm286 = vcmp.ne.s32.totalorder %v116, 0
    %vm287 = vcmp.ne.s32.totalorder %v123, 0
    %vm288 = vcmp.ne.s32.totalorder %v130, 0
    %vm289 = vcmp.ne.s32.totalorder %v137, 0
    %vm290 = vcmp.ne.s32.totalorder %v144, 0
    %vm291 = vcmp.ne.s32.totalorder %v151, 0
    %vm292 = vcmp.ne.s32.totalorder %v158, 0
    %vm293 = vcmp.ne.s32.totalorder %v165, 0
    %vm294 = vcmp.ne.s32.totalorder %v172, 0
    %vm295 = vcmp.ne.s32.totalorder %v179, 0
    %vm296 = vcmp.ne.s32.totalorder %v186, 0
    %vm297 = vcmp.ne.s32.totalorder %v193, 0
    %vm298 = vcmp.ne.s32.totalorder %v200, 0
    %vm299 = vcmp.ne.s32.totalorder %v207, 0
    %vm300 = vcmp.ne.s32.totalorder %v214, 0
    %vm301 = vcmp.ne.s32.totalorder %v221, 0
    %vm302 = vcmp.ne.s32.totalorder %v228, 0
    %vm303 = vcmp.ne.s32.totalorder %v235, 0
    %vm304 = vcmp.ne.s32.totalorder %v242, 0
    %vm305 = vcmp.ne.s32.totalorder %v249, 0
    %vm306 = vcmp.ne.s32.totalorder %v256, 0
    %vm307 = vcmp.ne.s32.totalorder %v263, 0
    %vm308 = vcmp.ne.s32.totalorder %v270, 0
    %vm309 = vcmp.ne.s32.totalorder %v277, 0
    %vm310 = vcmp.lt.s32.totalorder %v60, 0
    %vm311 = vcmp.lt.s32.totalorder %v67, 0
    %vm312 = vcmp.lt.s32.totalorder %v74, 0
    %vm313 = vcmp.lt.s32.totalorder %v81, 0
    %vm314 = vcmp.lt.s32.totalorder %v88, 0
    %vm315 = vcmp.lt.s32.totalorder %v95, 0
    %vm316 = vcmp.lt.s32.totalorder %v102, 0
    %vm317 = vcmp.lt.s32.totalorder %v109, 0
    %vm318 = vcmp.lt.s32.totalorder %v116, 0
    %vm319 = vcmp.lt.s32.totalorder %v123, 0
    %vm320 = vcmp.lt.s32.totalorder %v130, 0
    %vm321 = vcmp.lt.s32.totalorder %v137, 0
    %vm322 = vcmp.lt.s32.totalorder %v144, 0
    %vm323 = vcmp.lt.s32.totalorder %v151, 0
    %vm324 = vcmp.lt.s32.totalorder %v158, 0
    %vm325 = vcmp.lt.s32.totalorder %v165, 0
    %vm326 = vcmp.lt.s32.totalorder %v172, 0
    %vm327 = vcmp.lt.s32.totalorder %v179, 0
    %vm328 = vcmp.lt.s32.totalorder %v186, 0
    %vm329 = vcmp.lt.s32.totalorder %v193, 0
    %vm330 = vcmp.lt.s32.totalorder %v200, 0
    %vm331 = vcmp.lt.s32.totalorder %v207, 0
    %vm332 = vcmp.lt.s32.totalorder %v214, 0
    %vm333 = vcmp.lt.s32.totalorder %v221, 0
    %vm334 = vcmp.lt.s32.totalorder %v228, 0
    %vm335 = vcmp.lt.s32.totalorder %v235, 0
    %vm336 = vcmp.lt.s32.totalorder %v242, 0
    %vm337 = vcmp.lt.s32.totalorder %v249, 0
    %vm338 = vcmp.lt.s32.totalorder %v256, 0
    %vm339 = vcmp.lt.s32.totalorder %v263, 0
    %vm340 = vcmp.lt.s32.totalorder %v270, 0
    %vm341 = vcmp.lt.s32.totalorder %v277, 0
    %vm342 = vmand %vm310, %vm278
    %vm343 = vmand %vm311, %vm279
    %vm344 = vmand %vm312, %vm280
    %vm345 = vmand %vm313, %vm281
    %vm346 = vmand %vm314, %vm282
    %vm347 = vmand %vm315, %vm283
    %vm348 = vmand %vm316, %vm284
    %vm349 = vmand %vm317, %vm285
    %vm350 = vmand %vm318, %vm286
    %vm351 = vmand %vm319, %vm287
    %vm352 = vmand %vm320, %vm288
    %vm353 = vmand %vm321, %vm289
    %vm354 = vmand %vm322, %vm290
    %vm355 = vmand %vm323, %vm291
    %vm356 = vmand %vm324, %vm292
    %vm357 = vmand %vm325, %vm293
    %vm358 = vmand %vm326, %vm294
    %vm359 = vmand %vm327, %vm295
    %vm360 = vmand %vm328, %vm296
    %vm361 = vmand %vm329, %vm297
    %vm362 = vmand %vm330, %vm298
    %vm363 = vmand %vm331, %vm299
    %vm364 = vmand %vm332, %vm300
    %vm365 = vmand %vm333, %vm301
    %vm366 = vmand %vm334, %vm302
    %vm367 = vmand %vm335, %vm303
    %vm368 = vmand %vm336, %vm304
    %vm369 = vmand %vm337, %vm305
    %vm370 = vmand %vm338, %vm306
    %vm371 = vmand %vm339, %vm307
    %vm372 = vmand %vm340, %vm308
    %vm373 = vmand %vm341, %vm309
    %v374 = vadd.s32 %v60, 32
    %v375 = vadd.s32 %v67, 32
    %v376 = vadd.s32 %v74, 32
    %v377 = vadd.s32 %v81, 32
    %v378 = vadd.s32 %v88, 32
    %v379 = vadd.s32 %v95, 32
    %v380 = vadd.s32 %v102, 32
    %v381 = vadd.s32 %v109, 32
    %v382 = vadd.s32 %v116, 32
    %v383 = vadd.s32 %v123, 32
    %v384 = vadd.s32 %v130, 32
    %v385 = vadd.s32 %v137, 32
    %v386 = vadd.s32 %v144, 32
    %v387 = vadd.s32 %v151, 32
    %v388 = vadd.s32 %v158, 32
    %v389 = vadd.s32 %v165, 32
    %v390 = vadd.s32 %v172, 32
    %v391 = vadd.s32 %v179, 32
    %v392 = vadd.s32 %v186, 32
    %v393 = vadd.s32 %v193, 32
    %v394 = vadd.s32 %v200, 32
    %v395 = vadd.s32 %v207, 32
    %v396 = vadd.s32 %v214, 32
    %v397 = vadd.s32 %v221, 32
    %v398 = vadd.s32 %v228, 32
    %v399 = vadd.s32 %v235, 32
    %v400 = vadd.s32 %v242, 32
    %v401 = vadd.s32 %v249, 32
    %v402 = vadd.s32 %v256, 32
    %v403 = vadd.s32 %v263, 32
    %v404 = vadd.s32 %v270, 32
    %v405 = vadd.s32 %v277, 32
    %v406 = vsel %vm342, %v374, %v60
    %v407 = vsel %vm343, %v375, %v67
    %v408 = vsel %vm344, %v376, %v74
    %v409 = vsel %vm345, %v377, %v81
    %v410 = vsel %vm346, %v378, %v88
    %v411 = vsel %vm347, %v379, %v95
    %v412 = vsel %vm348, %v380, %v102
    %v413 = vsel %vm349, %v381, %v109
    %v414 = vsel %vm350, %v382, %v116
    %v415 = vsel %vm351, %v383, %v123
    %v416 = vsel %vm352, %v384, %v130
    %v417 = vsel %vm353, %v385, %v137
    %v418 = vsel %vm354, %v386, %v144
    %v419 = vsel %vm355, %v387, %v151
    %v420 = vsel %vm356, %v388, %v158
    %v421 = vsel %vm357, %v389, %v165
    %v422 = vsel %vm358, %v390, %v172
    %v423 = vsel %vm359, %v391, %v179
    %v424 = vsel %vm360, %v392, %v186
    %v425 = vsel %vm361, %v393, %v193
    %v426 = vsel %vm362, %v394, %v200
    %v427 = vsel %vm363, %v395, %v207
    %v428 = vsel %vm364, %v396, %v214
    %v429 = vsel %vm365, %v397, %v221
    %v430 = vsel %vm366, %v398, %v228
    %v431 = vsel %vm367, %v399, %v235
    %v432 = vsel %vm368, %v400, %v242
    %v433 = vsel %vm369, %v401, %v249
    %v434 = vsel %vm370, %v402, %v256
    %v435 = vsel %vm371, %v403, %v263
    %v436 = vsel %vm372, %v404, %v270
    %v437 = vsel %vm373, %v405, %v277
    %v438 = vld [vmem:[%s0] sm:$0xff]
    %v439 = vld [vmem:[%s0 + $0x8] sm:$0xff]
    %v440 = vld [vmem:[%s0 + $0x10] sm:$0xff]
    %v441 = vld [vmem:[%s0 + $0x18] sm:$0xff]
    %v442 = vld [vmem:[%s0 + $0x20] sm:$0xff]
    %v443 = vld [vmem:[%s0 + $0x28] sm:$0xff]
    %v444 = vld [vmem:[%s0 + $0x30] sm:$0xff]
    %v445 = vld [vmem:[%s0 + $0x38] sm:$0xff]
    %v446 = vld [vmem:[%s0 + $0x40] sm:$0xff]
    %v447 = vld [vmem:[%s0 + $0x48] sm:$0xff]
    %v448 = vld [vmem:[%s0 + $0x50] sm:$0xff]
    %v449 = vld [vmem:[%s0 + $0x58] sm:$0xff]
    %v450 = vld [vmem:[%s0 + $0x60] sm:$0xff]
    %v451 = vld [vmem:[%s0 + $0x68] sm:$0xff]
    %v452 = vld [vmem:[%s0 + $0x70] sm:$0xff]
    %v453 = vld [vmem:[%s0 + $0x78] sm:$0xff]
    %v454 = vld [vmem:[%s0 + $0x80] sm:$0xff]
    %v455 = vld [vmem:[%s0 + $0x88] sm:$0xff]
    %v456 = vld [vmem:[%s0 + $0x90] sm:$0xff]
    %v457 = vld [vmem:[%s0 + $0x98] sm:$0xff]
    %v458 = vld [vmem:[%s0 + $0xa0] sm:$0xff]
    %v459 = vld [vmem:[%s0 + $0xa8] sm:$0xff]
    %v460 = vld [vmem:[%s0 + $0xb0] sm:$0xff]
    %v461 = vld [vmem:[%s0 + $0xb8] sm:$0xff]
    %v462 = vld [vmem:[%s0 + $0xc0] sm:$0xff]
    %v463 = vld [vmem:[%s0 + $0xc8] sm:$0xff]
    %v464 = vld [vmem:[%s0 + $0xd0] sm:$0xff]
    %v465 = vld [vmem:[%s0 + $0xd8] sm:$0xff]
    %v466 = vld [vmem:[%s0 + $0xe0] sm:$0xff]
    %v467 = vld [vmem:[%s0 + $0xe8] sm:$0xff]
    %v468 = vld [vmem:[%s0 + $0xf0] sm:$0xff]
    %v469 = vld [vmem:[%s0 + $0xf8] sm:$0xff]
    %vm470 = vcmp.ge.s32.totalorder %v406, 2
    %vm471 = vcmp.ge.s32.totalorder %v407, 2
    %vm472 = vcmp.ge.s32.totalorder %v408, 2
    %vm473 = vcmp.ge.s32.totalorder %v409, 2
    %vm474 = vcmp.ge.s32.totalorder %v410, 2
    %vm475 = vcmp.ge.s32.totalorder %v411, 2
    %vm476 = vcmp.ge.s32.totalorder %v412, 2
    %vm477 = vcmp.ge.s32.totalorder %v413, 2
    %vm478 = vcmp.ge.s32.totalorder %v414, 2
    %vm479 = vcmp.ge.s32.totalorder %v415, 2
    %vm480 = vcmp.ge.s32.totalorder %v416, 2
    %vm481 = vcmp.ge.s32.totalorder %v417, 2
    %vm482 = vcmp.ge.s32.totalorder %v418, 2
    %vm483 = vcmp.ge.s32.totalorder %v419, 2
    %vm484 = vcmp.ge.s32.totalorder %v420, 2
    %vm485 = vcmp.ge.s32.totalorder %v421, 2
    %vm486 = vcmp.ge.s32.totalorder %v422, 2
    %vm487 = vcmp.ge.s32.totalorder %v423, 2
    %vm488 = vcmp.ge.s32.totalorder %v424, 2
    %vm489 = vcmp.ge.s32.totalorder %v425, 2
    %vm490 = vcmp.ge.s32.totalorder %v426, 2
    %vm491 = vcmp.ge.s32.totalorder %v427, 2
    %vm492 = vcmp.ge.s32.totalorder %v428, 2
    %vm493 = vcmp.ge.s32.totalorder %v429, 2
    %vm494 = vcmp.ge.s32.totalorder %v430, 2
    %vm495 = vcmp.ge.s32.totalorder %v431, 2
    %vm496 = vcmp.ge.s32.totalorder %v432, 2
    %vm497 = vcmp.ge.s32.totalorder %v433, 2
    %vm498 = vcmp.ge.s32.totalorder %v434, 2
    %vm499 = vcmp.ge.s32.totalorder %v435, 2
    %vm500 = vcmp.ge.s32.totalorder %v436, 2
    %vm501 = vcmp.ge.s32.totalorder %v437, 2
    %v502 = vrot.slane %v438, 6
    %v503 = vrot.slane %v439, 6
    %v504 = vrot.slane %v440, 6
    %v505 = vrot.slane %v441, 6
    %v506 = vrot.slane %v442, 6
    %v507 = vrot.slane %v443, 6
    %v508 = vrot.slane %v444, 6
    %v509 = vrot.slane %v445, 6
    %v510 = vrot.slane %v446, 6
    %v511 = vrot.slane %v447, 6
    %v512 = vrot.slane %v448, 6
    %v513 = vrot.slane %v449, 6
    %v514 = vrot.slane %v450, 6
    %v515 = vrot.slane %v451, 6
    %v516 = vrot.slane %v452, 6
    %v517 = vrot.slane %v453, 6
    %v518 = vrot.slane %v454, 6
    %v519 = vrot.slane %v455, 6
    %v520 = vrot.slane %v456, 6
    %v521 = vrot.slane %v457, 6
    %v522 = vrot.slane %v458, 6
    %v523 = vrot.slane %v459, 6
    %v524 = vrot.slane %v460, 6
    %v525 = vrot.slane %v461, 6
    %v526 = vrot.slane %v462, 6
    %v527 = vrot.slane %v463, 6
    %v528 = vrot.slane %v464, 6
    %v529 = vrot.slane %v465, 6
    %v530 = vrot.slane %v466, 6
    %v531 = vrot.slane %v467, 6
    %v532 = vrot.slane %v468, 6
    %v533 = vrot.slane %v469, 6
    %vm534 = vcmp.lt.s32.totalorder %v22, 2
    %v535 = vsel %vm534, %v532, %v533
    %v536 = vsel %vm534, %v531, %v532
    %v537 = vsel %vm534, %v530, %v531
    %v538 = vsel %vm534, %v529, %v530
    %v539 = vsel %vm534, %v528, %v529
    %v540 = vsel %vm534, %v527, %v528
    %v541 = vsel %vm534, %v526, %v527
    %v542 = vsel %vm534, %v525, %v526
    %v543 = vsel %vm534, %v524, %v525
    %v544 = vsel %vm534, %v523, %v524
    %v545 = vsel %vm534, %v522, %v523
    %v546 = vsel %vm534, %v521, %v522
    %v547 = vsel %vm534, %v520, %v521
    %v548 = vsel %vm534, %v519, %v520
    %v549 = vsel %vm534, %v518, %v519
    %v550 = vsel %vm534, %v517, %v518
    %v551 = vsel %vm534, %v516, %v517
    %v552 = vsel %vm534, %v515, %v516
    %v553 = vsel %vm534, %v514, %v515
    %v554 = vsel %vm534, %v513, %v514
    %v555 = vsel %vm534, %v512, %v513
    %v556 = vsel %vm534, %v511, %v512
    %v557 = vsel %vm534, %v510, %v511
    %v558 = vsel %vm534, %v509, %v510
    %v559 = vsel %vm534, %v508, %v509
    %v560 = vsel %vm534, %v507, %v508
    %v561 = vsel %vm534, %v506, %v507
    %v562 = vsel %vm534, %v505, %v506
    %v563 = vsel %vm534, %v504, %v505
    %v564 = vsel %vm534, %v503, %v504
    %v565 = vsel %vm534, %v502, %v503
    %v566 = vsel %vm534, %v533, %v502
    %v567 = vsel %vm470, 1, 0
    %v568 = vsel %vm471, 1, 0
    %v569 = vsel %vm472, 1, 0
    %v570 = vsel %vm473, 1, 0
    %v571 = vsel %vm474, 1, 0
    %v572 = vsel %vm475, 1, 0
    %v573 = vsel %vm476, 1, 0
    %v574 = vsel %vm477, 1, 0
    %v575 = vsel %vm478, 1, 0
    %v576 = vsel %vm479, 1, 0
    %v577 = vsel %vm480, 1, 0
    %v578 = vsel %vm481, 1, 0
    %v579 = vsel %vm482, 1, 0
    %v580 = vsel %vm483, 1, 0
    %v581 = vsel %vm484, 1, 0
    %v582 = vsel %vm485, 1, 0
    %v583 = vsel %vm486, 1, 0
    %v584 = vsel %vm487, 1, 0
    %v585 = vsel %vm488, 1, 0
    %v586 = vsel %vm489, 1, 0
    %v587 = vsel %vm490, 1, 0
    %v588 = vsel %vm491, 1, 0
    %v589 = vsel %vm492, 1, 0
    %v590 = vsel %vm493, 1, 0
    %v591 = vsel %vm494, 1, 0
    %v592 = vsel %vm495, 1, 0
    %v593 = vsel %vm496, 1, 0
    %v594 = vsel %vm497, 1, 0
    %v595 = vsel %vm498, 1, 0
    %v596 = vsel %vm499, 1, 0
    %v597 = vsel %vm500, 1, 0
    %v598 = vsel %vm501, 1, 0
    %vm599 = vcmp.eq.s32.totalorder %v567, 1
    %vm600 = vcmp.eq.s32.totalorder %v568, 1
    %vm601 = vcmp.eq.s32.totalorder %v569, 1
    %vm602 = vcmp.eq.s32.totalorder %v570, 1
    %vm603 = vcmp.eq.s32.totalorder %v571, 1
    %vm604 = vcmp.eq.s32.totalorder %v572, 1
    %vm605 = vcmp.eq.s32.totalorder %v573, 1
    %vm606 = vcmp.eq.s32.totalorder %v574, 1
    %vm607 = vcmp.eq.s32.totalorder %v575, 1
    %vm608 = vcmp.eq.s32.totalorder %v576, 1
    %vm609 = vcmp.eq.s32.totalorder %v577, 1
    %vm610 = vcmp.eq.s32.totalorder %v578, 1
    %vm611 = vcmp.eq.s32.totalorder %v579, 1
    %vm612 = vcmp.eq.s32.totalorder %v580, 1
    %vm613 = vcmp.eq.s32.totalorder %v581, 1
    %vm614 = vcmp.eq.s32.totalorder %v582, 1
    %vm615 = vcmp.eq.s32.totalorder %v583, 1
    %vm616 = vcmp.eq.s32.totalorder %v584, 1
    %vm617 = vcmp.eq.s32.totalorder %v585, 1
    %vm618 = vcmp.eq.s32.totalorder %v586, 1
    %vm619 = vcmp.eq.s32.totalorder %v587, 1
    %vm620 = vcmp.eq.s32.totalorder %v588, 1
    %vm621 = vcmp.eq.s32.totalorder %v589, 1
    %vm622 = vcmp.eq.s32.totalorder %v590, 1
    %vm623 = vcmp.eq.s32.totalorder %v591, 1
    %vm624 = vcmp.eq.s32.totalorder %v592, 1
    %vm625 = vcmp.eq.s32.totalorder %v593, 1
    %vm626 = vcmp.eq.s32.totalorder %v594, 1
    %vm627 = vcmp.eq.s32.totalorder %v595, 1
    %vm628 = vcmp.eq.s32.totalorder %v596, 1
    %vm629 = vcmp.eq.s32.totalorder %v597, 1
    %vm630 = vcmp.eq.s32.totalorder %v598, 1
    %v631 = vsel %vm599, %v566, 0.0
    %v632 = vsel %vm600, %v565, 0.0
    %v633 = vsel %vm601, %v564, 0.0
    %v634 = vsel %vm602, %v563, 0.0
    %v635 = vsel %vm603, %v562, 0.0
    %v636 = vsel %vm604, %v561, 0.0
    %v637 = vsel %vm605, %v560, 0.0
    %v638 = vsel %vm606, %v559, 0.0
    %v639 = vsel %vm607, %v558, 0.0
    %v640 = vsel %vm608, %v557, 0.0
    %v641 = vsel %vm609, %v556, 0.0
    %v642 = vsel %vm610, %v555, 0.0
    %v643 = vsel %vm611, %v554, 0.0
    %v644 = vsel %vm612, %v553, 0.0
    %v645 = vsel %vm613, %v552, 0.0
    %v646 = vsel %vm614, %v551, 0.0
    %v647 = vsel %vm615, %v550, 0.0
    %v648 = vsel %vm616, %v549, 0.0
    %v649 = vsel %vm617, %v548, 0.0
    %v650 = vsel %vm618, %v547, 0.0
    %v651 = vsel %vm619, %v546, 0.0
    %v652 = vsel %vm620, %v545, 0.0
    %v653 = vsel %vm621, %v544, 0.0
    %v654 = vsel %vm622, %v543, 0.0
    %v655 = vsel %vm623, %v542, 0.0
    %v656 = vsel %vm624, %v541, 0.0
    %v657 = vsel %vm625, %v540, 0.0
    %v658 = vsel %vm626, %v539, 0.0
    %v659 = vsel %vm627, %v538, 0.0
    %v660 = vsel %vm628, %v537, 0.0
    %v661 = vsel %vm629, %v536, 0.0
    %v662 = vsel %vm630, %v535, 0.0
    %vm663 = vcmp.ge.s32.totalorder %v406, 1
    %vm664 = vcmp.ge.s32.totalorder %v407, 1
    %vm665 = vcmp.ge.s32.totalorder %v408, 1
    %vm666 = vcmp.ge.s32.totalorder %v409, 1
    %vm667 = vcmp.ge.s32.totalorder %v410, 1
    %vm668 = vcmp.ge.s32.totalorder %v411, 1
    %vm669 = vcmp.ge.s32.totalorder %v412, 1
    %vm670 = vcmp.ge.s32.totalorder %v413, 1
    %vm671 = vcmp.ge.s32.totalorder %v414, 1
    %vm672 = vcmp.ge.s32.totalorder %v415, 1
    %vm673 = vcmp.ge.s32.totalorder %v416, 1
    %vm674 = vcmp.ge.s32.totalorder %v417, 1
    %vm675 = vcmp.ge.s32.totalorder %v418, 1
    %vm676 = vcmp.ge.s32.totalorder %v419, 1
    %vm677 = vcmp.ge.s32.totalorder %v420, 1
    %vm678 = vcmp.ge.s32.totalorder %v421, 1
    %vm679 = vcmp.ge.s32.totalorder %v422, 1
    %vm680 = vcmp.ge.s32.totalorder %v423, 1
    %vm681 = vcmp.ge.s32.totalorder %v424, 1
    %vm682 = vcmp.ge.s32.totalorder %v425, 1
    %vm683 = vcmp.ge.s32.totalorder %v426, 1
    %vm684 = vcmp.ge.s32.totalorder %v427, 1
    %vm685 = vcmp.ge.s32.totalorder %v428, 1
    %vm686 = vcmp.ge.s32.totalorder %v429, 1
    %vm687 = vcmp.ge.s32.totalorder %v430, 1
    %vm688 = vcmp.ge.s32.totalorder %v431, 1
    %vm689 = vcmp.ge.s32.totalorder %v432, 1
    %vm690 = vcmp.ge.s32.totalorder %v433, 1
    %vm691 = vcmp.ge.s32.totalorder %v434, 1
    %vm692 = vcmp.ge.s32.totalorder %v435, 1
    %vm693 = vcmp.ge.s32.totalorder %v436, 1
    %vm694 = vcmp.ge.s32.totalorder %v437, 1
    %v695 = vrot.slane %v438, 7
    %v696 = vrot.slane %v439, 7
    %v697 = vrot.slane %v440, 7
    %v698 = vrot.slane %v441, 7
    %v699 = vrot.slane %v442, 7
    %v700 = vrot.slane %v443, 7
    %v701 = vrot.slane %v444, 7
    %v702 = vrot.slane %v445, 7
    %v703 = vrot.slane %v446, 7
    %v704 = vrot.slane %v447, 7
    %v705 = vrot.slane %v448, 7
    %v706 = vrot.slane %v449, 7
    %v707 = vrot.slane %v450, 7
    %v708 = vrot.slane %v451, 7
    %v709 = vrot.slane %v452, 7
    %v710 = vrot.slane %v453, 7
    %v711 = vrot.slane %v454, 7
    %v712 = vrot.slane %v455, 7
    %v713 = vrot.slane %v456, 7
    %v714 = vrot.slane %v457, 7
    %v715 = vrot.slane %v458, 7
    %v716 = vrot.slane %v459, 7
    %v717 = vrot.slane %v460, 7
    %v718 = vrot.slane %v461, 7
    %v719 = vrot.slane %v462, 7
    %v720 = vrot.slane %v463, 7
    %v721 = vrot.slane %v464, 7
    %v722 = vrot.slane %v465, 7
    %v723 = vrot.slane %v466, 7
    %v724 = vrot.slane %v467, 7
    %v725 = vrot.slane %v468, 7
    %v726 = vrot.slane %v469, 7
    %vm727 = vcmp.lt.s32.totalorder %v22, 1
    %v728 = vsel %vm727, %v725, %v726
    %v729 = vsel %vm727, %v724, %v725
    %v730 = vsel %vm727, %v723, %v724
    %v731 = vsel %vm727, %v722, %v723
    %v732 = vsel %vm727, %v721, %v722
    %v733 = vsel %vm727, %v720, %v721
    %v734 = vsel %vm727, %v719, %v720
    %v735 = vsel %vm727, %v718, %v719
    %v736 = vsel %vm727, %v717, %v718
    %v737 = vsel %vm727, %v716, %v717
    %v738 = vsel %vm727, %v715, %v716
    %v739 = vsel %vm727, %v714, %v715
    %v740 = vsel %vm727, %v713, %v714
    %v741 = vsel %vm727, %v712, %v713
    %v742 = vsel %vm727, %v711, %v712
    %v743 = vsel %vm727, %v710, %v711
    %v744 = vsel %vm727, %v709, %v710
    %v745 = vsel %vm727, %v708, %v709
    %v746 = vsel %vm727, %v707, %v708
    %v747 = vsel %vm727, %v706, %v707
    %v748 = vsel %vm727, %v705, %v706
    %v749 = vsel %vm727, %v704, %v705
    %v750 = vsel %vm727, %v703, %v704
    %v751 = vsel %vm727, %v702, %v703
    %v752 = vsel %vm727, %v701, %v702
    %v753 = vsel %vm727, %v700, %v701
    %v754 = vsel %vm727, %v699, %v700
    %v755 = vsel %vm727, %v698, %v699
    %v756 = vsel %vm727, %v697, %v698
    %v757 = vsel %vm727, %v696, %v697
    %v758 = vsel %vm727, %v695, %v696
    %v759 = vsel %vm727, %v726, %v695
    %v760 = vsel %vm663, 1, 0
    %v761 = vsel %vm664, 1, 0
    %v762 = vsel %vm665, 1, 0
    %v763 = vsel %vm666, 1, 0
    %v764 = vsel %vm667, 1, 0
    %v765 = vsel %vm668, 1, 0
    %v766 = vsel %vm669, 1, 0
    %v767 = vsel %vm670, 1, 0
    %v768 = vsel %vm671, 1, 0
    %v769 = vsel %vm672, 1, 0
    %v770 = vsel %vm673, 1, 0
    %v771 = vsel %vm674, 1, 0
    %v772 = vsel %vm675, 1, 0
    %v773 = vsel %vm676, 1, 0
    %v774 = vsel %vm677, 1, 0
    %v775 = vsel %vm678, 1, 0
    %v776 = vsel %vm679, 1, 0
    %v777 = vsel %vm680, 1, 0
    %v778 = vsel %vm681, 1, 0
    %v779 = vsel %vm682, 1, 0
    %v780 = vsel %vm683, 1, 0
    %v781 = vsel %vm684, 1, 0
    %v782 = vsel %vm685, 1, 0
    %v783 = vsel %vm686, 1, 0
    %v784 = vsel %vm687, 1, 0
    %v785 = vsel %vm688, 1, 0
    %v786 = vsel %vm689, 1, 0
    %v787 = vsel %vm690, 1, 0
    %v788 = vsel %vm691, 1, 0
    %v789 = vsel %vm692, 1, 0
    %v790 = vsel %vm693, 1, 0
    %v791 = vsel %vm694, 1, 0
    %vm792 = vcmp.eq.s32.totalorder %v760, 1
    %vm793 = vcmp.eq.s32.totalorder %v761, 1
    %vm794 = vcmp.eq.s32.totalorder %v762, 1
    %vm795 = vcmp.eq.s32.totalorder %v763, 1
    %vm796 = vcmp.eq.s32.totalorder %v764, 1
    %vm797 = vcmp.eq.s32.totalorder %v765, 1
    %vm798 = vcmp.eq.s32.totalorder %v766, 1
    %vm799 = vcmp.eq.s32.totalorder %v767, 1
    %vm800 = vcmp.eq.s32.totalorder %v768, 1
    %vm801 = vcmp.eq.s32.totalorder %v769, 1
    %vm802 = vcmp.eq.s32.totalorder %v770, 1
    %vm803 = vcmp.eq.s32.totalorder %v771, 1
    %vm804 = vcmp.eq.s32.totalorder %v772, 1
    %vm805 = vcmp.eq.s32.totalorder %v773, 1
    %vm806 = vcmp.eq.s32.totalorder %v774, 1
    %vm807 = vcmp.eq.s32.totalorder %v775, 1
    %vm808 = vcmp.eq.s32.totalorder %v776, 1
    %vm809 = vcmp.eq.s32.totalorder %v777, 1
    %vm810 = vcmp.eq.s32.totalorder %v778, 1
    %vm811 = vcmp.eq.s32.totalorder %v779, 1
    %vm812 = vcmp.eq.s32.totalorder %v780, 1
    %vm813 = vcmp.eq.s32.totalorder %v781, 1
    %vm814 = vcmp.eq.s32.totalorder %v782, 1
    %vm815 = vcmp.eq.s32.totalorder %v783, 1
    %vm816 = vcmp.eq.s32.totalorder %v784, 1
    %vm817 = vcmp.eq.s32.totalorder %v785, 1
    %vm818 = vcmp.eq.s32.totalorder %v786, 1
    %vm819 = vcmp.eq.s32.totalorder %v787, 1
    %vm820 = vcmp.eq.s32.totalorder %v788, 1
    %vm821 = vcmp.eq.s32.totalorder %v789, 1
    %vm822 = vcmp.eq.s32.totalorder %v790, 1
    %vm823 = vcmp.eq.s32.totalorder %v791, 1
    %v824 = vsel %vm792, %v759, 0.0
    %v825 = vsel %vm793, %v758, 0.0
    %v826 = vsel %vm794, %v757, 0.0
    %v827 = vsel %vm795, %v756, 0.0
    %v828 = vsel %vm796, %v755, 0.0
    %v829 = vsel %vm797, %v754, 0.0
    %v830 = vsel %vm798, %v753, 0.0
    %v831 = vsel %vm799, %v752, 0.0
    %v832 = vsel %vm800, %v751, 0.0
    %v833 = vsel %vm801, %v750, 0.0
    %v834 = vsel %vm802, %v749, 0.0
    %v835 = vsel %vm803, %v748, 0.0
    %v836 = vsel %vm804, %v747, 0.0
    %v837 = vsel %vm805, %v746, 0.0
    %v838 = vsel %vm806, %v745, 0.0
    %v839 = vsel %vm807, %v744, 0.0
    %v840 = vsel %vm808, %v743, 0.0
    %v841 = vsel %vm809, %v742, 0.0
    %v842 = vsel %vm810, %v741, 0.0
    %v843 = vsel %vm811, %v740, 0.0
    %v844 = vsel %vm812, %v739, 0.0
    %v845 = vsel %vm813, %v738, 0.0
    %v846 = vsel %vm814, %v737, 0.0
    %v847 = vsel %vm815, %v736, 0.0
    %v848 = vsel %vm816, %v735, 0.0
    %v849 = vsel %vm817, %v734, 0.0
    %v850 = vsel %vm818, %v733, 0.0
    %v851 = vsel %vm819, %v732, 0.0
    %v852 = vsel %vm820, %v731, 0.0
    %v853 = vsel %vm821, %v730, 0.0
    %v854 = vsel %vm822, %v729, 0.0
    %v855 = vsel %vm823, %v728, 0.0
    %vm856 = vcmp.lt.s32.totalorder %v406, 31
    %vm857 = vcmp.lt.s32.totalorder %v407, 31
    %vm858 = vcmp.lt.s32.totalorder %v408, 31
    %vm859 = vcmp.lt.s32.totalorder %v409, 31
    %vm860 = vcmp.lt.s32.totalorder %v410, 31
    %vm861 = vcmp.lt.s32.totalorder %v411, 31
    %vm862 = vcmp.lt.s32.totalorder %v412, 31
    %vm863 = vcmp.lt.s32.totalorder %v413, 31
    %vm864 = vcmp.lt.s32.totalorder %v414, 31
    %vm865 = vcmp.lt.s32.totalorder %v415, 31
    %vm866 = vcmp.lt.s32.totalorder %v416, 31
    %vm867 = vcmp.lt.s32.totalorder %v417, 31
    %vm868 = vcmp.lt.s32.totalorder %v418, 31
    %vm869 = vcmp.lt.s32.totalorder %v419, 31
    %vm870 = vcmp.lt.s32.totalorder %v420, 31
    %vm871 = vcmp.lt.s32.totalorder %v421, 31
    %vm872 = vcmp.lt.s32.totalorder %v422, 31
    %vm873 = vcmp.lt.s32.totalorder %v423, 31
    %vm874 = vcmp.lt.s32.totalorder %v424, 31
    %vm875 = vcmp.lt.s32.totalorder %v425, 31
    %vm876 = vcmp.lt.s32.totalorder %v426, 31
    %vm877 = vcmp.lt.s32.totalorder %v427, 31
    %vm878 = vcmp.lt.s32.totalorder %v428, 31
    %vm879 = vcmp.lt.s32.totalorder %v429, 31
    %vm880 = vcmp.lt.s32.totalorder %v430, 31
    %vm881 = vcmp.lt.s32.totalorder %v431, 31
    %vm882 = vcmp.lt.s32.totalorder %v432, 31
    %vm883 = vcmp.lt.s32.totalorder %v433, 31
    %vm884 = vcmp.lt.s32.totalorder %v434, 31
    %vm885 = vcmp.lt.s32.totalorder %v435, 31
    %vm886 = vcmp.lt.s32.totalorder %v436, 31
    %vm887 = vcmp.lt.s32.totalorder %v437, 31
    %v888 = vrot.slane %v438, 1
    %v889 = vrot.slane %v439, 1
    %v890 = vrot.slane %v440, 1
    %v891 = vrot.slane %v441, 1
    %v892 = vrot.slane %v442, 1
    %v893 = vrot.slane %v443, 1
    %v894 = vrot.slane %v444, 1
    %v895 = vrot.slane %v445, 1
    %v896 = vrot.slane %v446, 1
    %v897 = vrot.slane %v447, 1
    %v898 = vrot.slane %v448, 1
    %v899 = vrot.slane %v449, 1
    %v900 = vrot.slane %v450, 1
    %v901 = vrot.slane %v451, 1
    %v902 = vrot.slane %v452, 1
    %v903 = vrot.slane %v453, 1
    %v904 = vrot.slane %v454, 1
    %v905 = vrot.slane %v455, 1
    %v906 = vrot.slane %v456, 1
    %v907 = vrot.slane %v457, 1
    %v908 = vrot.slane %v458, 1
    %v909 = vrot.slane %v459, 1
    %v910 = vrot.slane %v460, 1
    %v911 = vrot.slane %v461, 1
    %v912 = vrot.slane %v462, 1
    %v913 = vrot.slane %v463, 1
    %v914 = vrot.slane %v464, 1
    %v915 = vrot.slane %v465, 1
    %v916 = vrot.slane %v466, 1
    %v917 = vrot.slane %v467, 1
    %v918 = vrot.slane %v468, 1
    %v919 = vrot.slane %v469, 1
    %vm920 = vcmp.lt.s32.totalorder %v22, 7
    %v921 = vsel %vm920, %v918, %v919
    %v922 = vsel %vm920, %v917, %v918
    %v923 = vsel %vm920, %v916, %v917
    %v924 = vsel %vm920, %v915, %v916
    %v925 = vsel %vm920, %v914, %v915
    %v926 = vsel %vm920, %v913, %v914
    %v927 = vsel %vm920, %v912, %v913
    %v928 = vsel %vm920, %v911, %v912
    %v929 = vsel %vm920, %v910, %v911
    %v930 = vsel %vm920, %v909, %v910
    %v931 = vsel %vm920, %v908, %v909
    %v932 = vsel %vm920, %v907, %v908
    %v933 = vsel %vm920, %v906, %v907
    %v934 = vsel %vm920, %v905, %v906
    %v935 = vsel %vm920, %v904, %v905
    %v936 = vsel %vm920, %v903, %v904
    %v937 = vsel %vm920, %v902, %v903
    %v938 = vsel %vm920, %v901, %v902
    %v939 = vsel %vm920, %v900, %v901
    %v940 = vsel %vm920, %v899, %v900
    %v941 = vsel %vm920, %v898, %v899
    %v942 = vsel %vm920, %v897, %v898
    %v943 = vsel %vm920, %v896, %v897
    %v944 = vsel %vm920, %v895, %v896
    %v945 = vsel %vm920, %v894, %v895
    %v946 = vsel %vm920, %v893, %v894
    %v947 = vsel %vm920, %v892, %v893
    %v948 = vsel %vm920, %v891, %v892
    %v949 = vsel %vm920, %v890, %v891
    %v950 = vsel %vm920, %v889, %v890
    %v951 = vsel %vm920, %v888, %v889
    %v952 = vsel %vm920, %v919, %v888
    %v953 = vsel %vm856, 1, 0
    %v954 = vsel %vm857, 1, 0
    %v955 = vsel %vm858, 1, 0
    %v956 = vsel %vm859, 1, 0
    %v957 = vsel %vm860, 1, 0
    %v958 = vsel %vm861, 1, 0
    %v959 = vsel %vm862, 1, 0
    %v960 = vsel %vm863, 1, 0
    %v961 = vsel %vm864, 1, 0
    %v962 = vsel %vm865, 1, 0
    %v963 = vsel %vm866, 1, 0
    %v964 = vsel %vm867, 1, 0
    %v965 = vsel %vm868, 1, 0
    %v966 = vsel %vm869, 1, 0
    %v967 = vsel %vm870, 1, 0
    %v968 = vsel %vm871, 1, 0
    %v969 = vsel %vm872, 1, 0
    %v970 = vsel %vm873, 1, 0
    %v971 = vsel %vm874, 1, 0
    %v972 = vsel %vm875, 1, 0
    %v973 = vsel %vm876, 1, 0
    %v974 = vsel %vm877, 1, 0
    %v975 = vsel %vm878, 1, 0
    %v976 = vsel %vm879, 1, 0
    %v977 = vsel %vm880, 1, 0
    %v978 = vsel %vm881, 1, 0
    %v979 = vsel %vm882, 1, 0
    %v980 = vsel %vm883, 1, 0
    %v981 = vsel %vm884, 1, 0
    %v982 = vsel %vm885, 1, 0
    %v983 = vsel %vm886, 1, 0
    %v984 = vsel %vm887, 1, 0
    %vm985 = vcmp.eq.s32.totalorder %v953, 1
    %vm986 = vcmp.eq.s32.totalorder %v954, 1
    %vm987 = vcmp.eq.s32.totalorder %v955, 1
    %vm988 = vcmp.eq.s32.totalorder %v956, 1
    %vm989 = vcmp.eq.s32.totalorder %v957, 1
    %vm990 = vcmp.eq.s32.totalorder %v958, 1
    %vm991 = vcmp.eq.s32.totalorder %v959, 1
    %vm992 = vcmp.eq.s32.totalorder %v960, 1
    %vm993 = vcmp.eq.s32.totalorder %v961, 1
    %vm994 = vcmp.eq.s32.totalorder %v962, 1
    %vm995 = vcmp.eq.s32.totalorder %v963, 1
    %vm996 = vcmp.eq.s32.totalorder %v964, 1
    %vm997 = vcmp.eq.s32.totalorder %v965, 1
    %vm998 = vcmp.eq.s32.totalorder %v966, 1
    %vm999 = vcmp.eq.s32.totalorder %v967, 1
    %vm1000 = vcmp.eq.s32.totalorder %v968, 1
    %vm1001 = vcmp.eq.s32.totalorder %v969, 1
    %vm1002 = vcmp.eq.s32.totalorder %v970, 1
    %vm1003 = vcmp.eq.s32.totalorder %v971, 1
    %vm1004 = vcmp.eq.s32.totalorder %v972, 1
    %vm1005 = vcmp.eq.s32.totalorder %v973, 1
    %vm1006 = vcmp.eq.s32.totalorder %v974, 1
    %vm1007 = vcmp.eq.s32.totalorder %v975, 1
    %vm1008 = vcmp.eq.s32.totalorder %v976, 1
    %vm1009 = vcmp.eq.s32.totalorder %v977, 1
    %vm1010 = vcmp.eq.s32.totalorder %v978, 1
    %vm1011 = vcmp.eq.s32.totalorder %v979, 1
    %vm1012 = vcmp.eq.s32.totalorder %v980, 1
    %vm1013 = vcmp.eq.s32.totalorder %v981, 1
    %vm1014 = vcmp.eq.s32.totalorder %v982, 1
    %vm1015 = vcmp.eq.s32.totalorder %v983, 1
    %vm1016 = vcmp.eq.s32.totalorder %v984, 1
    %v1017 = vsel %vm985, %v951, 0.0
    %v1018 = vsel %vm986, %v950, 0.0
    %v1019 = vsel %vm987, %v949, 0.0
    %v1020 = vsel %vm988, %v948, 0.0
    %v1021 = vsel %vm989, %v947, 0.0
    %v1022 = vsel %vm990, %v946, 0.0
    %v1023 = vsel %vm991, %v945, 0.0
    %v1024 = vsel %vm992, %v944, 0.0
    %v1025 = vsel %vm993, %v943, 0.0
    %v1026 = vsel %vm994, %v942, 0.0
    %v1027 = vsel %vm995, %v941, 0.0
    %v1028 = vsel %vm996, %v940, 0.0
    %v1029 = vsel %vm997, %v939, 0.0
    %v1030 = vsel %vm998, %v938, 0.0
    %v1031 = vsel %vm999, %v937, 0.0
    %v1032 = vsel %vm1000, %v936, 0.0
    %v1033 = vsel %vm1001, %v935, 0.0
    %v1034 = vsel %vm1002, %v934, 0.0
    %v1035 = vsel %vm1003, %v933, 0.0
    %v1036 = vsel %vm1004, %v932, 0.0
    %v1037 = vsel %vm1005, %v931, 0.0
    %v1038 = vsel %vm1006, %v930, 0.0
    %v1039 = vsel %vm1007, %v929, 0.0
    %v1040 = vsel %vm1008, %v928, 0.0
    %v1041 = vsel %vm1009, %v927, 0.0
    %v1042 = vsel %vm1010, %v926, 0.0
    %v1043 = vsel %vm1011, %v925, 0.0
    %v1044 = vsel %vm1012, %v924, 0.0
    %v1045 = vsel %vm1013, %v923, 0.0
    %v1046 = vsel %vm1014, %v922, 0.0
    %v1047 = vsel %vm1015, %v921, 0.0
    %v1048 = vsel %vm1016, %v952, 0.0
    %vm1049 = vcmp.lt.s32.totalorder %v406, 30
    %vm1050 = vcmp.lt.s32.totalorder %v407, 30
    %vm1051 = vcmp.lt.s32.totalorder %v408, 30
    %vm1052 = vcmp.lt.s32.totalorder %v409, 30
    %vm1053 = vcmp.lt.s32.totalorder %v410, 30
    %vm1054 = vcmp.lt.s32.totalorder %v411, 30
    %vm1055 = vcmp.lt.s32.totalorder %v412, 30
    %vm1056 = vcmp.lt.s32.totalorder %v413, 30
    %vm1057 = vcmp.lt.s32.totalorder %v414, 30
    %vm1058 = vcmp.lt.s32.totalorder %v415, 30
    %vm1059 = vcmp.lt.s32.totalorder %v416, 30
    %vm1060 = vcmp.lt.s32.totalorder %v417, 30
    %vm1061 = vcmp.lt.s32.totalorder %v418, 30
    %vm1062 = vcmp.lt.s32.totalorder %v419, 30
    %vm1063 = vcmp.lt.s32.totalorder %v420, 30
    %vm1064 = vcmp.lt.s32.totalorder %v421, 30
    %vm1065 = vcmp.lt.s32.totalorder %v422, 30
    %vm1066 = vcmp.lt.s32.totalorder %v423, 30
    %vm1067 = vcmp.lt.s32.totalorder %v424, 30
    %vm1068 = vcmp.lt.s32.totalorder %v425, 30
    %vm1069 = vcmp.lt.s32.totalorder %v426, 30
    %vm1070 = vcmp.lt.s32.totalorder %v427, 30
    %vm1071 = vcmp.lt.s32.totalorder %v428, 30
    %vm1072 = vcmp.lt.s32.totalorder %v429, 30
    %vm1073 = vcmp.lt.s32.totalorder %v430, 30
    %vm1074 = vcmp.lt.s32.totalorder %v431, 30
    %vm1075 = vcmp.lt.s32.totalorder %v432, 30
    %vm1076 = vcmp.lt.s32.totalorder %v433, 30
    %vm1077 = vcmp.lt.s32.totalorder %v434, 30
    %vm1078 = vcmp.lt.s32.totalorder %v435, 30
    %vm1079 = vcmp.lt.s32.totalorder %v436, 30
    %vm1080 = vcmp.lt.s32.totalorder %v437, 30
    %v1081 = vrot.slane %v438, 2
    %v1082 = vrot.slane %v439, 2
    %v1083 = vrot.slane %v440, 2
    %v1084 = vrot.slane %v441, 2
    %v1085 = vrot.slane %v442, 2
    %v1086 = vrot.slane %v443, 2
    %v1087 = vrot.slane %v444, 2
    %v1088 = vrot.slane %v445, 2
    %v1089 = vrot.slane %v446, 2
    %v1090 = vrot.slane %v447, 2
    %v1091 = vrot.slane %v448, 2
    %v1092 = vrot.slane %v449, 2
    %v1093 = vrot.slane %v450, 2
    %v1094 = vrot.slane %v451, 2
    %v1095 = vrot.slane %v452, 2
    %v1096 = vrot.slane %v453, 2
    %v1097 = vrot.slane %v454, 2
    %v1098 = vrot.slane %v455, 2
    %v1099 = vrot.slane %v456, 2
    %v1100 = vrot.slane %v457, 2
    %v1101 = vrot.slane %v458, 2
    %v1102 = vrot.slane %v459, 2
    %v1103 = vrot.slane %v460, 2
    %v1104 = vrot.slane %v461, 2
    %v1105 = vrot.slane %v462, 2
    %v1106 = vrot.slane %v463, 2
    %v1107 = vrot.slane %v464, 2
    %v1108 = vrot.slane %v465, 2
    %v1109 = vrot.slane %v466, 2
    %v1110 = vrot.slane %v467, 2
    %v1111 = vrot.slane %v468, 2
    %v1112 = vrot.slane %v469, 2
    %vm1113 = vcmp.lt.s32.totalorder %v22, 6
    %v1114 = vsel %vm1113, %v1111, %v1112
    %v1115 = vsel %vm1113, %v1110, %v1111
    %v1116 = vsel %vm1113, %v1109, %v1110
    %v1117 = vsel %vm1113, %v1108, %v1109
    %v1118 = vsel %vm1113, %v1107, %v1108
    %v1119 = vsel %vm1113, %v1106, %v1107
    %v1120 = vsel %vm1113, %v1105, %v1106
    %v1121 = vsel %vm1113, %v1104, %v1105
    %v1122 = vsel %vm1113, %v1103, %v1104
    %v1123 = vsel %vm1113, %v1102, %v1103
    %v1124 = vsel %vm1113, %v1101, %v1102
    %v1125 = vsel %vm1113, %v1100, %v1101
    %v1126 = vsel %vm1113, %v1099, %v1100
    %v1127 = vsel %vm1113, %v1098, %v1099
    %v1128 = vsel %vm1113, %v1097, %v1098
    %v1129 = vsel %vm1113, %v1096, %v1097
    %v1130 = vsel %vm1113, %v1095, %v1096
    %v1131 = vsel %vm1113, %v1094, %v1095
    %v1132 = vsel %vm1113, %v1093, %v1094
    %v1133 = vsel %vm1113, %v1092, %v1093
    %v1134 = vsel %vm1113, %v1091, %v1092
    %v1135 = vsel %vm1113, %v1090, %v1091
    %v1136 = vsel %vm1113, %v1089, %v1090
    %v1137 = vsel %vm1113, %v1088, %v1089
    %v1138 = vsel %vm1113, %v1087, %v1088
    %v1139 = vsel %vm1113, %v1086, %v1087
    %v1140 = vsel %vm1113, %v1085, %v1086
    %v1141 = vsel %vm1113, %v1084, %v1085
    %v1142 = vsel %vm1113, %v1083, %v1084
    %v1143 = vsel %vm1113, %v1082, %v1083
    %v1144 = vsel %vm1113, %v1081, %v1082
    %v1145 = vsel %vm1113, %v1112, %v1081
    %v1146 = vsel %vm1049, 1, 0
    %v1147 = vsel %vm1050, 1, 0
    %v1148 = vsel %vm1051, 1, 0
    %v1149 = vsel %vm1052, 1, 0
    %v1150 = vsel %vm1053, 1, 0
    %v1151 = vsel %vm1054, 1, 0
    %v1152 = vsel %vm1055, 1, 0
    %v1153 = vsel %vm1056, 1, 0
    %v1154 = vsel %vm1057, 1, 0
    %v1155 = vsel %vm1058, 1, 0
    %v1156 = vsel %vm1059, 1, 0
    %v1157 = vsel %vm1060, 1, 0
    %v1158 = vsel %vm1061, 1, 0
    %v1159 = vsel %vm1062, 1, 0
    %v1160 = vsel %vm1063, 1, 0
    %v1161 = vsel %vm1064, 1, 0
    %v1162 = vsel %vm1065, 1, 0
    %v1163 = vsel %vm1066, 1, 0
    %v1164 = vsel %vm1067, 1, 0
    %v1165 = vsel %vm1068, 1, 0
    %v1166 = vsel %vm1069, 1, 0
    %v1167 = vsel %vm1070, 1, 0
    %v1168 = vsel %vm1071, 1, 0
    %v1169 = vsel %vm1072, 1, 0
    %v1170 = vsel %vm1073, 1, 0
    %v1171 = vsel %vm1074, 1, 0
    %v1172 = vsel %vm1075, 1, 0
    %v1173 = vsel %vm1076, 1, 0
    %v1174 = vsel %vm1077, 1, 0
    %v1175 = vsel %vm1078, 1, 0
    %v1176 = vsel %vm1079, 1, 0
    %v1177 = vsel %vm1080, 1, 0
    %vm1178 = vcmp.eq.s32.totalorder %v1146, 1
    %vm1179 = vcmp.eq.s32.totalorder %v1147, 1
    %vm1180 = vcmp.eq.s32.totalorder %v1148, 1
    %vm1181 = vcmp.eq.s32.totalorder %v1149, 1
    %vm1182 = vcmp.eq.s32.totalorder %v1150, 1
    %vm1183 = vcmp.eq.s32.totalorder %v1151, 1
    %vm1184 = vcmp.eq.s32.totalorder %v1152, 1
    %vm1185 = vcmp.eq.s32.totalorder %v1153, 1
    %vm1186 = vcmp.eq.s32.totalorder %v1154, 1
    %vm1187 = vcmp.eq.s32.totalorder %v1155, 1
    %vm1188 = vcmp.eq.s32.totalorder %v1156, 1
    %vm1189 = vcmp.eq.s32.totalorder %v1157, 1
    %vm1190 = vcmp.eq.s32.totalorder %v1158, 1
    %vm1191 = vcmp.eq.s32.totalorder %v1159, 1
    %vm1192 = vcmp.eq.s32.totalorder %v1160, 1
    %vm1193 = vcmp.eq.s32.totalorder %v1161, 1
    %vm1194 = vcmp.eq.s32.totalorder %v1162, 1
    %vm1195 = vcmp.eq.s32.totalorder %v1163, 1
    %vm1196 = vcmp.eq.s32.totalorder %v1164, 1
    %vm1197 = vcmp.eq.s32.totalorder %v1165, 1
    %vm1198 = vcmp.eq.s32.totalorder %v1166, 1
    %vm1199 = vcmp.eq.s32.totalorder %v1167, 1
    %vm1200 = vcmp.eq.s32.totalorder %v1168, 1
    %vm1201 = vcmp.eq.s32.totalorder %v1169, 1
    %vm1202 = vcmp.eq.s32.totalorder %v1170, 1
    %vm1203 = vcmp.eq.s32.totalorder %v1171, 1
    %vm1204 = vcmp.eq.s32.totalorder %v1172, 1
    %vm1205 = vcmp.eq.s32.totalorder %v1173, 1
    %vm1206 = vcmp.eq.s32.totalorder %v1174, 1
    %vm1207 = vcmp.eq.s32.totalorder %v1175, 1
    %vm1208 = vcmp.eq.s32.totalorder %v1176, 1
    %vm1209 = vcmp.eq.s32.totalorder %v1177, 1
    %v1210 = vsel %vm1178, %v1144, 0.0
    %v1211 = vsel %vm1179, %v1143, 0.0
    %v1212 = vsel %vm1180, %v1142, 0.0
    %v1213 = vsel %vm1181, %v1141, 0.0
    %v1214 = vsel %vm1182, %v1140, 0.0
    %v1215 = vsel %vm1183, %v1139, 0.0
    %v1216 = vsel %vm1184, %v1138, 0.0
    %v1217 = vsel %vm1185, %v1137, 0.0
    %v1218 = vsel %vm1186, %v1136, 0.0
    %v1219 = vsel %vm1187, %v1135, 0.0
    %v1220 = vsel %vm1188, %v1134, 0.0
    %v1221 = vsel %vm1189, %v1133, 0.0
    %v1222 = vsel %vm1190, %v1132, 0.0
    %v1223 = vsel %vm1191, %v1131, 0.0
    %v1224 = vsel %vm1192, %v1130, 0.0
    %v1225 = vsel %vm1193, %v1129, 0.0
    %v1226 = vsel %vm1194, %v1128, 0.0
    %v1227 = vsel %vm1195, %v1127, 0.0
    %v1228 = vsel %vm1196, %v1126, 0.0
    %v1229 = vsel %vm1197, %v1125, 0.0
    %v1230 = vsel %vm1198, %v1124, 0.0
    %v1231 = vsel %vm1199, %v1123, 0.0
    %v1232 = vsel %vm1200, %v1122, 0.0
    %v1233 = vsel %vm1201, %v1121, 0.0
    %v1234 = vsel %vm1202, %v1120, 0.0
    %v1235 = vsel %vm1203, %v1119, 0.0
    %v1236 = vsel %vm1204, %v1118, 0.0
    %v1237 = vsel %vm1205, %v1117, 0.0
    %v1238 = vsel %vm1206, %v1116, 0.0
    %v1239 = vsel %vm1207, %v1115, 0.0
    %v1240 = vsel %vm1208, %v1114, 0.0
    %v1241 = vsel %vm1209, %v1145, 0.0
    %v1242 = vld [vmem:[%s4] ss:$0 sm:$0xff]
    %v1243 = vld [vmem:[%s2] sm:$0x1]
    %1245 = vset.pattern.permute.xlu0 1
    %1246 = vperm.xlu0 %1245, %v631
    %v1247 = vpop.permute.xlu0 %1246
    %1250 = vset.pattern.permute.xlu0 1
    %1251 = vperm.xlu0 %1250, %v632
    %v1252 = vpop.permute.xlu0 %1251
    %1255 = vset.pattern.permute.xlu0 1
    %1256 = vperm.xlu0 %1255, %v633
    %v1257 = vpop.permute.xlu0 %1256
    %1260 = vset.pattern.permute.xlu0 1
    %1261 = vperm.xlu0 %1260, %v634
    %v1262 = vpop.permute.xlu0 %1261
    %1265 = vset.pattern.permute.xlu0 1
    %1266 = vperm.xlu0 %1265, %v635
    %v1267 = vpop.permute.xlu0 %1266
    %1270 = vset.pattern.permute.xlu0 1
    %1271 = vperm.xlu0 %1270, %v636
    %v1272 = vpop.permute.xlu0 %1271
    %1275 = vset.pattern.permute.xlu0 1
    %1276 = vperm.xlu0 %1275, %v637
    %v1277 = vpop.permute.xlu0 %1276
    %1280 = vset.pattern.permute.xlu0 1
    %1281 = vperm.xlu0 %1280, %v638
    %v1282 = vpop.permute.xlu0 %1281
    %1285 = vset.pattern.permute.xlu0 1
    %1286 = vperm.xlu0 %1285, %v639
    %v1287 = vpop.permute.xlu0 %1286
    %1290 = vset.pattern.permute.xlu0 1
    %1291 = vperm.xlu0 %1290, %v640
    %v1292 = vpop.permute.xlu0 %1291
    %1295 = vset.pattern.permute.xlu0 1
    %1296 = vperm.xlu0 %1295, %v641
    %v1297 = vpop.permute.xlu0 %1296
    %1300 = vset.pattern.permute.xlu0 1
    %1301 = vperm.xlu0 %1300, %v642
    %v1302 = vpop.permute.xlu0 %1301
    %1305 = vset.pattern.permute.xlu0 1
    %1306 = vperm.xlu0 %1305, %v643
    %v1307 = vpop.permute.xlu0 %1306
    %1310 = vset.pattern.permute.xlu0 1
    %1311 = vperm.xlu0 %1310, %v644
    %v1312 = vpop.permute.xlu0 %1311
    %1315 = vset.pattern.permute.xlu0 1
    %1316 = vperm.xlu0 %1315, %v645
    %v1317 = vpop.permute.xlu0 %1316
    %1320 = vset.pattern.permute.xlu0 1
    %1321 = vperm.xlu0 %1320, %v646
    %v1322 = vpop.permute.xlu0 %1321
    %1325 = vset.pattern.permute.xlu0 1
    %1326 = vperm.xlu0 %1325, %v647
    %v1327 = vpop.permute.xlu0 %1326
    %1330 = vset.pattern.permute.xlu0 1
    %1331 = vperm.xlu0 %1330, %v648
    %v1332 = vpop.permute.xlu0 %1331
    %1335 = vset.pattern.permute.xlu0 1
    %1336 = vperm.xlu0 %1335, %v649
    %v1337 = vpop.permute.xlu0 %1336
    %1340 = vset.pattern.permute.xlu0 1
    %1341 = vperm.xlu0 %1340, %v650
    %v1342 = vpop.permute.xlu0 %1341
    %1345 = vset.pattern.permute.xlu0 1
    %1346 = vperm.xlu0 %1345, %v651
    %v1347 = vpop.permute.xlu0 %1346
    %1350 = vset.pattern.permute.xlu0 1
    %1351 = vperm.xlu0 %1350, %v652
    %v1352 = vpop.permute.xlu0 %1351
    %1355 = vset.pattern.permute.xlu0 1
    %1356 = vperm.xlu0 %1355, %v653
    %v1357 = vpop.permute.xlu0 %1356
    %1360 = vset.pattern.permute.xlu0 1
    %1361 = vperm.xlu0 %1360, %v654
    %v1362 = vpop.permute.xlu0 %1361
    %1365 = vset.pattern.permute.xlu0 1
    %1366 = vperm.xlu0 %1365, %v655
    %v1367 = vpop.permute.xlu0 %1366
    %1370 = vset.pattern.permute.xlu0 1
    %1371 = vperm.xlu0 %1370, %v656
    %v1372 = vpop.permute.xlu0 %1371
    %1375 = vset.pattern.permute.xlu0 1
    %1376 = vperm.xlu0 %1375, %v657
    %v1377 = vpop.permute.xlu0 %1376
    %1380 = vset.pattern.permute.xlu0 1
    %1381 = vperm.xlu0 %1380, %v658
    %v1382 = vpop.permute.xlu0 %1381
    %1385 = vset.pattern.permute.xlu0 1
    %1386 = vperm.xlu0 %1385, %v659
    %v1387 = vpop.permute.xlu0 %1386
    %1390 = vset.pattern.permute.xlu0 1
    %1391 = vperm.xlu0 %1390, %v660
    %v1392 = vpop.permute.xlu0 %1391
    %1395 = vset.pattern.permute.xlu0 1
    %1396 = vperm.xlu0 %1395, %v661
    %v1397 = vpop.permute.xlu0 %1396
    %1400 = vset.pattern.permute.xlu0 1
    %1401 = vperm.xlu0 %1400, %v662
    %v1402 = vpop.permute.xlu0 %1401
    %v1404 = vlaneseq
    %v1405 = vshrl.u32 %v1404, 7
    %v1406 = vsub.s32 0, %v1405
    %v1407 = vrot.slane %v1243, %v1406
    %v1408 = vmul.f32 %v1247, %v1407
    %v1409 = vmul.f32 %v1252, %v1407
    %v1410 = vmul.f32 %v1257, %v1407
    %v1411 = vmul.f32 %v1262, %v1407
    %v1412 = vmul.f32 %v1267, %v1407
    %v1413 = vmul.f32 %v1272, %v1407
    %v1414 = vmul.f32 %v1277, %v1407
    %v1415 = vmul.f32 %v1282, %v1407
    %v1416 = vmul.f32 %v1287, %v1407
    %v1417 = vmul.f32 %v1292, %v1407
    %v1418 = vmul.f32 %v1297, %v1407
    %v1419 = vmul.f32 %v1302, %v1407
    %v1420 = vmul.f32 %v1307, %v1407
    %v1421 = vmul.f32 %v1312, %v1407
    %v1422 = vmul.f32 %v1317, %v1407
    %v1423 = vmul.f32 %v1322, %v1407
    %v1424 = vmul.f32 %v1327, %v1407
    %v1425 = vmul.f32 %v1332, %v1407
    %v1426 = vmul.f32 %v1337, %v1407
    %v1427 = vmul.f32 %v1342, %v1407
    %v1428 = vmul.f32 %v1347, %v1407
    %v1429 = vmul.f32 %v1352, %v1407
    %v1430 = vmul.f32 %v1357, %v1407
    %v1431 = vmul.f32 %v1362, %v1407
    %v1432 = vmul.f32 %v1367, %v1407
    %v1433 = vmul.f32 %v1372, %v1407
    %v1434 = vmul.f32 %v1377, %v1407
    %v1435 = vmul.f32 %v1382, %v1407
    %v1436 = vmul.f32 %v1387, %v1407
    %v1437 = vmul.f32 %v1392, %v1407
    %v1438 = vmul.f32 %v1397, %v1407
    %v1439 = vmul.f32 %v1402, %v1407
    %v1440 = vadd.f32 %v1242, %v1408
    %v1441 = vadd.f32 %v1242, %v1409
    %v1442 = vadd.f32 %v1242, %v1410
    %v1443 = vadd.f32 %v1242, %v1411
    %v1444 = vadd.f32 %v1242, %v1412
    %v1445 = vadd.f32 %v1242, %v1413
    %v1446 = vadd.f32 %v1242, %v1414
    %v1447 = vadd.f32 %v1242, %v1415
    %v1448 = vadd.f32 %v1242, %v1416
    %v1449 = vadd.f32 %v1242, %v1417
    %v1450 = vadd.f32 %v1242, %v1418
    %v1451 = vadd.f32 %v1242, %v1419
    %v1452 = vadd.f32 %v1242, %v1420
    %v1453 = vadd.f32 %v1242, %v1421
    %v1454 = vadd.f32 %v1242, %v1422
    %v1455 = vadd.f32 %v1242, %v1423
    %v1456 = vadd.f32 %v1242, %v1424
    %v1457 = vadd.f32 %v1242, %v1425
    %v1458 = vadd.f32 %v1242, %v1426
    %v1459 = vadd.f32 %v1242, %v1427
    %v1460 = vadd.f32 %v1242, %v1428
    %v1461 = vadd.f32 %v1242, %v1429
    %v1462 = vadd.f32 %v1242, %v1430
    %v1463 = vadd.f32 %v1242, %v1431
    %v1464 = vadd.f32 %v1242, %v1432
    %v1465 = vadd.f32 %v1242, %v1433
    %v1466 = vadd.f32 %v1242, %v1434
    %v1467 = vadd.f32 %v1242, %v1435
    %v1468 = vadd.f32 %v1242, %v1436
    %v1469 = vadd.f32 %v1242, %v1437
    %v1470 = vadd.f32 %v1242, %v1438
    %v1471 = vadd.f32 %v1242, %v1439
    %v1472 = vld [vmem:[%s2 + $0x1] sm:$0x1]
    %1474 = vset.pattern.permute.xlu0 0
    %1475 = vperm.xlu0 %1474, %v824
    %v1476 = vpop.permute.xlu0 %1475
    %1479 = vset.pattern.permute.xlu0 0
    %1480 = vperm.xlu0 %1479, %v825
    %v1481 = vpop.permute.xlu0 %1480
    %1484 = vset.pattern.permute.xlu0 0
    %1485 = vperm.xlu0 %1484, %v826
    %v1486 = vpop.permute.xlu0 %1485
    %1489 = vset.pattern.permute.xlu0 0
    %1490 = vperm.xlu0 %1489, %v827
    %v1491 = vpop.permute.xlu0 %1490
    %1494 = vset.pattern.permute.xlu0 0
    %1495 = vperm.xlu0 %1494, %v828
    %v1496 = vpop.permute.xlu0 %1495
    %1499 = vset.pattern.permute.xlu0 0
    %1500 = vperm.xlu0 %1499, %v829
    %v1501 = vpop.permute.xlu0 %1500
    %1504 = vset.pattern.permute.xlu0 0
    %1505 = vperm.xlu0 %1504, %v830
    %v1506 = vpop.permute.xlu0 %1505
    %1509 = vset.pattern.permute.xlu0 0
    %1510 = vperm.xlu0 %1509, %v831
    %v1511 = vpop.permute.xlu0 %1510
    %1514 = vset.pattern.permute.xlu0 0
    %1515 = vperm.xlu0 %1514, %v832
    %v1516 = vpop.permute.xlu0 %1515
    %1519 = vset.pattern.permute.xlu0 0
    %1520 = vperm.xlu0 %1519, %v833
    %v1521 = vpop.permute.xlu0 %1520
    %1524 = vset.pattern.permute.xlu0 0
    %1525 = vperm.xlu0 %1524, %v834
    %v1526 = vpop.permute.xlu0 %1525
    %1529 = vset.pattern.permute.xlu0 0
    %1530 = vperm.xlu0 %1529, %v835
    %v1531 = vpop.permute.xlu0 %1530
    %1534 = vset.pattern.permute.xlu0 0
    %1535 = vperm.xlu0 %1534, %v836
    %v1536 = vpop.permute.xlu0 %1535
    %1539 = vset.pattern.permute.xlu0 0
    %1540 = vperm.xlu0 %1539, %v837
    %v1541 = vpop.permute.xlu0 %1540
    %1544 = vset.pattern.permute.xlu0 0
    %1545 = vperm.xlu0 %1544, %v838
    %v1546 = vpop.permute.xlu0 %1545
    %1549 = vset.pattern.permute.xlu0 0
    %1550 = vperm.xlu0 %1549, %v839
    %v1551 = vpop.permute.xlu0 %1550
    %1554 = vset.pattern.permute.xlu0 0
    %1555 = vperm.xlu0 %1554, %v840
    %v1556 = vpop.permute.xlu0 %1555
    %1559 = vset.pattern.permute.xlu0 0
    %1560 = vperm.xlu0 %1559, %v841
    %v1561 = vpop.permute.xlu0 %1560
    %1564 = vset.pattern.permute.xlu0 0
    %1565 = vperm.xlu0 %1564, %v842
    %v1566 = vpop.permute.xlu0 %1565
    %1569 = vset.pattern.permute.xlu0 0
    %1570 = vperm.xlu0 %1569, %v843
    %v1571 = vpop.permute.xlu0 %1570
    %1574 = vset.pattern.permute.xlu0 0
    %1575 = vperm.xlu0 %1574, %v844
    %v1576 = vpop.permute.xlu0 %1575
    %1579 = vset.pattern.permute.xlu0 0
    %1580 = vperm.xlu0 %1579, %v845
    %v1581 = vpop.permute.xlu0 %1580
    %1584 = vset.pattern.permute.xlu0 0
    %1585 = vperm.xlu0 %1584, %v846
    %v1586 = vpop.permute.xlu0 %1585
    %1589 = vset.pattern.permute.xlu0 0
    %1590 = vperm.xlu0 %1589, %v847
    %v1591 = vpop.permute.xlu0 %1590
    %1594 = vset.pattern.permute.xlu0 0
    %1595 = vperm.xlu0 %1594, %v848
    %v1596 = vpop.permute.xlu0 %1595
    %1599 = vset.pattern.permute.xlu0 0
    %1600 = vperm.xlu0 %1599, %v849
    %v1601 = vpop.permute.xlu0 %1600
    %1604 = vset.pattern.permute.xlu0 0
    %1605 = vperm.xlu0 %1604, %v850
    %v1606 = vpop.permute.xlu0 %1605
    %1609 = vset.pattern.permute.xlu0 0
    %1610 = vperm.xlu0 %1609, %v851
    %v1611 = vpop.permute.xlu0 %1610
    %1614 = vset.pattern.permute.xlu0 0
    %1615 = vperm.xlu0 %1614, %v852
    %v1616 = vpop.permute.xlu0 %1615
    %1619 = vset.pattern.permute.xlu0 0
    %1620 = vperm.xlu0 %1619, %v853
    %v1621 = vpop.permute.xlu0 %1620
    %1624 = vset.pattern.permute.xlu0 0
    %1625 = vperm.xlu0 %1624, %v854
    %v1626 = vpop.permute.xlu0 %1625
    %1629 = vset.pattern.permute.xlu0 0
    %1630 = vperm.xlu0 %1629, %v855
    %v1631 = vpop.permute.xlu0 %1630
    %v1633 = vlaneseq
    %v1634 = vshrl.u32 %v1633, 7
    %v1635 = vsub.s32 0, %v1634
    %v1636 = vrot.slane %v1472, %v1635
    %v1637 = vmul.f32 %v1476, %v1636
    %v1638 = vmul.f32 %v1481, %v1636
    %v1639 = vmul.f32 %v1486, %v1636
    %v1640 = vmul.f32 %v1491, %v1636
    %v1641 = vmul.f32 %v1496, %v1636
    %v1642 = vmul.f32 %v1501, %v1636
    %v1643 = vmul.f32 %v1506, %v1636
    %v1644 = vmul.f32 %v1511, %v1636
    %v1645 = vmul.f32 %v1516, %v1636
    %v1646 = vmul.f32 %v1521, %v1636
    %v1647 = vmul.f32 %v1526, %v1636
    %v1648 = vmul.f32 %v1531, %v1636
    %v1649 = vmul.f32 %v1536, %v1636
    %v1650 = vmul.f32 %v1541, %v1636
    %v1651 = vmul.f32 %v1546, %v1636
    %v1652 = vmul.f32 %v1551, %v1636
    %v1653 = vmul.f32 %v1556, %v1636
    %v1654 = vmul.f32 %v1561, %v1636
    %v1655 = vmul.f32 %v1566, %v1636
    %v1656 = vmul.f32 %v1571, %v1636
    %v1657 = vmul.f32 %v1576, %v1636
    %v1658 = vmul.f32 %v1581, %v1636
    %v1659 = vmul.f32 %v1586, %v1636
    %v1660 = vmul.f32 %v1591, %v1636
    %v1661 = vmul.f32 %v1596, %v1636
    %v1662 = vmul.f32 %v1601, %v1636
    %v1663 = vmul.f32 %v1606, %v1636
    %v1664 = vmul.f32 %v1611, %v1636
    %v1665 = vmul.f32 %v1616, %v1636
    %v1666 = vmul.f32 %v1621, %v1636
    %v1667 = vmul.f32 %v1626, %v1636
    %v1668 = vmul.f32 %v1631, %v1636
    %v1669 = vadd.f32 %v1440, %v1637
    %v1670 = vadd.f32 %v1441, %v1638
    %v1671 = vadd.f32 %v1442, %v1639
    %v1672 = vadd.f32 %v1443, %v1640
    %v1673 = vadd.f32 %v1444, %v1641
    %v1674 = vadd.f32 %v1445, %v1642
    %v1675 = vadd.f32 %v1446, %v1643
    %v1676 = vadd.f32 %v1447, %v1644
    %v1677 = vadd.f32 %v1448, %v1645
    %v1678 = vadd.f32 %v1449, %v1646
    %v1679 = vadd.f32 %v1450, %v1647
    %v1680 = vadd.f32 %v1451, %v1648
    %v1681 = vadd.f32 %v1452, %v1649
    %v1682 = vadd.f32 %v1453, %v1650
    %v1683 = vadd.f32 %v1454, %v1651
    %v1684 = vadd.f32 %v1455, %v1652
    %v1685 = vadd.f32 %v1456, %v1653
    %v1686 = vadd.f32 %v1457, %v1654
    %v1687 = vadd.f32 %v1458, %v1655
    %v1688 = vadd.f32 %v1459, %v1656
    %v1689 = vadd.f32 %v1460, %v1657
    %v1690 = vadd.f32 %v1461, %v1658
    %v1691 = vadd.f32 %v1462, %v1659
    %v1692 = vadd.f32 %v1463, %v1660
    %v1693 = vadd.f32 %v1464, %v1661
    %v1694 = vadd.f32 %v1465, %v1662
    %v1695 = vadd.f32 %v1466, %v1663
    %v1696 = vadd.f32 %v1467, %v1664
    %v1697 = vadd.f32 %v1468, %v1665
    %v1698 = vadd.f32 %v1469, %v1666
    %v1699 = vadd.f32 %v1470, %v1667
    %v1700 = vadd.f32 %v1471, %v1668
    %v1701 = vld [vmem:[%s2 + $0x2] sm:$0x1]
    %1702 = vset.pattern.permute.xlu0 1
    %1703 = vperm.xlu0 %1702, %v824
    %v1704 = vpop.permute.xlu0 %1703
    %1706 = vset.pattern.permute.xlu0 1
    %1707 = vperm.xlu0 %1706, %v825
    %v1708 = vpop.permute.xlu0 %1707
    %1710 = vset.pattern.permute.xlu0 1
    %1711 = vperm.xlu0 %1710, %v826
    %v1712 = vpop.permute.xlu0 %1711
    %1714 = vset.pattern.permute.xlu0 1
    %1715 = vperm.xlu0 %1714, %v827
    %v1716 = vpop.permute.xlu0 %1715
    %1718 = vset.pattern.permute.xlu0 1
    %1719 = vperm.xlu0 %1718, %v828
    %v1720 = vpop.permute.xlu0 %1719
    %1722 = vset.pattern.permute.xlu0 1
    %1723 = vperm.xlu0 %1722, %v829
    %v1724 = vpop.permute.xlu0 %1723
    %1726 = vset.pattern.permute.xlu0 1
    %1727 = vperm.xlu0 %1726, %v830
    %v1728 = vpop.permute.xlu0 %1727
    %1730 = vset.pattern.permute.xlu0 1
    %1731 = vperm.xlu0 %1730, %v831
    %v1732 = vpop.permute.xlu0 %1731
    %1734 = vset.pattern.permute.xlu0 1
    %1735 = vperm.xlu0 %1734, %v832
    %v1736 = vpop.permute.xlu0 %1735
    %1738 = vset.pattern.permute.xlu0 1
    %1739 = vperm.xlu0 %1738, %v833
    %v1740 = vpop.permute.xlu0 %1739
    %1742 = vset.pattern.permute.xlu0 1
    %1743 = vperm.xlu0 %1742, %v834
    %v1744 = vpop.permute.xlu0 %1743
    %1746 = vset.pattern.permute.xlu0 1
    %1747 = vperm.xlu0 %1746, %v835
    %v1748 = vpop.permute.xlu0 %1747
    %1750 = vset.pattern.permute.xlu0 1
    %1751 = vperm.xlu0 %1750, %v836
    %v1752 = vpop.permute.xlu0 %1751
    %1754 = vset.pattern.permute.xlu0 1
    %1755 = vperm.xlu0 %1754, %v837
    %v1756 = vpop.permute.xlu0 %1755
    %1758 = vset.pattern.permute.xlu0 1
    %1759 = vperm.xlu0 %1758, %v838
    %v1760 = vpop.permute.xlu0 %1759
    %1762 = vset.pattern.permute.xlu0 1
    %1763 = vperm.xlu0 %1762, %v839
    %v1764 = vpop.permute.xlu0 %1763
    %1766 = vset.pattern.permute.xlu0 1
    %1767 = vperm.xlu0 %1766, %v840
    %v1768 = vpop.permute.xlu0 %1767
    %1770 = vset.pattern.permute.xlu0 1
    %1771 = vperm.xlu0 %1770, %v841
    %v1772 = vpop.permute.xlu0 %1771
    %1774 = vset.pattern.permute.xlu0 1
    %1775 = vperm.xlu0 %1774, %v842
    %v1776 = vpop.permute.xlu0 %1775
    %1778 = vset.pattern.permute.xlu0 1
    %1779 = vperm.xlu0 %1778, %v843
    %v1780 = vpop.permute.xlu0 %1779
    %1782 = vset.pattern.permute.xlu0 1
    %1783 = vperm.xlu0 %1782, %v844
    %v1784 = vpop.permute.xlu0 %1783
    %1786 = vset.pattern.permute.xlu0 1
    %1787 = vperm.xlu0 %1786, %v845
    %v1788 = vpop.permute.xlu0 %1787
    %1790 = vset.pattern.permute.xlu0 1
    %1791 = vperm.xlu0 %1790, %v846
    %v1792 = vpop.permute.xlu0 %1791
    %1794 = vset.pattern.permute.xlu0 1
    %1795 = vperm.xlu0 %1794, %v847
    %v1796 = vpop.permute.xlu0 %1795
    %1798 = vset.pattern.permute.xlu0 1
    %1799 = vperm.xlu0 %1798, %v848
    %v1800 = vpop.permute.xlu0 %1799
    %1802 = vset.pattern.permute.xlu0 1
    %1803 = vperm.xlu0 %1802, %v849
    %v1804 = vpop.permute.xlu0 %1803
    %1806 = vset.pattern.permute.xlu0 1
    %1807 = vperm.xlu0 %1806, %v850
    %v1808 = vpop.permute.xlu0 %1807
    %1810 = vset.pattern.permute.xlu0 1
    %1811 = vperm.xlu0 %1810, %v851
    %v1812 = vpop.permute.xlu0 %1811
    %1814 = vset.pattern.permute.xlu0 1
    %1815 = vperm.xlu0 %1814, %v852
    %v1816 = vpop.permute.xlu0 %1815
    %1818 = vset.pattern.permute.xlu0 1
    %1819 = vperm.xlu0 %1818, %v853
    %v1820 = vpop.permute.xlu0 %1819
    %1822 = vset.pattern.permute.xlu0 1
    %1823 = vperm.xlu0 %1822, %v854
    %v1824 = vpop.permute.xlu0 %1823
    %1826 = vset.pattern.permute.xlu0 1
    %1827 = vperm.xlu0 %1826, %v855
    %v1828 = vpop.permute.xlu0 %1827
    %v1830 = vlaneseq
    %v1831 = vshrl.u32 %v1830, 7
    %v1832 = vsub.s32 0, %v1831
    %v1833 = vrot.slane %v1701, %v1832
    %v1834 = vmul.f32 %v1704, %v1833
    %v1835 = vmul.f32 %v1708, %v1833
    %v1836 = vmul.f32 %v1712, %v1833
    %v1837 = vmul.f32 %v1716, %v1833
    %v1838 = vmul.f32 %v1720, %v1833
    %v1839 = vmul.f32 %v1724, %v1833
    %v1840 = vmul.f32 %v1728, %v1833
    %v1841 = vmul.f32 %v1732, %v1833
    %v1842 = vmul.f32 %v1736, %v1833
    %v1843 = vmul.f32 %v1740, %v1833
    %v1844 = vmul.f32 %v1744, %v1833
    %v1845 = vmul.f32 %v1748, %v1833
    %v1846 = vmul.f32 %v1752, %v1833
    %v1847 = vmul.f32 %v1756, %v1833
    %v1848 = vmul.f32 %v1760, %v1833
    %v1849 = vmul.f32 %v1764, %v1833
    %v1850 = vmul.f32 %v1768, %v1833
    %v1851 = vmul.f32 %v1772, %v1833
    %v1852 = vmul.f32 %v1776, %v1833
    %v1853 = vmul.f32 %v1780, %v1833
    %v1854 = vmul.f32 %v1784, %v1833
    %v1855 = vmul.f32 %v1788, %v1833
    %v1856 = vmul.f32 %v1792, %v1833
    %v1857 = vmul.f32 %v1796, %v1833
    %v1858 = vmul.f32 %v1800, %v1833
    %v1859 = vmul.f32 %v1804, %v1833
    %v1860 = vmul.f32 %v1808, %v1833
    %v1861 = vmul.f32 %v1812, %v1833
    %v1862 = vmul.f32 %v1816, %v1833
    %v1863 = vmul.f32 %v1820, %v1833
    %v1864 = vmul.f32 %v1824, %v1833
    %v1865 = vmul.f32 %v1828, %v1833
    %v1866 = vadd.f32 %v1669, %v1834
    %v1867 = vadd.f32 %v1670, %v1835
    %v1868 = vadd.f32 %v1671, %v1836
    %v1869 = vadd.f32 %v1672, %v1837
    %v1870 = vadd.f32 %v1673, %v1838
    %v1871 = vadd.f32 %v1674, %v1839
    %v1872 = vadd.f32 %v1675, %v1840
    %v1873 = vadd.f32 %v1676, %v1841
    %v1874 = vadd.f32 %v1677, %v1842
    %v1875 = vadd.f32 %v1678, %v1843
    %v1876 = vadd.f32 %v1679, %v1844
    %v1877 = vadd.f32 %v1680, %v1845
    %v1878 = vadd.f32 %v1681, %v1846
    %v1879 = vadd.f32 %v1682, %v1847
    %v1880 = vadd.f32 %v1683, %v1848
    %v1881 = vadd.f32 %v1684, %v1849
    %v1882 = vadd.f32 %v1685, %v1850
    %v1883 = vadd.f32 %v1686, %v1851
    %v1884 = vadd.f32 %v1687, %v1852
    %v1885 = vadd.f32 %v1688, %v1853
    %v1886 = vadd.f32 %v1689, %v1854
    %v1887 = vadd.f32 %v1690, %v1855
    %v1888 = vadd.f32 %v1691, %v1856
    %v1889 = vadd.f32 %v1692, %v1857
    %v1890 = vadd.f32 %v1693, %v1858
    %v1891 = vadd.f32 %v1694, %v1859
    %v1892 = vadd.f32 %v1695, %v1860
    %v1893 = vadd.f32 %v1696, %v1861
    %v1894 = vadd.f32 %v1697, %v1862
    %v1895 = vadd.f32 %v1698, %v1863
    %v1896 = vadd.f32 %v1699, %v1864
    %v1897 = vadd.f32 %v1700, %v1865
    %v1898 = vld [vmem:[%s2 + $0x3] sm:$0x1]
    %1900 = vset.pattern.permute.xlu0 0
    %1901 = vperm.xlu0 %1900, %v438
    %v1902 = vpop.permute.xlu0 %1901
    %1905 = vset.pattern.permute.xlu0 0
    %1906 = vperm.xlu0 %1905, %v439
    %v1907 = vpop.permute.xlu0 %1906
    %1910 = vset.pattern.permute.xlu0 0
    %1911 = vperm.xlu0 %1910, %v440
    %v1912 = vpop.permute.xlu0 %1911
    %1915 = vset.pattern.permute.xlu0 0
    %1916 = vperm.xlu0 %1915, %v441
    %v1917 = vpop.permute.xlu0 %1916
    %1920 = vset.pattern.permute.xlu0 0
    %1921 = vperm.xlu0 %1920, %v442
    %v1922 = vpop.permute.xlu0 %1921
    %1925 = vset.pattern.permute.xlu0 0
    %1926 = vperm.xlu0 %1925, %v443
    %v1927 = vpop.permute.xlu0 %1926
    %1930 = vset.pattern.permute.xlu0 0
    %1931 = vperm.xlu0 %1930, %v444
    %v1932 = vpop.permute.xlu0 %1931
    %1935 = vset.pattern.permute.xlu0 0
    %1936 = vperm.xlu0 %1935, %v445
    %v1937 = vpop.permute.xlu0 %1936
    %1940 = vset.pattern.permute.xlu0 0
    %1941 = vperm.xlu0 %1940, %v446
    %v1942 = vpop.permute.xlu0 %1941
    %1945 = vset.pattern.permute.xlu0 0
    %1946 = vperm.xlu0 %1945, %v447
    %v1947 = vpop.permute.xlu0 %1946
    %1950 = vset.pattern.permute.xlu0 0
    %1951 = vperm.xlu0 %1950, %v448
    %v1952 = vpop.permute.xlu0 %1951
    %1955 = vset.pattern.permute.xlu0 0
    %1956 = vperm.xlu0 %1955, %v449
    %v1957 = vpop.permute.xlu0 %1956
    %1960 = vset.pattern.permute.xlu0 0
    %1961 = vperm.xlu0 %1960, %v450
    %v1962 = vpop.permute.xlu0 %1961
    %1965 = vset.pattern.permute.xlu0 0
    %1966 = vperm.xlu0 %1965, %v451
    %v1967 = vpop.permute.xlu0 %1966
    %1970 = vset.pattern.permute.xlu0 0
    %1971 = vperm.xlu0 %1970, %v452
    %v1972 = vpop.permute.xlu0 %1971
    %1975 = vset.pattern.permute.xlu0 0
    %1976 = vperm.xlu0 %1975, %v453
    %v1977 = vpop.permute.xlu0 %1976
    %1980 = vset.pattern.permute.xlu0 0
    %1981 = vperm.xlu0 %1980, %v454
    %v1982 = vpop.permute.xlu0 %1981
    %1985 = vset.pattern.permute.xlu0 0
    %1986 = vperm.xlu0 %1985, %v455
    %v1987 = vpop.permute.xlu0 %1986
    %1990 = vset.pattern.permute.xlu0 0
    %1991 = vperm.xlu0 %1990, %v456
    %v1992 = vpop.permute.xlu0 %1991
    %1995 = vset.pattern.permute.xlu0 0
    %1996 = vperm.xlu0 %1995, %v457
    %v1997 = vpop.permute.xlu0 %1996
    %2000 = vset.pattern.permute.xlu0 0
    %2001 = vperm.xlu0 %2000, %v458
    %v2002 = vpop.permute.xlu0 %2001
    %2005 = vset.pattern.permute.xlu0 0
    %2006 = vperm.xlu0 %2005, %v459
    %v2007 = vpop.permute.xlu0 %2006
    %2010 = vset.pattern.permute.xlu0 0
    %2011 = vperm.xlu0 %2010, %v460
    %v2012 = vpop.permute.xlu0 %2011
    %2015 = vset.pattern.permute.xlu0 0
    %2016 = vperm.xlu0 %2015, %v461
    %v2017 = vpop.permute.xlu0 %2016
    %2020 = vset.pattern.permute.xlu0 0
    %2021 = vperm.xlu0 %2020, %v462
    %v2022 = vpop.permute.xlu0 %2021
    %2025 = vset.pattern.permute.xlu0 0
    %2026 = vperm.xlu0 %2025, %v463
    %v2027 = vpop.permute.xlu0 %2026
    %2030 = vset.pattern.permute.xlu0 0
    %2031 = vperm.xlu0 %2030, %v464
    %v2032 = vpop.permute.xlu0 %2031
    %2035 = vset.pattern.permute.xlu0 0
    %2036 = vperm.xlu0 %2035, %v465
    %v2037 = vpop.permute.xlu0 %2036
    %2040 = vset.pattern.permute.xlu0 0
    %2041 = vperm.xlu0 %2040, %v466
    %v2042 = vpop.permute.xlu0 %2041
    %2045 = vset.pattern.permute.xlu0 0
    %2046 = vperm.xlu0 %2045, %v467
    %v2047 = vpop.permute.xlu0 %2046
    %2050 = vset.pattern.permute.xlu0 0
    %2051 = vperm.xlu0 %2050, %v468
    %v2052 = vpop.permute.xlu0 %2051
    %2055 = vset.pattern.permute.xlu0 0
    %2056 = vperm.xlu0 %2055, %v469
    %v2057 = vpop.permute.xlu0 %2056
    %v2059 = vlaneseq
    %v2060 = vshrl.u32 %v2059, 7
    %v2061 = vsub.s32 0, %v2060
    %v2062 = vrot.slane %v1898, %v2061
    %v2063 = vmul.f32 %v1902, %v2062
    %v2064 = vmul.f32 %v1907, %v2062
    %v2065 = vmul.f32 %v1912, %v2062
    %v2066 = vmul.f32 %v1917, %v2062
    %v2067 = vmul.f32 %v1922, %v2062
    %v2068 = vmul.f32 %v1927, %v2062
    %v2069 = vmul.f32 %v1932, %v2062
    %v2070 = vmul.f32 %v1937, %v2062
    %v2071 = vmul.f32 %v1942, %v2062
    %v2072 = vmul.f32 %v1947, %v2062
    %v2073 = vmul.f32 %v1952, %v2062
    %v2074 = vmul.f32 %v1957, %v2062
    %v2075 = vmul.f32 %v1962, %v2062
    %v2076 = vmul.f32 %v1967, %v2062
    %v2077 = vmul.f32 %v1972, %v2062
    %v2078 = vmul.f32 %v1977, %v2062
    %v2079 = vmul.f32 %v1982, %v2062
    %v2080 = vmul.f32 %v1987, %v2062
    %v2081 = vmul.f32 %v1992, %v2062
    %v2082 = vmul.f32 %v1997, %v2062
    %v2083 = vmul.f32 %v2002, %v2062
    %v2084 = vmul.f32 %v2007, %v2062
    %v2085 = vmul.f32 %v2012, %v2062
    %v2086 = vmul.f32 %v2017, %v2062
    %v2087 = vmul.f32 %v2022, %v2062
    %v2088 = vmul.f32 %v2027, %v2062
    %v2089 = vmul.f32 %v2032, %v2062
    %v2090 = vmul.f32 %v2037, %v2062
    %v2091 = vmul.f32 %v2042, %v2062
    %v2092 = vmul.f32 %v2047, %v2062
    %v2093 = vmul.f32 %v2052, %v2062
    %v2094 = vmul.f32 %v2057, %v2062
    %v2095 = vadd.f32 %v1866, %v2063
    %v2096 = vadd.f32 %v1867, %v2064
    %v2097 = vadd.f32 %v1868, %v2065
    %v2098 = vadd.f32 %v1869, %v2066
    %v2099 = vadd.f32 %v1870, %v2067
    %v2100 = vadd.f32 %v1871, %v2068
    %v2101 = vadd.f32 %v1872, %v2069
    %v2102 = vadd.f32 %v1873, %v2070
    %v2103 = vadd.f32 %v1874, %v2071
    %v2104 = vadd.f32 %v1875, %v2072
    %v2105 = vadd.f32 %v1876, %v2073
    %v2106 = vadd.f32 %v1877, %v2074
    %v2107 = vadd.f32 %v1878, %v2075
    %v2108 = vadd.f32 %v1879, %v2076
    %v2109 = vadd.f32 %v1880, %v2077
    %v2110 = vadd.f32 %v1881, %v2078
    %v2111 = vadd.f32 %v1882, %v2079
    %v2112 = vadd.f32 %v1883, %v2080
    %v2113 = vadd.f32 %v1884, %v2081
    %v2114 = vadd.f32 %v1885, %v2082
    %v2115 = vadd.f32 %v1886, %v2083
    %v2116 = vadd.f32 %v1887, %v2084
    %v2117 = vadd.f32 %v1888, %v2085
    %v2118 = vadd.f32 %v1889, %v2086
    %v2119 = vadd.f32 %v1890, %v2087
    %v2120 = vadd.f32 %v1891, %v2088
    %v2121 = vadd.f32 %v1892, %v2089
    %v2122 = vadd.f32 %v1893, %v2090
    %v2123 = vadd.f32 %v1894, %v2091
    %v2124 = vadd.f32 %v1895, %v2092
    %v2125 = vadd.f32 %v1896, %v2093
    %v2126 = vadd.f32 %v1897, %v2094
    %v2127 = vld [vmem:[%s2 + $0x4] sm:$0x1]
    %2128 = vset.pattern.permute.xlu0 1
    %2129 = vperm.xlu0 %2128, %v438
    %v2130 = vpop.permute.xlu0 %2129
    %2132 = vset.pattern.permute.xlu0 1
    %2133 = vperm.xlu0 %2132, %v439
    %v2134 = vpop.permute.xlu0 %2133
    %2136 = vset.pattern.permute.xlu0 1
    %2137 = vperm.xlu0 %2136, %v440
    %v2138 = vpop.permute.xlu0 %2137
    %2140 = vset.pattern.permute.xlu0 1
    %2141 = vperm.xlu0 %2140, %v441
    %v2142 = vpop.permute.xlu0 %2141
    %2144 = vset.pattern.permute.xlu0 1
    %2145 = vperm.xlu0 %2144, %v442
    %v2146 = vpop.permute.xlu0 %2145
    %2148 = vset.pattern.permute.xlu0 1
    %2149 = vperm.xlu0 %2148, %v443
    %v2150 = vpop.permute.xlu0 %2149
    %2152 = vset.pattern.permute.xlu0 1
    %2153 = vperm.xlu0 %2152, %v444
    %v2154 = vpop.permute.xlu0 %2153
    %2156 = vset.pattern.permute.xlu0 1
    %2157 = vperm.xlu0 %2156, %v445
    %v2158 = vpop.permute.xlu0 %2157
    %2160 = vset.pattern.permute.xlu0 1
    %2161 = vperm.xlu0 %2160, %v446
    %v2162 = vpop.permute.xlu0 %2161
    %2164 = vset.pattern.permute.xlu0 1
    %2165 = vperm.xlu0 %2164, %v447
    %v2166 = vpop.permute.xlu0 %2165
    %2168 = vset.pattern.permute.xlu0 1
    %2169 = vperm.xlu0 %2168, %v448
    %v2170 = vpop.permute.xlu0 %2169
    %2172 = vset.pattern.permute.xlu0 1
    %2173 = vperm.xlu0 %2172, %v449
    %v2174 = vpop.permute.xlu0 %2173
    %2176 = vset.pattern.permute.xlu0 1
    %2177 = vperm.xlu0 %2176, %v450
    %v2178 = vpop.permute.xlu0 %2177
    %2180 = vset.pattern.permute.xlu0 1
    %2181 = vperm.xlu0 %2180, %v451
    %v2182 = vpop.permute.xlu0 %2181
    %2184 = vset.pattern.permute.xlu0 1
    %2185 = vperm.xlu0 %2184, %v452
    %v2186 = vpop.permute.xlu0 %2185
    %2188 = vset.pattern.permute.xlu0 1
    %2189 = vperm.xlu0 %2188, %v453
    %v2190 = vpop.permute.xlu0 %2189
    %2192 = vset.pattern.permute.xlu0 1
    %2193 = vperm.xlu0 %2192, %v454
    %v2194 = vpop.permute.xlu0 %2193
    %2196 = vset.pattern.permute.xlu0 1
    %2197 = vperm.xlu0 %2196, %v455
    %v2198 = vpop.permute.xlu0 %2197
    %2200 = vset.pattern.permute.xlu0 1
    %2201 = vperm.xlu0 %2200, %v456
    %v2202 = vpop.permute.xlu0 %2201
    %2204 = vset.pattern.permute.xlu0 1
    %2205 = vperm.xlu0 %2204, %v457
    %v2206 = vpop.permute.xlu0 %2205
    %2208 = vset.pattern.permute.xlu0 1
    %2209 = vperm.xlu0 %2208, %v458
    %v2210 = vpop.permute.xlu0 %2209
    %2212 = vset.pattern.permute.xlu0 1
    %2213 = vperm.xlu0 %2212, %v459
    %v2214 = vpop.permute.xlu0 %2213
    %2216 = vset.pattern.permute.xlu0 1
    %2217 = vperm.xlu0 %2216, %v460
    %v2218 = vpop.permute.xlu0 %2217
    %2220 = vset.pattern.permute.xlu0 1
    %2221 = vperm.xlu0 %2220, %v461
    %v2222 = vpop.permute.xlu0 %2221
    %2224 = vset.pattern.permute.xlu0 1
    %2225 = vperm.xlu0 %2224, %v462
    %v2226 = vpop.permute.xlu0 %2225
    %2228 = vset.pattern.permute.xlu0 1
    %2229 = vperm.xlu0 %2228, %v463
    %v2230 = vpop.permute.xlu0 %2229
    %2232 = vset.pattern.permute.xlu0 1
    %2233 = vperm.xlu0 %2232, %v464
    %v2234 = vpop.permute.xlu0 %2233
    %2236 = vset.pattern.permute.xlu0 1
    %2237 = vperm.xlu0 %2236, %v465
    %v2238 = vpop.permute.xlu0 %2237
    %2240 = vset.pattern.permute.xlu0 1
    %2241 = vperm.xlu0 %2240, %v466
    %v2242 = vpop.permute.xlu0 %2241
    %2244 = vset.pattern.permute.xlu0 1
    %2245 = vperm.xlu0 %2244, %v467
    %v2246 = vpop.permute.xlu0 %2245
    %2248 = vset.pattern.permute.xlu0 1
    %2249 = vperm.xlu0 %2248, %v468
    %v2250 = vpop.permute.xlu0 %2249
    %2252 = vset.pattern.permute.xlu0 1
    %2253 = vperm.xlu0 %2252, %v469
    %v2254 = vpop.permute.xlu0 %2253
    %v2256 = vlaneseq
    %v2257 = vshrl.u32 %v2256, 7
    %v2258 = vsub.s32 0, %v2257
    %v2259 = vrot.slane %v2127, %v2258
    %v2260 = vmul.f32 %v2130, %v2259
    %v2261 = vmul.f32 %v2134, %v2259
    %v2262 = vmul.f32 %v2138, %v2259
    %v2263 = vmul.f32 %v2142, %v2259
    %v2264 = vmul.f32 %v2146, %v2259
    %v2265 = vmul.f32 %v2150, %v2259
    %v2266 = vmul.f32 %v2154, %v2259
    %v2267 = vmul.f32 %v2158, %v2259
    %v2268 = vmul.f32 %v2162, %v2259
    %v2269 = vmul.f32 %v2166, %v2259
    %v2270 = vmul.f32 %v2170, %v2259
    %v2271 = vmul.f32 %v2174, %v2259
    %v2272 = vmul.f32 %v2178, %v2259
    %v2273 = vmul.f32 %v2182, %v2259
    %v2274 = vmul.f32 %v2186, %v2259
    %v2275 = vmul.f32 %v2190, %v2259
    %v2276 = vmul.f32 %v2194, %v2259
    %v2277 = vmul.f32 %v2198, %v2259
    %v2278 = vmul.f32 %v2202, %v2259
    %v2279 = vmul.f32 %v2206, %v2259
    %v2280 = vmul.f32 %v2210, %v2259
    %v2281 = vmul.f32 %v2214, %v2259
    %v2282 = vmul.f32 %v2218, %v2259
    %v2283 = vmul.f32 %v2222, %v2259
    %v2284 = vmul.f32 %v2226, %v2259
    %v2285 = vmul.f32 %v2230, %v2259
    %v2286 = vmul.f32 %v2234, %v2259
    %v2287 = vmul.f32 %v2238, %v2259
    %v2288 = vmul.f32 %v2242, %v2259
    %v2289 = vmul.f32 %v2246, %v2259
    %v2290 = vmul.f32 %v2250, %v2259
    %v2291 = vmul.f32 %v2254, %v2259
    %v2292 = vadd.f32 %v2095, %v2260
    %v2293 = vadd.f32 %v2096, %v2261
    %v2294 = vadd.f32 %v2097, %v2262
    %v2295 = vadd.f32 %v2098, %v2263
    %v2296 = vadd.f32 %v2099, %v2264
    %v2297 = vadd.f32 %v2100, %v2265
    %v2298 = vadd.f32 %v2101, %v2266
    %v2299 = vadd.f32 %v2102, %v2267
    %v2300 = vadd.f32 %v2103, %v2268
    %v2301 = vadd.f32 %v2104, %v2269
    %v2302 = vadd.f32 %v2105, %v2270
    %v2303 = vadd.f32 %v2106, %v2271
    %v2304 = vadd.f32 %v2107, %v2272
    %v2305 = vadd.f32 %v2108, %v2273
    %v2306 = vadd.f32 %v2109, %v2274
    %v2307 = vadd.f32 %v2110, %v2275
    %v2308 = vadd.f32 %v2111, %v2276
    %v2309 = vadd.f32 %v2112, %v2277
    %v2310 = vadd.f32 %v2113, %v2278
    %v2311 = vadd.f32 %v2114, %v2279
    %v2312 = vadd.f32 %v2115, %v2280
    %v2313 = vadd.f32 %v2116, %v2281
    %v2314 = vadd.f32 %v2117, %v2282
    %v2315 = vadd.f32 %v2118, %v2283
    %v2316 = vadd.f32 %v2119, %v2284
    %v2317 = vadd.f32 %v2120, %v2285
    %v2318 = vadd.f32 %v2121, %v2286
    %v2319 = vadd.f32 %v2122, %v2287
    %v2320 = vadd.f32 %v2123, %v2288
    %v2321 = vadd.f32 %v2124, %v2289
    %v2322 = vadd.f32 %v2125, %v2290
    %v2323 = vadd.f32 %v2126, %v2291
    %v2324 = vld [vmem:[%s2 + $0x5] sm:$0x1]
    %2326 = vset.pattern.permute.xlu0 0
    %2327 = vperm.xlu0 %2326, %v1017
    %v2328 = vpop.permute.xlu0 %2327
    %2331 = vset.pattern.permute.xlu0 0
    %2332 = vperm.xlu0 %2331, %v1018
    %v2333 = vpop.permute.xlu0 %2332
    %2336 = vset.pattern.permute.xlu0 0
    %2337 = vperm.xlu0 %2336, %v1019
    %v2338 = vpop.permute.xlu0 %2337
    %2341 = vset.pattern.permute.xlu0 0
    %2342 = vperm.xlu0 %2341, %v1020
    %v2343 = vpop.permute.xlu0 %2342
    %2346 = vset.pattern.permute.xlu0 0
    %2347 = vperm.xlu0 %2346, %v1021
    %v2348 = vpop.permute.xlu0 %2347
    %2351 = vset.pattern.permute.xlu0 0
    %2352 = vperm.xlu0 %2351, %v1022
    %v2353 = vpop.permute.xlu0 %2352
    %2356 = vset.pattern.permute.xlu0 0
    %2357 = vperm.xlu0 %2356, %v1023
    %v2358 = vpop.permute.xlu0 %2357
    %2361 = vset.pattern.permute.xlu0 0
    %2362 = vperm.xlu0 %2361, %v1024
    %v2363 = vpop.permute.xlu0 %2362
    %2366 = vset.pattern.permute.xlu0 0
    %2367 = vperm.xlu0 %2366, %v1025
    %v2368 = vpop.permute.xlu0 %2367
    %2371 = vset.pattern.permute.xlu0 0
    %2372 = vperm.xlu0 %2371, %v1026
    %v2373 = vpop.permute.xlu0 %2372
    %2376 = vset.pattern.permute.xlu0 0
    %2377 = vperm.xlu0 %2376, %v1027
    %v2378 = vpop.permute.xlu0 %2377
    %2381 = vset.pattern.permute.xlu0 0
    %2382 = vperm.xlu0 %2381, %v1028
    %v2383 = vpop.permute.xlu0 %2382
    %2386 = vset.pattern.permute.xlu0 0
    %2387 = vperm.xlu0 %2386, %v1029
    %v2388 = vpop.permute.xlu0 %2387
    %2391 = vset.pattern.permute.xlu0 0
    %2392 = vperm.xlu0 %2391, %v1030
    %v2393 = vpop.permute.xlu0 %2392
    %2396 = vset.pattern.permute.xlu0 0
    %2397 = vperm.xlu0 %2396, %v1031
    %v2398 = vpop.permute.xlu0 %2397
    %2401 = vset.pattern.permute.xlu0 0
    %2402 = vperm.xlu0 %2401, %v1032
    %v2403 = vpop.permute.xlu0 %2402
    %2406 = vset.pattern.permute.xlu0 0
    %2407 = vperm.xlu0 %2406, %v1033
    %v2408 = vpop.permute.xlu0 %2407
    %2411 = vset.pattern.permute.xlu0 0
    %2412 = vperm.xlu0 %2411, %v1034
    %v2413 = vpop.permute.xlu0 %2412
    %2416 = vset.pattern.permute.xlu0 0
    %2417 = vperm.xlu0 %2416, %v1035
    %v2418 = vpop.permute.xlu0 %2417
    %2421 = vset.pattern.permute.xlu0 0
    %2422 = vperm.xlu0 %2421, %v1036
    %v2423 = vpop.permute.xlu0 %2422
    %2426 = vset.pattern.permute.xlu0 0
    %2427 = vperm.xlu0 %2426, %v1037
    %v2428 = vpop.permute.xlu0 %2427
    %2431 = vset.pattern.permute.xlu0 0
    %2432 = vperm.xlu0 %2431, %v1038
    %v2433 = vpop.permute.xlu0 %2432
    %2436 = vset.pattern.permute.xlu0 0
    %2437 = vperm.xlu0 %2436, %v1039
    %v2438 = vpop.permute.xlu0 %2437
    %2441 = vset.pattern.permute.xlu0 0
    %2442 = vperm.xlu0 %2441, %v1040
    %v2443 = vpop.permute.xlu0 %2442
    %2446 = vset.pattern.permute.xlu0 0
    %2447 = vperm.xlu0 %2446, %v1041
    %v2448 = vpop.permute.xlu0 %2447
    %2451 = vset.pattern.permute.xlu0 0
    %2452 = vperm.xlu0 %2451, %v1042
    %v2453 = vpop.permute.xlu0 %2452
    %2456 = vset.pattern.permute.xlu0 0
    %2457 = vperm.xlu0 %2456, %v1043
    %v2458 = vpop.permute.xlu0 %2457
    %2461 = vset.pattern.permute.xlu0 0
    %2462 = vperm.xlu0 %2461, %v1044
    %v2463 = vpop.permute.xlu0 %2462
    %2466 = vset.pattern.permute.xlu0 0
    %2467 = vperm.xlu0 %2466, %v1045
    %v2468 = vpop.permute.xlu0 %2467
    %2471 = vset.pattern.permute.xlu0 0
    %2472 = vperm.xlu0 %2471, %v1046
    %v2473 = vpop.permute.xlu0 %2472
    %2476 = vset.pattern.permute.xlu0 0
    %2477 = vperm.xlu0 %2476, %v1047
    %v2478 = vpop.permute.xlu0 %2477
    %2481 = vset.pattern.permute.xlu0 0
    %2482 = vperm.xlu0 %2481, %v1048
    %v2483 = vpop.permute.xlu0 %2482
    %v2485 = vlaneseq
    %v2486 = vshrl.u32 %v2485, 7
    %v2487 = vsub.s32 0, %v2486
    %v2488 = vrot.slane %v2324, %v2487
    %v2489 = vmul.f32 %v2328, %v2488
    %v2490 = vmul.f32 %v2333, %v2488
    %v2491 = vmul.f32 %v2338, %v2488
    %v2492 = vmul.f32 %v2343, %v2488
    %v2493 = vmul.f32 %v2348, %v2488
    %v2494 = vmul.f32 %v2353, %v2488
    %v2495 = vmul.f32 %v2358, %v2488
    %v2496 = vmul.f32 %v2363, %v2488
    %v2497 = vmul.f32 %v2368, %v2488
    %v2498 = vmul.f32 %v2373, %v2488
    %v2499 = vmul.f32 %v2378, %v2488
    %v2500 = vmul.f32 %v2383, %v2488
    %v2501 = vmul.f32 %v2388, %v2488
    %v2502 = vmul.f32 %v2393, %v2488
    %v2503 = vmul.f32 %v2398, %v2488
    %v2504 = vmul.f32 %v2403, %v2488
    %v2505 = vmul.f32 %v2408, %v2488
    %v2506 = vmul.f32 %v2413, %v2488
    %v2507 = vmul.f32 %v2418, %v2488
    %v2508 = vmul.f32 %v2423, %v2488
    %v2509 = vmul.f32 %v2428, %v2488
    %v2510 = vmul.f32 %v2433, %v2488
    %v2511 = vmul.f32 %v2438, %v2488
    %v2512 = vmul.f32 %v2443, %v2488
    %v2513 = vmul.f32 %v2448, %v2488
    %v2514 = vmul.f32 %v2453, %v2488
    %v2515 = vmul.f32 %v2458, %v2488
    %v2516 = vmul.f32 %v2463, %v2488
    %v2517 = vmul.f32 %v2468, %v2488
    %v2518 = vmul.f32 %v2473, %v2488
    %v2519 = vmul.f32 %v2478, %v2488
    %v2520 = vmul.f32 %v2483, %v2488
    %v2521 = vadd.f32 %v2292, %v2489
    %v2522 = vadd.f32 %v2293, %v2490
    %v2523 = vadd.f32 %v2294, %v2491
    %v2524 = vadd.f32 %v2295, %v2492
    %v2525 = vadd.f32 %v2296, %v2493
    %v2526 = vadd.f32 %v2297, %v2494
    %v2527 = vadd.f32 %v2298, %v2495
    %v2528 = vadd.f32 %v2299, %v2496
    %v2529 = vadd.f32 %v2300, %v2497
    %v2530 = vadd.f32 %v2301, %v2498
    %v2531 = vadd.f32 %v2302, %v2499
    %v2532 = vadd.f32 %v2303, %v2500
    %v2533 = vadd.f32 %v2304, %v2501
    %v2534 = vadd.f32 %v2305, %v2502
    %v2535 = vadd.f32 %v2306, %v2503
    %v2536 = vadd.f32 %v2307, %v2504
    %v2537 = vadd.f32 %v2308, %v2505
    %v2538 = vadd.f32 %v2309, %v2506
    %v2539 = vadd.f32 %v2310, %v2507
    %v2540 = vadd.f32 %v2311, %v2508
    %v2541 = vadd.f32 %v2312, %v2509
    %v2542 = vadd.f32 %v2313, %v2510
    %v2543 = vadd.f32 %v2314, %v2511
    %v2544 = vadd.f32 %v2315, %v2512
    %v2545 = vadd.f32 %v2316, %v2513
    %v2546 = vadd.f32 %v2317, %v2514
    %v2547 = vadd.f32 %v2318, %v2515
    %v2548 = vadd.f32 %v2319, %v2516
    %v2549 = vadd.f32 %v2320, %v2517
    %v2550 = vadd.f32 %v2321, %v2518
    %v2551 = vadd.f32 %v2322, %v2519
    %v2552 = vadd.f32 %v2323, %v2520
    %v2553 = vld [vmem:[%s2 + $0x6] sm:$0x1]
    %2554 = vset.pattern.permute.xlu0 1
    %2555 = vperm.xlu0 %2554, %v1017
    %v2556 = vpop.permute.xlu0 %2555
    %2558 = vset.pattern.permute.xlu0 1
    %2559 = vperm.xlu0 %2558, %v1018
    %v2560 = vpop.permute.xlu0 %2559
    %2562 = vset.pattern.permute.xlu0 1
    %2563 = vperm.xlu0 %2562, %v1019
    %v2564 = vpop.permute.xlu0 %2563
    %2566 = vset.pattern.permute.xlu0 1
    %2567 = vperm.xlu0 %2566, %v1020
    %v2568 = vpop.permute.xlu0 %2567
    %2570 = vset.pattern.permute.xlu0 1
    %2571 = vperm.xlu0 %2570, %v1021
    %v2572 = vpop.permute.xlu0 %2571
    %2574 = vset.pattern.permute.xlu0 1
    %2575 = vperm.xlu0 %2574, %v1022
    %v2576 = vpop.permute.xlu0 %2575
    %2578 = vset.pattern.permute.xlu0 1
    %2579 = vperm.xlu0 %2578, %v1023
    %v2580 = vpop.permute.xlu0 %2579
    %2582 = vset.pattern.permute.xlu0 1
    %2583 = vperm.xlu0 %2582, %v1024
    %v2584 = vpop.permute.xlu0 %2583
    %2586 = vset.pattern.permute.xlu0 1
    %2587 = vperm.xlu0 %2586, %v1025
    %v2588 = vpop.permute.xlu0 %2587
    %2590 = vset.pattern.permute.xlu0 1
    %2591 = vperm.xlu0 %2590, %v1026
    %v2592 = vpop.permute.xlu0 %2591
    %2594 = vset.pattern.permute.xlu0 1
    %2595 = vperm.xlu0 %2594, %v1027
    %v2596 = vpop.permute.xlu0 %2595
    %2598 = vset.pattern.permute.xlu0 1
    %2599 = vperm.xlu0 %2598, %v1028
    %v2600 = vpop.permute.xlu0 %2599
    %2602 = vset.pattern.permute.xlu0 1
    %2603 = vperm.xlu0 %2602, %v1029
    %v2604 = vpop.permute.xlu0 %2603
    %2606 = vset.pattern.permute.xlu0 1
    %2607 = vperm.xlu0 %2606, %v1030
    %v2608 = vpop.permute.xlu0 %2607
    %2610 = vset.pattern.permute.xlu0 1
    %2611 = vperm.xlu0 %2610, %v1031
    %v2612 = vpop.permute.xlu0 %2611
    %2614 = vset.pattern.permute.xlu0 1
    %2615 = vperm.xlu0 %2614, %v1032
    %v2616 = vpop.permute.xlu0 %2615
    %2618 = vset.pattern.permute.xlu0 1
    %2619 = vperm.xlu0 %2618, %v1033
    %v2620 = vpop.permute.xlu0 %2619
    %2622 = vset.pattern.permute.xlu0 1
    %2623 = vperm.xlu0 %2622, %v1034
    %v2624 = vpop.permute.xlu0 %2623
    %2626 = vset.pattern.permute.xlu0 1
    %2627 = vperm.xlu0 %2626, %v1035
    %v2628 = vpop.permute.xlu0 %2627
    %2630 = vset.pattern.permute.xlu0 1
    %2631 = vperm.xlu0 %2630, %v1036
    %v2632 = vpop.permute.xlu0 %2631
    %2634 = vset.pattern.permute.xlu0 1
    %2635 = vperm.xlu0 %2634, %v1037
    %v2636 = vpop.permute.xlu0 %2635
    %2638 = vset.pattern.permute.xlu0 1
    %2639 = vperm.xlu0 %2638, %v1038
    %v2640 = vpop.permute.xlu0 %2639
    %2642 = vset.pattern.permute.xlu0 1
    %2643 = vperm.xlu0 %2642, %v1039
    %v2644 = vpop.permute.xlu0 %2643
    %2646 = vset.pattern.permute.xlu0 1
    %2647 = vperm.xlu0 %2646, %v1040
    %v2648 = vpop.permute.xlu0 %2647
    %2650 = vset.pattern.permute.xlu0 1
    %2651 = vperm.xlu0 %2650, %v1041
    %v2652 = vpop.permute.xlu0 %2651
    %2654 = vset.pattern.permute.xlu0 1
    %2655 = vperm.xlu0 %2654, %v1042
    %v2656 = vpop.permute.xlu0 %2655
    %2658 = vset.pattern.permute.xlu0 1
    %2659 = vperm.xlu0 %2658, %v1043
    %v2660 = vpop.permute.xlu0 %2659
    %2662 = vset.pattern.permute.xlu0 1
    %2663 = vperm.xlu0 %2662, %v1044
    %v2664 = vpop.permute.xlu0 %2663
    %2666 = vset.pattern.permute.xlu0 1
    %2667 = vperm.xlu0 %2666, %v1045
    %v2668 = vpop.permute.xlu0 %2667
    %2670 = vset.pattern.permute.xlu0 1
    %2671 = vperm.xlu0 %2670, %v1046
    %v2672 = vpop.permute.xlu0 %2671
    %2674 = vset.pattern.permute.xlu0 1
    %2675 = vperm.xlu0 %2674, %v1047
    %v2676 = vpop.permute.xlu0 %2675
    %2678 = vset.pattern.permute.xlu0 1
    %2679 = vperm.xlu0 %2678, %v1048
    %v2680 = vpop.permute.xlu0 %2679
    %v2682 = vlaneseq
    %v2683 = vshrl.u32 %v2682, 7
    %v2684 = vsub.s32 0, %v2683
    %v2685 = vrot.slane %v2553, %v2684
    %v2686 = vmul.f32 %v2556, %v2685
    %v2687 = vmul.f32 %v2560, %v2685
    %v2688 = vmul.f32 %v2564, %v2685
    %v2689 = vmul.f32 %v2568, %v2685
    %v2690 = vmul.f32 %v2572, %v2685
    %v2691 = vmul.f32 %v2576, %v2685
    %v2692 = vmul.f32 %v2580, %v2685
    %v2693 = vmul.f32 %v2584, %v2685
    %v2694 = vmul.f32 %v2588, %v2685
    %v2695 = vmul.f32 %v2592, %v2685
    %v2696 = vmul.f32 %v2596, %v2685
    %v2697 = vmul.f32 %v2600, %v2685
    %v2698 = vmul.f32 %v2604, %v2685
    %v2699 = vmul.f32 %v2608, %v2685
    %v2700 = vmul.f32 %v2612, %v2685
    %v2701 = vmul.f32 %v2616, %v2685
    %v2702 = vmul.f32 %v2620, %v2685
    %v2703 = vmul.f32 %v2624, %v2685
    %v2704 = vmul.f32 %v2628, %v2685
    %v2705 = vmul.f32 %v2632, %v2685
    %v2706 = vmul.f32 %v2636, %v2685
    %v2707 = vmul.f32 %v2640, %v2685
    %v2708 = vmul.f32 %v2644, %v2685
    %v2709 = vmul.f32 %v2648, %v2685
    %v2710 = vmul.f32 %v2652, %v2685
    %v2711 = vmul.f32 %v2656, %v2685
    %v2712 = vmul.f32 %v2660, %v2685
    %v2713 = vmul.f32 %v2664, %v2685
    %v2714 = vmul.f32 %v2668, %v2685
    %v2715 = vmul.f32 %v2672, %v2685
    %v2716 = vmul.f32 %v2676, %v2685
    %v2717 = vmul.f32 %v2680, %v2685
    %v2718 = vadd.f32 %v2521, %v2686
    %v2719 = vadd.f32 %v2522, %v2687
    %v2720 = vadd.f32 %v2523, %v2688
    %v2721 = vadd.f32 %v2524, %v2689
    %v2722 = vadd.f32 %v2525, %v2690
    %v2723 = vadd.f32 %v2526, %v2691
    %v2724 = vadd.f32 %v2527, %v2692
    %v2725 = vadd.f32 %v2528, %v2693
    %v2726 = vadd.f32 %v2529, %v2694
    %v2727 = vadd.f32 %v2530, %v2695
    %v2728 = vadd.f32 %v2531, %v2696
    %v2729 = vadd.f32 %v2532, %v2697
    %v2730 = vadd.f32 %v2533, %v2698
    %v2731 = vadd.f32 %v2534, %v2699
    %v2732 = vadd.f32 %v2535, %v2700
    %v2733 = vadd.f32 %v2536, %v2701
    %v2734 = vadd.f32 %v2537, %v2702
    %v2735 = vadd.f32 %v2538, %v2703
    %v2736 = vadd.f32 %v2539, %v2704
    %v2737 = vadd.f32 %v2540, %v2705
    %v2738 = vadd.f32 %v2541, %v2706
    %v2739 = vadd.f32 %v2542, %v2707
    %v2740 = vadd.f32 %v2543, %v2708
    %v2741 = vadd.f32 %v2544, %v2709
    %v2742 = vadd.f32 %v2545, %v2710
    %v2743 = vadd.f32 %v2546, %v2711
    %v2744 = vadd.f32 %v2547, %v2712
    %v2745 = vadd.f32 %v2548, %v2713
    %v2746 = vadd.f32 %v2549, %v2714
    %v2747 = vadd.f32 %v2550, %v2715
    %v2748 = vadd.f32 %v2551, %v2716
    %v2749 = vadd.f32 %v2552, %v2717
    %v2750 = vmul.f32 %v1476, %v1407
    %v2751 = vmul.f32 %v1481, %v1407
    %v2752 = vmul.f32 %v1486, %v1407
    %v2753 = vmul.f32 %v1491, %v1407
    %v2754 = vmul.f32 %v1496, %v1407
    %v2755 = vmul.f32 %v1501, %v1407
    %v2756 = vmul.f32 %v1506, %v1407
    %v2757 = vmul.f32 %v1511, %v1407
    %v2758 = vmul.f32 %v1516, %v1407
    %v2759 = vmul.f32 %v1521, %v1407
    %v2760 = vmul.f32 %v1526, %v1407
    %v2761 = vmul.f32 %v1531, %v1407
    %v2762 = vmul.f32 %v1536, %v1407
    %v2763 = vmul.f32 %v1541, %v1407
    %v2764 = vmul.f32 %v1546, %v1407
    %v2765 = vmul.f32 %v1551, %v1407
    %v2766 = vmul.f32 %v1556, %v1407
    %v2767 = vmul.f32 %v1561, %v1407
    %v2768 = vmul.f32 %v1566, %v1407
    %v2769 = vmul.f32 %v1571, %v1407
    %v2770 = vmul.f32 %v1576, %v1407
    %v2771 = vmul.f32 %v1581, %v1407
    %v2772 = vmul.f32 %v1586, %v1407
    %v2773 = vmul.f32 %v1591, %v1407
    %v2774 = vmul.f32 %v1596, %v1407
    %v2775 = vmul.f32 %v1601, %v1407
    %v2776 = vmul.f32 %v1606, %v1407
    %v2777 = vmul.f32 %v1611, %v1407
    %v2778 = vmul.f32 %v1616, %v1407
    %v2779 = vmul.f32 %v1621, %v1407
    %v2780 = vmul.f32 %v1626, %v1407
    %v2781 = vmul.f32 %v1631, %v1407
    %v2782 = vadd.f32 %v1242, %v2750
    %v2783 = vadd.f32 %v1242, %v2751
    %v2784 = vadd.f32 %v1242, %v2752
    %v2785 = vadd.f32 %v1242, %v2753
    %v2786 = vadd.f32 %v1242, %v2754
    %v2787 = vadd.f32 %v1242, %v2755
    %v2788 = vadd.f32 %v1242, %v2756
    %v2789 = vadd.f32 %v1242, %v2757
    %v2790 = vadd.f32 %v1242, %v2758
    %v2791 = vadd.f32 %v1242, %v2759
    %v2792 = vadd.f32 %v1242, %v2760
    %v2793 = vadd.f32 %v1242, %v2761
    %v2794 = vadd.f32 %v1242, %v2762
    %v2795 = vadd.f32 %v1242, %v2763
    %v2796 = vadd.f32 %v1242, %v2764
    %v2797 = vadd.f32 %v1242, %v2765
    %v2798 = vadd.f32 %v1242, %v2766
    %v2799 = vadd.f32 %v1242, %v2767
    %v2800 = vadd.f32 %v1242, %v2768
    %v2801 = vadd.f32 %v1242, %v2769
    %v2802 = vadd.f32 %v1242, %v2770
    %v2803 = vadd.f32 %v1242, %v2771
    %v2804 = vadd.f32 %v1242, %v2772
    %v2805 = vadd.f32 %v1242, %v2773
    %v2806 = vadd.f32 %v1242, %v2774
    %v2807 = vadd.f32 %v1242, %v2775
    %v2808 = vadd.f32 %v1242, %v2776
    %v2809 = vadd.f32 %v1242, %v2777
    %v2810 = vadd.f32 %v1242, %v2778
    %v2811 = vadd.f32 %v1242, %v2779
    %v2812 = vadd.f32 %v1242, %v2780
    %v2813 = vadd.f32 %v1242, %v2781
    %v2814 = vmul.f32 %v1704, %v1636
    %v2815 = vmul.f32 %v1708, %v1636
    %v2816 = vmul.f32 %v1712, %v1636
    %v2817 = vmul.f32 %v1716, %v1636
    %v2818 = vmul.f32 %v1720, %v1636
    %v2819 = vmul.f32 %v1724, %v1636
    %v2820 = vmul.f32 %v1728, %v1636
    %v2821 = vmul.f32 %v1732, %v1636
    %v2822 = vmul.f32 %v1736, %v1636
    %v2823 = vmul.f32 %v1740, %v1636
    %v2824 = vmul.f32 %v1744, %v1636
    %v2825 = vmul.f32 %v1748, %v1636
    %v2826 = vmul.f32 %v1752, %v1636
    %v2827 = vmul.f32 %v1756, %v1636
    %v2828 = vmul.f32 %v1760, %v1636
    %v2829 = vmul.f32 %v1764, %v1636
    %v2830 = vmul.f32 %v1768, %v1636
    %v2831 = vmul.f32 %v1772, %v1636
    %v2832 = vmul.f32 %v1776, %v1636
    %v2833 = vmul.f32 %v1780, %v1636
    %v2834 = vmul.f32 %v1784, %v1636
    %v2835 = vmul.f32 %v1788, %v1636
    %v2836 = vmul.f32 %v1792, %v1636
    %v2837 = vmul.f32 %v1796, %v1636
    %v2838 = vmul.f32 %v1800, %v1636
    %v2839 = vmul.f32 %v1804, %v1636
    %v2840 = vmul.f32 %v1808, %v1636
    %v2841 = vmul.f32 %v1812, %v1636
    %v2842 = vmul.f32 %v1816, %v1636
    %v2843 = vmul.f32 %v1820, %v1636
    %v2844 = vmul.f32 %v1824, %v1636
    %v2845 = vmul.f32 %v1828, %v1636
    %v2846 = vadd.f32 %v2782, %v2814
    %v2847 = vadd.f32 %v2783, %v2815
    %v2848 = vadd.f32 %v2784, %v2816
    %v2849 = vadd.f32 %v2785, %v2817
    %v2850 = vadd.f32 %v2786, %v2818
    %v2851 = vadd.f32 %v2787, %v2819
    %v2852 = vadd.f32 %v2788, %v2820
    %v2853 = vadd.f32 %v2789, %v2821
    %v2854 = vadd.f32 %v2790, %v2822
    %v2855 = vadd.f32 %v2791, %v2823
    %v2856 = vadd.f32 %v2792, %v2824
    %v2857 = vadd.f32 %v2793, %v2825
    %v2858 = vadd.f32 %v2794, %v2826
    %v2859 = vadd.f32 %v2795, %v2827
    %v2860 = vadd.f32 %v2796, %v2828
    %v2861 = vadd.f32 %v2797, %v2829
    %v2862 = vadd.f32 %v2798, %v2830
    %v2863 = vadd.f32 %v2799, %v2831
    %v2864 = vadd.f32 %v2800, %v2832
    %v2865 = vadd.f32 %v2801, %v2833
    %v2866 = vadd.f32 %v2802, %v2834
    %v2867 = vadd.f32 %v2803, %v2835
    %v2868 = vadd.f32 %v2804, %v2836
    %v2869 = vadd.f32 %v2805, %v2837
    %v2870 = vadd.f32 %v2806, %v2838
    %v2871 = vadd.f32 %v2807, %v2839
    %v2872 = vadd.f32 %v2808, %v2840
    %v2873 = vadd.f32 %v2809, %v2841
    %v2874 = vadd.f32 %v2810, %v2842
    %v2875 = vadd.f32 %v2811, %v2843
    %v2876 = vadd.f32 %v2812, %v2844
    %v2877 = vadd.f32 %v2813, %v2845
    %v2878 = vmul.f32 %v1902, %v1833
    %v2879 = vmul.f32 %v1907, %v1833
    %v2880 = vmul.f32 %v1912, %v1833
    %v2881 = vmul.f32 %v1917, %v1833
    %v2882 = vmul.f32 %v1922, %v1833
    %v2883 = vmul.f32 %v1927, %v1833
    %v2884 = vmul.f32 %v1932, %v1833
    %v2885 = vmul.f32 %v1937, %v1833
    %v2886 = vmul.f32 %v1942, %v1833
    %v2887 = vmul.f32 %v1947, %v1833
    %v2888 = vmul.f32 %v1952, %v1833
    %v2889 = vmul.f32 %v1957, %v1833
    %v2890 = vmul.f32 %v1962, %v1833
    %v2891 = vmul.f32 %v1967, %v1833
    %v2892 = vmul.f32 %v1972, %v1833
    %v2893 = vmul.f32 %v1977, %v1833
    %v2894 = vmul.f32 %v1982, %v1833
    %v2895 = vmul.f32 %v1987, %v1833
    %v2896 = vmul.f32 %v1992, %v1833
    %v2897 = vmul.f32 %v1997, %v1833
    %v2898 = vmul.f32 %v2002, %v1833
    %v2899 = vmul.f32 %v2007, %v1833
    %v2900 = vmul.f32 %v2012, %v1833
    %v2901 = vmul.f32 %v2017, %v1833
    %v2902 = vmul.f32 %v2022, %v1833
    %v2903 = vmul.f32 %v2027, %v1833
    %v2904 = vmul.f32 %v2032, %v1833
    %v2905 = vmul.f32 %v2037, %v1833
    %v2906 = vmul.f32 %v2042, %v1833
    %v2907 = vmul.f32 %v2047, %v1833
    %v2908 = vmul.f32 %v2052, %v1833
    %v2909 = vmul.f32 %v2057, %v1833
    %v2910 = vadd.f32 %v2846, %v2878
    %v2911 = vadd.f32 %v2847, %v2879
    %v2912 = vadd.f32 %v2848, %v2880
    %v2913 = vadd.f32 %v2849, %v2881
    %v2914 = vadd.f32 %v2850, %v2882
    %v2915 = vadd.f32 %v2851, %v2883
    %v2916 = vadd.f32 %v2852, %v2884
    %v2917 = vadd.f32 %v2853, %v2885
    %v2918 = vadd.f32 %v2854, %v2886
    %v2919 = vadd.f32 %v2855, %v2887
    %v2920 = vadd.f32 %v2856, %v2888
    %v2921 = vadd.f32 %v2857, %v2889
    %v2922 = vadd.f32 %v2858, %v2890
    %v2923 = vadd.f32 %v2859, %v2891
    %v2924 = vadd.f32 %v2860, %v2892
    %v2925 = vadd.f32 %v2861, %v2893
    %v2926 = vadd.f32 %v2862, %v2894
    %v2927 = vadd.f32 %v2863, %v2895
    %v2928 = vadd.f32 %v2864, %v2896
    %v2929 = vadd.f32 %v2865, %v2897
    %v2930 = vadd.f32 %v2866, %v2898
    %v2931 = vadd.f32 %v2867, %v2899
    %v2932 = vadd.f32 %v2868, %v2900
    %v2933 = vadd.f32 %v2869, %v2901
    %v2934 = vadd.f32 %v2870, %v2902
    %v2935 = vadd.f32 %v2871, %v2903
    %v2936 = vadd.f32 %v2872, %v2904
    %v2937 = vadd.f32 %v2873, %v2905
    %v2938 = vadd.f32 %v2874, %v2906
    %v2939 = vadd.f32 %v2875, %v2907
    %v2940 = vadd.f32 %v2876, %v2908
    %v2941 = vadd.f32 %v2877, %v2909
    %v2942 = vmul.f32 %v2130, %v2062
    %v2943 = vmul.f32 %v2134, %v2062
    %v2944 = vmul.f32 %v2138, %v2062
    %v2945 = vmul.f32 %v2142, %v2062
    %v2946 = vmul.f32 %v2146, %v2062
    %v2947 = vmul.f32 %v2150, %v2062
    %v2948 = vmul.f32 %v2154, %v2062
    %v2949 = vmul.f32 %v2158, %v2062
    %v2950 = vmul.f32 %v2162, %v2062
    %v2951 = vmul.f32 %v2166, %v2062
    %v2952 = vmul.f32 %v2170, %v2062
    %v2953 = vmul.f32 %v2174, %v2062
    %v2954 = vmul.f32 %v2178, %v2062
    %v2955 = vmul.f32 %v2182, %v2062
    %v2956 = vmul.f32 %v2186, %v2062
    %v2957 = vmul.f32 %v2190, %v2062
    %v2958 = vmul.f32 %v2194, %v2062
    %v2959 = vmul.f32 %v2198, %v2062
    %v2960 = vmul.f32 %v2202, %v2062
    %v2961 = vmul.f32 %v2206, %v2062
    %v2962 = vmul.f32 %v2210, %v2062
    %v2963 = vmul.f32 %v2214, %v2062
    %v2964 = vmul.f32 %v2218, %v2062
    %v2965 = vmul.f32 %v2222, %v2062
    %v2966 = vmul.f32 %v2226, %v2062
    %v2967 = vmul.f32 %v2230, %v2062
    %v2968 = vmul.f32 %v2234, %v2062
    %v2969 = vmul.f32 %v2238, %v2062
    %v2970 = vmul.f32 %v2242, %v2062
    %v2971 = vmul.f32 %v2246, %v2062
    %v2972 = vmul.f32 %v2250, %v2062
    %v2973 = vmul.f32 %v2254, %v2062
    %v2974 = vadd.f32 %v2910, %v2942
    %v2975 = vadd.f32 %v2911, %v2943
    %v2976 = vadd.f32 %v2912, %v2944
    %v2977 = vadd.f32 %v2913, %v2945
    %v2978 = vadd.f32 %v2914, %v2946
    %v2979 = vadd.f32 %v2915, %v2947
    %v2980 = vadd.f32 %v2916, %v2948
    %v2981 = vadd.f32 %v2917, %v2949
    %v2982 = vadd.f32 %v2918, %v2950
    %v2983 = vadd.f32 %v2919, %v2951
    %v2984 = vadd.f32 %v2920, %v2952
    %v2985 = vadd.f32 %v2921, %v2953
    %v2986 = vadd.f32 %v2922, %v2954
    %v2987 = vadd.f32 %v2923, %v2955
    %v2988 = vadd.f32 %v2924, %v2956
    %v2989 = vadd.f32 %v2925, %v2957
    %v2990 = vadd.f32 %v2926, %v2958
    %v2991 = vadd.f32 %v2927, %v2959
    %v2992 = vadd.f32 %v2928, %v2960
    %v2993 = vadd.f32 %v2929, %v2961
    %v2994 = vadd.f32 %v2930, %v2962
    %v2995 = vadd.f32 %v2931, %v2963
    %v2996 = vadd.f32 %v2932, %v2964
    %v2997 = vadd.f32 %v2933, %v2965
    %v2998 = vadd.f32 %v2934, %v2966
    %v2999 = vadd.f32 %v2935, %v2967
    %v3000 = vadd.f32 %v2936, %v2968
    %v3001 = vadd.f32 %v2937, %v2969
    %v3002 = vadd.f32 %v2938, %v2970
    %v3003 = vadd.f32 %v2939, %v2971
    %v3004 = vadd.f32 %v2940, %v2972
    %v3005 = vadd.f32 %v2941, %v2973
    %v3006 = vmul.f32 %v2328, %v2259
    %v3007 = vmul.f32 %v2333, %v2259
    %v3008 = vmul.f32 %v2338, %v2259
    %v3009 = vmul.f32 %v2343, %v2259
    %v3010 = vmul.f32 %v2348, %v2259
    %v3011 = vmul.f32 %v2353, %v2259
    %v3012 = vmul.f32 %v2358, %v2259
    %v3013 = vmul.f32 %v2363, %v2259
    %v3014 = vmul.f32 %v2368, %v2259
    %v3015 = vmul.f32 %v2373, %v2259
    %v3016 = vmul.f32 %v2378, %v2259
    %v3017 = vmul.f32 %v2383, %v2259
    %v3018 = vmul.f32 %v2388, %v2259
    %v3019 = vmul.f32 %v2393, %v2259
    %v3020 = vmul.f32 %v2398, %v2259
    %v3021 = vmul.f32 %v2403, %v2259
    %v3022 = vmul.f32 %v2408, %v2259
    %v3023 = vmul.f32 %v2413, %v2259
    %v3024 = vmul.f32 %v2418, %v2259
    %v3025 = vmul.f32 %v2423, %v2259
    %v3026 = vmul.f32 %v2428, %v2259
    %v3027 = vmul.f32 %v2433, %v2259
    %v3028 = vmul.f32 %v2438, %v2259
    %v3029 = vmul.f32 %v2443, %v2259
    %v3030 = vmul.f32 %v2448, %v2259
    %v3031 = vmul.f32 %v2453, %v2259
    %v3032 = vmul.f32 %v2458, %v2259
    %v3033 = vmul.f32 %v2463, %v2259
    %v3034 = vmul.f32 %v2468, %v2259
    %v3035 = vmul.f32 %v2473, %v2259
    %v3036 = vmul.f32 %v2478, %v2259
    %v3037 = vmul.f32 %v2483, %v2259
    %v3038 = vadd.f32 %v2974, %v3006
    %v3039 = vadd.f32 %v2975, %v3007
    %v3040 = vadd.f32 %v2976, %v3008
    %v3041 = vadd.f32 %v2977, %v3009
    %v3042 = vadd.f32 %v2978, %v3010
    %v3043 = vadd.f32 %v2979, %v3011
    %v3044 = vadd.f32 %v2980, %v3012
    %v3045 = vadd.f32 %v2981, %v3013
    %v3046 = vadd.f32 %v2982, %v3014
    %v3047 = vadd.f32 %v2983, %v3015
    %v3048 = vadd.f32 %v2984, %v3016
    %v3049 = vadd.f32 %v2985, %v3017
    %v3050 = vadd.f32 %v2986, %v3018
    %v3051 = vadd.f32 %v2987, %v3019
    %v3052 = vadd.f32 %v2988, %v3020
    %v3053 = vadd.f32 %v2989, %v3021
    %v3054 = vadd.f32 %v2990, %v3022
    %v3055 = vadd.f32 %v2991, %v3023
    %v3056 = vadd.f32 %v2992, %v3024
    %v3057 = vadd.f32 %v2993, %v3025
    %v3058 = vadd.f32 %v2994, %v3026
    %v3059 = vadd.f32 %v2995, %v3027
    %v3060 = vadd.f32 %v2996, %v3028
    %v3061 = vadd.f32 %v2997, %v3029
    %v3062 = vadd.f32 %v2998, %v3030
    %v3063 = vadd.f32 %v2999, %v3031
    %v3064 = vadd.f32 %v3000, %v3032
    %v3065 = vadd.f32 %v3001, %v3033
    %v3066 = vadd.f32 %v3002, %v3034
    %v3067 = vadd.f32 %v3003, %v3035
    %v3068 = vadd.f32 %v3004, %v3036
    %v3069 = vadd.f32 %v3005, %v3037
    %v3070 = vmul.f32 %v2556, %v2488
    %v3071 = vmul.f32 %v2560, %v2488
    %v3072 = vmul.f32 %v2564, %v2488
    %v3073 = vmul.f32 %v2568, %v2488
    %v3074 = vmul.f32 %v2572, %v2488
    %v3075 = vmul.f32 %v2576, %v2488
    %v3076 = vmul.f32 %v2580, %v2488
    %v3077 = vmul.f32 %v2584, %v2488
    %v3078 = vmul.f32 %v2588, %v2488
    %v3079 = vmul.f32 %v2592, %v2488
    %v3080 = vmul.f32 %v2596, %v2488
    %v3081 = vmul.f32 %v2600, %v2488
    %v3082 = vmul.f32 %v2604, %v2488
    %v3083 = vmul.f32 %v2608, %v2488
    %v3084 = vmul.f32 %v2612, %v2488
    %v3085 = vmul.f32 %v2616, %v2488
    %v3086 = vmul.f32 %v2620, %v2488
    %v3087 = vmul.f32 %v2624, %v2488
    %v3088 = vmul.f32 %v2628, %v2488
    %v3089 = vmul.f32 %v2632, %v2488
    %v3090 = vmul.f32 %v2636, %v2488
    %v3091 = vmul.f32 %v2640, %v2488
    %v3092 = vmul.f32 %v2644, %v2488
    %v3093 = vmul.f32 %v2648, %v2488
    %v3094 = vmul.f32 %v2652, %v2488
    %v3095 = vmul.f32 %v2656, %v2488
    %v3096 = vmul.f32 %v2660, %v2488
    %v3097 = vmul.f32 %v2664, %v2488
    %v3098 = vmul.f32 %v2668, %v2488
    %v3099 = vmul.f32 %v2672, %v2488
    %v3100 = vmul.f32 %v2676, %v2488
    %v3101 = vmul.f32 %v2680, %v2488
    %v3102 = vadd.f32 %v3038, %v3070
    %v3103 = vadd.f32 %v3039, %v3071
    %v3104 = vadd.f32 %v3040, %v3072
    %v3105 = vadd.f32 %v3041, %v3073
    %v3106 = vadd.f32 %v3042, %v3074
    %v3107 = vadd.f32 %v3043, %v3075
    %v3108 = vadd.f32 %v3044, %v3076
    %v3109 = vadd.f32 %v3045, %v3077
    %v3110 = vadd.f32 %v3046, %v3078
    %v3111 = vadd.f32 %v3047, %v3079
    %v3112 = vadd.f32 %v3048, %v3080
    %v3113 = vadd.f32 %v3049, %v3081
    %v3114 = vadd.f32 %v3050, %v3082
    %v3115 = vadd.f32 %v3051, %v3083
    %v3116 = vadd.f32 %v3052, %v3084
    %v3117 = vadd.f32 %v3053, %v3085
    %v3118 = vadd.f32 %v3054, %v3086
    %v3119 = vadd.f32 %v3055, %v3087
    %v3120 = vadd.f32 %v3056, %v3088
    %v3121 = vadd.f32 %v3057, %v3089
    %v3122 = vadd.f32 %v3058, %v3090
    %v3123 = vadd.f32 %v3059, %v3091
    %v3124 = vadd.f32 %v3060, %v3092
    %v3125 = vadd.f32 %v3061, %v3093
    %v3126 = vadd.f32 %v3062, %v3094
    %v3127 = vadd.f32 %v3063, %v3095
    %v3128 = vadd.f32 %v3064, %v3096
    %v3129 = vadd.f32 %v3065, %v3097
    %v3130 = vadd.f32 %v3066, %v3098
    %v3131 = vadd.f32 %v3067, %v3099
    %v3132 = vadd.f32 %v3068, %v3100
    %v3133 = vadd.f32 %v3069, %v3101
    %3135 = vset.pattern.permute.xlu0 0
    %3136 = vperm.xlu0 %3135, %v1210
    %v3137 = vpop.permute.xlu0 %3136
    %3140 = vset.pattern.permute.xlu0 0
    %3141 = vperm.xlu0 %3140, %v1211
    %v3142 = vpop.permute.xlu0 %3141
    %3145 = vset.pattern.permute.xlu0 0
    %3146 = vperm.xlu0 %3145, %v1212
    %v3147 = vpop.permute.xlu0 %3146
    %3150 = vset.pattern.permute.xlu0 0
    %3151 = vperm.xlu0 %3150, %v1213
    %v3152 = vpop.permute.xlu0 %3151
    %3155 = vset.pattern.permute.xlu0 0
    %3156 = vperm.xlu0 %3155, %v1214
    %v3157 = vpop.permute.xlu0 %3156
    %3160 = vset.pattern.permute.xlu0 0
    %3161 = vperm.xlu0 %3160, %v1215
    %v3162 = vpop.permute.xlu0 %3161
    %3165 = vset.pattern.permute.xlu0 0
    %3166 = vperm.xlu0 %3165, %v1216
    %v3167 = vpop.permute.xlu0 %3166
    %3170 = vset.pattern.permute.xlu0 0
    %3171 = vperm.xlu0 %3170, %v1217
    %v3172 = vpop.permute.xlu0 %3171
    %3175 = vset.pattern.permute.xlu0 0
    %3176 = vperm.xlu0 %3175, %v1218
    %v3177 = vpop.permute.xlu0 %3176
    %3180 = vset.pattern.permute.xlu0 0
    %3181 = vperm.xlu0 %3180, %v1219
    %v3182 = vpop.permute.xlu0 %3181
    %3185 = vset.pattern.permute.xlu0 0
    %3186 = vperm.xlu0 %3185, %v1220
    %v3187 = vpop.permute.xlu0 %3186
    %3190 = vset.pattern.permute.xlu0 0
    %3191 = vperm.xlu0 %3190, %v1221
    %v3192 = vpop.permute.xlu0 %3191
    %3195 = vset.pattern.permute.xlu0 0
    %3196 = vperm.xlu0 %3195, %v1222
    %v3197 = vpop.permute.xlu0 %3196
    %3200 = vset.pattern.permute.xlu0 0
    %3201 = vperm.xlu0 %3200, %v1223
    %v3202 = vpop.permute.xlu0 %3201
    %3205 = vset.pattern.permute.xlu0 0
    %3206 = vperm.xlu0 %3205, %v1224
    %v3207 = vpop.permute.xlu0 %3206
    %3210 = vset.pattern.permute.xlu0 0
    %3211 = vperm.xlu0 %3210, %v1225
    %v3212 = vpop.permute.xlu0 %3211
    %3215 = vset.pattern.permute.xlu0 0
    %3216 = vperm.xlu0 %3215, %v1226
    %v3217 = vpop.permute.xlu0 %3216
    %3220 = vset.pattern.permute.xlu0 0
    %3221 = vperm.xlu0 %3220, %v1227
    %v3222 = vpop.permute.xlu0 %3221
    %3225 = vset.pattern.permute.xlu0 0
    %3226 = vperm.xlu0 %3225, %v1228
    %v3227 = vpop.permute.xlu0 %3226
    %3230 = vset.pattern.permute.xlu0 0
    %3231 = vperm.xlu0 %3230, %v1229
    %v3232 = vpop.permute.xlu0 %3231
    %3235 = vset.pattern.permute.xlu0 0
    %3236 = vperm.xlu0 %3235, %v1230
    %v3237 = vpop.permute.xlu0 %3236
    %3240 = vset.pattern.permute.xlu0 0
    %3241 = vperm.xlu0 %3240, %v1231
    %v3242 = vpop.permute.xlu0 %3241
    %3245 = vset.pattern.permute.xlu0 0
    %3246 = vperm.xlu0 %3245, %v1232
    %v3247 = vpop.permute.xlu0 %3246
    %3250 = vset.pattern.permute.xlu0 0
    %3251 = vperm.xlu0 %3250, %v1233
    %v3252 = vpop.permute.xlu0 %3251
    %3255 = vset.pattern.permute.xlu0 0
    %3256 = vperm.xlu0 %3255, %v1234
    %v3257 = vpop.permute.xlu0 %3256
    %3260 = vset.pattern.permute.xlu0 0
    %3261 = vperm.xlu0 %3260, %v1235
    %v3262 = vpop.permute.xlu0 %3261
    %3265 = vset.pattern.permute.xlu0 0
    %3266 = vperm.xlu0 %3265, %v1236
    %v3267 = vpop.permute.xlu0 %3266
    %3270 = vset.pattern.permute.xlu0 0
    %3271 = vperm.xlu0 %3270, %v1237
    %v3272 = vpop.permute.xlu0 %3271
    %3275 = vset.pattern.permute.xlu0 0
    %3276 = vperm.xlu0 %3275, %v1238
    %v3277 = vpop.permute.xlu0 %3276
    %3280 = vset.pattern.permute.xlu0 0
    %3281 = vperm.xlu0 %3280, %v1239
    %v3282 = vpop.permute.xlu0 %3281
    %3285 = vset.pattern.permute.xlu0 0
    %3286 = vperm.xlu0 %3285, %v1240
    %v3287 = vpop.permute.xlu0 %3286
    %3290 = vset.pattern.permute.xlu0 0
    %3291 = vperm.xlu0 %3290, %v1241
    %v3292 = vpop.permute.xlu0 %3291
    %v3294 = vmul.f32 %v3137, %v2685
    %v3295 = vmul.f32 %v3142, %v2685
    %v3296 = vmul.f32 %v3147, %v2685
    %v3297 = vmul.f32 %v3152, %v2685
    %v3298 = vmul.f32 %v3157, %v2685
    %v3299 = vmul.f32 %v3162, %v2685
    %v3300 = vmul.f32 %v3167, %v2685
    %v3301 = vmul.f32 %v3172, %v2685
    %v3302 = vmul.f32 %v3177, %v2685
    %v3303 = vmul.f32 %v3182, %v2685
    %v3304 = vmul.f32 %v3187, %v2685
    %v3305 = vmul.f32 %v3192, %v2685
    %v3306 = vmul.f32 %v3197, %v2685
    %v3307 = vmul.f32 %v3202, %v2685
    %v3308 = vmul.f32 %v3207, %v2685
    %v3309 = vmul.f32 %v3212, %v2685
    %v3310 = vmul.f32 %v3217, %v2685
    %v3311 = vmul.f32 %v3222, %v2685
    %v3312 = vmul.f32 %v3227, %v2685
    %v3313 = vmul.f32 %v3232, %v2685
    %v3314 = vmul.f32 %v3237, %v2685
    %v3315 = vmul.f32 %v3242, %v2685
    %v3316 = vmul.f32 %v3247, %v2685
    %v3317 = vmul.f32 %v3252, %v2685
    %v3318 = vmul.f32 %v3257, %v2685
    %v3319 = vmul.f32 %v3262, %v2685
    %v3320 = vmul.f32 %v3267, %v2685
    %v3321 = vmul.f32 %v3272, %v2685
    %v3322 = vmul.f32 %v3277, %v2685
    %v3323 = vmul.f32 %v3282, %v2685
    %v3324 = vmul.f32 %v3287, %v2685
    %v3325 = vmul.f32 %v3292, %v2685
    %v3326 = vadd.f32 %v3102, %v3294
    %v3327 = vadd.f32 %v3103, %v3295
    %v3328 = vadd.f32 %v3104, %v3296
    %v3329 = vadd.f32 %v3105, %v3297
    %v3330 = vadd.f32 %v3106, %v3298
    %v3331 = vadd.f32 %v3107, %v3299
    %v3332 = vadd.f32 %v3108, %v3300
    %v3333 = vadd.f32 %v3109, %v3301
    %v3334 = vadd.f32 %v3110, %v3302
    %v3335 = vadd.f32 %v3111, %v3303
    %v3336 = vadd.f32 %v3112, %v3304
    %v3337 = vadd.f32 %v3113, %v3305
    %v3338 = vadd.f32 %v3114, %v3306
    %v3339 = vadd.f32 %v3115, %v3307
    %v3340 = vadd.f32 %v3116, %v3308
    %v3341 = vadd.f32 %v3117, %v3309
    %v3342 = vadd.f32 %v3118, %v3310
    %v3343 = vadd.f32 %v3119, %v3311
    %v3344 = vadd.f32 %v3120, %v3312
    %v3345 = vadd.f32 %v3121, %v3313
    %v3346 = vadd.f32 %v3122, %v3314
    %v3347 = vadd.f32 %v3123, %v3315
    %v3348 = vadd.f32 %v3124, %v3316
    %v3349 = vadd.f32 %v3125, %v3317
    %v3350 = vadd.f32 %v3126, %v3318
    %v3351 = vadd.f32 %v3127, %v3319
    %v3352 = vadd.f32 %v3128, %v3320
    %v3353 = vadd.f32 %v3129, %v3321
    %v3354 = vadd.f32 %v3130, %v3322
    %v3355 = vadd.f32 %v3131, %v3323
    %v3356 = vadd.f32 %v3132, %v3324
    %v3357 = vadd.f32 %v3133, %v3325
    %v3358 = vmax.f32 %v2718, %v3326
    %v3359 = vmax.f32 %v2719, %v3327
    %v3360 = vmax.f32 %v2720, %v3328
    %v3361 = vmax.f32 %v2721, %v3329
    %v3362 = vmax.f32 %v2722, %v3330
    %v3363 = vmax.f32 %v2723, %v3331
    %v3364 = vmax.f32 %v2724, %v3332
    %v3365 = vmax.f32 %v2725, %v3333
    %v3366 = vmax.f32 %v2726, %v3334
    %v3367 = vmax.f32 %v2727, %v3335
    %v3368 = vmax.f32 %v2728, %v3336
    %v3369 = vmax.f32 %v2729, %v3337
    %v3370 = vmax.f32 %v2730, %v3338
    %v3371 = vmax.f32 %v2731, %v3339
    %v3372 = vmax.f32 %v2732, %v3340
    %v3373 = vmax.f32 %v2733, %v3341
    %v3374 = vmax.f32 %v2734, %v3342
    %v3375 = vmax.f32 %v2735, %v3343
    %v3376 = vmax.f32 %v2736, %v3344
    %v3377 = vmax.f32 %v2737, %v3345
    %v3378 = vmax.f32 %v2738, %v3346
    %v3379 = vmax.f32 %v2739, %v3347
    %v3380 = vmax.f32 %v2740, %v3348
    %v3381 = vmax.f32 %v2741, %v3349
    %v3382 = vmax.f32 %v2742, %v3350
    %v3383 = vmax.f32 %v2743, %v3351
    %v3384 = vmax.f32 %v2744, %v3352
    %v3385 = vmax.f32 %v2745, %v3353
    %v3386 = vmax.f32 %v2746, %v3354
    %v3387 = vmax.f32 %v2747, %v3355
    %v3388 = vmax.f32 %v2748, %v3356
    %v3389 = vmax.f32 %v2749, %v3357
    %v3390 = vmax.f32 %v3358, 0.0
    %v3391 = vmax.f32 %v3359, 0.0
    %v3392 = vmax.f32 %v3360, 0.0
    %v3393 = vmax.f32 %v3361, 0.0
    %v3394 = vmax.f32 %v3362, 0.0
    %v3395 = vmax.f32 %v3363, 0.0
    %v3396 = vmax.f32 %v3364, 0.0
    %v3397 = vmax.f32 %v3365, 0.0
    %v3398 = vmax.f32 %v3366, 0.0
    %v3399 = vmax.f32 %v3367, 0.0
    %v3400 = vmax.f32 %v3368, 0.0
    %v3401 = vmax.f32 %v3369, 0.0
    %v3402 = vmax.f32 %v3370, 0.0
    %v3403 = vmax.f32 %v3371, 0.0
    %v3404 = vmax.f32 %v3372, 0.0
    %v3405 = vmax.f32 %v3373, 0.0
    %v3406 = vmax.f32 %v3374, 0.0
    %v3407 = vmax.f32 %v3375, 0.0
    %v3408 = vmax.f32 %v3376, 0.0
    %v3409 = vmax.f32 %v3377, 0.0
    %v3410 = vmax.f32 %v3378, 0.0
    %v3411 = vmax.f32 %v3379, 0.0
    %v3412 = vmax.f32 %v3380, 0.0
    %v3413 = vmax.f32 %v3381, 0.0
    %v3414 = vmax.f32 %v3382, 0.0
    %v3415 = vmax.f32 %v3383, 0.0
    %v3416 = vmax.f32 %v3384, 0.0
    %v3417 = vmax.f32 %v3385, 0.0
    %v3418 = vmax.f32 %v3386, 0.0
    %v3419 = vmax.f32 %v3387, 0.0
    %v3420 = vmax.f32 %v3388, 0.0
    %v3421 = vmax.f32 %v3389, 0.0
    %v3422 = vrot.slane %v3390, 7
    %v3423 = vrot.slane %v3391, 7
    %v3424 = vrot.slane %v3392, 7
    %v3425 = vrot.slane %v3393, 7
    %v3426 = vrot.slane %v3394, 7
    %v3427 = vrot.slane %v3395, 7
    %v3428 = vrot.slane %v3396, 7
    %v3429 = vrot.slane %v3397, 7
    %v3430 = vrot.slane %v3398, 7
    %v3431 = vrot.slane %v3399, 7
    %v3432 = vrot.slane %v3400, 7
    %v3433 = vrot.slane %v3401, 7
    %v3434 = vrot.slane %v3402, 7
    %v3435 = vrot.slane %v3403, 7
    %v3436 = vrot.slane %v3404, 7
    %v3437 = vrot.slane %v3405, 7
    %v3438 = vrot.slane %v3406, 7
    %v3439 = vrot.slane %v3407, 7
    %v3440 = vrot.slane %v3408, 7
    %v3441 = vrot.slane %v3409, 7
    %v3442 = vrot.slane %v3410, 7
    %v3443 = vrot.slane %v3411, 7
    %v3444 = vrot.slane %v3412, 7
    %v3445 = vrot.slane %v3413, 7
    %v3446 = vrot.slane %v3414, 7
    %v3447 = vrot.slane %v3415, 7
    %v3448 = vrot.slane %v3416, 7
    %v3449 = vrot.slane %v3417, 7
    %v3450 = vrot.slane %v3418, 7
    %v3451 = vrot.slane %v3419, 7
    %v3452 = vrot.slane %v3420, 7
    %v3453 = vrot.slane %v3421, 7
    %v3454 = vsel %vm727, %v3452, %v3453
    %v3455 = vsel %vm727, %v3451, %v3452
    %v3456 = vsel %vm727, %v3450, %v3451
    %v3457 = vsel %vm727, %v3449, %v3450
    %v3458 = vsel %vm727, %v3448, %v3449
    %v3459 = vsel %vm727, %v3447, %v3448
    %v3460 = vsel %vm727, %v3446, %v3447
    %v3461 = vsel %vm727, %v3445, %v3446
    %v3462 = vsel %vm727, %v3444, %v3445
    %v3463 = vsel %vm727, %v3443, %v3444
    %v3464 = vsel %vm727, %v3442, %v3443
    %v3465 = vsel %vm727, %v3441, %v3442
    %v3466 = vsel %vm727, %v3440, %v3441
    %v3467 = vsel %vm727, %v3439, %v3440
    %v3468 = vsel %vm727, %v3438, %v3439
    %v3469 = vsel %vm727, %v3437, %v3438
    %v3470 = vsel %vm727, %v3436, %v3437
    %v3471 = vsel %vm727, %v3435, %v3436
    %v3472 = vsel %vm727, %v3434, %v3435
    %v3473 = vsel %vm727, %v3433, %v3434
    %v3474 = vsel %vm727, %v3432, %v3433
    %v3475 = vsel %vm727, %v3431, %v3432
    %v3476 = vsel %vm727, %v3430, %v3431
    %v3477 = vsel %vm727, %v3429, %v3430
    %v3478 = vsel %vm727, %v3428, %v3429
    %v3479 = vsel %vm727, %v3427, %v3428
    %v3480 = vsel %vm727, %v3426, %v3427
    %v3481 = vsel %vm727, %v3425, %v3426
    %v3482 = vsel %vm727, %v3424, %v3425
    %v3483 = vsel %vm727, %v3423, %v3424
    %v3484 = vsel %vm727, %v3422, %v3423
    %v3485 = vsel %vm727, %v3453, %v3422
    %v3486 = vsel %vm792, %v3485, 0.0
    %v3487 = vsel %vm793, %v3484, 0.0
    %v3488 = vsel %vm794, %v3483, 0.0
    %v3489 = vsel %vm795, %v3482, 0.0
    %v3490 = vsel %vm796, %v3481, 0.0
    %v3491 = vsel %vm797, %v3480, 0.0
    %v3492 = vsel %vm798, %v3479, 0.0
    %v3493 = vsel %vm799, %v3478, 0.0
    %v3494 = vsel %vm800, %v3477, 0.0
    %v3495 = vsel %vm801, %v3476, 0.0
    %v3496 = vsel %vm802, %v3475, 0.0
    %v3497 = vsel %vm803, %v3474, 0.0
    %v3498 = vsel %vm804, %v3473, 0.0
    %v3499 = vsel %vm805, %v3472, 0.0
    %v3500 = vsel %vm806, %v3471, 0.0
    %v3501 = vsel %vm807, %v3470, 0.0
    %v3502 = vsel %vm808, %v3469, 0.0
    %v3503 = vsel %vm809, %v3468, 0.0
    %v3504 = vsel %vm810, %v3467, 0.0
    %v3505 = vsel %vm811, %v3466, 0.0
    %v3506 = vsel %vm812, %v3465, 0.0
    %v3507 = vsel %vm813, %v3464, 0.0
    %v3508 = vsel %vm814, %v3463, 0.0
    %v3509 = vsel %vm815, %v3462, 0.0
    %v3510 = vsel %vm816, %v3461, 0.0
    %v3511 = vsel %vm817, %v3460, 0.0
    %v3512 = vsel %vm818, %v3459, 0.0
    %v3513 = vsel %vm819, %v3458, 0.0
    %v3514 = vsel %vm820, %v3457, 0.0
    %v3515 = vsel %vm821, %v3456, 0.0
    %v3516 = vsel %vm822, %v3455, 0.0
    %v3517 = vsel %vm823, %v3454, 0.0
    %v3518 = vld [vmem:[%s2 + $0x8] sm:$0xff]
    %v3519 = vld [vmem:[%s2 + $0x10] sm:$0xff]
    %v3520 = vld [vmem:[%s2 + $0x18] sm:$0xff]
    %v3521 = vld [vmem:[%s2 + $0x20] sm:$0xff]
    %vm3522 = vcmask 130048
    %v3524 = vsel %vm3522, %v3390, 0
    %v3527 = vsel %vm3522, %v3391, 0
    %v3530 = vsel %vm3522, %v3392, 0
    %v3533 = vsel %vm3522, %v3393, 0
    %v3536 = vsel %vm3522, %v3394, 0
    %v3539 = vsel %vm3522, %v3395, 0
    %v3542 = vsel %vm3522, %v3396, 0
    %v3545 = vsel %vm3522, %v3397, 0
    %v3548 = vsel %vm3522, %v3398, 0
    %v3551 = vsel %vm3522, %v3399, 0
    %v3554 = vsel %vm3522, %v3400, 0
    %v3557 = vsel %vm3522, %v3401, 0
    %v3560 = vsel %vm3522, %v3402, 0
    %v3563 = vsel %vm3522, %v3403, 0
    %v3566 = vsel %vm3522, %v3404, 0
    %v3569 = vsel %vm3522, %v3405, 0
    %v3572 = vsel %vm3522, %v3406, 0
    %v3575 = vsel %vm3522, %v3407, 0
    %v3578 = vsel %vm3522, %v3408, 0
    %v3581 = vsel %vm3522, %v3409, 0
    %v3584 = vsel %vm3522, %v3410, 0
    %v3587 = vsel %vm3522, %v3411, 0
    %v3590 = vsel %vm3522, %v3412, 0
    %v3593 = vsel %vm3522, %v3413, 0
    %v3596 = vsel %vm3522, %v3414, 0
    %v3599 = vsel %vm3522, %v3415, 0
    %v3602 = vsel %vm3522, %v3416, 0
    %v3605 = vsel %vm3522, %v3417, 0
    %v3608 = vsel %vm3522, %v3418, 0
    %v3611 = vsel %vm3522, %v3419, 0
    %v3614 = vsel %vm3522, %v3420, 0
    %v3617 = vsel %vm3522, %v3421, 0
    %3619 = vmatprep.subr.mxu0 0.0
    %3620 = vmatpush1.msra.mxu0 %v3520
    %3621 = vmatprep.subr.mxu0 0.0
    %3622 = vmatpush1.msra.mxu0 %v3521
    %3623 = vmatprep.subr.mxu0 0.0
    %3624 = vmatpush1.msra.mxu0 0.0
    %3625 = vmatprep.subr.mxu0 0.0
    %3626 = vmatpush1.msra.mxu0 0.0
    %3627 = vmatprep.subr.mxu0 0.0
    %3628 = vmatpush1.msra.mxu0 0.0
    %3629 = vmatprep.subr.mxu0 0.0
    %3630 = vmatpush1.msra.mxu0 0.0
    %3631 = vmatprep.subr.mxu0 0.0
    %3632 = vmatpush1.msra.mxu0 0.0
    %3633 = vmatprep.subr.mxu0 0.0
    %3634 = vmatpush1.msra.mxu0 0.0
    %3635 = vmatprep.subr.mxu0 0.0
    %3636 = vmatpush1.msra.mxu0 0.0
    %3637 = vmatprep.subr.mxu0 0.0
    %3638 = vmatpush1.msra.mxu0 0.0
    %3639 = vmatprep.subr.mxu0 0.0
    %3640 = vmatpush1.msra.mxu0 0.0
    %3641 = vmatprep.subr.mxu0 0.0
    %3642 = vmatpush1.msra.mxu0 0.0
    %3643 = vmatprep.subr.mxu0 0.0
    %3644 = vmatpush1.msra.mxu0 0.0
    %3645 = vmatprep.subr.mxu0 0.0
    %3646 = vmatpush1.msra.mxu0 0.0
    %3647 = vmatprep.subr.mxu0 0.0
    %3648 = vmatpush1.msra.mxu0 0.0
    %3649 = vmatprep.subr.mxu0 0.0
    %3650 = vmatpush1.msra.mxu0 0.0
    %3651 = vmatprep.subr.mxu0 0.0
    %3652 = vmatpush1.msra.mxu0 0.0
    %3653 = vmatprep.subr.mxu0 0.0
    %3654 = vmatpush1.msra.mxu0 0.0
    %3655 = vmatprep.subr.mxu0 0.0
    %3656 = vmatpush1.msra.mxu0 0.0
    %3657 = vmatprep.subr.mxu0 0.0
    %3658 = vmatpush1.msra.mxu0 0.0
    %3659 = vmatprep.subr.mxu0 0.0
    %3660 = vmatpush1.msra.mxu0 0.0
    %3661 = vmatprep.subr.mxu0 0.0
    %3662 = vmatpush1.msra.mxu0 0.0
    %3663 = vmatprep.subr.mxu0 0.0
    %3664 = vmatpush1.msra.mxu0 0.0
    %3665 = vmatprep.subr.mxu0 0.0
    %3666 = vmatpush1.msra.mxu0 0.0
    %3667 = vmatprep.subr.mxu0 0.0
    %3668 = vmatpush1.msra.mxu0 0.0
    %3669 = vmatprep.subr.mxu0 0.0
    %3670 = vmatpush1.msra.mxu0 0.0
    %3671 = vmatprep.subr.mxu0 0.0
    %3672 = vmatpush1.msra.mxu0 0.0
    %3673 = vmatprep.subr.mxu0 0.0
    %3674 = vmatpush1.msra.mxu0 0.0
    %3675 = vmatprep.subr.mxu0 0.0
    %3676 = vmatpush1.msra.mxu0 0.0
    %3677 = vmatprep.subr.mxu0 0.0
    %3678 = vmatpush1.msra.mxu0 0.0
    %3679 = vmatprep.subr.mxu0 0.0
    %3680 = vmatpush1.msra.mxu0 0.0
    %3681 = vmatprep.subr.mxu0 0.0
    %3682 = vmatpush1.msra.mxu0 0.0
    %3683 = vmatprep.mubr.f32.mxu0 0.0
    %3684 = vmatmul.mubr.f32.gmra.mrb[0].mxu0 %v3524
    %v3685 = vpop.f32.mrb[0].mxu0
    %v3686 = vadd.f32 0.0, %v3685
    %v3687 = vpop.f32.mrb[0].mxu0
    %3688 = vmatprep.mubr.f32.mxu0 0.0
    %3689 = vmatmul.mubr.f32.gmra.mrb[0].mxu0 %v3527
    %v3690 = vpop.f32.mrb[0].mxu0
    %v3691 = vadd.f32 0.0, %v3690
    %v3692 = vpop.f32.mrb[0].mxu0
    %3693 = vmatprep.mubr.f32.mxu0 0.0
    %3694 = vmatmul.mubr.f32.gmra.mrb[0].mxu0 %v3530
    %v3695 = vpop.f32.mrb[0].mxu0
    %v3696 = vadd.f32 0.0, %v3695
    %v3697 = vpop.f32.mrb[0].mxu0
    %3698 = vmatprep.mubr.f32.mxu0 0.0
    %3699 = vmatmul.mubr.f32.gmra.mrb[0].mxu0 %v3533
    %v3700 = vpop.f32.mrb[0].mxu0
    %v3701 = vadd.f32 0.0, %v3700
    %v3702 = vpop.f32.mrb[0].mxu0
    %3703 = vmatprep.mubr.f32.mxu0 0.0
    %3704 = vmatmul.mubr.f32.gmra.mrb[0].mxu0 %v3536
    %v3705 = vpop.f32.mrb[0].mxu0
    %v3706 = vadd.f32 0.0, %v3705
    %v3707 = vpop.f32.mrb[0].mxu0
    %3708 = vmatprep.mubr.f32.mxu0 0.0
    %3709 = vmatmul.mubr.f32.gmra.mrb[0].mxu0 %v3539
    %v3710 = vpop.f32.mrb[0].mxu0
    %v3711 = vadd.f32 0.0, %v3710
    %v3712 = vpop.f32.mrb[0].mxu0
    %3713 = vmatprep.mubr.f32.mxu0 0.0
    %3714 = vmatmul.mubr.f32.gmra.mrb[0].mxu0 %v3542
    %v3715 = vpop.f32.mrb[0].mxu0
    %v3716 = vadd.f32 0.0, %v3715
    %v3717 = vpop.f32.mrb[0].mxu0
    %3718 = vmatprep.mubr.f32.mxu0 0.0
    %3719 = vmatmul.mubr.f32.gmra.mrb[0].mxu0 %v3545
    %v3720 = vpop.f32.mrb[0].mxu0
    %v3721 = vadd.f32 0.0, %v3720
    %v3722 = vpop.f32.mrb[0].mxu0
    %3723 = vmatprep.mubr.f32.mxu0 0.0
    %3724 = vmatmul.mubr.f32.gmra.mrb[0].mxu0 %v3548
    %v3725 = vpop.f32.mrb[0].mxu0
    %v3726 = vadd.f32 0.0, %v3725
    %v3727 = vpop.f32.mrb[0].mxu0
    %3728 = vmatprep.mubr.f32.mxu0 0.0
    %3729 = vmatmul.mubr.f32.gmra.mrb[0].mxu0 %v3551
    %v3730 = vpop.f32.mrb[0].mxu0
    %v3731 = vadd.f32 0.0, %v3730
    %v3732 = vpop.f32.mrb[0].mxu0
    %3733 = vmatprep.mubr.f32.mxu0 0.0
    %3734 = vmatmul.mubr.f32.gmra.mrb[0].mxu0 %v3554
    %v3735 = vpop.f32.mrb[0].mxu0
    %v3736 = vadd.f32 0.0, %v3735
    %v3737 = vpop.f32.mrb[0].mxu0
    %3738 = vmatprep.mubr.f32.mxu0 0.0
    %3739 = vmatmul.mubr.f32.gmra.mrb[0].mxu0 %v3557
    %v3740 = vpop.f32.mrb[0].mxu0
    %v3741 = vadd.f32 0.0, %v3740
    %v3742 = vpop.f32.mrb[0].mxu0
    %3743 = vmatprep.mubr.f32.mxu0 0.0
    %3744 = vmatmul.mubr.f32.gmra.mrb[0].mxu0 %v3560
    %v3745 = vpop.f32.mrb[0].mxu0
    %v3746 = vadd.f32 0.0, %v3745
    %v3747 = vpop.f32.mrb[0].mxu0
    %3748 = vmatprep.mubr.f32.mxu0 0.0
    %3749 = vmatmul.mubr.f32.gmra.mrb[0].mxu0 %v3563
    %v3750 = vpop.f32.mrb[0].mxu0
    %v3751 = vadd.f32 0.0, %v3750
    %v3752 = vpop.f32.mrb[0].mxu0
    %3753 = vmatprep.mubr.f32.mxu0 0.0
    %3754 = vmatmul.mubr.f32.gmra.mrb[0].mxu0 %v3566
    %v3755 = vpop.f32.mrb[0].mxu0
    %v3756 = vadd.f32 0.0, %v3755
    %v3757 = vpop.f32.mrb[0].mxu0
    %3758 = vmatprep.mubr.f32.mxu0 0.0
    %3759 = vmatmul.mubr.f32.gmra.mrb[0].mxu0 %v3569
    %v3760 = vpop.f32.mrb[0].mxu0
    %v3761 = vadd.f32 0.0, %v3760
    %v3762 = vpop.f32.mrb[0].mxu0
    %3763 = vmatprep.mubr.f32.mxu0 0.0
    %3764 = vmatmul.mubr.f32.gmra.mrb[0].mxu0 %v3572
    %v3765 = vpop.f32.mrb[0].mxu0
    %v3766 = vadd.f32 0.0, %v3765
    %v3767 = vpop.f32.mrb[0].mxu0
    %3768 = vmatprep.mubr.f32.mxu0 0.0
    %3769 = vmatmul.mubr.f32.gmra.mrb[0].mxu0 %v3575
    %v3770 = vpop.f32.mrb[0].mxu0
    %v3771 = vadd.f32 0.0, %v3770
    %v3772 = vpop.f32.mrb[0].mxu0
    %3773 = vmatprep.mubr.f32.mxu0 0.0
    %3774 = vmatmul.mubr.f32.gmra.mrb[0].mxu0 %v3578
    %v3775 = vpop.f32.mrb[0].mxu0
    %v3776 = vadd.f32 0.0, %v3775
    %v3777 = vpop.f32.mrb[0].mxu0
    %3778 = vmatprep.mubr.f32.mxu0 0.0
    %3779 = vmatmul.mubr.f32.gmra.mrb[0].mxu0 %v3581
    %v3780 = vpop.f32.mrb[0].mxu0
    %v3781 = vadd.f32 0.0, %v3780
    %v3782 = vpop.f32.mrb[0].mxu0
    %3783 = vmatprep.mubr.f32.mxu0 0.0
    %3784 = vmatmul.mubr.f32.gmra.mrb[0].mxu0 %v3584
    %v3785 = vpop.f32.mrb[0].mxu0
    %v3786 = vadd.f32 0.0, %v3785
    %v3787 = vpop.f32.mrb[0].mxu0
    %3788 = vmatprep.mubr.f32.mxu0 0.0
    %3789 = vmatmul.mubr.f32.gmra.mrb[0].mxu0 %v3587
    %v3790 = vpop.f32.mrb[0].mxu0
    %v3791 = vadd.f32 0.0, %v3790
    %v3792 = vpop.f32.mrb[0].mxu0
    %3793 = vmatprep.mubr.f32.mxu0 0.0
    %3794 = vmatmul.mubr.f32.gmra.mrb[0].mxu0 %v3590
    %v3795 = vpop.f32.mrb[0].mxu0
    %v3796 = vadd.f32 0.0, %v3795
    %v3797 = vpop.f32.mrb[0].mxu0
    %3798 = vmatprep.mubr.f32.mxu0 0.0
    %3799 = vmatmul.mubr.f32.gmra.mrb[0].mxu0 %v3593
    %v3800 = vpop.f32.mrb[0].mxu0
    %v3801 = vadd.f32 0.0, %v3800
    %v3802 = vpop.f32.mrb[0].mxu0
    %3803 = vmatprep.mubr.f32.mxu0 0.0
    %3804 = vmatmul.mubr.f32.gmra.mrb[0].mxu0 %v3596
    %v3805 = vpop.f32.mrb[0].mxu0
    %v3806 = vadd.f32 0.0, %v3805
    %v3807 = vpop.f32.mrb[0].mxu0
    %3808 = vmatprep.mubr.f32.mxu0 0.0
    %3809 = vmatmul.mubr.f32.gmra.mrb[0].mxu0 %v3599
    %v3810 = vpop.f32.mrb[0].mxu0
    %v3811 = vadd.f32 0.0, %v3810
    %v3812 = vpop.f32.mrb[0].mxu0
    %3813 = vmatprep.mubr.f32.mxu0 0.0
    %3814 = vmatmul.mubr.f32.gmra.mrb[0].mxu0 %v3602
    %v3815 = vpop.f32.mrb[0].mxu0
    %v3816 = vadd.f32 0.0, %v3815
    %v3817 = vpop.f32.mrb[0].mxu0
    %3818 = vmatprep.mubr.f32.mxu0 0.0
    %3819 = vmatmul.mubr.f32.gmra.mrb[0].mxu0 %v3605
    %v3820 = vpop.f32.mrb[0].mxu0
    %v3821 = vadd.f32 0.0, %v3820
    %v3822 = vpop.f32.mrb[0].mxu0
    %3823 = vmatprep.mubr.f32.mxu0 0.0
    %3824 = vmatmul.mubr.f32.gmra.mrb[0].mxu0 %v3608
    %v3825 = vpop.f32.mrb[0].mxu0
    %v3826 = vadd.f32 0.0, %v3825
    %v3827 = vpop.f32.mrb[0].mxu0
    %3828 = vmatprep.mubr.f32.mxu0 0.0
    %3829 = vmatmul.mubr.f32.gmra.mrb[0].mxu0 %v3611
    %v3830 = vpop.f32.mrb[0].mxu0
    %v3831 = vadd.f32 0.0, %v3830
    %v3832 = vpop.f32.mrb[0].mxu0
    %3833 = vmatprep.mubr.f32.mxu0 0.0
    %3834 = vmatmul.mubr.f32.gmra.mrb[0].mxu0 %v3614
    %v3835 = vpop.f32.mrb[0].mxu0
    %v3836 = vadd.f32 0.0, %v3835
    %v3837 = vpop.f32.mrb[0].mxu0
    %3838 = vmatprep.mubr.f32.mxu0 0.0
    %3839 = vmatmul.mubr.f32.gmra.mrb[0].mxu0 %v3617
    %v3840 = vpop.f32.mrb[0].mxu0
    %v3841 = vadd.f32 0.0, %v3840
    %v3842 = vpop.f32.mrb[0].mxu0
    %3843 = vdwg.mxu0
    %v3845 = vsel %vm3522, %v3486, 0
    %v3848 = vsel %vm3522, %v3487, 0
    %v3851 = vsel %vm3522, %v3488, 0
    %v3854 = vsel %vm3522, %v3489, 0
    %v3857 = vsel %vm3522, %v3490, 0
    %v3860 = vsel %vm3522, %v3491, 0
    %v3863 = vsel %vm3522, %v3492, 0
    %v3866 = vsel %vm3522, %v3493, 0
    %v3869 = vsel %vm3522, %v3494, 0
    %v3872 = vsel %vm3522, %v3495, 0
    %v3875 = vsel %vm3522, %v3496, 0
    %v3878 = vsel %vm3522, %v3497, 0
    %v3881 = vsel %vm3522, %v3498, 0
    %v3884 = vsel %vm3522, %v3499, 0
    %v3887 = vsel %vm3522, %v3500, 0
    %v3890 = vsel %vm3522, %v3501, 0
    %v3893 = vsel %vm3522, %v3502, 0
    %v3896 = vsel %vm3522, %v3503, 0
    %v3899 = vsel %vm3522, %v3504, 0
    %v3902 = vsel %vm3522, %v3505, 0
    %v3905 = vsel %vm3522, %v3506, 0
    %v3908 = vsel %vm3522, %v3507, 0
    %v3911 = vsel %vm3522, %v3508, 0
    %v3914 = vsel %vm3522, %v3509, 0
    %v3917 = vsel %vm3522, %v3510, 0
    %v3920 = vsel %vm3522, %v3511, 0
    %v3923 = vsel %vm3522, %v3512, 0
    %v3926 = vsel %vm3522, %v3513, 0
    %v3929 = vsel %vm3522, %v3514, 0
    %v3932 = vsel %vm3522, %v3515, 0
    %v3935 = vsel %vm3522, %v3516, 0
    %v3938 = vsel %vm3522, %v3517, 0
    %3940 = vmatprep.subr.mxu0 0.0
    %3941 = vmatpush1.msra.mxu0 %v3518
    %3942 = vmatprep.subr.mxu0 0.0
    %3943 = vmatpush1.msra.mxu0 %v3519
    %3944 = vmatprep.subr.mxu0 0.0
    %3945 = vmatpush1.msra.mxu0 0.0
    %3946 = vmatprep.subr.mxu0 0.0
    %3947 = vmatpush1.msra.mxu0 0.0
    %3948 = vmatprep.subr.mxu0 0.0
    %3949 = vmatpush1.msra.mxu0 0.0
    %3950 = vmatprep.subr.mxu0 0.0
    %3951 = vmatpush1.msra.mxu0 0.0
    %3952 = vmatprep.subr.mxu0 0.0
    %3953 = vmatpush1.msra.mxu0 0.0
    %3954 = vmatprep.subr.mxu0 0.0
    %3955 = vmatpush1.msra.mxu0 0.0
    %3956 = vmatprep.subr.mxu0 0.0
    %3957 = vmatpush1.msra.mxu0 0.0
    %3958 = vmatprep.subr.mxu0 0.0
    %3959 = vmatpush1.msra.mxu0 0.0
    %3960 = vmatprep.subr.mxu0 0.0
    %3961 = vmatpush1.msra.mxu0 0.0
    %3962 = vmatprep.subr.mxu0 0.0
    %3963 = vmatpush1.msra.mxu0 0.0
    %3964 = vmatprep.subr.mxu0 0.0
    %3965 = vmatpush1.msra.mxu0 0.0
    %3966 = vmatprep.subr.mxu0 0.0
    %3967 = vmatpush1.msra.mxu0 0.0
    %3968 = vmatprep.subr.mxu0 0.0
    %3969 = vmatpush1.msra.mxu0 0.0
    %3970 = vmatprep.subr.mxu0 0.0
    %3971 = vmatpush1.msra.mxu0 0.0
    %3972 = vmatprep.subr.mxu0 0.0
    %3973 = vmatpush1.msra.mxu0 0.0
    %3974 = vmatprep.subr.mxu0 0.0
    %3975 = vmatpush1.msra.mxu0 0.0
    %3976 = vmatprep.subr.mxu0 0.0
    %3977 = vmatpush1.msra.mxu0 0.0
    %3978 = vmatprep.subr.mxu0 0.0
    %3979 = vmatpush1.msra.mxu0 0.0
    %3980 = vmatprep.subr.mxu0 0.0
    %3981 = vmatpush1.msra.mxu0 0.0
    %3982 = vmatprep.subr.mxu0 0.0
    %3983 = vmatpush1.msra.mxu0 0.0
    %3984 = vmatprep.subr.mxu0 0.0
    %3985 = vmatpush1.msra.mxu0 0.0
    %3986 = vmatprep.subr.mxu0 0.0
    %3987 = vmatpush1.msra.mxu0 0.0
    %3988 = vmatprep.subr.mxu0 0.0
    %3989 = vmatpush1.msra.mxu0 0.0
    %3990 = vmatprep.subr.mxu0 0.0
    %3991 = vmatpush1.msra.mxu0 0.0
    %3992 = vmatprep.subr.mxu0 0.0
    %3993 = vmatpush1.msra.mxu0 0.0
    %3994 = vmatprep.subr.mxu0 0.0
    %3995 = vmatpush1.msra.mxu0 0.0
    %3996 = vmatprep.subr.mxu0 0.0
    %3997 = vmatpush1.msra.mxu0 0.0
    %3998 = vmatprep.subr.mxu0 0.0
    %3999 = vmatpush1.msra.mxu0 0.0
    %4000 = vmatprep.subr.mxu0 0.0
    %4001 = vmatpush1.msra.mxu0 0.0
    %4002 = vmatprep.subr.mxu0 0.0
    %4003 = vmatpush1.msra.mxu0 0.0
    %4004 = vmatprep.mubr.f32.mxu0 0.0
    %4005 = vmatmul.mubr.f32.gmra.mrb[0].mxu0 %v3845
    %v4006 = vpop.f32.mrb[0].mxu0
    %v4007 = vadd.f32 %v3686, %v4006
    %v4008 = vpop.f32.mrb[0].mxu0
    %4009 = vmatprep.mubr.f32.mxu0 0.0
    %4010 = vmatmul.mubr.f32.gmra.mrb[0].mxu0 %v3848
    %v4011 = vpop.f32.mrb[0].mxu0
    %v4012 = vadd.f32 %v3691, %v4011
    %v4013 = vpop.f32.mrb[0].mxu0
    %4014 = vmatprep.mubr.f32.mxu0 0.0
    %4015 = vmatmul.mubr.f32.gmra.mrb[0].mxu0 %v3851
    %v4016 = vpop.f32.mrb[0].mxu0
    %v4017 = vadd.f32 %v3696, %v4016
    %v4018 = vpop.f32.mrb[0].mxu0
    %4019 = vmatprep.mubr.f32.mxu0 0.0
    %4020 = vmatmul.mubr.f32.gmra.mrb[0].mxu0 %v3854
    %v4021 = vpop.f32.mrb[0].mxu0
    %v4022 = vadd.f32 %v3701, %v4021
    %v4023 = vpop.f32.mrb[0].mxu0
    %4024 = vmatprep.mubr.f32.mxu0 0.0
    %4025 = vmatmul.mubr.f32.gmra.mrb[0].mxu0 %v3857
    %v4026 = vpop.f32.mrb[0].mxu0
    %v4027 = vadd.f32 %v3706, %v4026
    %v4028 = vpop.f32.mrb[0].mxu0
    %4029 = vmatprep.mubr.f32.mxu0 0.0
    %4030 = vmatmul.mubr.f32.gmra.mrb[0].mxu0 %v3860
    %v4031 = vpop.f32.mrb[0].mxu0
    %v4032 = vadd.f32 %v3711, %v4031
    %v4033 = vpop.f32.mrb[0].mxu0
    %4034 = vmatprep.mubr.f32.mxu0 0.0
    %4035 = vmatmul.mubr.f32.gmra.mrb[0].mxu0 %v3863
    %v4036 = vpop.f32.mrb[0].mxu0
    %v4037 = vadd.f32 %v3716, %v4036
    %v4038 = vpop.f32.mrb[0].mxu0
    %4039 = vmatprep.mubr.f32.mxu0 0.0
    %4040 = vmatmul.mubr.f32.gmra.mrb[0].mxu0 %v3866
    %v4041 = vpop.f32.mrb[0].mxu0
    %v4042 = vadd.f32 %v3721, %v4041
    %v4043 = vpop.f32.mrb[0].mxu0
    %4044 = vmatprep.mubr.f32.mxu0 0.0
    %4045 = vmatmul.mubr.f32.gmra.mrb[0].mxu0 %v3869
    %v4046 = vpop.f32.mrb[0].mxu0
    %v4047 = vadd.f32 %v3726, %v4046
    %v4048 = vpop.f32.mrb[0].mxu0
    %4049 = vmatprep.mubr.f32.mxu0 0.0
    %4050 = vmatmul.mubr.f32.gmra.mrb[0].mxu0 %v3872
    %v4051 = vpop.f32.mrb[0].mxu0
    %v4052 = vadd.f32 %v3731, %v4051
    %v4053 = vpop.f32.mrb[0].mxu0
    %4054 = vmatprep.mubr.f32.mxu0 0.0
    %4055 = vmatmul.mubr.f32.gmra.mrb[0].mxu0 %v3875
    %v4056 = vpop.f32.mrb[0].mxu0
    %v4057 = vadd.f32 %v3736, %v4056
    %v4058 = vpop.f32.mrb[0].mxu0
    %4059 = vmatprep.mubr.f32.mxu0 0.0
    %4060 = vmatmul.mubr.f32.gmra.mrb[0].mxu0 %v3878
    %v4061 = vpop.f32.mrb[0].mxu0
    %v4062 = vadd.f32 %v3741, %v4061
    %v4063 = vpop.f32.mrb[0].mxu0
    %4064 = vmatprep.mubr.f32.mxu0 0.0
    %4065 = vmatmul.mubr.f32.gmra.mrb[0].mxu0 %v3881
    %v4066 = vpop.f32.mrb[0].mxu0
    %v4067 = vadd.f32 %v3746, %v4066
    %v4068 = vpop.f32.mrb[0].mxu0
    %4069 = vmatprep.mubr.f32.mxu0 0.0
    %4070 = vmatmul.mubr.f32.gmra.mrb[0].mxu0 %v3884
    %v4071 = vpop.f32.mrb[0].mxu0
    %v4072 = vadd.f32 %v3751, %v4071
    %v4073 = vpop.f32.mrb[0].mxu0
    %4074 = vmatprep.mubr.f32.mxu0 0.0
    %4075 = vmatmul.mubr.f32.gmra.mrb[0].mxu0 %v3887
    %v4076 = vpop.f32.mrb[0].mxu0
    %v4077 = vadd.f32 %v3756, %v4076
    %v4078 = vpop.f32.mrb[0].mxu0
    %4079 = vmatprep.mubr.f32.mxu0 0.0
    %4080 = vmatmul.mubr.f32.gmra.mrb[0].mxu0 %v3890
    %v4081 = vpop.f32.mrb[0].mxu0
    %v4082 = vadd.f32 %v3761, %v4081
    %v4083 = vpop.f32.mrb[0].mxu0
    %4084 = vmatprep.mubr.f32.mxu0 0.0
    %4085 = vmatmul.mubr.f32.gmra.mrb[0].mxu0 %v3893
    %v4086 = vpop.f32.mrb[0].mxu0
    %v4087 = vadd.f32 %v3766, %v4086
    %v4088 = vpop.f32.mrb[0].mxu0
    %4089 = vmatprep.mubr.f32.mxu0 0.0
    %4090 = vmatmul.mubr.f32.gmra.mrb[0].mxu0 %v3896
    %v4091 = vpop.f32.mrb[0].mxu0
    %v4092 = vadd.f32 %v3771, %v4091
    %v4093 = vpop.f32.mrb[0].mxu0
    %4094 = vmatprep.mubr.f32.mxu0 0.0
    %4095 = vmatmul.mubr.f32.gmra.mrb[0].mxu0 %v3899
    %v4096 = vpop.f32.mrb[0].mxu0
    %v4097 = vadd.f32 %v3776, %v4096
    %v4098 = vpop.f32.mrb[0].mxu0
    %4099 = vmatprep.mubr.f32.mxu0 0.0
    %4100 = vmatmul.mubr.f32.gmra.mrb[0].mxu0 %v3902
    %v4101 = vpop.f32.mrb[0].mxu0
    %v4102 = vadd.f32 %v3781, %v4101
    %v4103 = vpop.f32.mrb[0].mxu0
    %4104 = vmatprep.mubr.f32.mxu0 0.0
    %4105 = vmatmul.mubr.f32.gmra.mrb[0].mxu0 %v3905
    %v4106 = vpop.f32.mrb[0].mxu0
    %v4107 = vadd.f32 %v3786, %v4106
    %v4108 = vpop.f32.mrb[0].mxu0
    %4109 = vmatprep.mubr.f32.mxu0 0.0
    %4110 = vmatmul.mubr.f32.gmra.mrb[0].mxu0 %v3908
    %v4111 = vpop.f32.mrb[0].mxu0
    %v4112 = vadd.f32 %v3791, %v4111
    %v4113 = vpop.f32.mrb[0].mxu0
    %4114 = vmatprep.mubr.f32.mxu0 0.0
    %4115 = vmatmul.mubr.f32.gmra.mrb[0].mxu0 %v3911
    %v4116 = vpop.f32.mrb[0].mxu0
    %v4117 = vadd.f32 %v3796, %v4116
    %v4118 = vpop.f32.mrb[0].mxu0
    %4119 = vmatprep.mubr.f32.mxu0 0.0
    %4120 = vmatmul.mubr.f32.gmra.mrb[0].mxu0 %v3914
    %v4121 = vpop.f32.mrb[0].mxu0
    %v4122 = vadd.f32 %v3801, %v4121
    %v4123 = vpop.f32.mrb[0].mxu0
    %4124 = vmatprep.mubr.f32.mxu0 0.0
    %4125 = vmatmul.mubr.f32.gmra.mrb[0].mxu0 %v3917
    %v4126 = vpop.f32.mrb[0].mxu0
    %v4127 = vadd.f32 %v3806, %v4126
    %v4128 = vpop.f32.mrb[0].mxu0
    %4129 = vmatprep.mubr.f32.mxu0 0.0
    %4130 = vmatmul.mubr.f32.gmra.mrb[0].mxu0 %v3920
    %v4131 = vpop.f32.mrb[0].mxu0
    %v4132 = vadd.f32 %v3811, %v4131
    %v4133 = vpop.f32.mrb[0].mxu0
    %4134 = vmatprep.mubr.f32.mxu0 0.0
    %4135 = vmatmul.mubr.f32.gmra.mrb[0].mxu0 %v3923
    %v4136 = vpop.f32.mrb[0].mxu0
    %v4137 = vadd.f32 %v3816, %v4136
    %v4138 = vpop.f32.mrb[0].mxu0
    %4139 = vmatprep.mubr.f32.mxu0 0.0
    %4140 = vmatmul.mubr.f32.gmra.mrb[0].mxu0 %v3926
    %v4141 = vpop.f32.mrb[0].mxu0
    %v4142 = vadd.f32 %v3821, %v4141
    %v4143 = vpop.f32.mrb[0].mxu0
    %4144 = vmatprep.mubr.f32.mxu0 0.0
    %4145 = vmatmul.mubr.f32.gmra.mrb[0].mxu0 %v3929
    %v4146 = vpop.f32.mrb[0].mxu0
    %v4147 = vadd.f32 %v3826, %v4146
    %v4148 = vpop.f32.mrb[0].mxu0
    %4149 = vmatprep.mubr.f32.mxu0 0.0
    %4150 = vmatmul.mubr.f32.gmra.mrb[0].mxu0 %v3932
    %v4151 = vpop.f32.mrb[0].mxu0
    %v4152 = vadd.f32 %v3831, %v4151
    %v4153 = vpop.f32.mrb[0].mxu0
    %4154 = vmatprep.mubr.f32.mxu0 0.0
    %4155 = vmatmul.mubr.f32.gmra.mrb[0].mxu0 %v3935
    %v4156 = vpop.f32.mrb[0].mxu0
    %v4157 = vadd.f32 %v3836, %v4156
    %v4158 = vpop.f32.mrb[0].mxu0
    %4159 = vmatprep.mubr.f32.mxu0 0.0
    %4160 = vmatmul.mubr.f32.gmra.mrb[0].mxu0 %v3938
    %v4161 = vpop.f32.mrb[0].mxu0
    %v4162 = vadd.f32 %v3841, %v4161
    %v4163 = vpop.f32.mrb[0].mxu0
    %4164 = vdwg.mxu0
    %v4165 = vrot.slane %v3390, 1
    %v4166 = vrot.slane %v3391, 1
    %v4167 = vrot.slane %v3392, 1
    %v4168 = vrot.slane %v3393, 1
    %v4169 = vrot.slane %v3394, 1
    %v4170 = vrot.slane %v3395, 1
    %v4171 = vrot.slane %v3396, 1
    %v4172 = vrot.slane %v3397, 1
    %v4173 = vrot.slane %v3398, 1
    %v4174 = vrot.slane %v3399, 1
    %v4175 = vrot.slane %v3400, 1
    %v4176 = vrot.slane %v3401, 1
    %v4177 = vrot.slane %v3402, 1
    %v4178 = vrot.slane %v3403, 1
    %v4179 = vrot.slane %v3404, 1
    %v4180 = vrot.slane %v3405, 1
    %v4181 = vrot.slane %v3406, 1
    %v4182 = vrot.slane %v3407, 1
    %v4183 = vrot.slane %v3408, 1
    %v4184 = vrot.slane %v3409, 1
    %v4185 = vrot.slane %v3410, 1
    %v4186 = vrot.slane %v3411, 1
    %v4187 = vrot.slane %v3412, 1
    %v4188 = vrot.slane %v3413, 1
    %v4189 = vrot.slane %v3414, 1
    %v4190 = vrot.slane %v3415, 1
    %v4191 = vrot.slane %v3416, 1
    %v4192 = vrot.slane %v3417, 1
    %v4193 = vrot.slane %v3418, 1
    %v4194 = vrot.slane %v3419, 1
    %v4195 = vrot.slane %v3420, 1
    %v4196 = vrot.slane %v3421, 1
    %v4197 = vsel %vm920, %v4195, %v4196
    %v4198 = vsel %vm920, %v4194, %v4195
    %v4199 = vsel %vm920, %v4193, %v4194
    %v4200 = vsel %vm920, %v4192, %v4193
    %v4201 = vsel %vm920, %v4191, %v4192
    %v4202 = vsel %vm920, %v4190, %v4191
    %v4203 = vsel %vm920, %v4189, %v4190
    %v4204 = vsel %vm920, %v4188, %v4189
    %v4205 = vsel %vm920, %v4187, %v4188
    %v4206 = vsel %vm920, %v4186, %v4187
    %v4207 = vsel %vm920, %v4185, %v4186
    %v4208 = vsel %vm920, %v4184, %v4185
    %v4209 = vsel %vm920, %v4183, %v4184
    %v4210 = vsel %vm920, %v4182, %v4183
    %v4211 = vsel %vm920, %v4181, %v4182
    %v4212 = vsel %vm920, %v4180, %v4181
    %v4213 = vsel %vm920, %v4179, %v4180
    %v4214 = vsel %vm920, %v4178, %v4179
    %v4215 = vsel %vm920, %v4177, %v4178
    %v4216 = vsel %vm920, %v4176, %v4177
    %v4217 = vsel %vm920, %v4175, %v4176
    %v4218 = vsel %vm920, %v4174, %v4175
    %v4219 = vsel %vm920, %v4173, %v4174
    %v4220 = vsel %vm920, %v4172, %v4173
    %v4221 = vsel %vm920, %v4171, %v4172
    %v4222 = vsel %vm920, %v4170, %v4171
    %v4223 = vsel %vm920, %v4169, %v4170
    %v4224 = vsel %vm920, %v4168, %v4169
    %v4225 = vsel %vm920, %v4167, %v4168
    %v4226 = vsel %vm920, %v4166, %v4167
    %v4227 = vsel %vm920, %v4165, %v4166
    %v4228 = vsel %vm920, %v4196, %v4165
    %v4229 = vsel %vm985, %v4227, 0.0
    %v4230 = vsel %vm986, %v4226, 0.0
    %v4231 = vsel %vm987, %v4225, 0.0
    %v4232 = vsel %vm988, %v4224, 0.0
    %v4233 = vsel %vm989, %v4223, 0.0
    %v4234 = vsel %vm990, %v4222, 0.0
    %v4235 = vsel %vm991, %v4221, 0.0
    %v4236 = vsel %vm992, %v4220, 0.0
    %v4237 = vsel %vm993, %v4219, 0.0
    %v4238 = vsel %vm994, %v4218, 0.0
    %v4239 = vsel %vm995, %v4217, 0.0
    %v4240 = vsel %vm996, %v4216, 0.0
    %v4241 = vsel %vm997, %v4215, 0.0
    %v4242 = vsel %vm998, %v4214, 0.0
    %v4243 = vsel %vm999, %v4213, 0.0
    %v4244 = vsel %vm1000, %v4212, 0.0
    %v4245 = vsel %vm1001, %v4211, 0.0
    %v4246 = vsel %vm1002, %v4210, 0.0
    %v4247 = vsel %vm1003, %v4209, 0.0
    %v4248 = vsel %vm1004, %v4208, 0.0
    %v4249 = vsel %vm1005, %v4207, 0.0
    %v4250 = vsel %vm1006, %v4206, 0.0
    %v4251 = vsel %vm1007, %v4205, 0.0
    %v4252 = vsel %vm1008, %v4204, 0.0
    %v4253 = vsel %vm1009, %v4203, 0.0
    %v4254 = vsel %vm1010, %v4202, 0.0
    %v4255 = vsel %vm1011, %v4201, 0.0
    %v4256 = vsel %vm1012, %v4200, 0.0
    %v4257 = vsel %vm1013, %v4199, 0.0
    %v4258 = vsel %vm1014, %v4198, 0.0
    %v4259 = vsel %vm1015, %v4197, 0.0
    %v4260 = vsel %vm1016, %v4228, 0.0
    %v4261 = vld [vmem:[%s2 + $0x28] sm:$0xff]
    %v4262 = vld [vmem:[%s2 + $0x30] sm:$0xff]
    %v4264 = vsel %vm3522, %v4229, 0
    %v4267 = vsel %vm3522, %v4230, 0
    %v4270 = vsel %vm3522, %v4231, 0
    %v4273 = vsel %vm3522, %v4232, 0
    %v4276 = vsel %vm3522, %v4233, 0
    %v4279 = vsel %vm3522, %v4234, 0
    %v4282 = vsel %vm3522, %v4235, 0
    %v4285 = vsel %vm3522, %v4236, 0
    %v4288 = vsel %vm3522, %v4237, 0
    %v4291 = vsel %vm3522, %v4238, 0
    %v4294 = vsel %vm3522, %v4239, 0
    %v4297 = vsel %vm3522, %v4240, 0
    %v4300 = vsel %vm3522, %v4241, 0
    %v4303 = vsel %vm3522, %v4242, 0
    %v4306 = vsel %vm3522, %v4243, 0
    %v4309 = vsel %vm3522, %v4244, 0
    %v4312 = vsel %vm3522, %v4245, 0
    %v4315 = vsel %vm3522, %v4246, 0
    %v4318 = vsel %vm3522, %v4247, 0
    %v4321 = vsel %vm3522, %v4248, 0
    %v4324 = vsel %vm3522, %v4249, 0
    %v4327 = vsel %vm3522, %v4250, 0
    %v4330 = vsel %vm3522, %v4251, 0
    %v4333 = vsel %vm3522, %v4252, 0
    %v4336 = vsel %vm3522, %v4253, 0
    %v4339 = vsel %vm3522, %v4254, 0
    %v4342 = vsel %vm3522, %v4255, 0
    %v4345 = vsel %vm3522, %v4256, 0
    %v4348 = vsel %vm3522, %v4257, 0
    %v4351 = vsel %vm3522, %v4258, 0
    %v4354 = vsel %vm3522, %v4259, 0
    %v4357 = vsel %vm3522, %v4260, 0
    %4359 = vmatprep.subr.mxu0 0.0
    %4360 = vmatpush1.msra.mxu0 %v4261
    %4361 = vmatprep.subr.mxu0 0.0
    %4362 = vmatpush1.msra.mxu0 %v4262
    %4363 = vmatprep.subr.mxu0 0.0
    %4364 = vmatpush1.msra.mxu0 0.0
    %4365 = vmatprep.subr.mxu0 0.0
    %4366 = vmatpush1.msra.mxu0 0.0
    %4367 = vmatprep.subr.mxu0 0.0
    %4368 = vmatpush1.msra.mxu0 0.0
    %4369 = vmatprep.subr.mxu0 0.0
    %4370 = vmatpush1.msra.mxu0 0.0
    %4371 = vmatprep.subr.mxu0 0.0
    %4372 = vmatpush1.msra.mxu0 0.0
    %4373 = vmatprep.subr.mxu0 0.0
    %4374 = vmatpush1.msra.mxu0 0.0
    %4375 = vmatprep.subr.mxu0 0.0
    %4376 = vmatpush1.msra.mxu0 0.0
    %4377 = vmatprep.subr.mxu0 0.0
    %4378 = vmatpush1.msra.mxu0 0.0
    %4379 = vmatprep.subr.mxu0 0.0
    %4380 = vmatpush1.msra.mxu0 0.0
    %4381 = vmatprep.subr.mxu0 0.0
    %4382 = vmatpush1.msra.mxu0 0.0
    %4383 = vmatprep.subr.mxu0 0.0
    %4384 = vmatpush1.msra.mxu0 0.0
    %4385 = vmatprep.subr.mxu0 0.0
    %4386 = vmatpush1.msra.mxu0 0.0
    %4387 = vmatprep.subr.mxu0 0.0
    %4388 = vmatpush1.msra.mxu0 0.0
    %4389 = vmatprep.subr.mxu0 0.0
    %4390 = vmatpush1.msra.mxu0 0.0
    %4391 = vmatprep.subr.mxu0 0.0
    %4392 = vmatpush1.msra.mxu0 0.0
    %4393 = vmatprep.subr.mxu0 0.0
    %4394 = vmatpush1.msra.mxu0 0.0
    %4395 = vmatprep.subr.mxu0 0.0
    %4396 = vmatpush1.msra.mxu0 0.0
    %4397 = vmatprep.subr.mxu0 0.0
    %4398 = vmatpush1.msra.mxu0 0.0
    %4399 = vmatprep.subr.mxu0 0.0
    %4400 = vmatpush1.msra.mxu0 0.0
    %4401 = vmatprep.subr.mxu0 0.0
    %4402 = vmatpush1.msra.mxu0 0.0
    %4403 = vmatprep.subr.mxu0 0.0
    %4404 = vmatpush1.msra.mxu0 0.0
    %4405 = vmatprep.subr.mxu0 0.0
    %4406 = vmatpush1.msra.mxu0 0.0
    %4407 = vmatprep.subr.mxu0 0.0
    %4408 = vmatpush1.msra.mxu0 0.0
    %4409 = vmatprep.subr.mxu0 0.0
    %4410 = vmatpush1.msra.mxu0 0.0
    %4411 = vmatprep.subr.mxu0 0.0
    %4412 = vmatpush1.msra.mxu0 0.0
    %4413 = vmatprep.subr.mxu0 0.0
    %4414 = vmatpush1.msra.mxu0 0.0
    %4415 = vmatprep.subr.mxu0 0.0
    %4416 = vmatpush1.msra.mxu0 0.0
    %4417 = vmatprep.subr.mxu0 0.0
    %4418 = vmatpush1.msra.mxu0 0.0
    %4419 = vmatprep.subr.mxu0 0.0
    %4420 = vmatpush1.msra.mxu0 0.0
    %4421 = vmatprep.subr.mxu0 0.0
    %4422 = vmatpush1.msra.mxu0 0.0
    %4423 = vmatprep.mubr.f32.mxu0 0.0
    %4424 = vmatmul.mubr.f32.gmra.mrb[0].mxu0 %v4264
    %v4425 = vpop.f32.mrb[0].mxu0
    %v4426 = vadd.f32 0.0, %v4425
    %v4427 = vpop.f32.mrb[0].mxu0
    %4428 = vmatprep.mubr.f32.mxu0 0.0
    %4429 = vmatmul.mubr.f32.gmra.mrb[0].mxu0 %v4267
    %v4430 = vpop.f32.mrb[0].mxu0
    %v4431 = vadd.f32 0.0, %v4430
    %v4432 = vpop.f32.mrb[0].mxu0
    %4433 = vmatprep.mubr.f32.mxu0 0.0
    %4434 = vmatmul.mubr.f32.gmra.mrb[0].mxu0 %v4270
    %v4435 = vpop.f32.mrb[0].mxu0
    %v4436 = vadd.f32 0.0, %v4435
    %v4437 = vpop.f32.mrb[0].mxu0
    %4438 = vmatprep.mubr.f32.mxu0 0.0
    %4439 = vmatmul.mubr.f32.gmra.mrb[0].mxu0 %v4273
    %v4440 = vpop.f32.mrb[0].mxu0
    %v4441 = vadd.f32 0.0, %v4440
    %v4442 = vpop.f32.mrb[0].mxu0
    %4443 = vmatprep.mubr.f32.mxu0 0.0
    %4444 = vmatmul.mubr.f32.gmra.mrb[0].mxu0 %v4276
    %v4445 = vpop.f32.mrb[0].mxu0
    %v4446 = vadd.f32 0.0, %v4445
    %v4447 = vpop.f32.mrb[0].mxu0
    %4448 = vmatprep.mubr.f32.mxu0 0.0
    %4449 = vmatmul.mubr.f32.gmra.mrb[0].mxu0 %v4279
    %v4450 = vpop.f32.mrb[0].mxu0
    %v4451 = vadd.f32 0.0, %v4450
    %v4452 = vpop.f32.mrb[0].mxu0
    %4453 = vmatprep.mubr.f32.mxu0 0.0
    %4454 = vmatmul.mubr.f32.gmra.mrb[0].mxu0 %v4282
    %v4455 = vpop.f32.mrb[0].mxu0
    %v4456 = vadd.f32 0.0, %v4455
    %v4457 = vpop.f32.mrb[0].mxu0
    %4458 = vmatprep.mubr.f32.mxu0 0.0
    %4459 = vmatmul.mubr.f32.gmra.mrb[0].mxu0 %v4285
    %v4460 = vpop.f32.mrb[0].mxu0
    %v4461 = vadd.f32 0.0, %v4460
    %v4462 = vpop.f32.mrb[0].mxu0
    %4463 = vmatprep.mubr.f32.mxu0 0.0
    %4464 = vmatmul.mubr.f32.gmra.mrb[0].mxu0 %v4288
    %v4465 = vpop.f32.mrb[0].mxu0
    %v4466 = vadd.f32 0.0, %v4465
    %v4467 = vpop.f32.mrb[0].mxu0
    %4468 = vmatprep.mubr.f32.mxu0 0.0
    %4469 = vmatmul.mubr.f32.gmra.mrb[0].mxu0 %v4291
    %v4470 = vpop.f32.mrb[0].mxu0
    %v4471 = vadd.f32 0.0, %v4470
    %v4472 = vpop.f32.mrb[0].mxu0
    %4473 = vmatprep.mubr.f32.mxu0 0.0
    %4474 = vmatmul.mubr.f32.gmra.mrb[0].mxu0 %v4294
    %v4475 = vpop.f32.mrb[0].mxu0
    %v4476 = vadd.f32 0.0, %v4475
    %v4477 = vpop.f32.mrb[0].mxu0
    %4478 = vmatprep.mubr.f32.mxu0 0.0
    %4479 = vmatmul.mubr.f32.gmra.mrb[0].mxu0 %v4297
    %v4480 = vpop.f32.mrb[0].mxu0
    %v4481 = vadd.f32 0.0, %v4480
    %v4482 = vpop.f32.mrb[0].mxu0
    %4483 = vmatprep.mubr.f32.mxu0 0.0
    %4484 = vmatmul.mubr.f32.gmra.mrb[0].mxu0 %v4300
    %v4485 = vpop.f32.mrb[0].mxu0
    %v4486 = vadd.f32 0.0, %v4485
    %v4487 = vpop.f32.mrb[0].mxu0
    %4488 = vmatprep.mubr.f32.mxu0 0.0
    %4489 = vmatmul.mubr.f32.gmra.mrb[0].mxu0 %v4303
    %v4490 = vpop.f32.mrb[0].mxu0
    %v4491 = vadd.f32 0.0, %v4490
    %v4492 = vpop.f32.mrb[0].mxu0
    %4493 = vmatprep.mubr.f32.mxu0 0.0
    %4494 = vmatmul.mubr.f32.gmra.mrb[0].mxu0 %v4306
    %v4495 = vpop.f32.mrb[0].mxu0
    %v4496 = vadd.f32 0.0, %v4495
    %v4497 = vpop.f32.mrb[0].mxu0
    %4498 = vmatprep.mubr.f32.mxu0 0.0
    %4499 = vmatmul.mubr.f32.gmra.mrb[0].mxu0 %v4309
    %v4500 = vpop.f32.mrb[0].mxu0
    %v4501 = vadd.f32 0.0, %v4500
    %v4502 = vpop.f32.mrb[0].mxu0
    %4503 = vmatprep.mubr.f32.mxu0 0.0
    %4504 = vmatmul.mubr.f32.gmra.mrb[0].mxu0 %v4312
    %v4505 = vpop.f32.mrb[0].mxu0
    %v4506 = vadd.f32 0.0, %v4505
    %v4507 = vpop.f32.mrb[0].mxu0
    %4508 = vmatprep.mubr.f32.mxu0 0.0
    %4509 = vmatmul.mubr.f32.gmra.mrb[0].mxu0 %v4315
    %v4510 = vpop.f32.mrb[0].mxu0
    %v4511 = vadd.f32 0.0, %v4510
    %v4512 = vpop.f32.mrb[0].mxu0
    %4513 = vmatprep.mubr.f32.mxu0 0.0
    %4514 = vmatmul.mubr.f32.gmra.mrb[0].mxu0 %v4318
    %v4515 = vpop.f32.mrb[0].mxu0
    %v4516 = vadd.f32 0.0, %v4515
    %v4517 = vpop.f32.mrb[0].mxu0
    %4518 = vmatprep.mubr.f32.mxu0 0.0
    %4519 = vmatmul.mubr.f32.gmra.mrb[0].mxu0 %v4321
    %v4520 = vpop.f32.mrb[0].mxu0
    %v4521 = vadd.f32 0.0, %v4520
    %v4522 = vpop.f32.mrb[0].mxu0
    %4523 = vmatprep.mubr.f32.mxu0 0.0
    %4524 = vmatmul.mubr.f32.gmra.mrb[0].mxu0 %v4324
    %v4525 = vpop.f32.mrb[0].mxu0
    %v4526 = vadd.f32 0.0, %v4525
    %v4527 = vpop.f32.mrb[0].mxu0
    %4528 = vmatprep.mubr.f32.mxu0 0.0
    %4529 = vmatmul.mubr.f32.gmra.mrb[0].mxu0 %v4327
    %v4530 = vpop.f32.mrb[0].mxu0
    %v4531 = vadd.f32 0.0, %v4530
    %v4532 = vpop.f32.mrb[0].mxu0
    %4533 = vmatprep.mubr.f32.mxu0 0.0
    %4534 = vmatmul.mubr.f32.gmra.mrb[0].mxu0 %v4330
    %v4535 = vpop.f32.mrb[0].mxu0
    %v4536 = vadd.f32 0.0, %v4535
    %v4537 = vpop.f32.mrb[0].mxu0
    %4538 = vmatprep.mubr.f32.mxu0 0.0
    %4539 = vmatmul.mubr.f32.gmra.mrb[0].mxu0 %v4333
    %v4540 = vpop.f32.mrb[0].mxu0
    %v4541 = vadd.f32 0.0, %v4540
    %v4542 = vpop.f32.mrb[0].mxu0
    %4543 = vmatprep.mubr.f32.mxu0 0.0
    %4544 = vmatmul.mubr.f32.gmra.mrb[0].mxu0 %v4336
    %v4545 = vpop.f32.mrb[0].mxu0
    %v4546 = vadd.f32 0.0, %v4545
    %v4547 = vpop.f32.mrb[0].mxu0
    %4548 = vmatprep.mubr.f32.mxu0 0.0
    %4549 = vmatmul.mubr.f32.gmra.mrb[0].mxu0 %v4339
    %v4550 = vpop.f32.mrb[0].mxu0
    %v4551 = vadd.f32 0.0, %v4550
    %v4552 = vpop.f32.mrb[0].mxu0
    %4553 = vmatprep.mubr.f32.mxu0 0.0
    %4554 = vmatmul.mubr.f32.gmra.mrb[0].mxu0 %v4342
    %v4555 = vpop.f32.mrb[0].mxu0
    %v4556 = vadd.f32 0.0, %v4555
    %v4557 = vpop.f32.mrb[0].mxu0
    %4558 = vmatprep.mubr.f32.mxu0 0.0
    %4559 = vmatmul.mubr.f32.gmra.mrb[0].mxu0 %v4345
    %v4560 = vpop.f32.mrb[0].mxu0
    %v4561 = vadd.f32 0.0, %v4560
    %v4562 = vpop.f32.mrb[0].mxu0
    %4563 = vmatprep.mubr.f32.mxu0 0.0
    %4564 = vmatmul.mubr.f32.gmra.mrb[0].mxu0 %v4348
    %v4565 = vpop.f32.mrb[0].mxu0
    %v4566 = vadd.f32 0.0, %v4565
    %v4567 = vpop.f32.mrb[0].mxu0
    %4568 = vmatprep.mubr.f32.mxu0 0.0
    %4569 = vmatmul.mubr.f32.gmra.mrb[0].mxu0 %v4351
    %v4570 = vpop.f32.mrb[0].mxu0
    %v4571 = vadd.f32 0.0, %v4570
    %v4572 = vpop.f32.mrb[0].mxu0
    %4573 = vmatprep.mubr.f32.mxu0 0.0
    %4574 = vmatmul.mubr.f32.gmra.mrb[0].mxu0 %v4354
    %v4575 = vpop.f32.mrb[0].mxu0
    %v4576 = vadd.f32 0.0, %v4575
    %v4577 = vpop.f32.mrb[0].mxu0
    %4578 = vmatprep.mubr.f32.mxu0 0.0
    %4579 = vmatmul.mubr.f32.gmra.mrb[0].mxu0 %v4357
    %v4580 = vpop.f32.mrb[0].mxu0
    %v4581 = vadd.f32 0.0, %v4580
    %v4582 = vpop.f32.mrb[0].mxu0
    %4583 = vdwg.mxu0
    %v4584 = vadd.f32 %v4007, %v4426
    %v4585 = vadd.f32 %v4012, %v4431
    %v4586 = vadd.f32 %v4017, %v4436
    %v4587 = vadd.f32 %v4022, %v4441
    %v4588 = vadd.f32 %v4027, %v4446
    %v4589 = vadd.f32 %v4032, %v4451
    %v4590 = vadd.f32 %v4037, %v4456
    %v4591 = vadd.f32 %v4042, %v4461
    %v4592 = vadd.f32 %v4047, %v4466
    %v4593 = vadd.f32 %v4052, %v4471
    %v4594 = vadd.f32 %v4057, %v4476
    %v4595 = vadd.f32 %v4062, %v4481
    %v4596 = vadd.f32 %v4067, %v4486
    %v4597 = vadd.f32 %v4072, %v4491
    %v4598 = vadd.f32 %v4077, %v4496
    %v4599 = vadd.f32 %v4082, %v4501
    %v4600 = vadd.f32 %v4087, %v4506
    %v4601 = vadd.f32 %v4092, %v4511
    %v4602 = vadd.f32 %v4097, %v4516
    %v4603 = vadd.f32 %v4102, %v4521
    %v4604 = vadd.f32 %v4107, %v4526
    %v4605 = vadd.f32 %v4112, %v4531
    %v4606 = vadd.f32 %v4117, %v4536
    %v4607 = vadd.f32 %v4122, %v4541
    %v4608 = vadd.f32 %v4127, %v4546
    %v4609 = vadd.f32 %v4132, %v4551
    %v4610 = vadd.f32 %v4137, %v4556
    %v4611 = vadd.f32 %v4142, %v4561
    %v4612 = vadd.f32 %v4147, %v4566
    %v4613 = vadd.f32 %v4152, %v4571
    %v4614 = vadd.f32 %v4157, %v4576
    %v4615 = vadd.f32 %v4162, %v4581
    %v4616 = vld [vmem:[%s4 + $0x1] ss:$0 sm:$0xff]
    %v4617 = vadd.f32 %v4584, %v4616
    %v4618 = vadd.f32 %v4585, %v4616
    %v4619 = vadd.f32 %v4586, %v4616
    %v4620 = vadd.f32 %v4587, %v4616
    %v4621 = vadd.f32 %v4588, %v4616
    %v4622 = vadd.f32 %v4589, %v4616
    %v4623 = vadd.f32 %v4590, %v4616
    %v4624 = vadd.f32 %v4591, %v4616
    %v4625 = vadd.f32 %v4592, %v4616
    %v4626 = vadd.f32 %v4593, %v4616
    %v4627 = vadd.f32 %v4594, %v4616
    %v4628 = vadd.f32 %v4595, %v4616
    %v4629 = vadd.f32 %v4596, %v4616
    %v4630 = vadd.f32 %v4597, %v4616
    %v4631 = vadd.f32 %v4598, %v4616
    %v4632 = vadd.f32 %v4599, %v4616
    %v4633 = vadd.f32 %v4600, %v4616
    %v4634 = vadd.f32 %v4601, %v4616
    %v4635 = vadd.f32 %v4602, %v4616
    %v4636 = vadd.f32 %v4603, %v4616
    %v4637 = vadd.f32 %v4604, %v4616
    %v4638 = vadd.f32 %v4605, %v4616
    %v4639 = vadd.f32 %v4606, %v4616
    %v4640 = vadd.f32 %v4607, %v4616
    %v4641 = vadd.f32 %v4608, %v4616
    %v4642 = vadd.f32 %v4609, %v4616
    %v4643 = vadd.f32 %v4610, %v4616
    %v4644 = vadd.f32 %v4611, %v4616
    %v4645 = vadd.f32 %v4612, %v4616
    %v4646 = vadd.f32 %v4613, %v4616
    %v4647 = vadd.f32 %v4614, %v4616
    %v4648 = vadd.f32 %v4615, %v4616
    %v4649 = vmax.f32 %v4617, 0.0
    %v4650 = vmax.f32 %v4618, 0.0
    %v4651 = vmax.f32 %v4619, 0.0
    %v4652 = vmax.f32 %v4620, 0.0
    %v4653 = vmax.f32 %v4621, 0.0
    %v4654 = vmax.f32 %v4622, 0.0
    %v4655 = vmax.f32 %v4623, 0.0
    %v4656 = vmax.f32 %v4624, 0.0
    %v4657 = vmax.f32 %v4625, 0.0
    %v4658 = vmax.f32 %v4626, 0.0
    %v4659 = vmax.f32 %v4627, 0.0
    %v4660 = vmax.f32 %v4628, 0.0
    %v4661 = vmax.f32 %v4629, 0.0
    %v4662 = vmax.f32 %v4630, 0.0
    %v4663 = vmax.f32 %v4631, 0.0
    %v4664 = vmax.f32 %v4632, 0.0
    %v4665 = vmax.f32 %v4633, 0.0
    %v4666 = vmax.f32 %v4634, 0.0
    %v4667 = vmax.f32 %v4635, 0.0
    %v4668 = vmax.f32 %v4636, 0.0
    %v4669 = vmax.f32 %v4637, 0.0
    %v4670 = vmax.f32 %v4638, 0.0
    %v4671 = vmax.f32 %v4639, 0.0
    %v4672 = vmax.f32 %v4640, 0.0
    %v4673 = vmax.f32 %v4641, 0.0
    %v4674 = vmax.f32 %v4642, 0.0
    %v4675 = vmax.f32 %v4643, 0.0
    %v4676 = vmax.f32 %v4644, 0.0
    %v4677 = vmax.f32 %v4645, 0.0
    %v4678 = vmax.f32 %v4646, 0.0
    %v4679 = vmax.f32 %v4647, 0.0
    %v4680 = vmax.f32 %v4648, 0.0
    %4681 = vrot.lane.b32.xlu0 %v3390, 16
    %v4682 = vpop.permute.xlu0 %4681
    %4683 = vrot.lane.b32.xlu0 %v3391, 16
    %v4684 = vpop.permute.xlu0 %4683
    %4685 = vrot.lane.b32.xlu0 %v3392, 16
    %v4686 = vpop.permute.xlu0 %4685
    %4687 = vrot.lane.b32.xlu0 %v3393, 16
    %v4688 = vpop.permute.xlu0 %4687
    %4689 = vrot.lane.b32.xlu0 %v3394, 16
    %v4690 = vpop.permute.xlu0 %4689
    %4691 = vrot.lane.b32.xlu0 %v3395, 16
    %v4692 = vpop.permute.xlu0 %4691
    %4693 = vrot.lane.b32.xlu0 %v3396, 16
    %v4694 = vpop.permute.xlu0 %4693
    %4695 = vrot.lane.b32.xlu0 %v3397, 16
    %v4696 = vpop.permute.xlu0 %4695
    %4697 = vrot.lane.b32.xlu0 %v3398, 16
    %v4698 = vpop.permute.xlu0 %4697
    %4699 = vrot.lane.b32.xlu0 %v3399, 16
    %v4700 = vpop.permute.xlu0 %4699
    %4701 = vrot.lane.b32.xlu0 %v3400, 16
    %v4702 = vpop.permute.xlu0 %4701
    %4703 = vrot.lane.b32.xlu0 %v3401, 16
    %v4704 = vpop.permute.xlu0 %4703
    %4705 = vrot.lane.b32.xlu0 %v3402, 16
    %v4706 = vpop.permute.xlu0 %4705
    %4707 = vrot.lane.b32.xlu0 %v3403, 16
    %v4708 = vpop.permute.xlu0 %4707
    %4709 = vrot.lane.b32.xlu0 %v3404, 16
    %v4710 = vpop.permute.xlu0 %4709
    %4711 = vrot.lane.b32.xlu0 %v3405, 16
    %v4712 = vpop.permute.xlu0 %4711
    %4713 = vrot.lane.b32.xlu0 %v3406, 16
    %v4714 = vpop.permute.xlu0 %4713
    %4715 = vrot.lane.b32.xlu0 %v3407, 16
    %v4716 = vpop.permute.xlu0 %4715
    %4717 = vrot.lane.b32.xlu0 %v3408, 16
    %v4718 = vpop.permute.xlu0 %4717
    %4719 = vrot.lane.b32.xlu0 %v3409, 16
    %v4720 = vpop.permute.xlu0 %4719
    %4721 = vrot.lane.b32.xlu0 %v3410, 16
    %v4722 = vpop.permute.xlu0 %4721
    %4723 = vrot.lane.b32.xlu0 %v3411, 16
    %v4724 = vpop.permute.xlu0 %4723
    %4725 = vrot.lane.b32.xlu0 %v3412, 16
    %v4726 = vpop.permute.xlu0 %4725
    %4727 = vrot.lane.b32.xlu0 %v3413, 16
    %v4728 = vpop.permute.xlu0 %4727
    %4729 = vrot.lane.b32.xlu0 %v3414, 16
    %v4730 = vpop.permute.xlu0 %4729
    %4731 = vrot.lane.b32.xlu0 %v3415, 16
    %v4732 = vpop.permute.xlu0 %4731
    %4733 = vrot.lane.b32.xlu0 %v3416, 16
    %v4734 = vpop.permute.xlu0 %4733
    %4735 = vrot.lane.b32.xlu0 %v3417, 16
    %v4736 = vpop.permute.xlu0 %4735
    %4737 = vrot.lane.b32.xlu0 %v3418, 16
    %v4738 = vpop.permute.xlu0 %4737
    %4739 = vrot.lane.b32.xlu0 %v3419, 16
    %v4740 = vpop.permute.xlu0 %4739
    %4741 = vrot.lane.b32.xlu0 %v3420, 16
    %v4742 = vpop.permute.xlu0 %4741
    %4743 = vrot.lane.b32.xlu0 %v3421, 16
    %v4744 = vpop.permute.xlu0 %4743
    %v4777 = vsel %vm3522, %v3390, %v4682
    %v4778 = vsel %vm3522, %v3391, %v4684
    %v4779 = vsel %vm3522, %v3392, %v4686
    %v4780 = vsel %vm3522, %v3393, %v4688
    %v4781 = vsel %vm3522, %v3394, %v4690
    %v4782 = vsel %vm3522, %v3395, %v4692
    %v4783 = vsel %vm3522, %v3396, %v4694
    %v4784 = vsel %vm3522, %v3397, %v4696
    %v4785 = vsel %vm3522, %v3398, %v4698
    %v4786 = vsel %vm3522, %v3399, %v4700
    %v4787 = vsel %vm3522, %v3400, %v4702
    %v4788 = vsel %vm3522, %v3401, %v4704
    %v4789 = vsel %vm3522, %v3402, %v4706
    %v4790 = vsel %vm3522, %v3403, %v4708
    %v4791 = vsel %vm3522, %v3404, %v4710
    %v4792 = vsel %vm3522, %v3405, %v4712
    %v4793 = vsel %vm3522, %v3406, %v4714
    %v4794 = vsel %vm3522, %v3407, %v4716
    %v4795 = vsel %vm3522, %v3408, %v4718
    %v4796 = vsel %vm3522, %v3409, %v4720
    %v4797 = vsel %vm3522, %v3410, %v4722
    %v4798 = vsel %vm3522, %v3411, %v4724
    %v4799 = vsel %vm3522, %v3412, %v4726
    %v4800 = vsel %vm3522, %v3413, %v4728
    %v4801 = vsel %vm3522, %v3414, %v4730
    %v4802 = vsel %vm3522, %v3415, %v4732
    %v4803 = vsel %vm3522, %v3416, %v4734
    %v4804 = vsel %vm3522, %v3417, %v4736
    %v4805 = vsel %vm3522, %v3418, %v4738
    %v4806 = vsel %vm3522, %v3419, %v4740
    %v4807 = vsel %vm3522, %v3420, %v4742
    %v4808 = vsel %vm3522, %v3421, %v4744
    %v4809 = vrot.slane %v4649, 7
    %v4810 = vrot.slane %v4650, 7
    %v4811 = vrot.slane %v4651, 7
    %v4812 = vrot.slane %v4652, 7
    %v4813 = vrot.slane %v4653, 7
    %v4814 = vrot.slane %v4654, 7
    %v4815 = vrot.slane %v4655, 7
    %v4816 = vrot.slane %v4656, 7
    %v4817 = vrot.slane %v4657, 7
    %v4818 = vrot.slane %v4658, 7
    %v4819 = vrot.slane %v4659, 7
    %v4820 = vrot.slane %v4660, 7
    %v4821 = vrot.slane %v4661, 7
    %v4822 = vrot.slane %v4662, 7
    %v4823 = vrot.slane %v4663, 7
    %v4824 = vrot.slane %v4664, 7
    %v4825 = vrot.slane %v4665, 7
    %v4826 = vrot.slane %v4666, 7
    %v4827 = vrot.slane %v4667, 7
    %v4828 = vrot.slane %v4668, 7
    %v4829 = vrot.slane %v4669, 7
    %v4830 = vrot.slane %v4670, 7
    %v4831 = vrot.slane %v4671, 7
    %v4832 = vrot.slane %v4672, 7
    %v4833 = vrot.slane %v4673, 7
    %v4834 = vrot.slane %v4674, 7
    %v4835 = vrot.slane %v4675, 7
    %v4836 = vrot.slane %v4676, 7
    %v4837 = vrot.slane %v4677, 7
    %v4838 = vrot.slane %v4678, 7
    %v4839 = vrot.slane %v4679, 7
    %v4840 = vrot.slane %v4680, 7
    %v4841 = vsel %vm727, %v4839, %v4840
    %v4842 = vsel %vm727, %v4838, %v4839
    %v4843 = vsel %vm727, %v4837, %v4838
    %v4844 = vsel %vm727, %v4836, %v4837
    %v4845 = vsel %vm727, %v4835, %v4836
    %v4846 = vsel %vm727, %v4834, %v4835
    %v4847 = vsel %vm727, %v4833, %v4834
    %v4848 = vsel %vm727, %v4832, %v4833
    %v4849 = vsel %vm727, %v4831, %v4832
    %v4850 = vsel %vm727, %v4830, %v4831
    %v4851 = vsel %vm727, %v4829, %v4830
    %v4852 = vsel %vm727, %v4828, %v4829
    %v4853 = vsel %vm727, %v4827, %v4828
    %v4854 = vsel %vm727, %v4826, %v4827
    %v4855 = vsel %vm727, %v4825, %v4826
    %v4856 = vsel %vm727, %v4824, %v4825
    %v4857 = vsel %vm727, %v4823, %v4824
    %v4858 = vsel %vm727, %v4822, %v4823
    %v4859 = vsel %vm727, %v4821, %v4822
    %v4860 = vsel %vm727, %v4820, %v4821
    %v4861 = vsel %vm727, %v4819, %v4820
    %v4862 = vsel %vm727, %v4818, %v4819
    %v4863 = vsel %vm727, %v4817, %v4818
    %v4864 = vsel %vm727, %v4816, %v4817
    %v4865 = vsel %vm727, %v4815, %v4816
    %v4866 = vsel %vm727, %v4814, %v4815
    %v4867 = vsel %vm727, %v4813, %v4814
    %v4868 = vsel %vm727, %v4812, %v4813
    %v4869 = vsel %vm727, %v4811, %v4812
    %v4870 = vsel %vm727, %v4810, %v4811
    %v4871 = vsel %vm727, %v4809, %v4810
    %v4872 = vsel %vm727, %v4840, %v4809
    %v4873 = vsel %vm792, %v4872, 0.0
    %v4874 = vsel %vm793, %v4871, 0.0
    %v4875 = vsel %vm794, %v4870, 0.0
    %v4876 = vsel %vm795, %v4869, 0.0
    %v4877 = vsel %vm796, %v4868, 0.0
    %v4878 = vsel %vm797, %v4867, 0.0
    %v4879 = vsel %vm798, %v4866, 0.0
    %v4880 = vsel %vm799, %v4865, 0.0
    %v4881 = vsel %vm800, %v4864, 0.0
    %v4882 = vsel %vm801, %v4863, 0.0
    %v4883 = vsel %vm802, %v4862, 0.0
    %v4884 = vsel %vm803, %v4861, 0.0
    %v4885 = vsel %vm804, %v4860, 0.0
    %v4886 = vsel %vm805, %v4859, 0.0
    %v4887 = vsel %vm806, %v4858, 0.0
    %v4888 = vsel %vm807, %v4857, 0.0
    %v4889 = vsel %vm808, %v4856, 0.0
    %v4890 = vsel %vm809, %v4855, 0.0
    %v4891 = vsel %vm810, %v4854, 0.0
    %v4892 = vsel %vm811, %v4853, 0.0
    %v4893 = vsel %vm812, %v4852, 0.0
    %v4894 = vsel %vm813, %v4851, 0.0
    %v4895 = vsel %vm814, %v4850, 0.0
    %v4896 = vsel %vm815, %v4849, 0.0
    %v4897 = vsel %vm816, %v4848, 0.0
    %v4898 = vsel %vm817, %v4847, 0.0
    %v4899 = vsel %vm818, %v4846, 0.0
    %v4900 = vsel %vm819, %v4845, 0.0
    %v4901 = vsel %vm820, %v4844, 0.0
    %v4902 = vsel %vm821, %v4843, 0.0
    %v4903 = vsel %vm822, %v4842, 0.0
    %v4904 = vsel %vm823, %v4841, 0.0
    %v4905 = vld [vmem:[%s2 + $0x38] sm:$0xff]
    %v4906 = vld [vmem:[%s2 + $0x40] sm:$0xff]
    %v4907 = vld [vmem:[%s2 + $0x48] sm:$0xff]
    %v4908 = vld [vmem:[%s2 + $0x50] sm:$0xff]
    %v4909 = vld [vmem:[%s2 + $0x58] sm:$0xff]
    %v4910 = vld [vmem:[%s2 + $0x60] sm:$0xff]
    %v4911 = vld [vmem:[%s2 + $0x68] sm:$0xff]
    %v4912 = vld [vmem:[%s2 + $0x70] sm:$0xff]
    %vm4913 = vcmask 261120
    %v4915 = vsel %vm4913, %v4649, 0
    %v4918 = vsel %vm4913, %v4650, 0
    %v4921 = vsel %vm4913, %v4651, 0
    %v4924 = vsel %vm4913, %v4652, 0
    %v4927 = vsel %vm4913, %v4653, 0
    %v4930 = vsel %vm4913, %v4654, 0
    %v4933 = vsel %vm4913, %v4655, 0
    %v4936 = vsel %vm4913, %v4656, 0
    %v4939 = vsel %vm4913, %v4657, 0
    %v4942 = vsel %vm4913, %v4658, 0
    %v4945 = vsel %vm4913, %v4659, 0
    %v4948 = vsel %vm4913, %v4660, 0
    %v4951 = vsel %vm4913, %v4661, 0
    %v4954 = vsel %vm4913, %v4662, 0
    %v4957 = vsel %vm4913, %v4663, 0
    %v4960 = vsel %vm4913, %v4664, 0
    %v4963 = vsel %vm4913, %v4665, 0
    %v4966 = vsel %vm4913, %v4666, 0
    %v4969 = vsel %vm4913, %v4667, 0
    %v4972 = vsel %vm4913, %v4668, 0
    %v4975 = vsel %vm4913, %v4669, 0
    %v4978 = vsel %vm4913, %v4670, 0
    %v4981 = vsel %vm4913, %v4671, 0
    %v4984 = vsel %vm4913, %v4672, 0
    %v4987 = vsel %vm4913, %v4673, 0
    %v4990 = vsel %vm4913, %v4674, 0
    %v4993 = vsel %vm4913, %v4675, 0
    %v4996 = vsel %vm4913, %v4676, 0
    %v4999 = vsel %vm4913, %v4677, 0
    %v5002 = vsel %vm4913, %v4678, 0
    %v5005 = vsel %vm4913, %v4679, 0
    %v5008 = vsel %vm4913, %v4680, 0
    %5010 = vmatprep.subr.mxu0 0.0
    %5011 = vmatpush1.msra.mxu0 %v4909
    %5012 = vmatprep.subr.mxu0 0.0
    %5013 = vmatpush1.msra.mxu0 %v4910
    %5014 = vmatprep.subr.mxu0 0.0
    %5015 = vmatpush1.msra.mxu0 %v4911
    %5016 = vmatprep.subr.mxu0 0.0
    %5017 = vmatpush1.msra.mxu0 %v4912
    %5018 = vmatprep.subr.mxu0 0.0
    %5019 = vmatpush1.msra.mxu0 0.0
    %5020 = vmatprep.subr.mxu0 0.0
    %5021 = vmatpush1.msra.mxu0 0.0
    %5022 = vmatprep.subr.mxu0 0.0
    %5023 = vmatpush1.msra.mxu0 0.0
    %5024 = vmatprep.subr.mxu0 0.0
    %5025 = vmatpush1.msra.mxu0 0.0
    %5026 = vmatprep.subr.mxu0 0.0
    %5027 = vmatpush1.msra.mxu0 0.0
    %5028 = vmatprep.subr.mxu0 0.0
    %5029 = vmatpush1.msra.mxu0 0.0
    %5030 = vmatprep.subr.mxu0 0.0
    %5031 = vmatpush1.msra.mxu0 0.0
    %5032 = vmatprep.subr.mxu0 0.0
    %5033 = vmatpush1.msra.mxu0 0.0
    %5034 = vmatprep.subr.mxu0 0.0
    %5035 = vmatpush1.msra.mxu0 0.0
    %5036 = vmatprep.subr.mxu0 0.0
    %5037 = vmatpush1.msra.mxu0 0.0
    %5038 = vmatprep.subr.mxu0 0.0
    %5039 = vmatpush1.msra.mxu0 0.0
    %5040 = vmatprep.subr.mxu0 0.0
    %5041 = vmatpush1.msra.mxu0 0.0
    %5042 = vmatprep.subr.mxu0 0.0
    %5043 = vmatpush1.msra.mxu0 0.0
    %5044 = vmatprep.subr.mxu0 0.0
    %5045 = vmatpush1.msra.mxu0 0.0
    %5046 = vmatprep.subr.mxu0 0.0
    %5047 = vmatpush1.msra.mxu0 0.0
    %5048 = vmatprep.subr.mxu0 0.0
    %5049 = vmatpush1.msra.mxu0 0.0
    %5050 = vmatprep.subr.mxu0 0.0
    %5051 = vmatpush1.msra.mxu0 0.0
    %5052 = vmatprep.subr.mxu0 0.0
    %5053 = vmatpush1.msra.mxu0 0.0
    %5054 = vmatprep.subr.mxu0 0.0
    %5055 = vmatpush1.msra.mxu0 0.0
    %5056 = vmatprep.subr.mxu0 0.0
    %5057 = vmatpush1.msra.mxu0 0.0
    %5058 = vmatprep.subr.mxu0 0.0
    %5059 = vmatpush1.msra.mxu0 0.0
    %5060 = vmatprep.subr.mxu0 0.0
    %5061 = vmatpush1.msra.mxu0 0.0
    %5062 = vmatprep.subr.mxu0 0.0
    %5063 = vmatpush1.msra.mxu0 0.0
    %5064 = vmatprep.subr.mxu0 0.0
    %5065 = vmatpush1.msra.mxu0 0.0
    %5066 = vmatprep.subr.mxu0 0.0
    %5067 = vmatpush1.msra.mxu0 0.0
    %5068 = vmatprep.subr.mxu0 0.0
    %5069 = vmatpush1.msra.mxu0 0.0
    %5070 = vmatprep.subr.mxu0 0.0
    %5071 = vmatpush1.msra.mxu0 0.0
    %5072 = vmatprep.subr.mxu0 0.0
    %5073 = vmatpush1.msra.mxu0 0.0
    %5074 = vmatprep.mubr.f32.mxu0 0.0
    %5075 = vmatmul.mubr.f32.gmra.mrb[0].mxu0 %v4915
    %v5076 = vpop.f32.mrb[0].mxu0
    %v5077 = vadd.f32 0.0, %v5076
    %v5078 = vpop.f32.mrb[0].mxu0
    %5079 = vmatprep.mubr.f32.mxu0 0.0
    %5080 = vmatmul.mubr.f32.gmra.mrb[0].mxu0 %v4918
    %v5081 = vpop.f32.mrb[0].mxu0
    %v5082 = vadd.f32 0.0, %v5081
    %v5083 = vpop.f32.mrb[0].mxu0
    %5084 = vmatprep.mubr.f32.mxu0 0.0
    %5085 = vmatmul.mubr.f32.gmra.mrb[0].mxu0 %v4921
    %v5086 = vpop.f32.mrb[0].mxu0
    %v5087 = vadd.f32 0.0, %v5086
    %v5088 = vpop.f32.mrb[0].mxu0
    %5089 = vmatprep.mubr.f32.mxu0 0.0
    %5090 = vmatmul.mubr.f32.gmra.mrb[0].mxu0 %v4924
    %v5091 = vpop.f32.mrb[0].mxu0
    %v5092 = vadd.f32 0.0, %v5091
    %v5093 = vpop.f32.mrb[0].mxu0
    %5094 = vmatprep.mubr.f32.mxu0 0.0
    %5095 = vmatmul.mubr.f32.gmra.mrb[0].mxu0 %v4927
    %v5096 = vpop.f32.mrb[0].mxu0
    %v5097 = vadd.f32 0.0, %v5096
    %v5098 = vpop.f32.mrb[0].mxu0
    %5099 = vmatprep.mubr.f32.mxu0 0.0
    %5100 = vmatmul.mubr.f32.gmra.mrb[0].mxu0 %v4930
    %v5101 = vpop.f32.mrb[0].mxu0
    %v5102 = vadd.f32 0.0, %v5101
    %v5103 = vpop.f32.mrb[0].mxu0
    %5104 = vmatprep.mubr.f32.mxu0 0.0
    %5105 = vmatmul.mubr.f32.gmra.mrb[0].mxu0 %v4933
    %v5106 = vpop.f32.mrb[0].mxu0
    %v5107 = vadd.f32 0.0, %v5106
    %v5108 = vpop.f32.mrb[0].mxu0
    %5109 = vmatprep.mubr.f32.mxu0 0.0
    %5110 = vmatmul.mubr.f32.gmra.mrb[0].mxu0 %v4936
    %v5111 = vpop.f32.mrb[0].mxu0
    %v5112 = vadd.f32 0.0, %v5111
    %v5113 = vpop.f32.mrb[0].mxu0
    %5114 = vmatprep.mubr.f32.mxu0 0.0
    %5115 = vmatmul.mubr.f32.gmra.mrb[0].mxu0 %v4939
    %v5116 = vpop.f32.mrb[0].mxu0
    %v5117 = vadd.f32 0.0, %v5116
    %v5118 = vpop.f32.mrb[0].mxu0
    %5119 = vmatprep.mubr.f32.mxu0 0.0
    %5120 = vmatmul.mubr.f32.gmra.mrb[0].mxu0 %v4942
    %v5121 = vpop.f32.mrb[0].mxu0
    %v5122 = vadd.f32 0.0, %v5121
    %v5123 = vpop.f32.mrb[0].mxu0
    %5124 = vmatprep.mubr.f32.mxu0 0.0
    %5125 = vmatmul.mubr.f32.gmra.mrb[0].mxu0 %v4945
    %v5126 = vpop.f32.mrb[0].mxu0
    %v5127 = vadd.f32 0.0, %v5126
    %v5128 = vpop.f32.mrb[0].mxu0
    %5129 = vmatprep.mubr.f32.mxu0 0.0
    %5130 = vmatmul.mubr.f32.gmra.mrb[0].mxu0 %v4948
    %v5131 = vpop.f32.mrb[0].mxu0
    %v5132 = vadd.f32 0.0, %v5131
    %v5133 = vpop.f32.mrb[0].mxu0
    %5134 = vmatprep.mubr.f32.mxu0 0.0
    %5135 = vmatmul.mubr.f32.gmra.mrb[0].mxu0 %v4951
    %v5136 = vpop.f32.mrb[0].mxu0
    %v5137 = vadd.f32 0.0, %v5136
    %v5138 = vpop.f32.mrb[0].mxu0
    %5139 = vmatprep.mubr.f32.mxu0 0.0
    %5140 = vmatmul.mubr.f32.gmra.mrb[0].mxu0 %v4954
    %v5141 = vpop.f32.mrb[0].mxu0
    %v5142 = vadd.f32 0.0, %v5141
    %v5143 = vpop.f32.mrb[0].mxu0
    %5144 = vmatprep.mubr.f32.mxu0 0.0
    %5145 = vmatmul.mubr.f32.gmra.mrb[0].mxu0 %v4957
    %v5146 = vpop.f32.mrb[0].mxu0
    %v5147 = vadd.f32 0.0, %v5146
    %v5148 = vpop.f32.mrb[0].mxu0
    %5149 = vmatprep.mubr.f32.mxu0 0.0
    %5150 = vmatmul.mubr.f32.gmra.mrb[0].mxu0 %v4960
    %v5151 = vpop.f32.mrb[0].mxu0
    %v5152 = vadd.f32 0.0, %v5151
    %v5153 = vpop.f32.mrb[0].mxu0
    %5154 = vmatprep.mubr.f32.mxu0 0.0
    %5155 = vmatmul.mubr.f32.gmra.mrb[0].mxu0 %v4963
    %v5156 = vpop.f32.mrb[0].mxu0
    %v5157 = vadd.f32 0.0, %v5156
    %v5158 = vpop.f32.mrb[0].mxu0
    %5159 = vmatprep.mubr.f32.mxu0 0.0
    %5160 = vmatmul.mubr.f32.gmra.mrb[0].mxu0 %v4966
    %v5161 = vpop.f32.mrb[0].mxu0
    %v5162 = vadd.f32 0.0, %v5161
    %v5163 = vpop.f32.mrb[0].mxu0
    %5164 = vmatprep.mubr.f32.mxu0 0.0
    %5165 = vmatmul.mubr.f32.gmra.mrb[0].mxu0 %v4969
    %v5166 = vpop.f32.mrb[0].mxu0
    %v5167 = vadd.f32 0.0, %v5166
    %v5168 = vpop.f32.mrb[0].mxu0
    %5169 = vmatprep.mubr.f32.mxu0 0.0
    %5170 = vmatmul.mubr.f32.gmra.mrb[0].mxu0 %v4972
    %v5171 = vpop.f32.mrb[0].mxu0
    %v5172 = vadd.f32 0.0, %v5171
    %v5173 = vpop.f32.mrb[0].mxu0
    %5174 = vmatprep.mubr.f32.mxu0 0.0
    %5175 = vmatmul.mubr.f32.gmra.mrb[0].mxu0 %v4975
    %v5176 = vpop.f32.mrb[0].mxu0
    %v5177 = vadd.f32 0.0, %v5176
    %v5178 = vpop.f32.mrb[0].mxu0
    %5179 = vmatprep.mubr.f32.mxu0 0.0
    %5180 = vmatmul.mubr.f32.gmra.mrb[0].mxu0 %v4978
    %v5181 = vpop.f32.mrb[0].mxu0
    %v5182 = vadd.f32 0.0, %v5181
    %v5183 = vpop.f32.mrb[0].mxu0
    %5184 = vmatprep.mubr.f32.mxu0 0.0
    %5185 = vmatmul.mubr.f32.gmra.mrb[0].mxu0 %v4981
    %v5186 = vpop.f32.mrb[0].mxu0
    %v5187 = vadd.f32 0.0, %v5186
    %v5188 = vpop.f32.mrb[0].mxu0
    %5189 = vmatprep.mubr.f32.mxu0 0.0
    %5190 = vmatmul.mubr.f32.gmra.mrb[0].mxu0 %v4984
    %v5191 = vpop.f32.mrb[0].mxu0
    %v5192 = vadd.f32 0.0, %v5191
    %v5193 = vpop.f32.mrb[0].mxu0
    %5194 = vmatprep.mubr.f32.mxu0 0.0
    %5195 = vmatmul.mubr.f32.gmra.mrb[0].mxu0 %v4987
    %v5196 = vpop.f32.mrb[0].mxu0
    %v5197 = vadd.f32 0.0, %v5196
    %v5198 = vpop.f32.mrb[0].mxu0
    %5199 = vmatprep.mubr.f32.mxu0 0.0
    %5200 = vmatmul.mubr.f32.gmra.mrb[0].mxu0 %v4990
    %v5201 = vpop.f32.mrb[0].mxu0
    %v5202 = vadd.f32 0.0, %v5201
    %v5203 = vpop.f32.mrb[0].mxu0
    %5204 = vmatprep.mubr.f32.mxu0 0.0
    %5205 = vmatmul.mubr.f32.gmra.mrb[0].mxu0 %v4993
    %v5206 = vpop.f32.mrb[0].mxu0
    %v5207 = vadd.f32 0.0, %v5206
    %v5208 = vpop.f32.mrb[0].mxu0
    %5209 = vmatprep.mubr.f32.mxu0 0.0
    %5210 = vmatmul.mubr.f32.gmra.mrb[0].mxu0 %v4996
    %v5211 = vpop.f32.mrb[0].mxu0
    %v5212 = vadd.f32 0.0, %v5211
    %v5213 = vpop.f32.mrb[0].mxu0
    %5214 = vmatprep.mubr.f32.mxu0 0.0
    %5215 = vmatmul.mubr.f32.gmra.mrb[0].mxu0 %v4999
    %v5216 = vpop.f32.mrb[0].mxu0
    %v5217 = vadd.f32 0.0, %v5216
    %v5218 = vpop.f32.mrb[0].mxu0
    %5219 = vmatprep.mubr.f32.mxu0 0.0
    %5220 = vmatmul.mubr.f32.gmra.mrb[0].mxu0 %v5002
    %v5221 = vpop.f32.mrb[0].mxu0
    %v5222 = vadd.f32 0.0, %v5221
    %v5223 = vpop.f32.mrb[0].mxu0
    %5224 = vmatprep.mubr.f32.mxu0 0.0
    %5225 = vmatmul.mubr.f32.gmra.mrb[0].mxu0 %v5005
    %v5226 = vpop.f32.mrb[0].mxu0
    %v5227 = vadd.f32 0.0, %v5226
    %v5228 = vpop.f32.mrb[0].mxu0
    %5229 = vmatprep.mubr.f32.mxu0 0.0
    %5230 = vmatmul.mubr.f32.gmra.mrb[0].mxu0 %v5008
    %v5231 = vpop.f32.mrb[0].mxu0
    %v5232 = vadd.f32 0.0, %v5231
    %v5233 = vpop.f32.mrb[0].mxu0
    %5234 = vdwg.mxu0
    %v5236 = vsel %vm4913, %v4873, 0
    %v5239 = vsel %vm4913, %v4874, 0
    %v5242 = vsel %vm4913, %v4875, 0
    %v5245 = vsel %vm4913, %v4876, 0
    %v5248 = vsel %vm4913, %v4877, 0
    %v5251 = vsel %vm4913, %v4878, 0
    %v5254 = vsel %vm4913, %v4879, 0
    %v5257 = vsel %vm4913, %v4880, 0
    %v5260 = vsel %vm4913, %v4881, 0
    %v5263 = vsel %vm4913, %v4882, 0
    %v5266 = vsel %vm4913, %v4883, 0
    %v5269 = vsel %vm4913, %v4884, 0
    %v5272 = vsel %vm4913, %v4885, 0
    %v5275 = vsel %vm4913, %v4886, 0
    %v5278 = vsel %vm4913, %v4887, 0
    %v5281 = vsel %vm4913, %v4888, 0
    %v5284 = vsel %vm4913, %v4889, 0
    %v5287 = vsel %vm4913, %v4890, 0
    %v5290 = vsel %vm4913, %v4891, 0
    %v5293 = vsel %vm4913, %v4892, 0
    %v5296 = vsel %vm4913, %v4893, 0
    %v5299 = vsel %vm4913, %v4894, 0
    %v5302 = vsel %vm4913, %v4895, 0
    %v5305 = vsel %vm4913, %v4896, 0
    %v5308 = vsel %vm4913, %v4897, 0
    %v5311 = vsel %vm4913, %v4898, 0
    %v5314 = vsel %vm4913, %v4899, 0
    %v5317 = vsel %vm4913, %v4900, 0
    %v5320 = vsel %vm4913, %v4901, 0
    %v5323 = vsel %vm4913, %v4902, 0
    %v5326 = vsel %vm4913, %v4903, 0
    %v5329 = vsel %vm4913, %v4904, 0
    %5331 = vmatprep.subr.mxu0 0.0
    %5332 = vmatpush1.msra.mxu0 %v4905
    %5333 = vmatprep.subr.mxu0 0.0
    %5334 = vmatpush1.msra.mxu0 %v4906
    %5335 = vmatprep.subr.mxu0 0.0
    %5336 = vmatpush1.msra.mxu0 %v4907
    %5337 = vmatprep.subr.mxu0 0.0
    %5338 = vmatpush1.msra.mxu0 %v4908
    %5339 = vmatprep.subr.mxu0 0.0
    %5340 = vmatpush1.msra.mxu0 0.0
    %5341 = vmatprep.subr.mxu0 0.0
    %5342 = vmatpush1.msra.mxu0 0.0
    %5343 = vmatprep.subr.mxu0 0.0
    %5344 = vmatpush1.msra.mxu0 0.0
    %5345 = vmatprep.subr.mxu0 0.0
    %5346 = vmatpush1.msra.mxu0 0.0
    %5347 = vmatprep.subr.mxu0 0.0
    %5348 = vmatpush1.msra.mxu0 0.0
    %5349 = vmatprep.subr.mxu0 0.0
    %5350 = vmatpush1.msra.mxu0 0.0
    %5351 = vmatprep.subr.mxu0 0.0
    %5352 = vmatpush1.msra.mxu0 0.0
    %5353 = vmatprep.subr.mxu0 0.0
    %5354 = vmatpush1.msra.mxu0 0.0
    %5355 = vmatprep.subr.mxu0 0.0
    %5356 = vmatpush1.msra.mxu0 0.0
    %5357 = vmatprep.subr.mxu0 0.0
    %5358 = vmatpush1.msra.mxu0 0.0
    %5359 = vmatprep.subr.mxu0 0.0
    %5360 = vmatpush1.msra.mxu0 0.0
    %5361 = vmatprep.subr.mxu0 0.0
    %5362 = vmatpush1.msra.mxu0 0.0
    %5363 = vmatprep.subr.mxu0 0.0
    %5364 = vmatpush1.msra.mxu0 0.0
    %5365 = vmatprep.subr.mxu0 0.0
    %5366 = vmatpush1.msra.mxu0 0.0
    %5367 = vmatprep.subr.mxu0 0.0
    %5368 = vmatpush1.msra.mxu0 0.0
    %5369 = vmatprep.subr.mxu0 0.0
    %5370 = vmatpush1.msra.mxu0 0.0
    %5371 = vmatprep.subr.mxu0 0.0
    %5372 = vmatpush1.msra.mxu0 0.0
    %5373 = vmatprep.subr.mxu0 0.0
    %5374 = vmatpush1.msra.mxu0 0.0
    %5375 = vmatprep.subr.mxu0 0.0
    %5376 = vmatpush1.msra.mxu0 0.0
    %5377 = vmatprep.subr.mxu0 0.0
    %5378 = vmatpush1.msra.mxu0 0.0
    %5379 = vmatprep.subr.mxu0 0.0
    %5380 = vmatpush1.msra.mxu0 0.0
    %5381 = vmatprep.subr.mxu0 0.0
    %5382 = vmatpush1.msra.mxu0 0.0
    %5383 = vmatprep.subr.mxu0 0.0
    %5384 = vmatpush1.msra.mxu0 0.0
    %5385 = vmatprep.subr.mxu0 0.0
    %5386 = vmatpush1.msra.mxu0 0.0
    %5387 = vmatprep.subr.mxu0 0.0
    %5388 = vmatpush1.msra.mxu0 0.0
    %5389 = vmatprep.subr.mxu0 0.0
    %5390 = vmatpush1.msra.mxu0 0.0
    %5391 = vmatprep.subr.mxu0 0.0
    %5392 = vmatpush1.msra.mxu0 0.0
    %5393 = vmatprep.subr.mxu0 0.0
    %5394 = vmatpush1.msra.mxu0 0.0
    %5395 = vmatprep.mubr.f32.mxu0 0.0
    %5396 = vmatmul.mubr.f32.gmra.mrb[0].mxu0 %v5236
    %v5397 = vpop.f32.mrb[0].mxu0
    %v5398 = vadd.f32 %v5077, %v5397
    %v5399 = vpop.f32.mrb[0].mxu0
    %5400 = vmatprep.mubr.f32.mxu0 0.0
    %5401 = vmatmul.mubr.f32.gmra.mrb[0].mxu0 %v5239
    %v5402 = vpop.f32.mrb[0].mxu0
    %v5403 = vadd.f32 %v5082, %v5402
    %v5404 = vpop.f32.mrb[0].mxu0
    %5405 = vmatprep.mubr.f32.mxu0 0.0
    %5406 = vmatmul.mubr.f32.gmra.mrb[0].mxu0 %v5242
    %v5407 = vpop.f32.mrb[0].mxu0
    %v5408 = vadd.f32 %v5087, %v5407
    %v5409 = vpop.f32.mrb[0].mxu0
    %5410 = vmatprep.mubr.f32.mxu0 0.0
    %5411 = vmatmul.mubr.f32.gmra.mrb[0].mxu0 %v5245
    %v5412 = vpop.f32.mrb[0].mxu0
    %v5413 = vadd.f32 %v5092, %v5412
    %v5414 = vpop.f32.mrb[0].mxu0
    %5415 = vmatprep.mubr.f32.mxu0 0.0
    %5416 = vmatmul.mubr.f32.gmra.mrb[0].mxu0 %v5248
    %v5417 = vpop.f32.mrb[0].mxu0
    %v5418 = vadd.f32 %v5097, %v5417
    %v5419 = vpop.f32.mrb[0].mxu0
    %5420 = vmatprep.mubr.f32.mxu0 0.0
    %5421 = vmatmul.mubr.f32.gmra.mrb[0].mxu0 %v5251
    %v5422 = vpop.f32.mrb[0].mxu0
    %v5423 = vadd.f32 %v5102, %v5422
    %v5424 = vpop.f32.mrb[0].mxu0
    %5425 = vmatprep.mubr.f32.mxu0 0.0
    %5426 = vmatmul.mubr.f32.gmra.mrb[0].mxu0 %v5254
    %v5427 = vpop.f32.mrb[0].mxu0
    %v5428 = vadd.f32 %v5107, %v5427
    %v5429 = vpop.f32.mrb[0].mxu0
    %5430 = vmatprep.mubr.f32.mxu0 0.0
    %5431 = vmatmul.mubr.f32.gmra.mrb[0].mxu0 %v5257
    %v5432 = vpop.f32.mrb[0].mxu0
    %v5433 = vadd.f32 %v5112, %v5432
    %v5434 = vpop.f32.mrb[0].mxu0
    %5435 = vmatprep.mubr.f32.mxu0 0.0
    %5436 = vmatmul.mubr.f32.gmra.mrb[0].mxu0 %v5260
    %v5437 = vpop.f32.mrb[0].mxu0
    %v5438 = vadd.f32 %v5117, %v5437
    %v5439 = vpop.f32.mrb[0].mxu0
    %5440 = vmatprep.mubr.f32.mxu0 0.0
    %5441 = vmatmul.mubr.f32.gmra.mrb[0].mxu0 %v5263
    %v5442 = vpop.f32.mrb[0].mxu0
    %v5443 = vadd.f32 %v5122, %v5442
    %v5444 = vpop.f32.mrb[0].mxu0
    %5445 = vmatprep.mubr.f32.mxu0 0.0
    %5446 = vmatmul.mubr.f32.gmra.mrb[0].mxu0 %v5266
    %v5447 = vpop.f32.mrb[0].mxu0
    %v5448 = vadd.f32 %v5127, %v5447
    %v5449 = vpop.f32.mrb[0].mxu0
    %5450 = vmatprep.mubr.f32.mxu0 0.0
    %5451 = vmatmul.mubr.f32.gmra.mrb[0].mxu0 %v5269
    %v5452 = vpop.f32.mrb[0].mxu0
    %v5453 = vadd.f32 %v5132, %v5452
    %v5454 = vpop.f32.mrb[0].mxu0
    %5455 = vmatprep.mubr.f32.mxu0 0.0
    %5456 = vmatmul.mubr.f32.gmra.mrb[0].mxu0 %v5272
    %v5457 = vpop.f32.mrb[0].mxu0
    %v5458 = vadd.f32 %v5137, %v5457
    %v5459 = vpop.f32.mrb[0].mxu0
    %5460 = vmatprep.mubr.f32.mxu0 0.0
    %5461 = vmatmul.mubr.f32.gmra.mrb[0].mxu0 %v5275
    %v5462 = vpop.f32.mrb[0].mxu0
    %v5463 = vadd.f32 %v5142, %v5462
    %v5464 = vpop.f32.mrb[0].mxu0
    %5465 = vmatprep.mubr.f32.mxu0 0.0
    %5466 = vmatmul.mubr.f32.gmra.mrb[0].mxu0 %v5278
    %v5467 = vpop.f32.mrb[0].mxu0
    %v5468 = vadd.f32 %v5147, %v5467
    %v5469 = vpop.f32.mrb[0].mxu0
    %5470 = vmatprep.mubr.f32.mxu0 0.0
    %5471 = vmatmul.mubr.f32.gmra.mrb[0].mxu0 %v5281
    %v5472 = vpop.f32.mrb[0].mxu0
    %v5473 = vadd.f32 %v5152, %v5472
    %v5474 = vpop.f32.mrb[0].mxu0
    %5475 = vmatprep.mubr.f32.mxu0 0.0
    %5476 = vmatmul.mubr.f32.gmra.mrb[0].mxu0 %v5284
    %v5477 = vpop.f32.mrb[0].mxu0
    %v5478 = vadd.f32 %v5157, %v5477
    %v5479 = vpop.f32.mrb[0].mxu0
    %5480 = vmatprep.mubr.f32.mxu0 0.0
    %5481 = vmatmul.mubr.f32.gmra.mrb[0].mxu0 %v5287
    %v5482 = vpop.f32.mrb[0].mxu0
    %v5483 = vadd.f32 %v5162, %v5482
    %v5484 = vpop.f32.mrb[0].mxu0
    %5485 = vmatprep.mubr.f32.mxu0 0.0
    %5486 = vmatmul.mubr.f32.gmra.mrb[0].mxu0 %v5290
    %v5487 = vpop.f32.mrb[0].mxu0
    %v5488 = vadd.f32 %v5167, %v5487
    %v5489 = vpop.f32.mrb[0].mxu0
    %5490 = vmatprep.mubr.f32.mxu0 0.0
    %5491 = vmatmul.mubr.f32.gmra.mrb[0].mxu0 %v5293
    %v5492 = vpop.f32.mrb[0].mxu0
    %v5493 = vadd.f32 %v5172, %v5492
    %v5494 = vpop.f32.mrb[0].mxu0
    %5495 = vmatprep.mubr.f32.mxu0 0.0
    %5496 = vmatmul.mubr.f32.gmra.mrb[0].mxu0 %v5296
    %v5497 = vpop.f32.mrb[0].mxu0
    %v5498 = vadd.f32 %v5177, %v5497
    %v5499 = vpop.f32.mrb[0].mxu0
    %5500 = vmatprep.mubr.f32.mxu0 0.0
    %5501 = vmatmul.mubr.f32.gmra.mrb[0].mxu0 %v5299
    %v5502 = vpop.f32.mrb[0].mxu0
    %v5503 = vadd.f32 %v5182, %v5502
    %v5504 = vpop.f32.mrb[0].mxu0
    %5505 = vmatprep.mubr.f32.mxu0 0.0
    %5506 = vmatmul.mubr.f32.gmra.mrb[0].mxu0 %v5302
    %v5507 = vpop.f32.mrb[0].mxu0
    %v5508 = vadd.f32 %v5187, %v5507
    %v5509 = vpop.f32.mrb[0].mxu0
    %5510 = vmatprep.mubr.f32.mxu0 0.0
    %5511 = vmatmul.mubr.f32.gmra.mrb[0].mxu0 %v5305
    %v5512 = vpop.f32.mrb[0].mxu0
    %v5513 = vadd.f32 %v5192, %v5512
    %v5514 = vpop.f32.mrb[0].mxu0
    %5515 = vmatprep.mubr.f32.mxu0 0.0
    %5516 = vmatmul.mubr.f32.gmra.mrb[0].mxu0 %v5308
    %v5517 = vpop.f32.mrb[0].mxu0
    %v5518 = vadd.f32 %v5197, %v5517
    %v5519 = vpop.f32.mrb[0].mxu0
    %5520 = vmatprep.mubr.f32.mxu0 0.0
    %5521 = vmatmul.mubr.f32.gmra.mrb[0].mxu0 %v5311
    %v5522 = vpop.f32.mrb[0].mxu0
    %v5523 = vadd.f32 %v5202, %v5522
    %v5524 = vpop.f32.mrb[0].mxu0
    %5525 = vmatprep.mubr.f32.mxu0 0.0
    %5526 = vmatmul.mubr.f32.gmra.mrb[0].mxu0 %v5314
    %v5527 = vpop.f32.mrb[0].mxu0
    %v5528 = vadd.f32 %v5207, %v5527
    %v5529 = vpop.f32.mrb[0].mxu0
    %5530 = vmatprep.mubr.f32.mxu0 0.0
    %5531 = vmatmul.mubr.f32.gmra.mrb[0].mxu0 %v5317
    %v5532 = vpop.f32.mrb[0].mxu0
    %v5533 = vadd.f32 %v5212, %v5532
    %v5534 = vpop.f32.mrb[0].mxu0
    %5535 = vmatprep.mubr.f32.mxu0 0.0
    %5536 = vmatmul.mubr.f32.gmra.mrb[0].mxu0 %v5320
    %v5537 = vpop.f32.mrb[0].mxu0
    %v5538 = vadd.f32 %v5217, %v5537
    %v5539 = vpop.f32.mrb[0].mxu0
    %5540 = vmatprep.mubr.f32.mxu0 0.0
    %5541 = vmatmul.mubr.f32.gmra.mrb[0].mxu0 %v5323
    %v5542 = vpop.f32.mrb[0].mxu0
    %v5543 = vadd.f32 %v5222, %v5542
    %v5544 = vpop.f32.mrb[0].mxu0
    %5545 = vmatprep.mubr.f32.mxu0 0.0
    %5546 = vmatmul.mubr.f32.gmra.mrb[0].mxu0 %v5326
    %v5547 = vpop.f32.mrb[0].mxu0
    %v5548 = vadd.f32 %v5227, %v5547
    %v5549 = vpop.f32.mrb[0].mxu0
    %5550 = vmatprep.mubr.f32.mxu0 0.0
    %5551 = vmatmul.mubr.f32.gmra.mrb[0].mxu0 %v5329
    %v5552 = vpop.f32.mrb[0].mxu0
    %v5553 = vadd.f32 %v5232, %v5552
    %v5554 = vpop.f32.mrb[0].mxu0
    %5555 = vdwg.mxu0
    %v5556 = vrot.slane %v4649, 1
    %v5557 = vrot.slane %v4650, 1
    %v5558 = vrot.slane %v4651, 1
    %v5559 = vrot.slane %v4652, 1
    %v5560 = vrot.slane %v4653, 1
    %v5561 = vrot.slane %v4654, 1
    %v5562 = vrot.slane %v4655, 1
    %v5563 = vrot.slane %v4656, 1
    %v5564 = vrot.slane %v4657, 1
    %v5565 = vrot.slane %v4658, 1
    %v5566 = vrot.slane %v4659, 1
    %v5567 = vrot.slane %v4660, 1
    %v5568 = vrot.slane %v4661, 1
    %v5569 = vrot.slane %v4662, 1
    %v5570 = vrot.slane %v4663, 1
    %v5571 = vrot.slane %v4664, 1
    %v5572 = vrot.slane %v4665, 1
    %v5573 = vrot.slane %v4666, 1
    %v5574 = vrot.slane %v4667, 1
    %v5575 = vrot.slane %v4668, 1
    %v5576 = vrot.slane %v4669, 1
    %v5577 = vrot.slane %v4670, 1
    %v5578 = vrot.slane %v4671, 1
    %v5579 = vrot.slane %v4672, 1
    %v5580 = vrot.slane %v4673, 1
    %v5581 = vrot.slane %v4674, 1
    %v5582 = vrot.slane %v4675, 1
    %v5583 = vrot.slane %v4676, 1
    %v5584 = vrot.slane %v4677, 1
    %v5585 = vrot.slane %v4678, 1
    %v5586 = vrot.slane %v4679, 1
    %v5587 = vrot.slane %v4680, 1
    %v5588 = vsel %vm920, %v5586, %v5587
    %v5589 = vsel %vm920, %v5585, %v5586
    %v5590 = vsel %vm920, %v5584, %v5585
    %v5591 = vsel %vm920, %v5583, %v5584
    %v5592 = vsel %vm920, %v5582, %v5583
    %v5593 = vsel %vm920, %v5581, %v5582
    %v5594 = vsel %vm920, %v5580, %v5581
    %v5595 = vsel %vm920, %v5579, %v5580
    %v5596 = vsel %vm920, %v5578, %v5579
    %v5597 = vsel %vm920, %v5577, %v5578
    %v5598 = vsel %vm920, %v5576, %v5577
    %v5599 = vsel %vm920, %v5575, %v5576
    %v5600 = vsel %vm920, %v5574, %v5575
    %v5601 = vsel %vm920, %v5573, %v5574
    %v5602 = vsel %vm920, %v5572, %v5573
    %v5603 = vsel %vm920, %v5571, %v5572
    %v5604 = vsel %vm920, %v5570, %v5571
    %v5605 = vsel %vm920, %v5569, %v5570
    %v5606 = vsel %vm920, %v5568, %v5569
    %v5607 = vsel %vm920, %v5567, %v5568
    %v5608 = vsel %vm920, %v5566, %v5567
    %v5609 = vsel %vm920, %v5565, %v5566
    %v5610 = vsel %vm920, %v5564, %v5565
    %v5611 = vsel %vm920, %v5563, %v5564
    %v5612 = vsel %vm920, %v5562, %v5563
    %v5613 = vsel %vm920, %v5561, %v5562
    %v5614 = vsel %vm920, %v5560, %v5561
    %v5615 = vsel %vm920, %v5559, %v5560
    %v5616 = vsel %vm920, %v5558, %v5559
    %v5617 = vsel %vm920, %v5557, %v5558
    %v5618 = vsel %vm920, %v5556, %v5557
    %v5619 = vsel %vm920, %v5587, %v5556
    %v5620 = vsel %vm985, %v5618, 0.0
    %v5621 = vsel %vm986, %v5617, 0.0
    %v5622 = vsel %vm987, %v5616, 0.0
    %v5623 = vsel %vm988, %v5615, 0.0
    %v5624 = vsel %vm989, %v5614, 0.0
    %v5625 = vsel %vm990, %v5613, 0.0
    %v5626 = vsel %vm991, %v5612, 0.0
    %v5627 = vsel %vm992, %v5611, 0.0
    %v5628 = vsel %vm993, %v5610, 0.0
    %v5629 = vsel %vm994, %v5609, 0.0
    %v5630 = vsel %vm995, %v5608, 0.0
    %v5631 = vsel %vm996, %v5607, 0.0
    %v5632 = vsel %vm997, %v5606, 0.0
    %v5633 = vsel %vm998, %v5605, 0.0
    %v5634 = vsel %vm999, %v5604, 0.0
    %v5635 = vsel %vm1000, %v5603, 0.0
    %v5636 = vsel %vm1001, %v5602, 0.0
    %v5637 = vsel %vm1002, %v5601, 0.0
    %v5638 = vsel %vm1003, %v5600, 0.0
    %v5639 = vsel %vm1004, %v5599, 0.0
    %v5640 = vsel %vm1005, %v5598, 0.0
    %v5641 = vsel %vm1006, %v5597, 0.0
    %v5642 = vsel %vm1007, %v5596, 0.0
    %v5643 = vsel %vm1008, %v5595, 0.0
    %v5644 = vsel %vm1009, %v5594, 0.0
    %v5645 = vsel %vm1010, %v5593, 0.0
    %v5646 = vsel %vm1011, %v5592, 0.0
    %v5647 = vsel %vm1012, %v5591, 0.0
    %v5648 = vsel %vm1013, %v5590, 0.0
    %v5649 = vsel %vm1014, %v5589, 0.0
    %v5650 = vsel %vm1015, %v5588, 0.0
    %v5651 = vsel %vm1016, %v5619, 0.0
    %v5652 = vld [vmem:[%s2 + $0x78] sm:$0xff]
    %v5653 = vld [vmem:[%s2 + $0x80] sm:$0xff]
    %v5654 = vld [vmem:[%s2 + $0x88] sm:$0xff]
    %v5655 = vld [vmem:[%s2 + $0x90] sm:$0xff]
    %v5657 = vsel %vm4913, %v5620, 0
    %v5660 = vsel %vm4913, %v5621, 0
    %v5663 = vsel %vm4913, %v5622, 0
    %v5666 = vsel %vm4913, %v5623, 0
    %v5669 = vsel %vm4913, %v5624, 0
    %v5672 = vsel %vm4913, %v5625, 0
    %v5675 = vsel %vm4913, %v5626, 0
    %v5678 = vsel %vm4913, %v5627, 0
    %v5681 = vsel %vm4913, %v5628, 0
    %v5684 = vsel %vm4913, %v5629, 0
    %v5687 = vsel %vm4913, %v5630, 0
    %v5690 = vsel %vm4913, %v5631, 0
    %v5693 = vsel %vm4913, %v5632, 0
    %v5696 = vsel %vm4913, %v5633, 0
    %v5699 = vsel %vm4913, %v5634, 0
    %v5702 = vsel %vm4913, %v5635, 0
    %v5705 = vsel %vm4913, %v5636, 0
    %v5708 = vsel %vm4913, %v5637, 0
    %v5711 = vsel %vm4913, %v5638, 0
    %v5714 = vsel %vm4913, %v5639, 0
    %v5717 = vsel %vm4913, %v5640, 0
    %v5720 = vsel %vm4913, %v5641, 0
    %v5723 = vsel %vm4913, %v5642, 0
    %v5726 = vsel %vm4913, %v5643, 0
    %v5729 = vsel %vm4913, %v5644, 0
    %v5732 = vsel %vm4913, %v5645, 0
    %v5735 = vsel %vm4913, %v5646, 0
    %v5738 = vsel %vm4913, %v5647, 0
    %v5741 = vsel %vm4913, %v5648, 0
    %v5744 = vsel %vm4913, %v5649, 0
    %v5747 = vsel %vm4913, %v5650, 0
    %v5750 = vsel %vm4913, %v5651, 0
    %5752 = vmatprep.subr.mxu0 0.0
    %5753 = vmatpush1.msra.mxu0 %v5652
    %5754 = vmatprep.subr.mxu0 0.0
    %5755 = vmatpush1.msra.mxu0 %v5653
    %5756 = vmatprep.subr.mxu0 0.0
    %5757 = vmatpush1.msra.mxu0 %v5654
    %5758 = vmatprep.subr.mxu0 0.0
    %5759 = vmatpush1.msra.mxu0 %v5655
    %5760 = vmatprep.subr.mxu0 0.0
    %5761 = vmatpush1.msra.mxu0 0.0
    %5762 = vmatprep.subr.mxu0 0.0
    %5763 = vmatpush1.msra.mxu0 0.0
    %5764 = vmatprep.subr.mxu0 0.0
    %5765 = vmatpush1.msra.mxu0 0.0
    %5766 = vmatprep.subr.mxu0 0.0
    %5767 = vmatpush1.msra.mxu0 0.0
    %5768 = vmatprep.subr.mxu0 0.0
    %5769 = vmatpush1.msra.mxu0 0.0
    %5770 = vmatprep.subr.mxu0 0.0
    %5771 = vmatpush1.msra.mxu0 0.0
    %5772 = vmatprep.subr.mxu0 0.0
    %5773 = vmatpush1.msra.mxu0 0.0
    %5774 = vmatprep.subr.mxu0 0.0
    %5775 = vmatpush1.msra.mxu0 0.0
    %5776 = vmatprep.subr.mxu0 0.0
    %5777 = vmatpush1.msra.mxu0 0.0
    %5778 = vmatprep.subr.mxu0 0.0
    %5779 = vmatpush1.msra.mxu0 0.0
    %5780 = vmatprep.subr.mxu0 0.0
    %5781 = vmatpush1.msra.mxu0 0.0
    %5782 = vmatprep.subr.mxu0 0.0
    %5783 = vmatpush1.msra.mxu0 0.0
    %5784 = vmatprep.subr.mxu0 0.0
    %5785 = vmatpush1.msra.mxu0 0.0
    %5786 = vmatprep.subr.mxu0 0.0
    %5787 = vmatpush1.msra.mxu0 0.0
    %5788 = vmatprep.subr.mxu0 0.0
    %5789 = vmatpush1.msra.mxu0 0.0
    %5790 = vmatprep.subr.mxu0 0.0
    %5791 = vmatpush1.msra.mxu0 0.0
    %5792 = vmatprep.subr.mxu0 0.0
    %5793 = vmatpush1.msra.mxu0 0.0
    %5794 = vmatprep.subr.mxu0 0.0
    %5795 = vmatpush1.msra.mxu0 0.0
    %5796 = vmatprep.subr.mxu0 0.0
    %5797 = vmatpush1.msra.mxu0 0.0
    %5798 = vmatprep.subr.mxu0 0.0
    %5799 = vmatpush1.msra.mxu0 0.0
    %5800 = vmatprep.subr.mxu0 0.0
    %5801 = vmatpush1.msra.mxu0 0.0
    %5802 = vmatprep.subr.mxu0 0.0
    %5803 = vmatpush1.msra.mxu0 0.0
    %5804 = vmatprep.subr.mxu0 0.0
    %5805 = vmatpush1.msra.mxu0 0.0
    %5806 = vmatprep.subr.mxu0 0.0
    %5807 = vmatpush1.msra.mxu0 0.0
    %5808 = vmatprep.subr.mxu0 0.0
    %5809 = vmatpush1.msra.mxu0 0.0
    %5810 = vmatprep.subr.mxu0 0.0
    %5811 = vmatpush1.msra.mxu0 0.0
    %5812 = vmatprep.subr.mxu0 0.0
    %5813 = vmatpush1.msra.mxu0 0.0
    %5814 = vmatprep.subr.mxu0 0.0
    %5815 = vmatpush1.msra.mxu0 0.0
    %5816 = vmatprep.mubr.f32.mxu0 0.0
    %5817 = vmatmul.mubr.f32.gmra.mrb[0].mxu0 %v5657
    %v5818 = vpop.f32.mrb[0].mxu0
    %v5819 = vadd.f32 0.0, %v5818
    %v5820 = vpop.f32.mrb[0].mxu0
    %5821 = vmatprep.mubr.f32.mxu0 0.0
    %5822 = vmatmul.mubr.f32.gmra.mrb[0].mxu0 %v5660
    %v5823 = vpop.f32.mrb[0].mxu0
    %v5824 = vadd.f32 0.0, %v5823
    %v5825 = vpop.f32.mrb[0].mxu0
    %5826 = vmatprep.mubr.f32.mxu0 0.0
    %5827 = vmatmul.mubr.f32.gmra.mrb[0].mxu0 %v5663
    %v5828 = vpop.f32.mrb[0].mxu0
    %v5829 = vadd.f32 0.0, %v5828
    %v5830 = vpop.f32.mrb[0].mxu0
    %5831 = vmatprep.mubr.f32.mxu0 0.0
    %5832 = vmatmul.mubr.f32.gmra.mrb[0].mxu0 %v5666
    %v5833 = vpop.f32.mrb[0].mxu0
    %v5834 = vadd.f32 0.0, %v5833
    %v5835 = vpop.f32.mrb[0].mxu0
    %5836 = vmatprep.mubr.f32.mxu0 0.0
    %5837 = vmatmul.mubr.f32.gmra.mrb[0].mxu0 %v5669
    %v5838 = vpop.f32.mrb[0].mxu0
    %v5839 = vadd.f32 0.0, %v5838
    %v5840 = vpop.f32.mrb[0].mxu0
    %5841 = vmatprep.mubr.f32.mxu0 0.0
    %5842 = vmatmul.mubr.f32.gmra.mrb[0].mxu0 %v5672
    %v5843 = vpop.f32.mrb[0].mxu0
    %v5844 = vadd.f32 0.0, %v5843
    %v5845 = vpop.f32.mrb[0].mxu0
    %5846 = vmatprep.mubr.f32.mxu0 0.0
    %5847 = vmatmul.mubr.f32.gmra.mrb[0].mxu0 %v5675
    %v5848 = vpop.f32.mrb[0].mxu0
    %v5849 = vadd.f32 0.0, %v5848
    %v5850 = vpop.f32.mrb[0].mxu0
    %5851 = vmatprep.mubr.f32.mxu0 0.0
    %5852 = vmatmul.mubr.f32.gmra.mrb[0].mxu0 %v5678
    %v5853 = vpop.f32.mrb[0].mxu0
    %v5854 = vadd.f32 0.0, %v5853
    %v5855 = vpop.f32.mrb[0].mxu0
    %5856 = vmatprep.mubr.f32.mxu0 0.0
    %5857 = vmatmul.mubr.f32.gmra.mrb[0].mxu0 %v5681
    %v5858 = vpop.f32.mrb[0].mxu0
    %v5859 = vadd.f32 0.0, %v5858
    %v5860 = vpop.f32.mrb[0].mxu0
    %5861 = vmatprep.mubr.f32.mxu0 0.0
    %5862 = vmatmul.mubr.f32.gmra.mrb[0].mxu0 %v5684
    %v5863 = vpop.f32.mrb[0].mxu0
    %v5864 = vadd.f32 0.0, %v5863
    %v5865 = vpop.f32.mrb[0].mxu0
    %5866 = vmatprep.mubr.f32.mxu0 0.0
    %5867 = vmatmul.mubr.f32.gmra.mrb[0].mxu0 %v5687
    %v5868 = vpop.f32.mrb[0].mxu0
    %v5869 = vadd.f32 0.0, %v5868
    %v5870 = vpop.f32.mrb[0].mxu0
    %5871 = vmatprep.mubr.f32.mxu0 0.0
    %5872 = vmatmul.mubr.f32.gmra.mrb[0].mxu0 %v5690
    %v5873 = vpop.f32.mrb[0].mxu0
    %v5874 = vadd.f32 0.0, %v5873
    %v5875 = vpop.f32.mrb[0].mxu0
    %5876 = vmatprep.mubr.f32.mxu0 0.0
    %5877 = vmatmul.mubr.f32.gmra.mrb[0].mxu0 %v5693
    %v5878 = vpop.f32.mrb[0].mxu0
    %v5879 = vadd.f32 0.0, %v5878
    %v5880 = vpop.f32.mrb[0].mxu0
    %5881 = vmatprep.mubr.f32.mxu0 0.0
    %5882 = vmatmul.mubr.f32.gmra.mrb[0].mxu0 %v5696
    %v5883 = vpop.f32.mrb[0].mxu0
    %v5884 = vadd.f32 0.0, %v5883
    %v5885 = vpop.f32.mrb[0].mxu0
    %5886 = vmatprep.mubr.f32.mxu0 0.0
    %5887 = vmatmul.mubr.f32.gmra.mrb[0].mxu0 %v5699
    %v5888 = vpop.f32.mrb[0].mxu0
    %v5889 = vadd.f32 0.0, %v5888
    %v5890 = vpop.f32.mrb[0].mxu0
    %5891 = vmatprep.mubr.f32.mxu0 0.0
    %5892 = vmatmul.mubr.f32.gmra.mrb[0].mxu0 %v5702
    %v5893 = vpop.f32.mrb[0].mxu0
    %v5894 = vadd.f32 0.0, %v5893
    %v5895 = vpop.f32.mrb[0].mxu0
    %5896 = vmatprep.mubr.f32.mxu0 0.0
    %5897 = vmatmul.mubr.f32.gmra.mrb[0].mxu0 %v5705
    %v5898 = vpop.f32.mrb[0].mxu0
    %v5899 = vadd.f32 0.0, %v5898
    %v5900 = vpop.f32.mrb[0].mxu0
    %5901 = vmatprep.mubr.f32.mxu0 0.0
    %5902 = vmatmul.mubr.f32.gmra.mrb[0].mxu0 %v5708
    %v5903 = vpop.f32.mrb[0].mxu0
    %v5904 = vadd.f32 0.0, %v5903
    %v5905 = vpop.f32.mrb[0].mxu0
    %5906 = vmatprep.mubr.f32.mxu0 0.0
    %5907 = vmatmul.mubr.f32.gmra.mrb[0].mxu0 %v5711
    %v5908 = vpop.f32.mrb[0].mxu0
    %v5909 = vadd.f32 0.0, %v5908
    %v5910 = vpop.f32.mrb[0].mxu0
    %5911 = vmatprep.mubr.f32.mxu0 0.0
    %5912 = vmatmul.mubr.f32.gmra.mrb[0].mxu0 %v5714
    %v5913 = vpop.f32.mrb[0].mxu0
    %v5914 = vadd.f32 0.0, %v5913
    %v5915 = vpop.f32.mrb[0].mxu0
    %5916 = vmatprep.mubr.f32.mxu0 0.0
    %5917 = vmatmul.mubr.f32.gmra.mrb[0].mxu0 %v5717
    %v5918 = vpop.f32.mrb[0].mxu0
    %v5919 = vadd.f32 0.0, %v5918
    %v5920 = vpop.f32.mrb[0].mxu0
    %5921 = vmatprep.mubr.f32.mxu0 0.0
    %5922 = vmatmul.mubr.f32.gmra.mrb[0].mxu0 %v5720
    %v5923 = vpop.f32.mrb[0].mxu0
    %v5924 = vadd.f32 0.0, %v5923
    %v5925 = vpop.f32.mrb[0].mxu0
    %5926 = vmatprep.mubr.f32.mxu0 0.0
    %5927 = vmatmul.mubr.f32.gmra.mrb[0].mxu0 %v5723
    %v5928 = vpop.f32.mrb[0].mxu0
    %v5929 = vadd.f32 0.0, %v5928
    %v5930 = vpop.f32.mrb[0].mxu0
    %5931 = vmatprep.mubr.f32.mxu0 0.0
    %5932 = vmatmul.mubr.f32.gmra.mrb[0].mxu0 %v5726
    %v5933 = vpop.f32.mrb[0].mxu0
    %v5934 = vadd.f32 0.0, %v5933
    %v5935 = vpop.f32.mrb[0].mxu0
    %5936 = vmatprep.mubr.f32.mxu0 0.0
    %5937 = vmatmul.mubr.f32.gmra.mrb[0].mxu0 %v5729
    %v5938 = vpop.f32.mrb[0].mxu0
    %v5939 = vadd.f32 0.0, %v5938
    %v5940 = vpop.f32.mrb[0].mxu0
    %5941 = vmatprep.mubr.f32.mxu0 0.0
    %5942 = vmatmul.mubr.f32.gmra.mrb[0].mxu0 %v5732
    %v5943 = vpop.f32.mrb[0].mxu0
    %v5944 = vadd.f32 0.0, %v5943
    %v5945 = vpop.f32.mrb[0].mxu0
    %5946 = vmatprep.mubr.f32.mxu0 0.0
    %5947 = vmatmul.mubr.f32.gmra.mrb[0].mxu0 %v5735
    %v5948 = vpop.f32.mrb[0].mxu0
    %v5949 = vadd.f32 0.0, %v5948
    %v5950 = vpop.f32.mrb[0].mxu0
    %5951 = vmatprep.mubr.f32.mxu0 0.0
    %5952 = vmatmul.mubr.f32.gmra.mrb[0].mxu0 %v5738
    %v5953 = vpop.f32.mrb[0].mxu0
    %v5954 = vadd.f32 0.0, %v5953
    %v5955 = vpop.f32.mrb[0].mxu0
    %5956 = vmatprep.mubr.f32.mxu0 0.0
    %5957 = vmatmul.mubr.f32.gmra.mrb[0].mxu0 %v5741
    %v5958 = vpop.f32.mrb[0].mxu0
    %v5959 = vadd.f32 0.0, %v5958
    %v5960 = vpop.f32.mrb[0].mxu0
    %5961 = vmatprep.mubr.f32.mxu0 0.0
    %5962 = vmatmul.mubr.f32.gmra.mrb[0].mxu0 %v5744
    %v5963 = vpop.f32.mrb[0].mxu0
    %v5964 = vadd.f32 0.0, %v5963
    %v5965 = vpop.f32.mrb[0].mxu0
    %5966 = vmatprep.mubr.f32.mxu0 0.0
    %5967 = vmatmul.mubr.f32.gmra.mrb[0].mxu0 %v5747
    %v5968 = vpop.f32.mrb[0].mxu0
    %v5969 = vadd.f32 0.0, %v5968
    %v5970 = vpop.f32.mrb[0].mxu0
    %5971 = vmatprep.mubr.f32.mxu0 0.0
    %5972 = vmatmul.mubr.f32.gmra.mrb[0].mxu0 %v5750
    %v5973 = vpop.f32.mrb[0].mxu0
    %v5974 = vadd.f32 0.0, %v5973
    %v5975 = vpop.f32.mrb[0].mxu0
    %5976 = vdwg.mxu0
    %v5977 = vadd.f32 %v5398, %v5819
    %v5978 = vadd.f32 %v5403, %v5824
    %v5979 = vadd.f32 %v5408, %v5829
    %v5980 = vadd.f32 %v5413, %v5834
    %v5981 = vadd.f32 %v5418, %v5839
    %v5982 = vadd.f32 %v5423, %v5844
    %v5983 = vadd.f32 %v5428, %v5849
    %v5984 = vadd.f32 %v5433, %v5854
    %v5985 = vadd.f32 %v5438, %v5859
    %v5986 = vadd.f32 %v5443, %v5864
    %v5987 = vadd.f32 %v5448, %v5869
    %v5988 = vadd.f32 %v5453, %v5874
    %v5989 = vadd.f32 %v5458, %v5879
    %v5990 = vadd.f32 %v5463, %v5884
    %v5991 = vadd.f32 %v5468, %v5889
    %v5992 = vadd.f32 %v5473, %v5894
    %v5993 = vadd.f32 %v5478, %v5899
    %v5994 = vadd.f32 %v5483, %v5904
    %v5995 = vadd.f32 %v5488, %v5909
    %v5996 = vadd.f32 %v5493, %v5914
    %v5997 = vadd.f32 %v5498, %v5919
    %v5998 = vadd.f32 %v5503, %v5924
    %v5999 = vadd.f32 %v5508, %v5929
    %v6000 = vadd.f32 %v5513, %v5934
    %v6001 = vadd.f32 %v5518, %v5939
    %v6002 = vadd.f32 %v5523, %v5944
    %v6003 = vadd.f32 %v5528, %v5949
    %v6004 = vadd.f32 %v5533, %v5954
    %v6005 = vadd.f32 %v5538, %v5959
    %v6006 = vadd.f32 %v5543, %v5964
    %v6007 = vadd.f32 %v5548, %v5969
    %v6008 = vadd.f32 %v5553, %v5974
    %v6009 = vld [vmem:[%s4 + $0x2] ss:$0 sm:$0xff]
    %v6010 = vadd.f32 %v5977, %v6009
    %v6011 = vadd.f32 %v5978, %v6009
    %v6012 = vadd.f32 %v5979, %v6009
    %v6013 = vadd.f32 %v5980, %v6009
    %v6014 = vadd.f32 %v5981, %v6009
    %v6015 = vadd.f32 %v5982, %v6009
    %v6016 = vadd.f32 %v5983, %v6009
    %v6017 = vadd.f32 %v5984, %v6009
    %v6018 = vadd.f32 %v5985, %v6009
    %v6019 = vadd.f32 %v5986, %v6009
    %v6020 = vadd.f32 %v5987, %v6009
    %v6021 = vadd.f32 %v5988, %v6009
    %v6022 = vadd.f32 %v5989, %v6009
    %v6023 = vadd.f32 %v5990, %v6009
    %v6024 = vadd.f32 %v5991, %v6009
    %v6025 = vadd.f32 %v5992, %v6009
    %v6026 = vadd.f32 %v5993, %v6009
    %v6027 = vadd.f32 %v5994, %v6009
    %v6028 = vadd.f32 %v5995, %v6009
    %v6029 = vadd.f32 %v5996, %v6009
    %v6030 = vadd.f32 %v5997, %v6009
    %v6031 = vadd.f32 %v5998, %v6009
    %v6032 = vadd.f32 %v5999, %v6009
    %v6033 = vadd.f32 %v6000, %v6009
    %v6034 = vadd.f32 %v6001, %v6009
    %v6035 = vadd.f32 %v6002, %v6009
    %v6036 = vadd.f32 %v6003, %v6009
    %v6037 = vadd.f32 %v6004, %v6009
    %v6038 = vadd.f32 %v6005, %v6009
    %v6039 = vadd.f32 %v6006, %v6009
    %v6040 = vadd.f32 %v6007, %v6009
    %v6041 = vadd.f32 %v6008, %v6009
    %v6042 = vadd.f32 %v6010, %v4777
    %v6043 = vadd.f32 %v6011, %v4778
    %v6044 = vadd.f32 %v6012, %v4779
    %v6045 = vadd.f32 %v6013, %v4780
    %v6046 = vadd.f32 %v6014, %v4781
    %v6047 = vadd.f32 %v6015, %v4782
    %v6048 = vadd.f32 %v6016, %v4783
    %v6049 = vadd.f32 %v6017, %v4784
    %v6050 = vadd.f32 %v6018, %v4785
    %v6051 = vadd.f32 %v6019, %v4786
    %v6052 = vadd.f32 %v6020, %v4787
    %v6053 = vadd.f32 %v6021, %v4788
    %v6054 = vadd.f32 %v6022, %v4789
    %v6055 = vadd.f32 %v6023, %v4790
    %v6056 = vadd.f32 %v6024, %v4791
    %v6057 = vadd.f32 %v6025, %v4792
    %v6058 = vadd.f32 %v6026, %v4793
    %v6059 = vadd.f32 %v6027, %v4794
    %v6060 = vadd.f32 %v6028, %v4795
    %v6061 = vadd.f32 %v6029, %v4796
    %v6062 = vadd.f32 %v6030, %v4797
    %v6063 = vadd.f32 %v6031, %v4798
    %v6064 = vadd.f32 %v6032, %v4799
    %v6065 = vadd.f32 %v6033, %v4800
    %v6066 = vadd.f32 %v6034, %v4801
    %v6067 = vadd.f32 %v6035, %v4802
    %v6068 = vadd.f32 %v6036, %v4803
    %v6069 = vadd.f32 %v6037, %v4804
    %v6070 = vadd.f32 %v6038, %v4805
    %v6071 = vadd.f32 %v6039, %v4806
    %v6072 = vadd.f32 %v6040, %v4807
    %v6073 = vadd.f32 %v6041, %v4808
    %v6074 = vmax.f32 %v6042, 0.0
    %v6075 = vmax.f32 %v6043, 0.0
    %v6076 = vmax.f32 %v6044, 0.0
    %v6077 = vmax.f32 %v6045, 0.0
    %v6078 = vmax.f32 %v6046, 0.0
    %v6079 = vmax.f32 %v6047, 0.0
    %v6080 = vmax.f32 %v6048, 0.0
    %v6081 = vmax.f32 %v6049, 0.0
    %v6082 = vmax.f32 %v6050, 0.0
    %v6083 = vmax.f32 %v6051, 0.0
    %v6084 = vmax.f32 %v6052, 0.0
    %v6085 = vmax.f32 %v6053, 0.0
    %v6086 = vmax.f32 %v6054, 0.0
    %v6087 = vmax.f32 %v6055, 0.0
    %v6088 = vmax.f32 %v6056, 0.0
    %v6089 = vmax.f32 %v6057, 0.0
    %v6090 = vmax.f32 %v6058, 0.0
    %v6091 = vmax.f32 %v6059, 0.0
    %v6092 = vmax.f32 %v6060, 0.0
    %v6093 = vmax.f32 %v6061, 0.0
    %v6094 = vmax.f32 %v6062, 0.0
    %v6095 = vmax.f32 %v6063, 0.0
    %v6096 = vmax.f32 %v6064, 0.0
    %v6097 = vmax.f32 %v6065, 0.0
    %v6098 = vmax.f32 %v6066, 0.0
    %v6099 = vmax.f32 %v6067, 0.0
    %v6100 = vmax.f32 %v6068, 0.0
    %v6101 = vmax.f32 %v6069, 0.0
    %v6102 = vmax.f32 %v6070, 0.0
    %v6103 = vmax.f32 %v6071, 0.0
    %v6104 = vmax.f32 %v6072, 0.0
    %v6105 = vmax.f32 %v6073, 0.0
    %v6106 = vld [vmem:[%s2 + $0x98] sm:$0xff]
    %v6107 = vld [vmem:[%s2 + $0xa0] sm:$0xff]
    %v6108 = vld [vmem:[%s2 + $0xa8] sm:$0xff]
    %v6109 = vld [vmem:[%s2 + $0xb0] sm:$0xff]
    %v6110 = vld [vmem:[%s4 + $0x3] ss:$0 sm:$0xff]
    %v6112 = vsel %vm4913, %v6074, 0
    %v6115 = vsel %vm4913, %v6075, 0
    %v6118 = vsel %vm4913, %v6076, 0
    %v6121 = vsel %vm4913, %v6077, 0
    %v6124 = vsel %vm4913, %v6078, 0
    %v6127 = vsel %vm4913, %v6079, 0
    %v6130 = vsel %vm4913, %v6080, 0
    %v6133 = vsel %vm4913, %v6081, 0
    %v6136 = vsel %vm4913, %v6082, 0
    %v6139 = vsel %vm4913, %v6083, 0
    %v6142 = vsel %vm4913, %v6084, 0
    %v6145 = vsel %vm4913, %v6085, 0
    %v6148 = vsel %vm4913, %v6086, 0
    %v6151 = vsel %vm4913, %v6087, 0
    %v6154 = vsel %vm4913, %v6088, 0
    %v6157 = vsel %vm4913, %v6089, 0
    %v6160 = vsel %vm4913, %v6090, 0
    %v6163 = vsel %vm4913, %v6091, 0
    %v6166 = vsel %vm4913, %v6092, 0
    %v6169 = vsel %vm4913, %v6093, 0
    %v6172 = vsel %vm4913, %v6094, 0
    %v6175 = vsel %vm4913, %v6095, 0
    %v6178 = vsel %vm4913, %v6096, 0
    %v6181 = vsel %vm4913, %v6097, 0
    %v6184 = vsel %vm4913, %v6098, 0
    %v6187 = vsel %vm4913, %v6099, 0
    %v6190 = vsel %vm4913, %v6100, 0
    %v6193 = vsel %vm4913, %v6101, 0
    %v6196 = vsel %vm4913, %v6102, 0
    %v6199 = vsel %vm4913, %v6103, 0
    %v6202 = vsel %vm4913, %v6104, 0
    %v6205 = vsel %vm4913, %v6105, 0
    %6207 = vmatprep.subr.mxu0 0.0
    %6208 = vmatpush1.msra.mxu0 %v6106
    %6209 = vmatprep.subr.mxu0 0.0
    %6210 = vmatpush1.msra.mxu0 %v6107
    %6211 = vmatprep.subr.mxu0 0.0
    %6212 = vmatpush1.msra.mxu0 %v6108
    %6213 = vmatprep.subr.mxu0 0.0
    %6214 = vmatpush1.msra.mxu0 %v6109
    %6215 = vmatprep.subr.mxu0 0.0
    %6216 = vmatpush1.msra.mxu0 0.0
    %6217 = vmatprep.subr.mxu0 0.0
    %6218 = vmatpush1.msra.mxu0 0.0
    %6219 = vmatprep.subr.mxu0 0.0
    %6220 = vmatpush1.msra.mxu0 0.0
    %6221 = vmatprep.subr.mxu0 0.0
    %6222 = vmatpush1.msra.mxu0 0.0
    %6223 = vmatprep.subr.mxu0 0.0
    %6224 = vmatpush1.msra.mxu0 0.0
    %6225 = vmatprep.subr.mxu0 0.0
    %6226 = vmatpush1.msra.mxu0 0.0
    %6227 = vmatprep.subr.mxu0 0.0
    %6228 = vmatpush1.msra.mxu0 0.0
    %6229 = vmatprep.subr.mxu0 0.0
    %6230 = vmatpush1.msra.mxu0 0.0
    %6231 = vmatprep.subr.mxu0 0.0
    %6232 = vmatpush1.msra.mxu0 0.0
    %6233 = vmatprep.subr.mxu0 0.0
    %6234 = vmatpush1.msra.mxu0 0.0
    %6235 = vmatprep.subr.mxu0 0.0
    %6236 = vmatpush1.msra.mxu0 0.0
    %6237 = vmatprep.subr.mxu0 0.0
    %6238 = vmatpush1.msra.mxu0 0.0
    %6239 = vmatprep.subr.mxu0 0.0
    %6240 = vmatpush1.msra.mxu0 0.0
    %6241 = vmatprep.subr.mxu0 0.0
    %6242 = vmatpush1.msra.mxu0 0.0
    %6243 = vmatprep.subr.mxu0 0.0
    %6244 = vmatpush1.msra.mxu0 0.0
    %6245 = vmatprep.subr.mxu0 0.0
    %6246 = vmatpush1.msra.mxu0 0.0
    %6247 = vmatprep.subr.mxu0 0.0
    %6248 = vmatpush1.msra.mxu0 0.0
    %6249 = vmatprep.subr.mxu0 0.0
    %6250 = vmatpush1.msra.mxu0 0.0
    %6251 = vmatprep.subr.mxu0 0.0
    %6252 = vmatpush1.msra.mxu0 0.0
    %6253 = vmatprep.subr.mxu0 0.0
    %6254 = vmatpush1.msra.mxu0 0.0
    %6255 = vmatprep.subr.mxu0 0.0
    %6256 = vmatpush1.msra.mxu0 0.0
    %6257 = vmatprep.subr.mxu0 0.0
    %6258 = vmatpush1.msra.mxu0 0.0
    %6259 = vmatprep.subr.mxu0 0.0
    %6260 = vmatpush1.msra.mxu0 0.0
    %6261 = vmatprep.subr.mxu0 0.0
    %6262 = vmatpush1.msra.mxu0 0.0
    %6263 = vmatprep.subr.mxu0 0.0
    %6264 = vmatpush1.msra.mxu0 0.0
    %6265 = vmatprep.subr.mxu0 0.0
    %6266 = vmatpush1.msra.mxu0 0.0
    %6267 = vmatprep.subr.mxu0 0.0
    %6268 = vmatpush1.msra.mxu0 0.0
    %6269 = vmatprep.subr.mxu0 0.0
    %6270 = vmatpush1.msra.mxu0 0.0
    %6271 = vmatprep.mubr.f32.mxu0 0.0
    %6272 = vmatmul.mubr.f32.gmra.mrb[0].mxu0 %v6112
    %v6273 = vpop.f32.mrb[0].mxu0
    %v6274 = vadd.f32 %v6110, %v6273
    %v6275 = vpop.f32.mrb[0].mxu0
    %6276 = vmatprep.mubr.f32.mxu0 0.0
    %6277 = vmatmul.mubr.f32.gmra.mrb[0].mxu0 %v6115
    %v6278 = vpop.f32.mrb[0].mxu0
    %v6279 = vadd.f32 %v6110, %v6278
    %v6280 = vpop.f32.mrb[0].mxu0
    %6281 = vmatprep.mubr.f32.mxu0 0.0
    %6282 = vmatmul.mubr.f32.gmra.mrb[0].mxu0 %v6118
    %v6283 = vpop.f32.mrb[0].mxu0
    %v6284 = vadd.f32 %v6110, %v6283
    %v6285 = vpop.f32.mrb[0].mxu0
    %6286 = vmatprep.mubr.f32.mxu0 0.0
    %6287 = vmatmul.mubr.f32.gmra.mrb[0].mxu0 %v6121
    %v6288 = vpop.f32.mrb[0].mxu0
    %v6289 = vadd.f32 %v6110, %v6288
    %v6290 = vpop.f32.mrb[0].mxu0
    %6291 = vmatprep.mubr.f32.mxu0 0.0
    %6292 = vmatmul.mubr.f32.gmra.mrb[0].mxu0 %v6124
    %v6293 = vpop.f32.mrb[0].mxu0
    %v6294 = vadd.f32 %v6110, %v6293
    %v6295 = vpop.f32.mrb[0].mxu0
    %6296 = vmatprep.mubr.f32.mxu0 0.0
    %6297 = vmatmul.mubr.f32.gmra.mrb[0].mxu0 %v6127
    %v6298 = vpop.f32.mrb[0].mxu0
    %v6299 = vadd.f32 %v6110, %v6298
    %v6300 = vpop.f32.mrb[0].mxu0
    %6301 = vmatprep.mubr.f32.mxu0 0.0
    %6302 = vmatmul.mubr.f32.gmra.mrb[0].mxu0 %v6130
    %v6303 = vpop.f32.mrb[0].mxu0
    %v6304 = vadd.f32 %v6110, %v6303
    %v6305 = vpop.f32.mrb[0].mxu0
    %6306 = vmatprep.mubr.f32.mxu0 0.0
    %6307 = vmatmul.mubr.f32.gmra.mrb[0].mxu0 %v6133
    %v6308 = vpop.f32.mrb[0].mxu0
    %v6309 = vadd.f32 %v6110, %v6308
    %v6310 = vpop.f32.mrb[0].mxu0
    %6311 = vmatprep.mubr.f32.mxu0 0.0
    %6312 = vmatmul.mubr.f32.gmra.mrb[0].mxu0 %v6136
    %v6313 = vpop.f32.mrb[0].mxu0
    %v6314 = vadd.f32 %v6110, %v6313
    %v6315 = vpop.f32.mrb[0].mxu0
    %6316 = vmatprep.mubr.f32.mxu0 0.0
    %6317 = vmatmul.mubr.f32.gmra.mrb[0].mxu0 %v6139
    %v6318 = vpop.f32.mrb[0].mxu0
    %v6319 = vadd.f32 %v6110, %v6318
    %v6320 = vpop.f32.mrb[0].mxu0
    %6321 = vmatprep.mubr.f32.mxu0 0.0
    %6322 = vmatmul.mubr.f32.gmra.mrb[0].mxu0 %v6142
    %v6323 = vpop.f32.mrb[0].mxu0
    %v6324 = vadd.f32 %v6110, %v6323
    %v6325 = vpop.f32.mrb[0].mxu0
    %6326 = vmatprep.mubr.f32.mxu0 0.0
    %6327 = vmatmul.mubr.f32.gmra.mrb[0].mxu0 %v6145
    %v6328 = vpop.f32.mrb[0].mxu0
    %v6329 = vadd.f32 %v6110, %v6328
    %v6330 = vpop.f32.mrb[0].mxu0
    %6331 = vmatprep.mubr.f32.mxu0 0.0
    %6332 = vmatmul.mubr.f32.gmra.mrb[0].mxu0 %v6148
    %v6333 = vpop.f32.mrb[0].mxu0
    %v6334 = vadd.f32 %v6110, %v6333
    %v6335 = vpop.f32.mrb[0].mxu0
    %6336 = vmatprep.mubr.f32.mxu0 0.0
    %6337 = vmatmul.mubr.f32.gmra.mrb[0].mxu0 %v6151
    %v6338 = vpop.f32.mrb[0].mxu0
    %v6339 = vadd.f32 %v6110, %v6338
    %v6340 = vpop.f32.mrb[0].mxu0
    %6341 = vmatprep.mubr.f32.mxu0 0.0
    %6342 = vmatmul.mubr.f32.gmra.mrb[0].mxu0 %v6154
    %v6343 = vpop.f32.mrb[0].mxu0
    %v6344 = vadd.f32 %v6110, %v6343
    %v6345 = vpop.f32.mrb[0].mxu0
    %6346 = vmatprep.mubr.f32.mxu0 0.0
    %6347 = vmatmul.mubr.f32.gmra.mrb[0].mxu0 %v6157
    %v6348 = vpop.f32.mrb[0].mxu0
    %v6349 = vadd.f32 %v6110, %v6348
    %v6350 = vpop.f32.mrb[0].mxu0
    %6351 = vmatprep.mubr.f32.mxu0 0.0
    %6352 = vmatmul.mubr.f32.gmra.mrb[0].mxu0 %v6160
    %v6353 = vpop.f32.mrb[0].mxu0
    %v6354 = vadd.f32 %v6110, %v6353
    %v6355 = vpop.f32.mrb[0].mxu0
    %6356 = vmatprep.mubr.f32.mxu0 0.0
    %6357 = vmatmul.mubr.f32.gmra.mrb[0].mxu0 %v6163
    %v6358 = vpop.f32.mrb[0].mxu0
    %v6359 = vadd.f32 %v6110, %v6358
    %v6360 = vpop.f32.mrb[0].mxu0
    %6361 = vmatprep.mubr.f32.mxu0 0.0
    %6362 = vmatmul.mubr.f32.gmra.mrb[0].mxu0 %v6166
    %v6363 = vpop.f32.mrb[0].mxu0
    %v6364 = vadd.f32 %v6110, %v6363
    %v6365 = vpop.f32.mrb[0].mxu0
    %6366 = vmatprep.mubr.f32.mxu0 0.0
    %6367 = vmatmul.mubr.f32.gmra.mrb[0].mxu0 %v6169
    %v6368 = vpop.f32.mrb[0].mxu0
    %v6369 = vadd.f32 %v6110, %v6368
    %v6370 = vpop.f32.mrb[0].mxu0
    %6371 = vmatprep.mubr.f32.mxu0 0.0
    %6372 = vmatmul.mubr.f32.gmra.mrb[0].mxu0 %v6172
    %v6373 = vpop.f32.mrb[0].mxu0
    %v6374 = vadd.f32 %v6110, %v6373
    %v6375 = vpop.f32.mrb[0].mxu0
    %6376 = vmatprep.mubr.f32.mxu0 0.0
    %6377 = vmatmul.mubr.f32.gmra.mrb[0].mxu0 %v6175
    %v6378 = vpop.f32.mrb[0].mxu0
    %v6379 = vadd.f32 %v6110, %v6378
    %v6380 = vpop.f32.mrb[0].mxu0
    %6381 = vmatprep.mubr.f32.mxu0 0.0
    %6382 = vmatmul.mubr.f32.gmra.mrb[0].mxu0 %v6178
    %v6383 = vpop.f32.mrb[0].mxu0
    %v6384 = vadd.f32 %v6110, %v6383
    %v6385 = vpop.f32.mrb[0].mxu0
    %6386 = vmatprep.mubr.f32.mxu0 0.0
    %6387 = vmatmul.mubr.f32.gmra.mrb[0].mxu0 %v6181
    %v6388 = vpop.f32.mrb[0].mxu0
    %v6389 = vadd.f32 %v6110, %v6388
    %v6390 = vpop.f32.mrb[0].mxu0
    %6391 = vmatprep.mubr.f32.mxu0 0.0
    %6392 = vmatmul.mubr.f32.gmra.mrb[0].mxu0 %v6184
    %v6393 = vpop.f32.mrb[0].mxu0
    %v6394 = vadd.f32 %v6110, %v6393
    %v6395 = vpop.f32.mrb[0].mxu0
    %6396 = vmatprep.mubr.f32.mxu0 0.0
    %6397 = vmatmul.mubr.f32.gmra.mrb[0].mxu0 %v6187
    %v6398 = vpop.f32.mrb[0].mxu0
    %v6399 = vadd.f32 %v6110, %v6398
    %v6400 = vpop.f32.mrb[0].mxu0
    %6401 = vmatprep.mubr.f32.mxu0 0.0
    %6402 = vmatmul.mubr.f32.gmra.mrb[0].mxu0 %v6190
    %v6403 = vpop.f32.mrb[0].mxu0
    %v6404 = vadd.f32 %v6110, %v6403
    %v6405 = vpop.f32.mrb[0].mxu0
    %6406 = vmatprep.mubr.f32.mxu0 0.0
    %6407 = vmatmul.mubr.f32.gmra.mrb[0].mxu0 %v6193
    %v6408 = vpop.f32.mrb[0].mxu0
    %v6409 = vadd.f32 %v6110, %v6408
    %v6410 = vpop.f32.mrb[0].mxu0
    %6411 = vmatprep.mubr.f32.mxu0 0.0
    %6412 = vmatmul.mubr.f32.gmra.mrb[0].mxu0 %v6196
    %v6413 = vpop.f32.mrb[0].mxu0
    %v6414 = vadd.f32 %v6110, %v6413
    %v6415 = vpop.f32.mrb[0].mxu0
    %6416 = vmatprep.mubr.f32.mxu0 0.0
    %6417 = vmatmul.mubr.f32.gmra.mrb[0].mxu0 %v6199
    %v6418 = vpop.f32.mrb[0].mxu0
    %v6419 = vadd.f32 %v6110, %v6418
    %v6420 = vpop.f32.mrb[0].mxu0
    %6421 = vmatprep.mubr.f32.mxu0 0.0
    %6422 = vmatmul.mubr.f32.gmra.mrb[0].mxu0 %v6202
    %v6423 = vpop.f32.mrb[0].mxu0
    %v6424 = vadd.f32 %v6110, %v6423
    %v6425 = vpop.f32.mrb[0].mxu0
    %6426 = vmatprep.mubr.f32.mxu0 0.0
    %6427 = vmatmul.mubr.f32.gmra.mrb[0].mxu0 %v6205
    %v6428 = vpop.f32.mrb[0].mxu0
    %v6429 = vadd.f32 %v6110, %v6428
    %v6430 = vpop.f32.mrb[0].mxu0
    %6431 = vdwg.mxu0
    %v6432 = vrot.slane %v6074, 7
    %v6433 = vrot.slane %v6075, 7
    %v6434 = vrot.slane %v6076, 7
    %v6435 = vrot.slane %v6077, 7
    %v6436 = vrot.slane %v6078, 7
    %v6437 = vrot.slane %v6079, 7
    %v6438 = vrot.slane %v6080, 7
    %v6439 = vrot.slane %v6081, 7
    %v6440 = vrot.slane %v6082, 7
    %v6441 = vrot.slane %v6083, 7
    %v6442 = vrot.slane %v6084, 7
    %v6443 = vrot.slane %v6085, 7
    %v6444 = vrot.slane %v6086, 7
    %v6445 = vrot.slane %v6087, 7
    %v6446 = vrot.slane %v6088, 7
    %v6447 = vrot.slane %v6089, 7
    %v6448 = vrot.slane %v6090, 7
    %v6449 = vrot.slane %v6091, 7
    %v6450 = vrot.slane %v6092, 7
    %v6451 = vrot.slane %v6093, 7
    %v6452 = vrot.slane %v6094, 7
    %v6453 = vrot.slane %v6095, 7
    %v6454 = vrot.slane %v6096, 7
    %v6455 = vrot.slane %v6097, 7
    %v6456 = vrot.slane %v6098, 7
    %v6457 = vrot.slane %v6099, 7
    %v6458 = vrot.slane %v6100, 7
    %v6459 = vrot.slane %v6101, 7
    %v6460 = vrot.slane %v6102, 7
    %v6461 = vrot.slane %v6103, 7
    %v6462 = vrot.slane %v6104, 7
    %v6463 = vrot.slane %v6105, 7
    %v6464 = vsel %vm727, %v6462, %v6463
    %v6465 = vsel %vm727, %v6461, %v6462
    %v6466 = vsel %vm727, %v6460, %v6461
    %v6467 = vsel %vm727, %v6459, %v6460
    %v6468 = vsel %vm727, %v6458, %v6459
    %v6469 = vsel %vm727, %v6457, %v6458
    %v6470 = vsel %vm727, %v6456, %v6457
    %v6471 = vsel %vm727, %v6455, %v6456
    %v6472 = vsel %vm727, %v6454, %v6455
    %v6473 = vsel %vm727, %v6453, %v6454
    %v6474 = vsel %vm727, %v6452, %v6453
    %v6475 = vsel %vm727, %v6451, %v6452
    %v6476 = vsel %vm727, %v6450, %v6451
    %v6477 = vsel %vm727, %v6449, %v6450
    %v6478 = vsel %vm727, %v6448, %v6449
    %v6479 = vsel %vm727, %v6447, %v6448
    %v6480 = vsel %vm727, %v6446, %v6447
    %v6481 = vsel %vm727, %v6445, %v6446
    %v6482 = vsel %vm727, %v6444, %v6445
    %v6483 = vsel %vm727, %v6443, %v6444
    %v6484 = vsel %vm727, %v6442, %v6443
    %v6485 = vsel %vm727, %v6441, %v6442
    %v6486 = vsel %vm727, %v6440, %v6441
    %v6487 = vsel %vm727, %v6439, %v6440
    %v6488 = vsel %vm727, %v6438, %v6439
    %v6489 = vsel %vm727, %v6437, %v6438
    %v6490 = vsel %vm727, %v6436, %v6437
    %v6491 = vsel %vm727, %v6435, %v6436
    %v6492 = vsel %vm727, %v6434, %v6435
    %v6493 = vsel %vm727, %v6433, %v6434
    %v6494 = vsel %vm727, %v6432, %v6433
    %v6495 = vsel %vm727, %v6463, %v6432
    %v6496 = vsel %vm792, %v6495, 0.0
    %v6497 = vsel %vm793, %v6494, 0.0
    %v6498 = vsel %vm794, %v6493, 0.0
    %v6499 = vsel %vm795, %v6492, 0.0
    %v6500 = vsel %vm796, %v6491, 0.0
    %v6501 = vsel %vm797, %v6490, 0.0
    %v6502 = vsel %vm798, %v6489, 0.0
    %v6503 = vsel %vm799, %v6488, 0.0
    %v6504 = vsel %vm800, %v6487, 0.0
    %v6505 = vsel %vm801, %v6486, 0.0
    %v6506 = vsel %vm802, %v6485, 0.0
    %v6507 = vsel %vm803, %v6484, 0.0
    %v6508 = vsel %vm804, %v6483, 0.0
    %v6509 = vsel %vm805, %v6482, 0.0
    %v6510 = vsel %vm806, %v6481, 0.0
    %v6511 = vsel %vm807, %v6480, 0.0
    %v6512 = vsel %vm808, %v6479, 0.0
    %v6513 = vsel %vm809, %v6478, 0.0
    %v6514 = vsel %vm810, %v6477, 0.0
    %v6515 = vsel %vm811, %v6476, 0.0
    %v6516 = vsel %vm812, %v6475, 0.0
    %v6517 = vsel %vm813, %v6474, 0.0
    %v6518 = vsel %vm814, %v6473, 0.0
    %v6519 = vsel %vm815, %v6472, 0.0
    %v6520 = vsel %vm816, %v6471, 0.0
    %v6521 = vsel %vm817, %v6470, 0.0
    %v6522 = vsel %vm818, %v6469, 0.0
    %v6523 = vsel %vm819, %v6468, 0.0
    %v6524 = vsel %vm820, %v6467, 0.0
    %v6525 = vsel %vm821, %v6466, 0.0
    %v6526 = vsel %vm822, %v6465, 0.0
    %v6527 = vsel %vm823, %v6464, 0.0
    %v6528 = vld [vmem:[%s2 + $0xb8] sm:$0xff]
    %v6529 = vld [vmem:[%s2 + $0xc0] sm:$0xff]
    %v6530 = vld [vmem:[%s2 + $0xc8] sm:$0xff]
    %v6531 = vld [vmem:[%s2 + $0xd0] sm:$0xff]
    %v6532 = vld [vmem:[%s2 + $0xd8] sm:$0xff]
    %v6533 = vld [vmem:[%s2 + $0xe0] sm:$0xff]
    %v6534 = vld [vmem:[%s2 + $0xe8] sm:$0xff]
    %v6535 = vld [vmem:[%s2 + $0xf0] sm:$0xff]
    %6536 = vmatprep.subr.mxu0 0.0
    %6537 = vmatpush1.msra.mxu0 %v6532
    %6538 = vmatprep.subr.mxu0 0.0
    %6539 = vmatpush1.msra.mxu0 %v6533
    %6540 = vmatprep.subr.mxu0 0.0
    %6541 = vmatpush1.msra.mxu0 %v6534
    %6542 = vmatprep.subr.mxu0 0.0
    %6543 = vmatpush1.msra.mxu0 %v6535
    %6544 = vmatprep.subr.mxu0 0.0
    %6545 = vmatpush1.msra.mxu0 0.0
    %6546 = vmatprep.subr.mxu0 0.0
    %6547 = vmatpush1.msra.mxu0 0.0
    %6548 = vmatprep.subr.mxu0 0.0
    %6549 = vmatpush1.msra.mxu0 0.0
    %6550 = vmatprep.subr.mxu0 0.0
    %6551 = vmatpush1.msra.mxu0 0.0
    %6552 = vmatprep.subr.mxu0 0.0
    %6553 = vmatpush1.msra.mxu0 0.0
    %6554 = vmatprep.subr.mxu0 0.0
    %6555 = vmatpush1.msra.mxu0 0.0
    %6556 = vmatprep.subr.mxu0 0.0
    %6557 = vmatpush1.msra.mxu0 0.0
    %6558 = vmatprep.subr.mxu0 0.0
    %6559 = vmatpush1.msra.mxu0 0.0
    %6560 = vmatprep.subr.mxu0 0.0
    %6561 = vmatpush1.msra.mxu0 0.0
    %6562 = vmatprep.subr.mxu0 0.0
    %6563 = vmatpush1.msra.mxu0 0.0
    %6564 = vmatprep.subr.mxu0 0.0
    %6565 = vmatpush1.msra.mxu0 0.0
    %6566 = vmatprep.subr.mxu0 0.0
    %6567 = vmatpush1.msra.mxu0 0.0
    %6568 = vmatprep.subr.mxu0 0.0
    %6569 = vmatpush1.msra.mxu0 0.0
    %6570 = vmatprep.subr.mxu0 0.0
    %6571 = vmatpush1.msra.mxu0 0.0
    %6572 = vmatprep.subr.mxu0 0.0
    %6573 = vmatpush1.msra.mxu0 0.0
    %6574 = vmatprep.subr.mxu0 0.0
    %6575 = vmatpush1.msra.mxu0 0.0
    %6576 = vmatprep.subr.mxu0 0.0
    %6577 = vmatpush1.msra.mxu0 0.0
    %6578 = vmatprep.subr.mxu0 0.0
    %6579 = vmatpush1.msra.mxu0 0.0
    %6580 = vmatprep.subr.mxu0 0.0
    %6581 = vmatpush1.msra.mxu0 0.0
    %6582 = vmatprep.subr.mxu0 0.0
    %6583 = vmatpush1.msra.mxu0 0.0
    %6584 = vmatprep.subr.mxu0 0.0
    %6585 = vmatpush1.msra.mxu0 0.0
    %6586 = vmatprep.subr.mxu0 0.0
    %6587 = vmatpush1.msra.mxu0 0.0
    %6588 = vmatprep.subr.mxu0 0.0
    %6589 = vmatpush1.msra.mxu0 0.0
    %6590 = vmatprep.subr.mxu0 0.0
    %6591 = vmatpush1.msra.mxu0 0.0
    %6592 = vmatprep.subr.mxu0 0.0
    %6593 = vmatpush1.msra.mxu0 0.0
    %6594 = vmatprep.subr.mxu0 0.0
    %6595 = vmatpush1.msra.mxu0 0.0
    %6596 = vmatprep.subr.mxu0 0.0
    %6597 = vmatpush1.msra.mxu0 0.0
    %6598 = vmatprep.subr.mxu0 0.0
    %6599 = vmatpush1.msra.mxu0 0.0
    %6600 = vmatprep.mubr.f32.mxu0 0.0
    %6601 = vmatmul.mubr.f32.gmra.mrb[0].mxu0 %v6112
    %v6602 = vpop.f32.mrb[0].mxu0
    %v6603 = vadd.f32 0.0, %v6602
    %v6604 = vpop.f32.mrb[0].mxu0
    %6605 = vmatprep.mubr.f32.mxu0 0.0
    %6606 = vmatmul.mubr.f32.gmra.mrb[0].mxu0 %v6115
    %v6607 = vpop.f32.mrb[0].mxu0
    %v6608 = vadd.f32 0.0, %v6607
    %v6609 = vpop.f32.mrb[0].mxu0
    %6610 = vmatprep.mubr.f32.mxu0 0.0
    %6611 = vmatmul.mubr.f32.gmra.mrb[0].mxu0 %v6118
    %v6612 = vpop.f32.mrb[0].mxu0
    %v6613 = vadd.f32 0.0, %v6612
    %v6614 = vpop.f32.mrb[0].mxu0
    %6615 = vmatprep.mubr.f32.mxu0 0.0
    %6616 = vmatmul.mubr.f32.gmra.mrb[0].mxu0 %v6121
    %v6617 = vpop.f32.mrb[0].mxu0
    %v6618 = vadd.f32 0.0, %v6617
    %v6619 = vpop.f32.mrb[0].mxu0
    %6620 = vmatprep.mubr.f32.mxu0 0.0
    %6621 = vmatmul.mubr.f32.gmra.mrb[0].mxu0 %v6124
    %v6622 = vpop.f32.mrb[0].mxu0
    %v6623 = vadd.f32 0.0, %v6622
    %v6624 = vpop.f32.mrb[0].mxu0
    %6625 = vmatprep.mubr.f32.mxu0 0.0
    %6626 = vmatmul.mubr.f32.gmra.mrb[0].mxu0 %v6127
    %v6627 = vpop.f32.mrb[0].mxu0
    %v6628 = vadd.f32 0.0, %v6627
    %v6629 = vpop.f32.mrb[0].mxu0
    %6630 = vmatprep.mubr.f32.mxu0 0.0
    %6631 = vmatmul.mubr.f32.gmra.mrb[0].mxu0 %v6130
    %v6632 = vpop.f32.mrb[0].mxu0
    %v6633 = vadd.f32 0.0, %v6632
    %v6634 = vpop.f32.mrb[0].mxu0
    %6635 = vmatprep.mubr.f32.mxu0 0.0
    %6636 = vmatmul.mubr.f32.gmra.mrb[0].mxu0 %v6133
    %v6637 = vpop.f32.mrb[0].mxu0
    %v6638 = vadd.f32 0.0, %v6637
    %v6639 = vpop.f32.mrb[0].mxu0
    %6640 = vmatprep.mubr.f32.mxu0 0.0
    %6641 = vmatmul.mubr.f32.gmra.mrb[0].mxu0 %v6136
    %v6642 = vpop.f32.mrb[0].mxu0
    %v6643 = vadd.f32 0.0, %v6642
    %v6644 = vpop.f32.mrb[0].mxu0
    %6645 = vmatprep.mubr.f32.mxu0 0.0
    %6646 = vmatmul.mubr.f32.gmra.mrb[0].mxu0 %v6139
    %v6647 = vpop.f32.mrb[0].mxu0
    %v6648 = vadd.f32 0.0, %v6647
    %v6649 = vpop.f32.mrb[0].mxu0
    %6650 = vmatprep.mubr.f32.mxu0 0.0
    %6651 = vmatmul.mubr.f32.gmra.mrb[0].mxu0 %v6142
    %v6652 = vpop.f32.mrb[0].mxu0
    %v6653 = vadd.f32 0.0, %v6652
    %v6654 = vpop.f32.mrb[0].mxu0
    %6655 = vmatprep.mubr.f32.mxu0 0.0
    %6656 = vmatmul.mubr.f32.gmra.mrb[0].mxu0 %v6145
    %v6657 = vpop.f32.mrb[0].mxu0
    %v6658 = vadd.f32 0.0, %v6657
    %v6659 = vpop.f32.mrb[0].mxu0
    %6660 = vmatprep.mubr.f32.mxu0 0.0
    %6661 = vmatmul.mubr.f32.gmra.mrb[0].mxu0 %v6148
    %v6662 = vpop.f32.mrb[0].mxu0
    %v6663 = vadd.f32 0.0, %v6662
    %v6664 = vpop.f32.mrb[0].mxu0
    %6665 = vmatprep.mubr.f32.mxu0 0.0
    %6666 = vmatmul.mubr.f32.gmra.mrb[0].mxu0 %v6151
    %v6667 = vpop.f32.mrb[0].mxu0
    %v6668 = vadd.f32 0.0, %v6667
    %v6669 = vpop.f32.mrb[0].mxu0
    %6670 = vmatprep.mubr.f32.mxu0 0.0
    %6671 = vmatmul.mubr.f32.gmra.mrb[0].mxu0 %v6154
    %v6672 = vpop.f32.mrb[0].mxu0
    %v6673 = vadd.f32 0.0, %v6672
    %v6674 = vpop.f32.mrb[0].mxu0
    %6675 = vmatprep.mubr.f32.mxu0 0.0
    %6676 = vmatmul.mubr.f32.gmra.mrb[0].mxu0 %v6157
    %v6677 = vpop.f32.mrb[0].mxu0
    %v6678 = vadd.f32 0.0, %v6677
    %v6679 = vpop.f32.mrb[0].mxu0
    %6680 = vmatprep.mubr.f32.mxu0 0.0
    %6681 = vmatmul.mubr.f32.gmra.mrb[0].mxu0 %v6160
    %v6682 = vpop.f32.mrb[0].mxu0
    %v6683 = vadd.f32 0.0, %v6682
    %v6684 = vpop.f32.mrb[0].mxu0
    %6685 = vmatprep.mubr.f32.mxu0 0.0
    %6686 = vmatmul.mubr.f32.gmra.mrb[0].mxu0 %v6163
    %v6687 = vpop.f32.mrb[0].mxu0
    %v6688 = vadd.f32 0.0, %v6687
    %v6689 = vpop.f32.mrb[0].mxu0
    %6690 = vmatprep.mubr.f32.mxu0 0.0
    %6691 = vmatmul.mubr.f32.gmra.mrb[0].mxu0 %v6166
    %v6692 = vpop.f32.mrb[0].mxu0
    %v6693 = vadd.f32 0.0, %v6692
    %v6694 = vpop.f32.mrb[0].mxu0
    %6695 = vmatprep.mubr.f32.mxu0 0.0
    %6696 = vmatmul.mubr.f32.gmra.mrb[0].mxu0 %v6169
    %v6697 = vpop.f32.mrb[0].mxu0
    %v6698 = vadd.f32 0.0, %v6697
    %v6699 = vpop.f32.mrb[0].mxu0
    %6700 = vmatprep.mubr.f32.mxu0 0.0
    %6701 = vmatmul.mubr.f32.gmra.mrb[0].mxu0 %v6172
    %v6702 = vpop.f32.mrb[0].mxu0
    %v6703 = vadd.f32 0.0, %v6702
    %v6704 = vpop.f32.mrb[0].mxu0
    %6705 = vmatprep.mubr.f32.mxu0 0.0
    %6706 = vmatmul.mubr.f32.gmra.mrb[0].mxu0 %v6175
    %v6707 = vpop.f32.mrb[0].mxu0
    %v6708 = vadd.f32 0.0, %v6707
    %v6709 = vpop.f32.mrb[0].mxu0
    %6710 = vmatprep.mubr.f32.mxu0 0.0
    %6711 = vmatmul.mubr.f32.gmra.mrb[0].mxu0 %v6178
    %v6712 = vpop.f32.mrb[0].mxu0
    %v6713 = vadd.f32 0.0, %v6712
    %v6714 = vpop.f32.mrb[0].mxu0
    %6715 = vmatprep.mubr.f32.mxu0 0.0
    %6716 = vmatmul.mubr.f32.gmra.mrb[0].mxu0 %v6181
    %v6717 = vpop.f32.mrb[0].mxu0
    %v6718 = vadd.f32 0.0, %v6717
    %v6719 = vpop.f32.mrb[0].mxu0
    %6720 = vmatprep.mubr.f32.mxu0 0.0
    %6721 = vmatmul.mubr.f32.gmra.mrb[0].mxu0 %v6184
    %v6722 = vpop.f32.mrb[0].mxu0
    %v6723 = vadd.f32 0.0, %v6722
    %v6724 = vpop.f32.mrb[0].mxu0
    %6725 = vmatprep.mubr.f32.mxu0 0.0
    %6726 = vmatmul.mubr.f32.gmra.mrb[0].mxu0 %v6187
    %v6727 = vpop.f32.mrb[0].mxu0
    %v6728 = vadd.f32 0.0, %v6727
    %v6729 = vpop.f32.mrb[0].mxu0
    %6730 = vmatprep.mubr.f32.mxu0 0.0
    %6731 = vmatmul.mubr.f32.gmra.mrb[0].mxu0 %v6190
    %v6732 = vpop.f32.mrb[0].mxu0
    %v6733 = vadd.f32 0.0, %v6732
    %v6734 = vpop.f32.mrb[0].mxu0
    %6735 = vmatprep.mubr.f32.mxu0 0.0
    %6736 = vmatmul.mubr.f32.gmra.mrb[0].mxu0 %v6193
    %v6737 = vpop.f32.mrb[0].mxu0
    %v6738 = vadd.f32 0.0, %v6737
    %v6739 = vpop.f32.mrb[0].mxu0
    %6740 = vmatprep.mubr.f32.mxu0 0.0
    %6741 = vmatmul.mubr.f32.gmra.mrb[0].mxu0 %v6196
    %v6742 = vpop.f32.mrb[0].mxu0
    %v6743 = vadd.f32 0.0, %v6742
    %v6744 = vpop.f32.mrb[0].mxu0
    %6745 = vmatprep.mubr.f32.mxu0 0.0
    %6746 = vmatmul.mubr.f32.gmra.mrb[0].mxu0 %v6199
    %v6747 = vpop.f32.mrb[0].mxu0
    %v6748 = vadd.f32 0.0, %v6747
    %v6749 = vpop.f32.mrb[0].mxu0
    %6750 = vmatprep.mubr.f32.mxu0 0.0
    %6751 = vmatmul.mubr.f32.gmra.mrb[0].mxu0 %v6202
    %v6752 = vpop.f32.mrb[0].mxu0
    %v6753 = vadd.f32 0.0, %v6752
    %v6754 = vpop.f32.mrb[0].mxu0
    %6755 = vmatprep.mubr.f32.mxu0 0.0
    %6756 = vmatmul.mubr.f32.gmra.mrb[0].mxu0 %v6205
    %v6757 = vpop.f32.mrb[0].mxu0
    %v6758 = vadd.f32 0.0, %v6757
    %v6759 = vpop.f32.mrb[0].mxu0
    %6760 = vdwg.mxu0
    %v6762 = vsel %vm4913, %v6496, 0
    %v6765 = vsel %vm4913, %v6497, 0
    %v6768 = vsel %vm4913, %v6498, 0
    %v6771 = vsel %vm4913, %v6499, 0
    %v6774 = vsel %vm4913, %v6500, 0
    %v6777 = vsel %vm4913, %v6501, 0
    %v6780 = vsel %vm4913, %v6502, 0
    %v6783 = vsel %vm4913, %v6503, 0
    %v6786 = vsel %vm4913, %v6504, 0
    %v6789 = vsel %vm4913, %v6505, 0
    %v6792 = vsel %vm4913, %v6506, 0
    %v6795 = vsel %vm4913, %v6507, 0
    %v6798 = vsel %vm4913, %v6508, 0
    %v6801 = vsel %vm4913, %v6509, 0
    %v6804 = vsel %vm4913, %v6510, 0
    %v6807 = vsel %vm4913, %v6511, 0
    %v6810 = vsel %vm4913, %v6512, 0
    %v6813 = vsel %vm4913, %v6513, 0
    %v6816 = vsel %vm4913, %v6514, 0
    %v6819 = vsel %vm4913, %v6515, 0
    %v6822 = vsel %vm4913, %v6516, 0
    %v6825 = vsel %vm4913, %v6517, 0
    %v6828 = vsel %vm4913, %v6518, 0
    %v6831 = vsel %vm4913, %v6519, 0
    %v6834 = vsel %vm4913, %v6520, 0
    %v6837 = vsel %vm4913, %v6521, 0
    %v6840 = vsel %vm4913, %v6522, 0
    %v6843 = vsel %vm4913, %v6523, 0
    %v6846 = vsel %vm4913, %v6524, 0
    %v6849 = vsel %vm4913, %v6525, 0
    %v6852 = vsel %vm4913, %v6526, 0
    %v6855 = vsel %vm4913, %v6527, 0
    %6857 = vmatprep.subr.mxu0 0.0
    %6858 = vmatpush1.msra.mxu0 %v6528
    %6859 = vmatprep.subr.mxu0 0.0
    %6860 = vmatpush1.msra.mxu0 %v6529
    %6861 = vmatprep.subr.mxu0 0.0
    %6862 = vmatpush1.msra.mxu0 %v6530
    %6863 = vmatprep.subr.mxu0 0.0
    %6864 = vmatpush1.msra.mxu0 %v6531
    %6865 = vmatprep.subr.mxu0 0.0
    %6866 = vmatpush1.msra.mxu0 0.0
    %6867 = vmatprep.subr.mxu0 0.0
    %6868 = vmatpush1.msra.mxu0 0.0
    %6869 = vmatprep.subr.mxu0 0.0
    %6870 = vmatpush1.msra.mxu0 0.0
    %6871 = vmatprep.subr.mxu0 0.0
    %6872 = vmatpush1.msra.mxu0 0.0
    %6873 = vmatprep.subr.mxu0 0.0
    %6874 = vmatpush1.msra.mxu0 0.0
    %6875 = vmatprep.subr.mxu0 0.0
    %6876 = vmatpush1.msra.mxu0 0.0
    %6877 = vmatprep.subr.mxu0 0.0
    %6878 = vmatpush1.msra.mxu0 0.0
    %6879 = vmatprep.subr.mxu0 0.0
    %6880 = vmatpush1.msra.mxu0 0.0
    %6881 = vmatprep.subr.mxu0 0.0
    %6882 = vmatpush1.msra.mxu0 0.0
    %6883 = vmatprep.subr.mxu0 0.0
    %6884 = vmatpush1.msra.mxu0 0.0
    %6885 = vmatprep.subr.mxu0 0.0
    %6886 = vmatpush1.msra.mxu0 0.0
    %6887 = vmatprep.subr.mxu0 0.0
    %6888 = vmatpush1.msra.mxu0 0.0
    %6889 = vmatprep.subr.mxu0 0.0
    %6890 = vmatpush1.msra.mxu0 0.0
    %6891 = vmatprep.subr.mxu0 0.0
    %6892 = vmatpush1.msra.mxu0 0.0
    %6893 = vmatprep.subr.mxu0 0.0
    %6894 = vmatpush1.msra.mxu0 0.0
    %6895 = vmatprep.subr.mxu0 0.0
    %6896 = vmatpush1.msra.mxu0 0.0
    %6897 = vmatprep.subr.mxu0 0.0
    %6898 = vmatpush1.msra.mxu0 0.0
    %6899 = vmatprep.subr.mxu0 0.0
    %6900 = vmatpush1.msra.mxu0 0.0
    %6901 = vmatprep.subr.mxu0 0.0
    %6902 = vmatpush1.msra.mxu0 0.0
    %6903 = vmatprep.subr.mxu0 0.0
    %6904 = vmatpush1.msra.mxu0 0.0
    %6905 = vmatprep.subr.mxu0 0.0
    %6906 = vmatpush1.msra.mxu0 0.0
    %6907 = vmatprep.subr.mxu0 0.0
    %6908 = vmatpush1.msra.mxu0 0.0
    %6909 = vmatprep.subr.mxu0 0.0
    %6910 = vmatpush1.msra.mxu0 0.0
    %6911 = vmatprep.subr.mxu0 0.0
    %6912 = vmatpush1.msra.mxu0 0.0
    %6913 = vmatprep.subr.mxu0 0.0
    %6914 = vmatpush1.msra.mxu0 0.0
    %6915 = vmatprep.subr.mxu0 0.0
    %6916 = vmatpush1.msra.mxu0 0.0
    %6917 = vmatprep.subr.mxu0 0.0
    %6918 = vmatpush1.msra.mxu0 0.0
    %6919 = vmatprep.subr.mxu0 0.0
    %6920 = vmatpush1.msra.mxu0 0.0
    %6921 = vmatprep.mubr.f32.mxu0 0.0
    %6922 = vmatmul.mubr.f32.gmra.mrb[0].mxu0 %v6762
    %v6923 = vpop.f32.mrb[0].mxu0
    %v6924 = vadd.f32 %v6603, %v6923
    %v6925 = vpop.f32.mrb[0].mxu0
    %6926 = vmatprep.mubr.f32.mxu0 0.0
    %6927 = vmatmul.mubr.f32.gmra.mrb[0].mxu0 %v6765
    %v6928 = vpop.f32.mrb[0].mxu0
    %v6929 = vadd.f32 %v6608, %v6928
    %v6930 = vpop.f32.mrb[0].mxu0
    %6931 = vmatprep.mubr.f32.mxu0 0.0
    %6932 = vmatmul.mubr.f32.gmra.mrb[0].mxu0 %v6768
    %v6933 = vpop.f32.mrb[0].mxu0
    %v6934 = vadd.f32 %v6613, %v6933
    %v6935 = vpop.f32.mrb[0].mxu0
    %6936 = vmatprep.mubr.f32.mxu0 0.0
    %6937 = vmatmul.mubr.f32.gmra.mrb[0].mxu0 %v6771
    %v6938 = vpop.f32.mrb[0].mxu0
    %v6939 = vadd.f32 %v6618, %v6938
    %v6940 = vpop.f32.mrb[0].mxu0
    %6941 = vmatprep.mubr.f32.mxu0 0.0
    %6942 = vmatmul.mubr.f32.gmra.mrb[0].mxu0 %v6774
    %v6943 = vpop.f32.mrb[0].mxu0
    %v6944 = vadd.f32 %v6623, %v6943
    %v6945 = vpop.f32.mrb[0].mxu0
    %6946 = vmatprep.mubr.f32.mxu0 0.0
    %6947 = vmatmul.mubr.f32.gmra.mrb[0].mxu0 %v6777
    %v6948 = vpop.f32.mrb[0].mxu0
    %v6949 = vadd.f32 %v6628, %v6948
    %v6950 = vpop.f32.mrb[0].mxu0
    %6951 = vmatprep.mubr.f32.mxu0 0.0
    %6952 = vmatmul.mubr.f32.gmra.mrb[0].mxu0 %v6780
    %v6953 = vpop.f32.mrb[0].mxu0
    %v6954 = vadd.f32 %v6633, %v6953
    %v6955 = vpop.f32.mrb[0].mxu0
    %6956 = vmatprep.mubr.f32.mxu0 0.0
    %6957 = vmatmul.mubr.f32.gmra.mrb[0].mxu0 %v6783
    %v6958 = vpop.f32.mrb[0].mxu0
    %v6959 = vadd.f32 %v6638, %v6958
    %v6960 = vpop.f32.mrb[0].mxu0
    %6961 = vmatprep.mubr.f32.mxu0 0.0
    %6962 = vmatmul.mubr.f32.gmra.mrb[0].mxu0 %v6786
    %v6963 = vpop.f32.mrb[0].mxu0
    %v6964 = vadd.f32 %v6643, %v6963
    %v6965 = vpop.f32.mrb[0].mxu0
    %6966 = vmatprep.mubr.f32.mxu0 0.0
    %6967 = vmatmul.mubr.f32.gmra.mrb[0].mxu0 %v6789
    %v6968 = vpop.f32.mrb[0].mxu0
    %v6969 = vadd.f32 %v6648, %v6968
    %v6970 = vpop.f32.mrb[0].mxu0
    %6971 = vmatprep.mubr.f32.mxu0 0.0
    %6972 = vmatmul.mubr.f32.gmra.mrb[0].mxu0 %v6792
    %v6973 = vpop.f32.mrb[0].mxu0
    %v6974 = vadd.f32 %v6653, %v6973
    %v6975 = vpop.f32.mrb[0].mxu0
    %6976 = vmatprep.mubr.f32.mxu0 0.0
    %6977 = vmatmul.mubr.f32.gmra.mrb[0].mxu0 %v6795
    %v6978 = vpop.f32.mrb[0].mxu0
    %v6979 = vadd.f32 %v6658, %v6978
    %v6980 = vpop.f32.mrb[0].mxu0
    %6981 = vmatprep.mubr.f32.mxu0 0.0
    %6982 = vmatmul.mubr.f32.gmra.mrb[0].mxu0 %v6798
    %v6983 = vpop.f32.mrb[0].mxu0
    %v6984 = vadd.f32 %v6663, %v6983
    %v6985 = vpop.f32.mrb[0].mxu0
    %6986 = vmatprep.mubr.f32.mxu0 0.0
    %6987 = vmatmul.mubr.f32.gmra.mrb[0].mxu0 %v6801
    %v6988 = vpop.f32.mrb[0].mxu0
    %v6989 = vadd.f32 %v6668, %v6988
    %v6990 = vpop.f32.mrb[0].mxu0
    %6991 = vmatprep.mubr.f32.mxu0 0.0
    %6992 = vmatmul.mubr.f32.gmra.mrb[0].mxu0 %v6804
    %v6993 = vpop.f32.mrb[0].mxu0
    %v6994 = vadd.f32 %v6673, %v6993
    %v6995 = vpop.f32.mrb[0].mxu0
    %6996 = vmatprep.mubr.f32.mxu0 0.0
    %6997 = vmatmul.mubr.f32.gmra.mrb[0].mxu0 %v6807
    %v6998 = vpop.f32.mrb[0].mxu0
    %v6999 = vadd.f32 %v6678, %v6998
    %v7000 = vpop.f32.mrb[0].mxu0
    %7001 = vmatprep.mubr.f32.mxu0 0.0
    %7002 = vmatmul.mubr.f32.gmra.mrb[0].mxu0 %v6810
    %v7003 = vpop.f32.mrb[0].mxu0
    %v7004 = vadd.f32 %v6683, %v7003
    %v7005 = vpop.f32.mrb[0].mxu0
    %7006 = vmatprep.mubr.f32.mxu0 0.0
    %7007 = vmatmul.mubr.f32.gmra.mrb[0].mxu0 %v6813
    %v7008 = vpop.f32.mrb[0].mxu0
    %v7009 = vadd.f32 %v6688, %v7008
    %v7010 = vpop.f32.mrb[0].mxu0
    %7011 = vmatprep.mubr.f32.mxu0 0.0
    %7012 = vmatmul.mubr.f32.gmra.mrb[0].mxu0 %v6816
    %v7013 = vpop.f32.mrb[0].mxu0
    %v7014 = vadd.f32 %v6693, %v7013
    %v7015 = vpop.f32.mrb[0].mxu0
    %7016 = vmatprep.mubr.f32.mxu0 0.0
    %7017 = vmatmul.mubr.f32.gmra.mrb[0].mxu0 %v6819
    %v7018 = vpop.f32.mrb[0].mxu0
    %v7019 = vadd.f32 %v6698, %v7018
    %v7020 = vpop.f32.mrb[0].mxu0
    %7021 = vmatprep.mubr.f32.mxu0 0.0
    %7022 = vmatmul.mubr.f32.gmra.mrb[0].mxu0 %v6822
    %v7023 = vpop.f32.mrb[0].mxu0
    %v7024 = vadd.f32 %v6703, %v7023
    %v7025 = vpop.f32.mrb[0].mxu0
    %7026 = vmatprep.mubr.f32.mxu0 0.0
    %7027 = vmatmul.mubr.f32.gmra.mrb[0].mxu0 %v6825
    %v7028 = vpop.f32.mrb[0].mxu0
    %v7029 = vadd.f32 %v6708, %v7028
    %v7030 = vpop.f32.mrb[0].mxu0
    %7031 = vmatprep.mubr.f32.mxu0 0.0
    %7032 = vmatmul.mubr.f32.gmra.mrb[0].mxu0 %v6828
    %v7033 = vpop.f32.mrb[0].mxu0
    %v7034 = vadd.f32 %v6713, %v7033
    %v7035 = vpop.f32.mrb[0].mxu0
    %7036 = vmatprep.mubr.f32.mxu0 0.0
    %7037 = vmatmul.mubr.f32.gmra.mrb[0].mxu0 %v6831
    %v7038 = vpop.f32.mrb[0].mxu0
    %v7039 = vadd.f32 %v6718, %v7038
    %v7040 = vpop.f32.mrb[0].mxu0
    %7041 = vmatprep.mubr.f32.mxu0 0.0
    %7042 = vmatmul.mubr.f32.gmra.mrb[0].mxu0 %v6834
    %v7043 = vpop.f32.mrb[0].mxu0
    %v7044 = vadd.f32 %v6723, %v7043
    %v7045 = vpop.f32.mrb[0].mxu0
    %7046 = vmatprep.mubr.f32.mxu0 0.0
    %7047 = vmatmul.mubr.f32.gmra.mrb[0].mxu0 %v6837
    %v7048 = vpop.f32.mrb[0].mxu0
    %v7049 = vadd.f32 %v6728, %v7048
    %v7050 = vpop.f32.mrb[0].mxu0
    %7051 = vmatprep.mubr.f32.mxu0 0.0
    %7052 = vmatmul.mubr.f32.gmra.mrb[0].mxu0 %v6840
    %v7053 = vpop.f32.mrb[0].mxu0
    %v7054 = vadd.f32 %v6733, %v7053
    %v7055 = vpop.f32.mrb[0].mxu0
    %7056 = vmatprep.mubr.f32.mxu0 0.0
    %7057 = vmatmul.mubr.f32.gmra.mrb[0].mxu0 %v6843
    %v7058 = vpop.f32.mrb[0].mxu0
    %v7059 = vadd.f32 %v6738, %v7058
    %v7060 = vpop.f32.mrb[0].mxu0
    %7061 = vmatprep.mubr.f32.mxu0 0.0
    %7062 = vmatmul.mubr.f32.gmra.mrb[0].mxu0 %v6846
    %v7063 = vpop.f32.mrb[0].mxu0
    %v7064 = vadd.f32 %v6743, %v7063
    %v7065 = vpop.f32.mrb[0].mxu0
    %7066 = vmatprep.mubr.f32.mxu0 0.0
    %7067 = vmatmul.mubr.f32.gmra.mrb[0].mxu0 %v6849
    %v7068 = vpop.f32.mrb[0].mxu0
    %v7069 = vadd.f32 %v6748, %v7068
    %v7070 = vpop.f32.mrb[0].mxu0
    %7071 = vmatprep.mubr.f32.mxu0 0.0
    %7072 = vmatmul.mubr.f32.gmra.mrb[0].mxu0 %v6852
    %v7073 = vpop.f32.mrb[0].mxu0
    %v7074 = vadd.f32 %v6753, %v7073
    %v7075 = vpop.f32.mrb[0].mxu0
    %7076 = vmatprep.mubr.f32.mxu0 0.0
    %7077 = vmatmul.mubr.f32.gmra.mrb[0].mxu0 %v6855
    %v7078 = vpop.f32.mrb[0].mxu0
    %v7079 = vadd.f32 %v6758, %v7078
    %v7080 = vpop.f32.mrb[0].mxu0
    %7081 = vdwg.mxu0
    %v7082 = vrot.slane %v6074, 1
    %v7083 = vrot.slane %v6075, 1
    %v7084 = vrot.slane %v6076, 1
    %v7085 = vrot.slane %v6077, 1
    %v7086 = vrot.slane %v6078, 1
    %v7087 = vrot.slane %v6079, 1
    %v7088 = vrot.slane %v6080, 1
    %v7089 = vrot.slane %v6081, 1
    %v7090 = vrot.slane %v6082, 1
    %v7091 = vrot.slane %v6083, 1
    %v7092 = vrot.slane %v6084, 1
    %v7093 = vrot.slane %v6085, 1
    %v7094 = vrot.slane %v6086, 1
    %v7095 = vrot.slane %v6087, 1
    %v7096 = vrot.slane %v6088, 1
    %v7097 = vrot.slane %v6089, 1
    %v7098 = vrot.slane %v6090, 1
    %v7099 = vrot.slane %v6091, 1
    %v7100 = vrot.slane %v6092, 1
    %v7101 = vrot.slane %v6093, 1
    %v7102 = vrot.slane %v6094, 1
    %v7103 = vrot.slane %v6095, 1
    %v7104 = vrot.slane %v6096, 1
    %v7105 = vrot.slane %v6097, 1
    %v7106 = vrot.slane %v6098, 1
    %v7107 = vrot.slane %v6099, 1
    %v7108 = vrot.slane %v6100, 1
    %v7109 = vrot.slane %v6101, 1
    %v7110 = vrot.slane %v6102, 1
    %v7111 = vrot.slane %v6103, 1
    %v7112 = vrot.slane %v6104, 1
    %v7113 = vrot.slane %v6105, 1
    %v7114 = vsel %vm920, %v7112, %v7113
    %v7115 = vsel %vm920, %v7111, %v7112
    %v7116 = vsel %vm920, %v7110, %v7111
    %v7117 = vsel %vm920, %v7109, %v7110
    %v7118 = vsel %vm920, %v7108, %v7109
    %v7119 = vsel %vm920, %v7107, %v7108
    %v7120 = vsel %vm920, %v7106, %v7107
    %v7121 = vsel %vm920, %v7105, %v7106
    %v7122 = vsel %vm920, %v7104, %v7105
    %v7123 = vsel %vm920, %v7103, %v7104
    %v7124 = vsel %vm920, %v7102, %v7103
    %v7125 = vsel %vm920, %v7101, %v7102
    %v7126 = vsel %vm920, %v7100, %v7101
    %v7127 = vsel %vm920, %v7099, %v7100
    %v7128 = vsel %vm920, %v7098, %v7099
    %v7129 = vsel %vm920, %v7097, %v7098
    %v7130 = vsel %vm920, %v7096, %v7097
    %v7131 = vsel %vm920, %v7095, %v7096
    %v7132 = vsel %vm920, %v7094, %v7095
    %v7133 = vsel %vm920, %v7093, %v7094
    %v7134 = vsel %vm920, %v7092, %v7093
    %v7135 = vsel %vm920, %v7091, %v7092
    %v7136 = vsel %vm920, %v7090, %v7091
    %v7137 = vsel %vm920, %v7089, %v7090
    %v7138 = vsel %vm920, %v7088, %v7089
    %v7139 = vsel %vm920, %v7087, %v7088
    %v7140 = vsel %vm920, %v7086, %v7087
    %v7141 = vsel %vm920, %v7085, %v7086
    %v7142 = vsel %vm920, %v7084, %v7085
    %v7143 = vsel %vm920, %v7083, %v7084
    %v7144 = vsel %vm920, %v7082, %v7083
    %v7145 = vsel %vm920, %v7113, %v7082
    %v7146 = vsel %vm985, %v7144, 0.0
    %v7147 = vsel %vm986, %v7143, 0.0
    %v7148 = vsel %vm987, %v7142, 0.0
    %v7149 = vsel %vm988, %v7141, 0.0
    %v7150 = vsel %vm989, %v7140, 0.0
    %v7151 = vsel %vm990, %v7139, 0.0
    %v7152 = vsel %vm991, %v7138, 0.0
    %v7153 = vsel %vm992, %v7137, 0.0
    %v7154 = vsel %vm993, %v7136, 0.0
    %v7155 = vsel %vm994, %v7135, 0.0
    %v7156 = vsel %vm995, %v7134, 0.0
    %v7157 = vsel %vm996, %v7133, 0.0
    %v7158 = vsel %vm997, %v7132, 0.0
    %v7159 = vsel %vm998, %v7131, 0.0
    %v7160 = vsel %vm999, %v7130, 0.0
    %v7161 = vsel %vm1000, %v7129, 0.0
    %v7162 = vsel %vm1001, %v7128, 0.0
    %v7163 = vsel %vm1002, %v7127, 0.0
    %v7164 = vsel %vm1003, %v7126, 0.0
    %v7165 = vsel %vm1004, %v7125, 0.0
    %v7166 = vsel %vm1005, %v7124, 0.0
    %v7167 = vsel %vm1006, %v7123, 0.0
    %v7168 = vsel %vm1007, %v7122, 0.0
    %v7169 = vsel %vm1008, %v7121, 0.0
    %v7170 = vsel %vm1009, %v7120, 0.0
    %v7171 = vsel %vm1010, %v7119, 0.0
    %v7172 = vsel %vm1011, %v7118, 0.0
    %v7173 = vsel %vm1012, %v7117, 0.0
    %v7174 = vsel %vm1013, %v7116, 0.0
    %v7175 = vsel %vm1014, %v7115, 0.0
    %v7176 = vsel %vm1015, %v7114, 0.0
    %v7177 = vsel %vm1016, %v7145, 0.0
    %v7178 = vld [vmem:[%s2 + $0xf8] sm:$0xff]
    %v7179 = vld [vmem:[%s2 + $0x100] sm:$0xff]
    %v7180 = vld [vmem:[%s2 + $0x108] sm:$0xff]
    %v7181 = vld [vmem:[%s2 + $0x110] sm:$0xff]
    %v7183 = vsel %vm4913, %v7146, 0
    %v7186 = vsel %vm4913, %v7147, 0
    %v7189 = vsel %vm4913, %v7148, 0
    %v7192 = vsel %vm4913, %v7149, 0
    %v7195 = vsel %vm4913, %v7150, 0
    %v7198 = vsel %vm4913, %v7151, 0
    %v7201 = vsel %vm4913, %v7152, 0
    %v7204 = vsel %vm4913, %v7153, 0
    %v7207 = vsel %vm4913, %v7154, 0
    %v7210 = vsel %vm4913, %v7155, 0
    %v7213 = vsel %vm4913, %v7156, 0
    %v7216 = vsel %vm4913, %v7157, 0
    %v7219 = vsel %vm4913, %v7158, 0
    %v7222 = vsel %vm4913, %v7159, 0
    %v7225 = vsel %vm4913, %v7160, 0
    %v7228 = vsel %vm4913, %v7161, 0
    %v7231 = vsel %vm4913, %v7162, 0
    %v7234 = vsel %vm4913, %v7163, 0
    %v7237 = vsel %vm4913, %v7164, 0
    %v7240 = vsel %vm4913, %v7165, 0
    %v7243 = vsel %vm4913, %v7166, 0
    %v7246 = vsel %vm4913, %v7167, 0
    %v7249 = vsel %vm4913, %v7168, 0
    %v7252 = vsel %vm4913, %v7169, 0
    %v7255 = vsel %vm4913, %v7170, 0
    %v7258 = vsel %vm4913, %v7171, 0
    %v7261 = vsel %vm4913, %v7172, 0
    %v7264 = vsel %vm4913, %v7173, 0
    %v7267 = vsel %vm4913, %v7174, 0
    %v7270 = vsel %vm4913, %v7175, 0
    %v7273 = vsel %vm4913, %v7176, 0
    %v7276 = vsel %vm4913, %v7177, 0
    %7278 = vmatprep.subr.mxu0 0.0
    %7279 = vmatpush1.msra.mxu0 %v7178
    %7280 = vmatprep.subr.mxu0 0.0
    %7281 = vmatpush1.msra.mxu0 %v7179
    %7282 = vmatprep.subr.mxu0 0.0
    %7283 = vmatpush1.msra.mxu0 %v7180
    %7284 = vmatprep.subr.mxu0 0.0
    %7285 = vmatpush1.msra.mxu0 %v7181
    %7286 = vmatprep.subr.mxu0 0.0
    %7287 = vmatpush1.msra.mxu0 0.0
    %7288 = vmatprep.subr.mxu0 0.0
    %7289 = vmatpush1.msra.mxu0 0.0
    %7290 = vmatprep.subr.mxu0 0.0
    %7291 = vmatpush1.msra.mxu0 0.0
    %7292 = vmatprep.subr.mxu0 0.0
    %7293 = vmatpush1.msra.mxu0 0.0
    %7294 = vmatprep.subr.mxu0 0.0
    %7295 = vmatpush1.msra.mxu0 0.0
    %7296 = vmatprep.subr.mxu0 0.0
    %7297 = vmatpush1.msra.mxu0 0.0
    %7298 = vmatprep.subr.mxu0 0.0
    %7299 = vmatpush1.msra.mxu0 0.0
    %7300 = vmatprep.subr.mxu0 0.0
    %7301 = vmatpush1.msra.mxu0 0.0
    %7302 = vmatprep.subr.mxu0 0.0
    %7303 = vmatpush1.msra.mxu0 0.0
    %7304 = vmatprep.subr.mxu0 0.0
    %7305 = vmatpush1.msra.mxu0 0.0
    %7306 = vmatprep.subr.mxu0 0.0
    %7307 = vmatpush1.msra.mxu0 0.0
    %7308 = vmatprep.subr.mxu0 0.0
    %7309 = vmatpush1.msra.mxu0 0.0
    %7310 = vmatprep.subr.mxu0 0.0
    %7311 = vmatpush1.msra.mxu0 0.0
    %7312 = vmatprep.subr.mxu0 0.0
    %7313 = vmatpush1.msra.mxu0 0.0
    %7314 = vmatprep.subr.mxu0 0.0
    %7315 = vmatpush1.msra.mxu0 0.0
    %7316 = vmatprep.subr.mxu0 0.0
    %7317 = vmatpush1.msra.mxu0 0.0
    %7318 = vmatprep.subr.mxu0 0.0
    %7319 = vmatpush1.msra.mxu0 0.0
    %7320 = vmatprep.subr.mxu0 0.0
    %7321 = vmatpush1.msra.mxu0 0.0
    %7322 = vmatprep.subr.mxu0 0.0
    %7323 = vmatpush1.msra.mxu0 0.0
    %7324 = vmatprep.subr.mxu0 0.0
    %7325 = vmatpush1.msra.mxu0 0.0
    %7326 = vmatprep.subr.mxu0 0.0
    %7327 = vmatpush1.msra.mxu0 0.0
    %7328 = vmatprep.subr.mxu0 0.0
    %7329 = vmatpush1.msra.mxu0 0.0
    %7330 = vmatprep.subr.mxu0 0.0
    %7331 = vmatpush1.msra.mxu0 0.0
    %7332 = vmatprep.subr.mxu0 0.0
    %7333 = vmatpush1.msra.mxu0 0.0
    %7334 = vmatprep.subr.mxu0 0.0
    %7335 = vmatpush1.msra.mxu0 0.0
    %7336 = vmatprep.subr.mxu0 0.0
    %7337 = vmatpush1.msra.mxu0 0.0
    %7338 = vmatprep.subr.mxu0 0.0
    %7339 = vmatpush1.msra.mxu0 0.0
    %7340 = vmatprep.subr.mxu0 0.0
    %7341 = vmatpush1.msra.mxu0 0.0
    %7342 = vmatprep.mubr.f32.mxu0 0.0
    %7343 = vmatmul.mubr.f32.gmra.mrb[0].mxu0 %v7183
    %v7344 = vpop.f32.mrb[0].mxu0
    %v7345 = vadd.f32 0.0, %v7344
    %v7346 = vpop.f32.mrb[0].mxu0
    %7347 = vmatprep.mubr.f32.mxu0 0.0
    %7348 = vmatmul.mubr.f32.gmra.mrb[0].mxu0 %v7186
    %v7349 = vpop.f32.mrb[0].mxu0
    %v7350 = vadd.f32 0.0, %v7349
    %v7351 = vpop.f32.mrb[0].mxu0
    %7352 = vmatprep.mubr.f32.mxu0 0.0
    %7353 = vmatmul.mubr.f32.gmra.mrb[0].mxu0 %v7189
    %v7354 = vpop.f32.mrb[0].mxu0
    %v7355 = vadd.f32 0.0, %v7354
    %v7356 = vpop.f32.mrb[0].mxu0
    %7357 = vmatprep.mubr.f32.mxu0 0.0
    %7358 = vmatmul.mubr.f32.gmra.mrb[0].mxu0 %v7192
    %v7359 = vpop.f32.mrb[0].mxu0
    %v7360 = vadd.f32 0.0, %v7359
    %v7361 = vpop.f32.mrb[0].mxu0
    %7362 = vmatprep.mubr.f32.mxu0 0.0
    %7363 = vmatmul.mubr.f32.gmra.mrb[0].mxu0 %v7195
    %v7364 = vpop.f32.mrb[0].mxu0
    %v7365 = vadd.f32 0.0, %v7364
    %v7366 = vpop.f32.mrb[0].mxu0
    %7367 = vmatprep.mubr.f32.mxu0 0.0
    %7368 = vmatmul.mubr.f32.gmra.mrb[0].mxu0 %v7198
    %v7369 = vpop.f32.mrb[0].mxu0
    %v7370 = vadd.f32 0.0, %v7369
    %v7371 = vpop.f32.mrb[0].mxu0
    %7372 = vmatprep.mubr.f32.mxu0 0.0
    %7373 = vmatmul.mubr.f32.gmra.mrb[0].mxu0 %v7201
    %v7374 = vpop.f32.mrb[0].mxu0
    %v7375 = vadd.f32 0.0, %v7374
    %v7376 = vpop.f32.mrb[0].mxu0
    %7377 = vmatprep.mubr.f32.mxu0 0.0
    %7378 = vmatmul.mubr.f32.gmra.mrb[0].mxu0 %v7204
    %v7379 = vpop.f32.mrb[0].mxu0
    %v7380 = vadd.f32 0.0, %v7379
    %v7381 = vpop.f32.mrb[0].mxu0
    %7382 = vmatprep.mubr.f32.mxu0 0.0
    %7383 = vmatmul.mubr.f32.gmra.mrb[0].mxu0 %v7207
    %v7384 = vpop.f32.mrb[0].mxu0
    %v7385 = vadd.f32 0.0, %v7384
    %v7386 = vpop.f32.mrb[0].mxu0
    %7387 = vmatprep.mubr.f32.mxu0 0.0
    %7388 = vmatmul.mubr.f32.gmra.mrb[0].mxu0 %v7210
    %v7389 = vpop.f32.mrb[0].mxu0
    %v7390 = vadd.f32 0.0, %v7389
    %v7391 = vpop.f32.mrb[0].mxu0
    %7392 = vmatprep.mubr.f32.mxu0 0.0
    %7393 = vmatmul.mubr.f32.gmra.mrb[0].mxu0 %v7213
    %v7394 = vpop.f32.mrb[0].mxu0
    %v7395 = vadd.f32 0.0, %v7394
    %v7396 = vpop.f32.mrb[0].mxu0
    %7397 = vmatprep.mubr.f32.mxu0 0.0
    %7398 = vmatmul.mubr.f32.gmra.mrb[0].mxu0 %v7216
    %v7399 = vpop.f32.mrb[0].mxu0
    %v7400 = vadd.f32 0.0, %v7399
    %v7401 = vpop.f32.mrb[0].mxu0
    %7402 = vmatprep.mubr.f32.mxu0 0.0
    %7403 = vmatmul.mubr.f32.gmra.mrb[0].mxu0 %v7219
    %v7404 = vpop.f32.mrb[0].mxu0
    %v7405 = vadd.f32 0.0, %v7404
    %v7406 = vpop.f32.mrb[0].mxu0
    %7407 = vmatprep.mubr.f32.mxu0 0.0
    %7408 = vmatmul.mubr.f32.gmra.mrb[0].mxu0 %v7222
    %v7409 = vpop.f32.mrb[0].mxu0
    %v7410 = vadd.f32 0.0, %v7409
    %v7411 = vpop.f32.mrb[0].mxu0
    %7412 = vmatprep.mubr.f32.mxu0 0.0
    %7413 = vmatmul.mubr.f32.gmra.mrb[0].mxu0 %v7225
    %v7414 = vpop.f32.mrb[0].mxu0
    %v7415 = vadd.f32 0.0, %v7414
    %v7416 = vpop.f32.mrb[0].mxu0
    %7417 = vmatprep.mubr.f32.mxu0 0.0
    %7418 = vmatmul.mubr.f32.gmra.mrb[0].mxu0 %v7228
    %v7419 = vpop.f32.mrb[0].mxu0
    %v7420 = vadd.f32 0.0, %v7419
    %v7421 = vpop.f32.mrb[0].mxu0
    %7422 = vmatprep.mubr.f32.mxu0 0.0
    %7423 = vmatmul.mubr.f32.gmra.mrb[0].mxu0 %v7231
    %v7424 = vpop.f32.mrb[0].mxu0
    %v7425 = vadd.f32 0.0, %v7424
    %v7426 = vpop.f32.mrb[0].mxu0
    %7427 = vmatprep.mubr.f32.mxu0 0.0
    %7428 = vmatmul.mubr.f32.gmra.mrb[0].mxu0 %v7234
    %v7429 = vpop.f32.mrb[0].mxu0
    %v7430 = vadd.f32 0.0, %v7429
    %v7431 = vpop.f32.mrb[0].mxu0
    %7432 = vmatprep.mubr.f32.mxu0 0.0
    %7433 = vmatmul.mubr.f32.gmra.mrb[0].mxu0 %v7237
    %v7434 = vpop.f32.mrb[0].mxu0
    %v7435 = vadd.f32 0.0, %v7434
    %v7436 = vpop.f32.mrb[0].mxu0
    %7437 = vmatprep.mubr.f32.mxu0 0.0
    %7438 = vmatmul.mubr.f32.gmra.mrb[0].mxu0 %v7240
    %v7439 = vpop.f32.mrb[0].mxu0
    %v7440 = vadd.f32 0.0, %v7439
    %v7441 = vpop.f32.mrb[0].mxu0
    %7442 = vmatprep.mubr.f32.mxu0 0.0
    %7443 = vmatmul.mubr.f32.gmra.mrb[0].mxu0 %v7243
    %v7444 = vpop.f32.mrb[0].mxu0
    %v7445 = vadd.f32 0.0, %v7444
    %v7446 = vpop.f32.mrb[0].mxu0
    %7447 = vmatprep.mubr.f32.mxu0 0.0
    %7448 = vmatmul.mubr.f32.gmra.mrb[0].mxu0 %v7246
    %v7449 = vpop.f32.mrb[0].mxu0
    %v7450 = vadd.f32 0.0, %v7449
    %v7451 = vpop.f32.mrb[0].mxu0
    %7452 = vmatprep.mubr.f32.mxu0 0.0
    %7453 = vmatmul.mubr.f32.gmra.mrb[0].mxu0 %v7249
    %v7454 = vpop.f32.mrb[0].mxu0
    %v7455 = vadd.f32 0.0, %v7454
    %v7456 = vpop.f32.mrb[0].mxu0
    %7457 = vmatprep.mubr.f32.mxu0 0.0
    %7458 = vmatmul.mubr.f32.gmra.mrb[0].mxu0 %v7252
    %v7459 = vpop.f32.mrb[0].mxu0
    %v7460 = vadd.f32 0.0, %v7459
    %v7461 = vpop.f32.mrb[0].mxu0
    %7462 = vmatprep.mubr.f32.mxu0 0.0
    %7463 = vmatmul.mubr.f32.gmra.mrb[0].mxu0 %v7255
    %v7464 = vpop.f32.mrb[0].mxu0
    %v7465 = vadd.f32 0.0, %v7464
    %v7466 = vpop.f32.mrb[0].mxu0
    %7467 = vmatprep.mubr.f32.mxu0 0.0
    %7468 = vmatmul.mubr.f32.gmra.mrb[0].mxu0 %v7258
    %v7469 = vpop.f32.mrb[0].mxu0
    %v7470 = vadd.f32 0.0, %v7469
    %v7471 = vpop.f32.mrb[0].mxu0
    %7472 = vmatprep.mubr.f32.mxu0 0.0
    %7473 = vmatmul.mubr.f32.gmra.mrb[0].mxu0 %v7261
    %v7474 = vpop.f32.mrb[0].mxu0
    %v7475 = vadd.f32 0.0, %v7474
    %v7476 = vpop.f32.mrb[0].mxu0
    %7477 = vmatprep.mubr.f32.mxu0 0.0
    %7478 = vmatmul.mubr.f32.gmra.mrb[0].mxu0 %v7264
    %v7479 = vpop.f32.mrb[0].mxu0
    %v7480 = vadd.f32 0.0, %v7479
    %v7481 = vpop.f32.mrb[0].mxu0
    %7482 = vmatprep.mubr.f32.mxu0 0.0
    %7483 = vmatmul.mubr.f32.gmra.mrb[0].mxu0 %v7267
    %v7484 = vpop.f32.mrb[0].mxu0
    %v7485 = vadd.f32 0.0, %v7484
    %v7486 = vpop.f32.mrb[0].mxu0
    %7487 = vmatprep.mubr.f32.mxu0 0.0
    %7488 = vmatmul.mubr.f32.gmra.mrb[0].mxu0 %v7270
    %v7489 = vpop.f32.mrb[0].mxu0
    %v7490 = vadd.f32 0.0, %v7489
    %v7491 = vpop.f32.mrb[0].mxu0
    %7492 = vmatprep.mubr.f32.mxu0 0.0
    %7493 = vmatmul.mubr.f32.gmra.mrb[0].mxu0 %v7273
    %v7494 = vpop.f32.mrb[0].mxu0
    %v7495 = vadd.f32 0.0, %v7494
    %v7496 = vpop.f32.mrb[0].mxu0
    %7497 = vmatprep.mubr.f32.mxu0 0.0
    %7498 = vmatmul.mubr.f32.gmra.mrb[0].mxu0 %v7276
    %v7499 = vpop.f32.mrb[0].mxu0
    %v7500 = vadd.f32 0.0, %v7499
    %v7501 = vpop.f32.mrb[0].mxu0
    %7502 = vdwg.mxu0
    %v7503 = vadd.f32 %v6924, %v7345
    %v7504 = vadd.f32 %v6929, %v7350
    %v7505 = vadd.f32 %v6934, %v7355
    %v7506 = vadd.f32 %v6939, %v7360
    %v7507 = vadd.f32 %v6944, %v7365
    %v7508 = vadd.f32 %v6949, %v7370
    %v7509 = vadd.f32 %v6954, %v7375
    %v7510 = vadd.f32 %v6959, %v7380
    %v7511 = vadd.f32 %v6964, %v7385
    %v7512 = vadd.f32 %v6969, %v7390
    %v7513 = vadd.f32 %v6974, %v7395
    %v7514 = vadd.f32 %v6979, %v7400
    %v7515 = vadd.f32 %v6984, %v7405
    %v7516 = vadd.f32 %v6989, %v7410
    %v7517 = vadd.f32 %v6994, %v7415
    %v7518 = vadd.f32 %v6999, %v7420
    %v7519 = vadd.f32 %v7004, %v7425
    %v7520 = vadd.f32 %v7009, %v7430
    %v7521 = vadd.f32 %v7014, %v7435
    %v7522 = vadd.f32 %v7019, %v7440
    %v7523 = vadd.f32 %v7024, %v7445
    %v7524 = vadd.f32 %v7029, %v7450
    %v7525 = vadd.f32 %v7034, %v7455
    %v7526 = vadd.f32 %v7039, %v7460
    %v7527 = vadd.f32 %v7044, %v7465
    %v7528 = vadd.f32 %v7049, %v7470
    %v7529 = vadd.f32 %v7054, %v7475
    %v7530 = vadd.f32 %v7059, %v7480
    %v7531 = vadd.f32 %v7064, %v7485
    %v7532 = vadd.f32 %v7069, %v7490
    %v7533 = vadd.f32 %v7074, %v7495
    %v7534 = vadd.f32 %v7079, %v7500
    %v7535 = vld [vmem:[%s4 + $0x4] ss:$0 sm:$0xff]
    %v7536 = vadd.f32 %v7503, %v7535
    %v7537 = vadd.f32 %v7504, %v7535
    %v7538 = vadd.f32 %v7505, %v7535
    %v7539 = vadd.f32 %v7506, %v7535
    %v7540 = vadd.f32 %v7507, %v7535
    %v7541 = vadd.f32 %v7508, %v7535
    %v7542 = vadd.f32 %v7509, %v7535
    %v7543 = vadd.f32 %v7510, %v7535
    %v7544 = vadd.f32 %v7511, %v7535
    %v7545 = vadd.f32 %v7512, %v7535
    %v7546 = vadd.f32 %v7513, %v7535
    %v7547 = vadd.f32 %v7514, %v7535
    %v7548 = vadd.f32 %v7515, %v7535
    %v7549 = vadd.f32 %v7516, %v7535
    %v7550 = vadd.f32 %v7517, %v7535
    %v7551 = vadd.f32 %v7518, %v7535
    %v7552 = vadd.f32 %v7519, %v7535
    %v7553 = vadd.f32 %v7520, %v7535
    %v7554 = vadd.f32 %v7521, %v7535
    %v7555 = vadd.f32 %v7522, %v7535
    %v7556 = vadd.f32 %v7523, %v7535
    %v7557 = vadd.f32 %v7524, %v7535
    %v7558 = vadd.f32 %v7525, %v7535
    %v7559 = vadd.f32 %v7526, %v7535
    %v7560 = vadd.f32 %v7527, %v7535
    %v7561 = vadd.f32 %v7528, %v7535
    %v7562 = vadd.f32 %v7529, %v7535
    %v7563 = vadd.f32 %v7530, %v7535
    %v7564 = vadd.f32 %v7531, %v7535
    %v7565 = vadd.f32 %v7532, %v7535
    %v7566 = vadd.f32 %v7533, %v7535
    %v7567 = vadd.f32 %v7534, %v7535
    %v7568 = vmax.f32 %v7536, 0.0
    %v7569 = vmax.f32 %v7537, 0.0
    %v7570 = vmax.f32 %v7538, 0.0
    %v7571 = vmax.f32 %v7539, 0.0
    %v7572 = vmax.f32 %v7540, 0.0
    %v7573 = vmax.f32 %v7541, 0.0
    %v7574 = vmax.f32 %v7542, 0.0
    %v7575 = vmax.f32 %v7543, 0.0
    %v7576 = vmax.f32 %v7544, 0.0
    %v7577 = vmax.f32 %v7545, 0.0
    %v7578 = vmax.f32 %v7546, 0.0
    %v7579 = vmax.f32 %v7547, 0.0
    %v7580 = vmax.f32 %v7548, 0.0
    %v7581 = vmax.f32 %v7549, 0.0
    %v7582 = vmax.f32 %v7550, 0.0
    %v7583 = vmax.f32 %v7551, 0.0
    %v7584 = vmax.f32 %v7552, 0.0
    %v7585 = vmax.f32 %v7553, 0.0
    %v7586 = vmax.f32 %v7554, 0.0
    %v7587 = vmax.f32 %v7555, 0.0
    %v7588 = vmax.f32 %v7556, 0.0
    %v7589 = vmax.f32 %v7557, 0.0
    %v7590 = vmax.f32 %v7558, 0.0
    %v7591 = vmax.f32 %v7559, 0.0
    %v7592 = vmax.f32 %v7560, 0.0
    %v7593 = vmax.f32 %v7561, 0.0
    %v7594 = vmax.f32 %v7562, 0.0
    %v7595 = vmax.f32 %v7563, 0.0
    %v7596 = vmax.f32 %v7564, 0.0
    %v7597 = vmax.f32 %v7565, 0.0
    %v7598 = vmax.f32 %v7566, 0.0
    %v7599 = vmax.f32 %v7567, 0.0
    %v7600 = vrot.slane %v7568, 7
    %v7601 = vrot.slane %v7569, 7
    %v7602 = vrot.slane %v7570, 7
    %v7603 = vrot.slane %v7571, 7
    %v7604 = vrot.slane %v7572, 7
    %v7605 = vrot.slane %v7573, 7
    %v7606 = vrot.slane %v7574, 7
    %v7607 = vrot.slane %v7575, 7
    %v7608 = vrot.slane %v7576, 7
    %v7609 = vrot.slane %v7577, 7
    %v7610 = vrot.slane %v7578, 7
    %v7611 = vrot.slane %v7579, 7
    %v7612 = vrot.slane %v7580, 7
    %v7613 = vrot.slane %v7581, 7
    %v7614 = vrot.slane %v7582, 7
    %v7615 = vrot.slane %v7583, 7
    %v7616 = vrot.slane %v7584, 7
    %v7617 = vrot.slane %v7585, 7
    %v7618 = vrot.slane %v7586, 7
    %v7619 = vrot.slane %v7587, 7
    %v7620 = vrot.slane %v7588, 7
    %v7621 = vrot.slane %v7589, 7
    %v7622 = vrot.slane %v7590, 7
    %v7623 = vrot.slane %v7591, 7
    %v7624 = vrot.slane %v7592, 7
    %v7625 = vrot.slane %v7593, 7
    %v7626 = vrot.slane %v7594, 7
    %v7627 = vrot.slane %v7595, 7
    %v7628 = vrot.slane %v7596, 7
    %v7629 = vrot.slane %v7597, 7
    %v7630 = vrot.slane %v7598, 7
    %v7631 = vrot.slane %v7599, 7
    %v7632 = vsel %vm727, %v7630, %v7631
    %v7633 = vsel %vm727, %v7629, %v7630
    %v7634 = vsel %vm727, %v7628, %v7629
    %v7635 = vsel %vm727, %v7627, %v7628
    %v7636 = vsel %vm727, %v7626, %v7627
    %v7637 = vsel %vm727, %v7625, %v7626
    %v7638 = vsel %vm727, %v7624, %v7625
    %v7639 = vsel %vm727, %v7623, %v7624
    %v7640 = vsel %vm727, %v7622, %v7623
    %v7641 = vsel %vm727, %v7621, %v7622
    %v7642 = vsel %vm727, %v7620, %v7621
    %v7643 = vsel %vm727, %v7619, %v7620
    %v7644 = vsel %vm727, %v7618, %v7619
    %v7645 = vsel %vm727, %v7617, %v7618
    %v7646 = vsel %vm727, %v7616, %v7617
    %v7647 = vsel %vm727, %v7615, %v7616
    %v7648 = vsel %vm727, %v7614, %v7615
    %v7649 = vsel %vm727, %v7613, %v7614
    %v7650 = vsel %vm727, %v7612, %v7613
    %v7651 = vsel %vm727, %v7611, %v7612
    %v7652 = vsel %vm727, %v7610, %v7611
    %v7653 = vsel %vm727, %v7609, %v7610
    %v7654 = vsel %vm727, %v7608, %v7609
    %v7655 = vsel %vm727, %v7607, %v7608
    %v7656 = vsel %vm727, %v7606, %v7607
    %v7657 = vsel %vm727, %v7605, %v7606
    %v7658 = vsel %vm727, %v7604, %v7605
    %v7659 = vsel %vm727, %v7603, %v7604
    %v7660 = vsel %vm727, %v7602, %v7603
    %v7661 = vsel %vm727, %v7601, %v7602
    %v7662 = vsel %vm727, %v7600, %v7601
    %v7663 = vsel %vm727, %v7631, %v7600
    %v7664 = vsel %vm792, %v7663, 0.0
    %v7665 = vsel %vm793, %v7662, 0.0
    %v7666 = vsel %vm794, %v7661, 0.0
    %v7667 = vsel %vm795, %v7660, 0.0
    %v7668 = vsel %vm796, %v7659, 0.0
    %v7669 = vsel %vm797, %v7658, 0.0
    %v7670 = vsel %vm798, %v7657, 0.0
    %v7671 = vsel %vm799, %v7656, 0.0
    %v7672 = vsel %vm800, %v7655, 0.0
    %v7673 = vsel %vm801, %v7654, 0.0
    %v7674 = vsel %vm802, %v7653, 0.0
    %v7675 = vsel %vm803, %v7652, 0.0
    %v7676 = vsel %vm804, %v7651, 0.0
    %v7677 = vsel %vm805, %v7650, 0.0
    %v7678 = vsel %vm806, %v7649, 0.0
    %v7679 = vsel %vm807, %v7648, 0.0
    %v7680 = vsel %vm808, %v7647, 0.0
    %v7681 = vsel %vm809, %v7646, 0.0
    %v7682 = vsel %vm810, %v7645, 0.0
    %v7683 = vsel %vm811, %v7644, 0.0
    %v7684 = vsel %vm812, %v7643, 0.0
    %v7685 = vsel %vm813, %v7642, 0.0
    %v7686 = vsel %vm814, %v7641, 0.0
    %v7687 = vsel %vm815, %v7640, 0.0
    %v7688 = vsel %vm816, %v7639, 0.0
    %v7689 = vsel %vm817, %v7638, 0.0
    %v7690 = vsel %vm818, %v7637, 0.0
    %v7691 = vsel %vm819, %v7636, 0.0
    %v7692 = vsel %vm820, %v7635, 0.0
    %v7693 = vsel %vm821, %v7634, 0.0
    %v7694 = vsel %vm822, %v7633, 0.0
    %v7695 = vsel %vm823, %v7632, 0.0
    %v7696 = vld [vmem:[%s2 + $0x118] sm:$0xff]
    %v7697 = vld [vmem:[%s2 + $0x120] sm:$0xff]
    %v7698 = vld [vmem:[%s2 + $0x128] sm:$0xff]
    %v7699 = vld [vmem:[%s2 + $0x130] sm:$0xff]
    %v7700 = vld [vmem:[%s2 + $0x138] sm:$0xff]
    %v7701 = vld [vmem:[%s2 + $0x140] sm:$0xff]
    %v7702 = vld [vmem:[%s2 + $0x148] sm:$0xff]
    %v7703 = vld [vmem:[%s2 + $0x150] sm:$0xff]
    %v7704 = vld [vmem:[%s2 + $0x158] sm:$0xff]
    %v7705 = vld [vmem:[%s2 + $0x160] sm:$0xff]
    %v7706 = vld [vmem:[%s2 + $0x168] sm:$0xff]
    %v7707 = vld [vmem:[%s2 + $0x170] sm:$0xff]
    %v7708 = vld [vmem:[%s2 + $0x178] sm:$0xff]
    %v7709 = vld [vmem:[%s2 + $0x180] sm:$0xff]
    %v7710 = vld [vmem:[%s2 + $0x188] sm:$0xff]
    %v7711 = vld [vmem:[%s2 + $0x190] sm:$0xff]
    %vm7712 = vcmask 523264
    %v7714 = vsel %vm7712, %v7568, 0
    %v7717 = vsel %vm7712, %v7569, 0
    %v7720 = vsel %vm7712, %v7570, 0
    %v7723 = vsel %vm7712, %v7571, 0
    %v7726 = vsel %vm7712, %v7572, 0
    %v7729 = vsel %vm7712, %v7573, 0
    %v7732 = vsel %vm7712, %v7574, 0
    %v7735 = vsel %vm7712, %v7575, 0
    %v7738 = vsel %vm7712, %v7576, 0
    %v7741 = vsel %vm7712, %v7577, 0
    %v7744 = vsel %vm7712, %v7578, 0
    %v7747 = vsel %vm7712, %v7579, 0
    %v7750 = vsel %vm7712, %v7580, 0
    %v7753 = vsel %vm7712, %v7581, 0
    %v7756 = vsel %vm7712, %v7582, 0
    %v7759 = vsel %vm7712, %v7583, 0
    %v7762 = vsel %vm7712, %v7584, 0
    %v7765 = vsel %vm7712, %v7585, 0
    %v7768 = vsel %vm7712, %v7586, 0
    %v7771 = vsel %vm7712, %v7587, 0
    %v7774 = vsel %vm7712, %v7588, 0
    %v7777 = vsel %vm7712, %v7589, 0
    %v7780 = vsel %vm7712, %v7590, 0
    %v7783 = vsel %vm7712, %v7591, 0
    %v7786 = vsel %vm7712, %v7592, 0
    %v7789 = vsel %vm7712, %v7593, 0
    %v7792 = vsel %vm7712, %v7594, 0
    %v7795 = vsel %vm7712, %v7595, 0
    %v7798 = vsel %vm7712, %v7596, 0
    %v7801 = vsel %vm7712, %v7597, 0
    %v7804 = vsel %vm7712, %v7598, 0
    %v7807 = vsel %vm7712, %v7599, 0
    %7809 = vmatprep.subr.mxu0 0.0
    %7810 = vmatpush1.msra.mxu0 %v7704
    %7811 = vmatprep.subr.mxu0 0.0
    %7812 = vmatpush1.msra.mxu0 %v7705
    %7813 = vmatprep.subr.mxu0 0.0
    %7814 = vmatpush1.msra.mxu0 %v7706
    %7815 = vmatprep.subr.mxu0 0.0
    %7816 = vmatpush1.msra.mxu0 %v7707
    %7817 = vmatprep.subr.mxu0 0.0
    %7818 = vmatpush1.msra.mxu0 %v7708
    %7819 = vmatprep.subr.mxu0 0.0
    %7820 = vmatpush1.msra.mxu0 %v7709
    %7821 = vmatprep.subr.mxu0 0.0
    %7822 = vmatpush1.msra.mxu0 %v7710
    %7823 = vmatprep.subr.mxu0 0.0
    %7824 = vmatpush1.msra.mxu0 %v7711
    %7825 = vmatprep.subr.mxu0 0.0
    %7826 = vmatpush1.msra.mxu0 0.0
    %7827 = vmatprep.subr.mxu0 0.0
    %7828 = vmatpush1.msra.mxu0 0.0
    %7829 = vmatprep.subr.mxu0 0.0
    %7830 = vmatpush1.msra.mxu0 0.0
    %7831 = vmatprep.subr.mxu0 0.0
    %7832 = vmatpush1.msra.mxu0 0.0
    %7833 = vmatprep.subr.mxu0 0.0
    %7834 = vmatpush1.msra.mxu0 0.0
    %7835 = vmatprep.subr.mxu0 0.0
    %7836 = vmatpush1.msra.mxu0 0.0
    %7837 = vmatprep.subr.mxu0 0.0
    %7838 = vmatpush1.msra.mxu0 0.0
    %7839 = vmatprep.subr.mxu0 0.0
    %7840 = vmatpush1.msra.mxu0 0.0
    %7841 = vmatprep.subr.mxu0 0.0
    %7842 = vmatpush1.msra.mxu0 0.0
    %7843 = vmatprep.subr.mxu0 0.0
    %7844 = vmatpush1.msra.mxu0 0.0
    %7845 = vmatprep.subr.mxu0 0.0
    %7846 = vmatpush1.msra.mxu0 0.0
    %7847 = vmatprep.subr.mxu0 0.0
    %7848 = vmatpush1.msra.mxu0 0.0
    %7849 = vmatprep.subr.mxu0 0.0
    %7850 = vmatpush1.msra.mxu0 0.0
    %7851 = vmatprep.subr.mxu0 0.0
    %7852 = vmatpush1.msra.mxu0 0.0
    %7853 = vmatprep.subr.mxu0 0.0
    %7854 = vmatpush1.msra.mxu0 0.0
    %7855 = vmatprep.subr.mxu0 0.0
    %7856 = vmatpush1.msra.mxu0 0.0
    %7857 = vmatprep.subr.mxu0 0.0
    %7858 = vmatpush1.msra.mxu0 0.0
    %7859 = vmatprep.subr.mxu0 0.0
    %7860 = vmatpush1.msra.mxu0 0.0
    %7861 = vmatprep.subr.mxu0 0.0
    %7862 = vmatpush1.msra.mxu0 0.0
    %7863 = vmatprep.subr.mxu0 0.0
    %7864 = vmatpush1.msra.mxu0 0.0
    %7865 = vmatprep.subr.mxu0 0.0
    %7866 = vmatpush1.msra.mxu0 0.0
    %7867 = vmatprep.subr.mxu0 0.0
    %7868 = vmatpush1.msra.mxu0 0.0
    %7869 = vmatprep.subr.mxu0 0.0
    %7870 = vmatpush1.msra.mxu0 0.0
    %7871 = vmatprep.subr.mxu0 0.0
    %7872 = vmatpush1.msra.mxu0 0.0
    %7873 = vmatprep.mubr.f32.mxu0 0.0
    %7874 = vmatmul.mubr.f32.gmra.mrb[0].mxu0 %v7714
    %v7875 = vpop.f32.mrb[0].mxu0
    %v7876 = vadd.f32 0.0, %v7875
    %v7877 = vpop.f32.mrb[0].mxu0
    %7878 = vmatprep.mubr.f32.mxu0 0.0
    %7879 = vmatmul.mubr.f32.gmra.mrb[0].mxu0 %v7717
    %v7880 = vpop.f32.mrb[0].mxu0
    %v7881 = vadd.f32 0.0, %v7880
    %v7882 = vpop.f32.mrb[0].mxu0
    %7883 = vmatprep.mubr.f32.mxu0 0.0
    %7884 = vmatmul.mubr.f32.gmra.mrb[0].mxu0 %v7720
    %v7885 = vpop.f32.mrb[0].mxu0
    %v7886 = vadd.f32 0.0, %v7885
    %v7887 = vpop.f32.mrb[0].mxu0
    %7888 = vmatprep.mubr.f32.mxu0 0.0
    %7889 = vmatmul.mubr.f32.gmra.mrb[0].mxu0 %v7723
    %v7890 = vpop.f32.mrb[0].mxu0
    %v7891 = vadd.f32 0.0, %v7890
    %v7892 = vpop.f32.mrb[0].mxu0
    %7893 = vmatprep.mubr.f32.mxu0 0.0
    %7894 = vmatmul.mubr.f32.gmra.mrb[0].mxu0 %v7726
    %v7895 = vpop.f32.mrb[0].mxu0
    %v7896 = vadd.f32 0.0, %v7895
    %v7897 = vpop.f32.mrb[0].mxu0
    %7898 = vmatprep.mubr.f32.mxu0 0.0
    %7899 = vmatmul.mubr.f32.gmra.mrb[0].mxu0 %v7729
    %v7900 = vpop.f32.mrb[0].mxu0
    %v7901 = vadd.f32 0.0, %v7900
    %v7902 = vpop.f32.mrb[0].mxu0
    %7903 = vmatprep.mubr.f32.mxu0 0.0
    %7904 = vmatmul.mubr.f32.gmra.mrb[0].mxu0 %v7732
    %v7905 = vpop.f32.mrb[0].mxu0
    %v7906 = vadd.f32 0.0, %v7905
    %v7907 = vpop.f32.mrb[0].mxu0
    %7908 = vmatprep.mubr.f32.mxu0 0.0
    %7909 = vmatmul.mubr.f32.gmra.mrb[0].mxu0 %v7735
    %v7910 = vpop.f32.mrb[0].mxu0
    %v7911 = vadd.f32 0.0, %v7910
    %v7912 = vpop.f32.mrb[0].mxu0
    %7913 = vmatprep.mubr.f32.mxu0 0.0
    %7914 = vmatmul.mubr.f32.gmra.mrb[0].mxu0 %v7738
    %v7915 = vpop.f32.mrb[0].mxu0
    %v7916 = vadd.f32 0.0, %v7915
    %v7917 = vpop.f32.mrb[0].mxu0
    %7918 = vmatprep.mubr.f32.mxu0 0.0
    %7919 = vmatmul.mubr.f32.gmra.mrb[0].mxu0 %v7741
    %v7920 = vpop.f32.mrb[0].mxu0
    %v7921 = vadd.f32 0.0, %v7920
    %v7922 = vpop.f32.mrb[0].mxu0
    %7923 = vmatprep.mubr.f32.mxu0 0.0
    %7924 = vmatmul.mubr.f32.gmra.mrb[0].mxu0 %v7744
    %v7925 = vpop.f32.mrb[0].mxu0
    %v7926 = vadd.f32 0.0, %v7925
    %v7927 = vpop.f32.mrb[0].mxu0
    %7928 = vmatprep.mubr.f32.mxu0 0.0
    %7929 = vmatmul.mubr.f32.gmra.mrb[0].mxu0 %v7747
    %v7930 = vpop.f32.mrb[0].mxu0
    %v7931 = vadd.f32 0.0, %v7930
    %v7932 = vpop.f32.mrb[0].mxu0
    %7933 = vmatprep.mubr.f32.mxu0 0.0
    %7934 = vmatmul.mubr.f32.gmra.mrb[0].mxu0 %v7750
    %v7935 = vpop.f32.mrb[0].mxu0
    %v7936 = vadd.f32 0.0, %v7935
    %v7937 = vpop.f32.mrb[0].mxu0
    %7938 = vmatprep.mubr.f32.mxu0 0.0
    %7939 = vmatmul.mubr.f32.gmra.mrb[0].mxu0 %v7753
    %v7940 = vpop.f32.mrb[0].mxu0
    %v7941 = vadd.f32 0.0, %v7940
    %v7942 = vpop.f32.mrb[0].mxu0
    %7943 = vmatprep.mubr.f32.mxu0 0.0
    %7944 = vmatmul.mubr.f32.gmra.mrb[0].mxu0 %v7756
    %v7945 = vpop.f32.mrb[0].mxu0
    %v7946 = vadd.f32 0.0, %v7945
    %v7947 = vpop.f32.mrb[0].mxu0
    %7948 = vmatprep.mubr.f32.mxu0 0.0
    %7949 = vmatmul.mubr.f32.gmra.mrb[0].mxu0 %v7759
    %v7950 = vpop.f32.mrb[0].mxu0
    %v7951 = vadd.f32 0.0, %v7950
    %v7952 = vpop.f32.mrb[0].mxu0
    %7953 = vmatprep.mubr.f32.mxu0 0.0
    %7954 = vmatmul.mubr.f32.gmra.mrb[0].mxu0 %v7762
    %v7955 = vpop.f32.mrb[0].mxu0
    %v7956 = vadd.f32 0.0, %v7955
    %v7957 = vpop.f32.mrb[0].mxu0
    %7958 = vmatprep.mubr.f32.mxu0 0.0
    %7959 = vmatmul.mubr.f32.gmra.mrb[0].mxu0 %v7765
    %v7960 = vpop.f32.mrb[0].mxu0
    %v7961 = vadd.f32 0.0, %v7960
    %v7962 = vpop.f32.mrb[0].mxu0
    %7963 = vmatprep.mubr.f32.mxu0 0.0
    %7964 = vmatmul.mubr.f32.gmra.mrb[0].mxu0 %v7768
    %v7965 = vpop.f32.mrb[0].mxu0
    %v7966 = vadd.f32 0.0, %v7965
    %v7967 = vpop.f32.mrb[0].mxu0
    %7968 = vmatprep.mubr.f32.mxu0 0.0
    %7969 = vmatmul.mubr.f32.gmra.mrb[0].mxu0 %v7771
    %v7970 = vpop.f32.mrb[0].mxu0
    %v7971 = vadd.f32 0.0, %v7970
    %v7972 = vpop.f32.mrb[0].mxu0
    %7973 = vmatprep.mubr.f32.mxu0 0.0
    %7974 = vmatmul.mubr.f32.gmra.mrb[0].mxu0 %v7774
    %v7975 = vpop.f32.mrb[0].mxu0
    %v7976 = vadd.f32 0.0, %v7975
    %v7977 = vpop.f32.mrb[0].mxu0
    %7978 = vmatprep.mubr.f32.mxu0 0.0
    %7979 = vmatmul.mubr.f32.gmra.mrb[0].mxu0 %v7777
    %v7980 = vpop.f32.mrb[0].mxu0
    %v7981 = vadd.f32 0.0, %v7980
    %v7982 = vpop.f32.mrb[0].mxu0
    %7983 = vmatprep.mubr.f32.mxu0 0.0
    %7984 = vmatmul.mubr.f32.gmra.mrb[0].mxu0 %v7780
    %v7985 = vpop.f32.mrb[0].mxu0
    %v7986 = vadd.f32 0.0, %v7985
    %v7987 = vpop.f32.mrb[0].mxu0
    %7988 = vmatprep.mubr.f32.mxu0 0.0
    %7989 = vmatmul.mubr.f32.gmra.mrb[0].mxu0 %v7783
    %v7990 = vpop.f32.mrb[0].mxu0
    %v7991 = vadd.f32 0.0, %v7990
    %v7992 = vpop.f32.mrb[0].mxu0
    %7993 = vmatprep.mubr.f32.mxu0 0.0
    %7994 = vmatmul.mubr.f32.gmra.mrb[0].mxu0 %v7786
    %v7995 = vpop.f32.mrb[0].mxu0
    %v7996 = vadd.f32 0.0, %v7995
    %v7997 = vpop.f32.mrb[0].mxu0
    %7998 = vmatprep.mubr.f32.mxu0 0.0
    %7999 = vmatmul.mubr.f32.gmra.mrb[0].mxu0 %v7789
    %v8000 = vpop.f32.mrb[0].mxu0
    %v8001 = vadd.f32 0.0, %v8000
    %v8002 = vpop.f32.mrb[0].mxu0
    %8003 = vmatprep.mubr.f32.mxu0 0.0
    %8004 = vmatmul.mubr.f32.gmra.mrb[0].mxu0 %v7792
    %v8005 = vpop.f32.mrb[0].mxu0
    %v8006 = vadd.f32 0.0, %v8005
    %v8007 = vpop.f32.mrb[0].mxu0
    %8008 = vmatprep.mubr.f32.mxu0 0.0
    %8009 = vmatmul.mubr.f32.gmra.mrb[0].mxu0 %v7795
    %v8010 = vpop.f32.mrb[0].mxu0
    %v8011 = vadd.f32 0.0, %v8010
    %v8012 = vpop.f32.mrb[0].mxu0
    %8013 = vmatprep.mubr.f32.mxu0 0.0
    %8014 = vmatmul.mubr.f32.gmra.mrb[0].mxu0 %v7798
    %v8015 = vpop.f32.mrb[0].mxu0
    %v8016 = vadd.f32 0.0, %v8015
    %v8017 = vpop.f32.mrb[0].mxu0
    %8018 = vmatprep.mubr.f32.mxu0 0.0
    %8019 = vmatmul.mubr.f32.gmra.mrb[0].mxu0 %v7801
    %v8020 = vpop.f32.mrb[0].mxu0
    %v8021 = vadd.f32 0.0, %v8020
    %v8022 = vpop.f32.mrb[0].mxu0
    %8023 = vmatprep.mubr.f32.mxu0 0.0
    %8024 = vmatmul.mubr.f32.gmra.mrb[0].mxu0 %v7804
    %v8025 = vpop.f32.mrb[0].mxu0
    %v8026 = vadd.f32 0.0, %v8025
    %v8027 = vpop.f32.mrb[0].mxu0
    %8028 = vmatprep.mubr.f32.mxu0 0.0
    %8029 = vmatmul.mubr.f32.gmra.mrb[0].mxu0 %v7807
    %v8030 = vpop.f32.mrb[0].mxu0
    %v8031 = vadd.f32 0.0, %v8030
    %v8032 = vpop.f32.mrb[0].mxu0
    %8033 = vdwg.mxu0
    %v8035 = vsel %vm7712, %v7664, 0
    %v8038 = vsel %vm7712, %v7665, 0
    %v8041 = vsel %vm7712, %v7666, 0
    %v8044 = vsel %vm7712, %v7667, 0
    %v8047 = vsel %vm7712, %v7668, 0
    %v8050 = vsel %vm7712, %v7669, 0
    %v8053 = vsel %vm7712, %v7670, 0
    %v8056 = vsel %vm7712, %v7671, 0
    %v8059 = vsel %vm7712, %v7672, 0
    %v8062 = vsel %vm7712, %v7673, 0
    %v8065 = vsel %vm7712, %v7674, 0
    %v8068 = vsel %vm7712, %v7675, 0
    %v8071 = vsel %vm7712, %v7676, 0
    %v8074 = vsel %vm7712, %v7677, 0
    %v8077 = vsel %vm7712, %v7678, 0
    %v8080 = vsel %vm7712, %v7679, 0
    %v8083 = vsel %vm7712, %v7680, 0
    %v8086 = vsel %vm7712, %v7681, 0
    %v8089 = vsel %vm7712, %v7682, 0
    %v8092 = vsel %vm7712, %v7683, 0
    %v8095 = vsel %vm7712, %v7684, 0
    %v8098 = vsel %vm7712, %v7685, 0
    %v8101 = vsel %vm7712, %v7686, 0
    %v8104 = vsel %vm7712, %v7687, 0
    %v8107 = vsel %vm7712, %v7688, 0
    %v8110 = vsel %vm7712, %v7689, 0
    %v8113 = vsel %vm7712, %v7690, 0
    %v8116 = vsel %vm7712, %v7691, 0
    %v8119 = vsel %vm7712, %v7692, 0
    %v8122 = vsel %vm7712, %v7693, 0
    %v8125 = vsel %vm7712, %v7694, 0
    %v8128 = vsel %vm7712, %v7695, 0
    %8130 = vmatprep.subr.mxu0 0.0
    %8131 = vmatpush1.msra.mxu0 %v7696
    %8132 = vmatprep.subr.mxu0 0.0
    %8133 = vmatpush1.msra.mxu0 %v7697
    %8134 = vmatprep.subr.mxu0 0.0
    %8135 = vmatpush1.msra.mxu0 %v7698
    %8136 = vmatprep.subr.mxu0 0.0
    %8137 = vmatpush1.msra.mxu0 %v7699
    %8138 = vmatprep.subr.mxu0 0.0
    %8139 = vmatpush1.msra.mxu0 %v7700
    %8140 = vmatprep.subr.mxu0 0.0
    %8141 = vmatpush1.msra.mxu0 %v7701
    %8142 = vmatprep.subr.mxu0 0.0
    %8143 = vmatpush1.msra.mxu0 %v7702
    %8144 = vmatprep.subr.mxu0 0.0
    %8145 = vmatpush1.msra.mxu0 %v7703
    %8146 = vmatprep.subr.mxu0 0.0
    %8147 = vmatpush1.msra.mxu0 0.0
    %8148 = vmatprep.subr.mxu0 0.0
    %8149 = vmatpush1.msra.mxu0 0.0
    %8150 = vmatprep.subr.mxu0 0.0
    %8151 = vmatpush1.msra.mxu0 0.0
    %8152 = vmatprep.subr.mxu0 0.0
    %8153 = vmatpush1.msra.mxu0 0.0
    %8154 = vmatprep.subr.mxu0 0.0
    %8155 = vmatpush1.msra.mxu0 0.0
    %8156 = vmatprep.subr.mxu0 0.0
    %8157 = vmatpush1.msra.mxu0 0.0
    %8158 = vmatprep.subr.mxu0 0.0
    %8159 = vmatpush1.msra.mxu0 0.0
    %8160 = vmatprep.subr.mxu0 0.0
    %8161 = vmatpush1.msra.mxu0 0.0
    %8162 = vmatprep.subr.mxu0 0.0
    %8163 = vmatpush1.msra.mxu0 0.0
    %8164 = vmatprep.subr.mxu0 0.0
    %8165 = vmatpush1.msra.mxu0 0.0
    %8166 = vmatprep.subr.mxu0 0.0
    %8167 = vmatpush1.msra.mxu0 0.0
    %8168 = vmatprep.subr.mxu0 0.0
    %8169 = vmatpush1.msra.mxu0 0.0
    %8170 = vmatprep.subr.mxu0 0.0
    %8171 = vmatpush1.msra.mxu0 0.0
    %8172 = vmatprep.subr.mxu0 0.0
    %8173 = vmatpush1.msra.mxu0 0.0
    %8174 = vmatprep.subr.mxu0 0.0
    %8175 = vmatpush1.msra.mxu0 0.0
    %8176 = vmatprep.subr.mxu0 0.0
    %8177 = vmatpush1.msra.mxu0 0.0
    %8178 = vmatprep.subr.mxu0 0.0
    %8179 = vmatpush1.msra.mxu0 0.0
    %8180 = vmatprep.subr.mxu0 0.0
    %8181 = vmatpush1.msra.mxu0 0.0
    %8182 = vmatprep.subr.mxu0 0.0
    %8183 = vmatpush1.msra.mxu0 0.0
    %8184 = vmatprep.subr.mxu0 0.0
    %8185 = vmatpush1.msra.mxu0 0.0
    %8186 = vmatprep.subr.mxu0 0.0
    %8187 = vmatpush1.msra.mxu0 0.0
    %8188 = vmatprep.subr.mxu0 0.0
    %8189 = vmatpush1.msra.mxu0 0.0
    %8190 = vmatprep.subr.mxu0 0.0
    %8191 = vmatpush1.msra.mxu0 0.0
    %8192 = vmatprep.subr.mxu0 0.0
    %8193 = vmatpush1.msra.mxu0 0.0
    %8194 = vmatprep.mubr.f32.mxu0 0.0
    %8195 = vmatmul.mubr.f32.gmra.mrb[0].mxu0 %v8035
    %v8196 = vpop.f32.mrb[0].mxu0
    %v8197 = vadd.f32 %v7876, %v8196
    %v8198 = vpop.f32.mrb[0].mxu0
    %8199 = vmatprep.mubr.f32.mxu0 0.0
    %8200 = vmatmul.mubr.f32.gmra.mrb[0].mxu0 %v8038
    %v8201 = vpop.f32.mrb[0].mxu0
    %v8202 = vadd.f32 %v7881, %v8201
    %v8203 = vpop.f32.mrb[0].mxu0
    %8204 = vmatprep.mubr.f32.mxu0 0.0
    %8205 = vmatmul.mubr.f32.gmra.mrb[0].mxu0 %v8041
    %v8206 = vpop.f32.mrb[0].mxu0
    %v8207 = vadd.f32 %v7886, %v8206
    %v8208 = vpop.f32.mrb[0].mxu0
    %8209 = vmatprep.mubr.f32.mxu0 0.0
    %8210 = vmatmul.mubr.f32.gmra.mrb[0].mxu0 %v8044
    %v8211 = vpop.f32.mrb[0].mxu0
    %v8212 = vadd.f32 %v7891, %v8211
    %v8213 = vpop.f32.mrb[0].mxu0
    %8214 = vmatprep.mubr.f32.mxu0 0.0
    %8215 = vmatmul.mubr.f32.gmra.mrb[0].mxu0 %v8047
    %v8216 = vpop.f32.mrb[0].mxu0
    %v8217 = vadd.f32 %v7896, %v8216
    %v8218 = vpop.f32.mrb[0].mxu0
    %8219 = vmatprep.mubr.f32.mxu0 0.0
    %8220 = vmatmul.mubr.f32.gmra.mrb[0].mxu0 %v8050
    %v8221 = vpop.f32.mrb[0].mxu0
    %v8222 = vadd.f32 %v7901, %v8221
    %v8223 = vpop.f32.mrb[0].mxu0
    %8224 = vmatprep.mubr.f32.mxu0 0.0
    %8225 = vmatmul.mubr.f32.gmra.mrb[0].mxu0 %v8053
    %v8226 = vpop.f32.mrb[0].mxu0
    %v8227 = vadd.f32 %v7906, %v8226
    %v8228 = vpop.f32.mrb[0].mxu0
    %8229 = vmatprep.mubr.f32.mxu0 0.0
    %8230 = vmatmul.mubr.f32.gmra.mrb[0].mxu0 %v8056
    %v8231 = vpop.f32.mrb[0].mxu0
    %v8232 = vadd.f32 %v7911, %v8231
    %v8233 = vpop.f32.mrb[0].mxu0
    %8234 = vmatprep.mubr.f32.mxu0 0.0
    %8235 = vmatmul.mubr.f32.gmra.mrb[0].mxu0 %v8059
    %v8236 = vpop.f32.mrb[0].mxu0
    %v8237 = vadd.f32 %v7916, %v8236
    %v8238 = vpop.f32.mrb[0].mxu0
    %8239 = vmatprep.mubr.f32.mxu0 0.0
    %8240 = vmatmul.mubr.f32.gmra.mrb[0].mxu0 %v8062
    %v8241 = vpop.f32.mrb[0].mxu0
    %v8242 = vadd.f32 %v7921, %v8241
    %v8243 = vpop.f32.mrb[0].mxu0
    %8244 = vmatprep.mubr.f32.mxu0 0.0
    %8245 = vmatmul.mubr.f32.gmra.mrb[0].mxu0 %v8065
    %v8246 = vpop.f32.mrb[0].mxu0
    %v8247 = vadd.f32 %v7926, %v8246
    %v8248 = vpop.f32.mrb[0].mxu0
    %8249 = vmatprep.mubr.f32.mxu0 0.0
    %8250 = vmatmul.mubr.f32.gmra.mrb[0].mxu0 %v8068
    %v8251 = vpop.f32.mrb[0].mxu0
    %v8252 = vadd.f32 %v7931, %v8251
    %v8253 = vpop.f32.mrb[0].mxu0
    %8254 = vmatprep.mubr.f32.mxu0 0.0
    %8255 = vmatmul.mubr.f32.gmra.mrb[0].mxu0 %v8071
    %v8256 = vpop.f32.mrb[0].mxu0
    %v8257 = vadd.f32 %v7936, %v8256
    %v8258 = vpop.f32.mrb[0].mxu0
    %8259 = vmatprep.mubr.f32.mxu0 0.0
    %8260 = vmatmul.mubr.f32.gmra.mrb[0].mxu0 %v8074
    %v8261 = vpop.f32.mrb[0].mxu0
    %v8262 = vadd.f32 %v7941, %v8261
    %v8263 = vpop.f32.mrb[0].mxu0
    %8264 = vmatprep.mubr.f32.mxu0 0.0
    %8265 = vmatmul.mubr.f32.gmra.mrb[0].mxu0 %v8077
    %v8266 = vpop.f32.mrb[0].mxu0
    %v8267 = vadd.f32 %v7946, %v8266
    %v8268 = vpop.f32.mrb[0].mxu0
    %8269 = vmatprep.mubr.f32.mxu0 0.0
    %8270 = vmatmul.mubr.f32.gmra.mrb[0].mxu0 %v8080
    %v8271 = vpop.f32.mrb[0].mxu0
    %v8272 = vadd.f32 %v7951, %v8271
    %v8273 = vpop.f32.mrb[0].mxu0
    %8274 = vmatprep.mubr.f32.mxu0 0.0
    %8275 = vmatmul.mubr.f32.gmra.mrb[0].mxu0 %v8083
    %v8276 = vpop.f32.mrb[0].mxu0
    %v8277 = vadd.f32 %v7956, %v8276
    %v8278 = vpop.f32.mrb[0].mxu0
    %8279 = vmatprep.mubr.f32.mxu0 0.0
    %8280 = vmatmul.mubr.f32.gmra.mrb[0].mxu0 %v8086
    %v8281 = vpop.f32.mrb[0].mxu0
    %v8282 = vadd.f32 %v7961, %v8281
    %v8283 = vpop.f32.mrb[0].mxu0
    %8284 = vmatprep.mubr.f32.mxu0 0.0
    %8285 = vmatmul.mubr.f32.gmra.mrb[0].mxu0 %v8089
    %v8286 = vpop.f32.mrb[0].mxu0
    %v8287 = vadd.f32 %v7966, %v8286
    %v8288 = vpop.f32.mrb[0].mxu0
    %8289 = vmatprep.mubr.f32.mxu0 0.0
    %8290 = vmatmul.mubr.f32.gmra.mrb[0].mxu0 %v8092
    %v8291 = vpop.f32.mrb[0].mxu0
    %v8292 = vadd.f32 %v7971, %v8291
    %v8293 = vpop.f32.mrb[0].mxu0
    %8294 = vmatprep.mubr.f32.mxu0 0.0
    %8295 = vmatmul.mubr.f32.gmra.mrb[0].mxu0 %v8095
    %v8296 = vpop.f32.mrb[0].mxu0
    %v8297 = vadd.f32 %v7976, %v8296
    %v8298 = vpop.f32.mrb[0].mxu0
    %8299 = vmatprep.mubr.f32.mxu0 0.0
    %8300 = vmatmul.mubr.f32.gmra.mrb[0].mxu0 %v8098
    %v8301 = vpop.f32.mrb[0].mxu0
    %v8302 = vadd.f32 %v7981, %v8301
    %v8303 = vpop.f32.mrb[0].mxu0
    %8304 = vmatprep.mubr.f32.mxu0 0.0
    %8305 = vmatmul.mubr.f32.gmra.mrb[0].mxu0 %v8101
    %v8306 = vpop.f32.mrb[0].mxu0
    %v8307 = vadd.f32 %v7986, %v8306
    %v8308 = vpop.f32.mrb[0].mxu0
    %8309 = vmatprep.mubr.f32.mxu0 0.0
    %8310 = vmatmul.mubr.f32.gmra.mrb[0].mxu0 %v8104
    %v8311 = vpop.f32.mrb[0].mxu0
    %v8312 = vadd.f32 %v7991, %v8311
    %v8313 = vpop.f32.mrb[0].mxu0
    %8314 = vmatprep.mubr.f32.mxu0 0.0
    %8315 = vmatmul.mubr.f32.gmra.mrb[0].mxu0 %v8107
    %v8316 = vpop.f32.mrb[0].mxu0
    %v8317 = vadd.f32 %v7996, %v8316
    %v8318 = vpop.f32.mrb[0].mxu0
    %8319 = vmatprep.mubr.f32.mxu0 0.0
    %8320 = vmatmul.mubr.f32.gmra.mrb[0].mxu0 %v8110
    %v8321 = vpop.f32.mrb[0].mxu0
    %v8322 = vadd.f32 %v8001, %v8321
    %v8323 = vpop.f32.mrb[0].mxu0
    %8324 = vmatprep.mubr.f32.mxu0 0.0
    %8325 = vmatmul.mubr.f32.gmra.mrb[0].mxu0 %v8113
    %v8326 = vpop.f32.mrb[0].mxu0
    %v8327 = vadd.f32 %v8006, %v8326
    %v8328 = vpop.f32.mrb[0].mxu0
    %8329 = vmatprep.mubr.f32.mxu0 0.0
    %8330 = vmatmul.mubr.f32.gmra.mrb[0].mxu0 %v8116
    %v8331 = vpop.f32.mrb[0].mxu0
    %v8332 = vadd.f32 %v8011, %v8331
    %v8333 = vpop.f32.mrb[0].mxu0
    %8334 = vmatprep.mubr.f32.mxu0 0.0
    %8335 = vmatmul.mubr.f32.gmra.mrb[0].mxu0 %v8119
    %v8336 = vpop.f32.mrb[0].mxu0
    %v8337 = vadd.f32 %v8016, %v8336
    %v8338 = vpop.f32.mrb[0].mxu0
    %8339 = vmatprep.mubr.f32.mxu0 0.0
    %8340 = vmatmul.mubr.f32.gmra.mrb[0].mxu0 %v8122
    %v8341 = vpop.f32.mrb[0].mxu0
    %v8342 = vadd.f32 %v8021, %v8341
    %v8343 = vpop.f32.mrb[0].mxu0
    %8344 = vmatprep.mubr.f32.mxu0 0.0
    %8345 = vmatmul.mubr.f32.gmra.mrb[0].mxu0 %v8125
    %v8346 = vpop.f32.mrb[0].mxu0
    %v8347 = vadd.f32 %v8026, %v8346
    %v8348 = vpop.f32.mrb[0].mxu0
    %8349 = vmatprep.mubr.f32.mxu0 0.0
    %8350 = vmatmul.mubr.f32.gmra.mrb[0].mxu0 %v8128
    %v8351 = vpop.f32.mrb[0].mxu0
    %v8352 = vadd.f32 %v8031, %v8351
    %v8353 = vpop.f32.mrb[0].mxu0
    %8354 = vdwg.mxu0
    %v8355 = vrot.slane %v7568, 1
    %v8356 = vrot.slane %v7569, 1
    %v8357 = vrot.slane %v7570, 1
    %v8358 = vrot.slane %v7571, 1
    %v8359 = vrot.slane %v7572, 1
    %v8360 = vrot.slane %v7573, 1
    %v8361 = vrot.slane %v7574, 1
    %v8362 = vrot.slane %v7575, 1
    %v8363 = vrot.slane %v7576, 1
    %v8364 = vrot.slane %v7577, 1
    %v8365 = vrot.slane %v7578, 1
    %v8366 = vrot.slane %v7579, 1
    %v8367 = vrot.slane %v7580, 1
    %v8368 = vrot.slane %v7581, 1
    %v8369 = vrot.slane %v7582, 1
    %v8370 = vrot.slane %v7583, 1
    %v8371 = vrot.slane %v7584, 1
    %v8372 = vrot.slane %v7585, 1
    %v8373 = vrot.slane %v7586, 1
    %v8374 = vrot.slane %v7587, 1
    %v8375 = vrot.slane %v7588, 1
    %v8376 = vrot.slane %v7589, 1
    %v8377 = vrot.slane %v7590, 1
    %v8378 = vrot.slane %v7591, 1
    %v8379 = vrot.slane %v7592, 1
    %v8380 = vrot.slane %v7593, 1
    %v8381 = vrot.slane %v7594, 1
    %v8382 = vrot.slane %v7595, 1
    %v8383 = vrot.slane %v7596, 1
    %v8384 = vrot.slane %v7597, 1
    %v8385 = vrot.slane %v7598, 1
    %v8386 = vrot.slane %v7599, 1
    %v8387 = vsel %vm920, %v8385, %v8386
    %v8388 = vsel %vm920, %v8384, %v8385
    %v8389 = vsel %vm920, %v8383, %v8384
    %v8390 = vsel %vm920, %v8382, %v8383
    %v8391 = vsel %vm920, %v8381, %v8382
    %v8392 = vsel %vm920, %v8380, %v8381
    %v8393 = vsel %vm920, %v8379, %v8380
    %v8394 = vsel %vm920, %v8378, %v8379
    %v8395 = vsel %vm920, %v8377, %v8378
    %v8396 = vsel %vm920, %v8376, %v8377
    %v8397 = vsel %vm920, %v8375, %v8376
    %v8398 = vsel %vm920, %v8374, %v8375
    %v8399 = vsel %vm920, %v8373, %v8374
    %v8400 = vsel %vm920, %v8372, %v8373
    %v8401 = vsel %vm920, %v8371, %v8372
    %v8402 = vsel %vm920, %v8370, %v8371
    %v8403 = vsel %vm920, %v8369, %v8370
    %v8404 = vsel %vm920, %v8368, %v8369
    %v8405 = vsel %vm920, %v8367, %v8368
    %v8406 = vsel %vm920, %v8366, %v8367
    %v8407 = vsel %vm920, %v8365, %v8366
    %v8408 = vsel %vm920, %v8364, %v8365
    %v8409 = vsel %vm920, %v8363, %v8364
    %v8410 = vsel %vm920, %v8362, %v8363
    %v8411 = vsel %vm920, %v8361, %v8362
    %v8412 = vsel %vm920, %v8360, %v8361
    %v8413 = vsel %vm920, %v8359, %v8360
    %v8414 = vsel %vm920, %v8358, %v8359
    %v8415 = vsel %vm920, %v8357, %v8358
    %v8416 = vsel %vm920, %v8356, %v8357
    %v8417 = vsel %vm920, %v8355, %v8356
    %v8418 = vsel %vm920, %v8386, %v8355
    %v8419 = vsel %vm985, %v8417, 0.0
    %v8420 = vsel %vm986, %v8416, 0.0
    %v8421 = vsel %vm987, %v8415, 0.0
    %v8422 = vsel %vm988, %v8414, 0.0
    %v8423 = vsel %vm989, %v8413, 0.0
    %v8424 = vsel %vm990, %v8412, 0.0
    %v8425 = vsel %vm991, %v8411, 0.0
    %v8426 = vsel %vm992, %v8410, 0.0
    %v8427 = vsel %vm993, %v8409, 0.0
    %v8428 = vsel %vm994, %v8408, 0.0
    %v8429 = vsel %vm995, %v8407, 0.0
    %v8430 = vsel %vm996, %v8406, 0.0
    %v8431 = vsel %vm997, %v8405, 0.0
    %v8432 = vsel %vm998, %v8404, 0.0
    %v8433 = vsel %vm999, %v8403, 0.0
    %v8434 = vsel %vm1000, %v8402, 0.0
    %v8435 = vsel %vm1001, %v8401, 0.0
    %v8436 = vsel %vm1002, %v8400, 0.0
    %v8437 = vsel %vm1003, %v8399, 0.0
    %v8438 = vsel %vm1004, %v8398, 0.0
    %v8439 = vsel %vm1005, %v8397, 0.0
    %v8440 = vsel %vm1006, %v8396, 0.0
    %v8441 = vsel %vm1007, %v8395, 0.0
    %v8442 = vsel %vm1008, %v8394, 0.0
    %v8443 = vsel %vm1009, %v8393, 0.0
    %v8444 = vsel %vm1010, %v8392, 0.0
    %v8445 = vsel %vm1011, %v8391, 0.0
    %v8446 = vsel %vm1012, %v8390, 0.0
    %v8447 = vsel %vm1013, %v8389, 0.0
    %v8448 = vsel %vm1014, %v8388, 0.0
    %v8449 = vsel %vm1015, %v8387, 0.0
    %v8450 = vsel %vm1016, %v8418, 0.0
    %v8451 = vld [vmem:[%s2 + $0x198] sm:$0xff]
    %v8452 = vld [vmem:[%s2 + $0x1a0] sm:$0xff]
    %v8453 = vld [vmem:[%s2 + $0x1a8] sm:$0xff]
    %v8454 = vld [vmem:[%s2 + $0x1b0] sm:$0xff]
    %v8455 = vld [vmem:[%s2 + $0x1b8] sm:$0xff]
    %v8456 = vld [vmem:[%s2 + $0x1c0] sm:$0xff]
    %v8457 = vld [vmem:[%s2 + $0x1c8] sm:$0xff]
    %v8458 = vld [vmem:[%s2 + $0x1d0] sm:$0xff]
    %v8460 = vsel %vm7712, %v8419, 0
    %v8463 = vsel %vm7712, %v8420, 0
    %v8466 = vsel %vm7712, %v8421, 0
    %v8469 = vsel %vm7712, %v8422, 0
    %v8472 = vsel %vm7712, %v8423, 0
    %v8475 = vsel %vm7712, %v8424, 0
    %v8478 = vsel %vm7712, %v8425, 0
    %v8481 = vsel %vm7712, %v8426, 0
    %v8484 = vsel %vm7712, %v8427, 0
    %v8487 = vsel %vm7712, %v8428, 0
    %v8490 = vsel %vm7712, %v8429, 0
    %v8493 = vsel %vm7712, %v8430, 0
    %v8496 = vsel %vm7712, %v8431, 0
    %v8499 = vsel %vm7712, %v8432, 0
    %v8502 = vsel %vm7712, %v8433, 0
    %v8505 = vsel %vm7712, %v8434, 0
    %v8508 = vsel %vm7712, %v8435, 0
    %v8511 = vsel %vm7712, %v8436, 0
    %v8514 = vsel %vm7712, %v8437, 0
    %v8517 = vsel %vm7712, %v8438, 0
    %v8520 = vsel %vm7712, %v8439, 0
    %v8523 = vsel %vm7712, %v8440, 0
    %v8526 = vsel %vm7712, %v8441, 0
    %v8529 = vsel %vm7712, %v8442, 0
    %v8532 = vsel %vm7712, %v8443, 0
    %v8535 = vsel %vm7712, %v8444, 0
    %v8538 = vsel %vm7712, %v8445, 0
    %v8541 = vsel %vm7712, %v8446, 0
    %v8544 = vsel %vm7712, %v8447, 0
    %v8547 = vsel %vm7712, %v8448, 0
    %v8550 = vsel %vm7712, %v8449, 0
    %v8553 = vsel %vm7712, %v8450, 0
    %8555 = vmatprep.subr.mxu0 0.0
    %8556 = vmatpush1.msra.mxu0 %v8451
    %8557 = vmatprep.subr.mxu0 0.0
    %8558 = vmatpush1.msra.mxu0 %v8452
    %8559 = vmatprep.subr.mxu0 0.0
    %8560 = vmatpush1.msra.mxu0 %v8453
    %8561 = vmatprep.subr.mxu0 0.0
    %8562 = vmatpush1.msra.mxu0 %v8454
    %8563 = vmatprep.subr.mxu0 0.0
    %8564 = vmatpush1.msra.mxu0 %v8455
    %8565 = vmatprep.subr.mxu0 0.0
    %8566 = vmatpush1.msra.mxu0 %v8456
    %8567 = vmatprep.subr.mxu0 0.0
    %8568 = vmatpush1.msra.mxu0 %v8457
    %8569 = vmatprep.subr.mxu0 0.0
    %8570 = vmatpush1.msra.mxu0 %v8458
    %8571 = vmatprep.subr.mxu0 0.0
    %8572 = vmatpush1.msra.mxu0 0.0
    %8573 = vmatprep.subr.mxu0 0.0
    %8574 = vmatpush1.msra.mxu0 0.0
    %8575 = vmatprep.subr.mxu0 0.0
    %8576 = vmatpush1.msra.mxu0 0.0
    %8577 = vmatprep.subr.mxu0 0.0
    %8578 = vmatpush1.msra.mxu0 0.0
    %8579 = vmatprep.subr.mxu0 0.0
    %8580 = vmatpush1.msra.mxu0 0.0
    %8581 = vmatprep.subr.mxu0 0.0
    %8582 = vmatpush1.msra.mxu0 0.0
    %8583 = vmatprep.subr.mxu0 0.0
    %8584 = vmatpush1.msra.mxu0 0.0
    %8585 = vmatprep.subr.mxu0 0.0
    %8586 = vmatpush1.msra.mxu0 0.0
    %8587 = vmatprep.subr.mxu0 0.0
    %8588 = vmatpush1.msra.mxu0 0.0
    %8589 = vmatprep.subr.mxu0 0.0
    %8590 = vmatpush1.msra.mxu0 0.0
    %8591 = vmatprep.subr.mxu0 0.0
    %8592 = vmatpush1.msra.mxu0 0.0
    %8593 = vmatprep.subr.mxu0 0.0
    %8594 = vmatpush1.msra.mxu0 0.0
    %8595 = vmatprep.subr.mxu0 0.0
    %8596 = vmatpush1.msra.mxu0 0.0
    %8597 = vmatprep.subr.mxu0 0.0
    %8598 = vmatpush1.msra.mxu0 0.0
    %8599 = vmatprep.subr.mxu0 0.0
    %8600 = vmatpush1.msra.mxu0 0.0
    %8601 = vmatprep.subr.mxu0 0.0
    %8602 = vmatpush1.msra.mxu0 0.0
    %8603 = vmatprep.subr.mxu0 0.0
    %8604 = vmatpush1.msra.mxu0 0.0
    %8605 = vmatprep.subr.mxu0 0.0
    %8606 = vmatpush1.msra.mxu0 0.0
    %8607 = vmatprep.subr.mxu0 0.0
    %8608 = vmatpush1.msra.mxu0 0.0
    %8609 = vmatprep.subr.mxu0 0.0
    %8610 = vmatpush1.msra.mxu0 0.0
    %8611 = vmatprep.subr.mxu0 0.0
    %8612 = vmatpush1.msra.mxu0 0.0
    %8613 = vmatprep.subr.mxu0 0.0
    %8614 = vmatpush1.msra.mxu0 0.0
    %8615 = vmatprep.subr.mxu0 0.0
    %8616 = vmatpush1.msra.mxu0 0.0
    %8617 = vmatprep.subr.mxu0 0.0
    %8618 = vmatpush1.msra.mxu0 0.0
    %8619 = vmatprep.mubr.f32.mxu0 0.0
    %8620 = vmatmul.mubr.f32.gmra.mrb[0].mxu0 %v8460
    %v8621 = vpop.f32.mrb[0].mxu0
    %v8622 = vadd.f32 0.0, %v8621
    %v8623 = vpop.f32.mrb[0].mxu0
    %8624 = vmatprep.mubr.f32.mxu0 0.0
    %8625 = vmatmul.mubr.f32.gmra.mrb[0].mxu0 %v8463
    %v8626 = vpop.f32.mrb[0].mxu0
    %v8627 = vadd.f32 0.0, %v8626
    %v8628 = vpop.f32.mrb[0].mxu0
    %8629 = vmatprep.mubr.f32.mxu0 0.0
    %8630 = vmatmul.mubr.f32.gmra.mrb[0].mxu0 %v8466
    %v8631 = vpop.f32.mrb[0].mxu0
    %v8632 = vadd.f32 0.0, %v8631
    %v8633 = vpop.f32.mrb[0].mxu0
    %8634 = vmatprep.mubr.f32.mxu0 0.0
    %8635 = vmatmul.mubr.f32.gmra.mrb[0].mxu0 %v8469
    %v8636 = vpop.f32.mrb[0].mxu0
    %v8637 = vadd.f32 0.0, %v8636
    %v8638 = vpop.f32.mrb[0].mxu0
    %8639 = vmatprep.mubr.f32.mxu0 0.0
    %8640 = vmatmul.mubr.f32.gmra.mrb[0].mxu0 %v8472
    %v8641 = vpop.f32.mrb[0].mxu0
    %v8642 = vadd.f32 0.0, %v8641
    %v8643 = vpop.f32.mrb[0].mxu0
    %8644 = vmatprep.mubr.f32.mxu0 0.0
    %8645 = vmatmul.mubr.f32.gmra.mrb[0].mxu0 %v8475
    %v8646 = vpop.f32.mrb[0].mxu0
    %v8647 = vadd.f32 0.0, %v8646
    %v8648 = vpop.f32.mrb[0].mxu0
    %8649 = vmatprep.mubr.f32.mxu0 0.0
    %8650 = vmatmul.mubr.f32.gmra.mrb[0].mxu0 %v8478
    %v8651 = vpop.f32.mrb[0].mxu0
    %v8652 = vadd.f32 0.0, %v8651
    %v8653 = vpop.f32.mrb[0].mxu0
    %8654 = vmatprep.mubr.f32.mxu0 0.0
    %8655 = vmatmul.mubr.f32.gmra.mrb[0].mxu0 %v8481
    %v8656 = vpop.f32.mrb[0].mxu0
    %v8657 = vadd.f32 0.0, %v8656
    %v8658 = vpop.f32.mrb[0].mxu0
    %8659 = vmatprep.mubr.f32.mxu0 0.0
    %8660 = vmatmul.mubr.f32.gmra.mrb[0].mxu0 %v8484
    %v8661 = vpop.f32.mrb[0].mxu0
    %v8662 = vadd.f32 0.0, %v8661
    %v8663 = vpop.f32.mrb[0].mxu0
    %8664 = vmatprep.mubr.f32.mxu0 0.0
    %8665 = vmatmul.mubr.f32.gmra.mrb[0].mxu0 %v8487
    %v8666 = vpop.f32.mrb[0].mxu0
    %v8667 = vadd.f32 0.0, %v8666
    %v8668 = vpop.f32.mrb[0].mxu0
    %8669 = vmatprep.mubr.f32.mxu0 0.0
    %8670 = vmatmul.mubr.f32.gmra.mrb[0].mxu0 %v8490
    %v8671 = vpop.f32.mrb[0].mxu0
    %v8672 = vadd.f32 0.0, %v8671
    %v8673 = vpop.f32.mrb[0].mxu0
    %8674 = vmatprep.mubr.f32.mxu0 0.0
    %8675 = vmatmul.mubr.f32.gmra.mrb[0].mxu0 %v8493
    %v8676 = vpop.f32.mrb[0].mxu0
    %v8677 = vadd.f32 0.0, %v8676
    %v8678 = vpop.f32.mrb[0].mxu0
    %8679 = vmatprep.mubr.f32.mxu0 0.0
    %8680 = vmatmul.mubr.f32.gmra.mrb[0].mxu0 %v8496
    %v8681 = vpop.f32.mrb[0].mxu0
    %v8682 = vadd.f32 0.0, %v8681
    %v8683 = vpop.f32.mrb[0].mxu0
    %8684 = vmatprep.mubr.f32.mxu0 0.0
    %8685 = vmatmul.mubr.f32.gmra.mrb[0].mxu0 %v8499
    %v8686 = vpop.f32.mrb[0].mxu0
    %v8687 = vadd.f32 0.0, %v8686
    %v8688 = vpop.f32.mrb[0].mxu0
    %8689 = vmatprep.mubr.f32.mxu0 0.0
    %8690 = vmatmul.mubr.f32.gmra.mrb[0].mxu0 %v8502
    %v8691 = vpop.f32.mrb[0].mxu0
    %v8692 = vadd.f32 0.0, %v8691
    %v8693 = vpop.f32.mrb[0].mxu0
    %8694 = vmatprep.mubr.f32.mxu0 0.0
    %8695 = vmatmul.mubr.f32.gmra.mrb[0].mxu0 %v8505
    %v8696 = vpop.f32.mrb[0].mxu0
    %v8697 = vadd.f32 0.0, %v8696
    %v8698 = vpop.f32.mrb[0].mxu0
    %8699 = vmatprep.mubr.f32.mxu0 0.0
    %8700 = vmatmul.mubr.f32.gmra.mrb[0].mxu0 %v8508
    %v8701 = vpop.f32.mrb[0].mxu0
    %v8702 = vadd.f32 0.0, %v8701
    %v8703 = vpop.f32.mrb[0].mxu0
    %8704 = vmatprep.mubr.f32.mxu0 0.0
    %8705 = vmatmul.mubr.f32.gmra.mrb[0].mxu0 %v8511
    %v8706 = vpop.f32.mrb[0].mxu0
    %v8707 = vadd.f32 0.0, %v8706
    %v8708 = vpop.f32.mrb[0].mxu0
    %8709 = vmatprep.mubr.f32.mxu0 0.0
    %8710 = vmatmul.mubr.f32.gmra.mrb[0].mxu0 %v8514
    %v8711 = vpop.f32.mrb[0].mxu0
    %v8712 = vadd.f32 0.0, %v8711
    %v8713 = vpop.f32.mrb[0].mxu0
    %8714 = vmatprep.mubr.f32.mxu0 0.0
    %8715 = vmatmul.mubr.f32.gmra.mrb[0].mxu0 %v8517
    %v8716 = vpop.f32.mrb[0].mxu0
    %v8717 = vadd.f32 0.0, %v8716
    %v8718 = vpop.f32.mrb[0].mxu0
    %8719 = vmatprep.mubr.f32.mxu0 0.0
    %8720 = vmatmul.mubr.f32.gmra.mrb[0].mxu0 %v8520
    %v8721 = vpop.f32.mrb[0].mxu0
    %v8722 = vadd.f32 0.0, %v8721
    %v8723 = vpop.f32.mrb[0].mxu0
    %8724 = vmatprep.mubr.f32.mxu0 0.0
    %8725 = vmatmul.mubr.f32.gmra.mrb[0].mxu0 %v8523
    %v8726 = vpop.f32.mrb[0].mxu0
    %v8727 = vadd.f32 0.0, %v8726
    %v8728 = vpop.f32.mrb[0].mxu0
    %8729 = vmatprep.mubr.f32.mxu0 0.0
    %8730 = vmatmul.mubr.f32.gmra.mrb[0].mxu0 %v8526
    %v8731 = vpop.f32.mrb[0].mxu0
    %v8732 = vadd.f32 0.0, %v8731
    %v8733 = vpop.f32.mrb[0].mxu0
    %8734 = vmatprep.mubr.f32.mxu0 0.0
    %8735 = vmatmul.mubr.f32.gmra.mrb[0].mxu0 %v8529
    %v8736 = vpop.f32.mrb[0].mxu0
    %v8737 = vadd.f32 0.0, %v8736
    %v8738 = vpop.f32.mrb[0].mxu0
    %8739 = vmatprep.mubr.f32.mxu0 0.0
    %8740 = vmatmul.mubr.f32.gmra.mrb[0].mxu0 %v8532
    %v8741 = vpop.f32.mrb[0].mxu0
    %v8742 = vadd.f32 0.0, %v8741
    %v8743 = vpop.f32.mrb[0].mxu0
    %8744 = vmatprep.mubr.f32.mxu0 0.0
    %8745 = vmatmul.mubr.f32.gmra.mrb[0].mxu0 %v8535
    %v8746 = vpop.f32.mrb[0].mxu0
    %v8747 = vadd.f32 0.0, %v8746
    %v8748 = vpop.f32.mrb[0].mxu0
    %8749 = vmatprep.mubr.f32.mxu0 0.0
    %8750 = vmatmul.mubr.f32.gmra.mrb[0].mxu0 %v8538
    %v8751 = vpop.f32.mrb[0].mxu0
    %v8752 = vadd.f32 0.0, %v8751
    %v8753 = vpop.f32.mrb[0].mxu0
    %8754 = vmatprep.mubr.f32.mxu0 0.0
    %8755 = vmatmul.mubr.f32.gmra.mrb[0].mxu0 %v8541
    %v8756 = vpop.f32.mrb[0].mxu0
    %v8757 = vadd.f32 0.0, %v8756
    %v8758 = vpop.f32.mrb[0].mxu0
    %8759 = vmatprep.mubr.f32.mxu0 0.0
    %8760 = vmatmul.mubr.f32.gmra.mrb[0].mxu0 %v8544
    %v8761 = vpop.f32.mrb[0].mxu0
    %v8762 = vadd.f32 0.0, %v8761
    %v8763 = vpop.f32.mrb[0].mxu0
    %8764 = vmatprep.mubr.f32.mxu0 0.0
    %8765 = vmatmul.mubr.f32.gmra.mrb[0].mxu0 %v8547
    %v8766 = vpop.f32.mrb[0].mxu0
    %v8767 = vadd.f32 0.0, %v8766
    %v8768 = vpop.f32.mrb[0].mxu0
    %8769 = vmatprep.mubr.f32.mxu0 0.0
    %8770 = vmatmul.mubr.f32.gmra.mrb[0].mxu0 %v8550
    %v8771 = vpop.f32.mrb[0].mxu0
    %v8772 = vadd.f32 0.0, %v8771
    %v8773 = vpop.f32.mrb[0].mxu0
    %8774 = vmatprep.mubr.f32.mxu0 0.0
    %8775 = vmatmul.mubr.f32.gmra.mrb[0].mxu0 %v8553
    %v8776 = vpop.f32.mrb[0].mxu0
    %v8777 = vadd.f32 0.0, %v8776
    %v8778 = vpop.f32.mrb[0].mxu0
    %8779 = vdwg.mxu0
    %v8780 = vadd.f32 %v8197, %v8622
    %v8781 = vadd.f32 %v8202, %v8627
    %v8782 = vadd.f32 %v8207, %v8632
    %v8783 = vadd.f32 %v8212, %v8637
    %v8784 = vadd.f32 %v8217, %v8642
    %v8785 = vadd.f32 %v8222, %v8647
    %v8786 = vadd.f32 %v8227, %v8652
    %v8787 = vadd.f32 %v8232, %v8657
    %v8788 = vadd.f32 %v8237, %v8662
    %v8789 = vadd.f32 %v8242, %v8667
    %v8790 = vadd.f32 %v8247, %v8672
    %v8791 = vadd.f32 %v8252, %v8677
    %v8792 = vadd.f32 %v8257, %v8682
    %v8793 = vadd.f32 %v8262, %v8687
    %v8794 = vadd.f32 %v8267, %v8692
    %v8795 = vadd.f32 %v8272, %v8697
    %v8796 = vadd.f32 %v8277, %v8702
    %v8797 = vadd.f32 %v8282, %v8707
    %v8798 = vadd.f32 %v8287, %v8712
    %v8799 = vadd.f32 %v8292, %v8717
    %v8800 = vadd.f32 %v8297, %v8722
    %v8801 = vadd.f32 %v8302, %v8727
    %v8802 = vadd.f32 %v8307, %v8732
    %v8803 = vadd.f32 %v8312, %v8737
    %v8804 = vadd.f32 %v8317, %v8742
    %v8805 = vadd.f32 %v8322, %v8747
    %v8806 = vadd.f32 %v8327, %v8752
    %v8807 = vadd.f32 %v8332, %v8757
    %v8808 = vadd.f32 %v8337, %v8762
    %v8809 = vadd.f32 %v8342, %v8767
    %v8810 = vadd.f32 %v8347, %v8772
    %v8811 = vadd.f32 %v8352, %v8777
    %v8812 = vld [vmem:[%s4 + $0x5] ss:$0 sm:$0xff]
    %v8813 = vadd.f32 %v8780, %v8812
    %v8814 = vadd.f32 %v8781, %v8812
    %v8815 = vadd.f32 %v8782, %v8812
    %v8816 = vadd.f32 %v8783, %v8812
    %v8817 = vadd.f32 %v8784, %v8812
    %v8818 = vadd.f32 %v8785, %v8812
    %v8819 = vadd.f32 %v8786, %v8812
    %v8820 = vadd.f32 %v8787, %v8812
    %v8821 = vadd.f32 %v8788, %v8812
    %v8822 = vadd.f32 %v8789, %v8812
    %v8823 = vadd.f32 %v8790, %v8812
    %v8824 = vadd.f32 %v8791, %v8812
    %v8825 = vadd.f32 %v8792, %v8812
    %v8826 = vadd.f32 %v8793, %v8812
    %v8827 = vadd.f32 %v8794, %v8812
    %v8828 = vadd.f32 %v8795, %v8812
    %v8829 = vadd.f32 %v8796, %v8812
    %v8830 = vadd.f32 %v8797, %v8812
    %v8831 = vadd.f32 %v8798, %v8812
    %v8832 = vadd.f32 %v8799, %v8812
    %v8833 = vadd.f32 %v8800, %v8812
    %v8834 = vadd.f32 %v8801, %v8812
    %v8835 = vadd.f32 %v8802, %v8812
    %v8836 = vadd.f32 %v8803, %v8812
    %v8837 = vadd.f32 %v8804, %v8812
    %v8838 = vadd.f32 %v8805, %v8812
    %v8839 = vadd.f32 %v8806, %v8812
    %v8840 = vadd.f32 %v8807, %v8812
    %v8841 = vadd.f32 %v8808, %v8812
    %v8842 = vadd.f32 %v8809, %v8812
    %v8843 = vadd.f32 %v8810, %v8812
    %v8844 = vadd.f32 %v8811, %v8812
    %v8845 = vadd.f32 %v8813, %v6274
    %v8846 = vadd.f32 %v8814, %v6279
    %v8847 = vadd.f32 %v8815, %v6284
    %v8848 = vadd.f32 %v8816, %v6289
    %v8849 = vadd.f32 %v8817, %v6294
    %v8850 = vadd.f32 %v8818, %v6299
    %v8851 = vadd.f32 %v8819, %v6304
    %v8852 = vadd.f32 %v8820, %v6309
    %v8853 = vadd.f32 %v8821, %v6314
    %v8854 = vadd.f32 %v8822, %v6319
    %v8855 = vadd.f32 %v8823, %v6324
    %v8856 = vadd.f32 %v8824, %v6329
    %v8857 = vadd.f32 %v8825, %v6334
    %v8858 = vadd.f32 %v8826, %v6339
    %v8859 = vadd.f32 %v8827, %v6344
    %v8860 = vadd.f32 %v8828, %v6349
    %v8861 = vadd.f32 %v8829, %v6354
    %v8862 = vadd.f32 %v8830, %v6359
    %v8863 = vadd.f32 %v8831, %v6364
    %v8864 = vadd.f32 %v8832, %v6369
    %v8865 = vadd.f32 %v8833, %v6374
    %v8866 = vadd.f32 %v8834, %v6379
    %v8867 = vadd.f32 %v8835, %v6384
    %v8868 = vadd.f32 %v8836, %v6389
    %v8869 = vadd.f32 %v8837, %v6394
    %v8870 = vadd.f32 %v8838, %v6399
    %v8871 = vadd.f32 %v8839, %v6404
    %v8872 = vadd.f32 %v8840, %v6409
    %v8873 = vadd.f32 %v8841, %v6414
    %v8874 = vadd.f32 %v8842, %v6419
    %v8875 = vadd.f32 %v8843, %v6424
    %v8876 = vadd.f32 %v8844, %v6429
    %v8877 = vmax.f32 %v8845, 0.0
    %v8878 = vmax.f32 %v8846, 0.0
    %v8879 = vmax.f32 %v8847, 0.0
    %v8880 = vmax.f32 %v8848, 0.0
    %v8881 = vmax.f32 %v8849, 0.0
    %v8882 = vmax.f32 %v8850, 0.0
    %v8883 = vmax.f32 %v8851, 0.0
    %v8884 = vmax.f32 %v8852, 0.0
    %v8885 = vmax.f32 %v8853, 0.0
    %v8886 = vmax.f32 %v8854, 0.0
    %v8887 = vmax.f32 %v8855, 0.0
    %v8888 = vmax.f32 %v8856, 0.0
    %v8889 = vmax.f32 %v8857, 0.0
    %v8890 = vmax.f32 %v8858, 0.0
    %v8891 = vmax.f32 %v8859, 0.0
    %v8892 = vmax.f32 %v8860, 0.0
    %v8893 = vmax.f32 %v8861, 0.0
    %v8894 = vmax.f32 %v8862, 0.0
    %v8895 = vmax.f32 %v8863, 0.0
    %v8896 = vmax.f32 %v8864, 0.0
    %v8897 = vmax.f32 %v8865, 0.0
    %v8898 = vmax.f32 %v8866, 0.0
    %v8899 = vmax.f32 %v8867, 0.0
    %v8900 = vmax.f32 %v8868, 0.0
    %v8901 = vmax.f32 %v8869, 0.0
    %v8902 = vmax.f32 %v8870, 0.0
    %v8903 = vmax.f32 %v8871, 0.0
    %v8904 = vmax.f32 %v8872, 0.0
    %v8905 = vmax.f32 %v8873, 0.0
    %v8906 = vmax.f32 %v8874, 0.0
    %v8907 = vmax.f32 %v8875, 0.0
    %v8908 = vmax.f32 %v8876, 0.0
    %8941 = vrot.lane.b32.xlu0 %v8877, 96
    %v8942 = vpop.permute.xlu0 %8941
    %8943 = vrot.lane.b32.xlu0 %v8878, 96
    %v8944 = vpop.permute.xlu0 %8943
    %8945 = vrot.lane.b32.xlu0 %v8879, 96
    %v8946 = vpop.permute.xlu0 %8945
    %8947 = vrot.lane.b32.xlu0 %v8880, 96
    %v8948 = vpop.permute.xlu0 %8947
    %8949 = vrot.lane.b32.xlu0 %v8881, 96
    %v8950 = vpop.permute.xlu0 %8949
    %8951 = vrot.lane.b32.xlu0 %v8882, 96
    %v8952 = vpop.permute.xlu0 %8951
    %8953 = vrot.lane.b32.xlu0 %v8883, 96
    %v8954 = vpop.permute.xlu0 %8953
    %8955 = vrot.lane.b32.xlu0 %v8884, 96
    %v8956 = vpop.permute.xlu0 %8955
    %8957 = vrot.lane.b32.xlu0 %v8885, 96
    %v8958 = vpop.permute.xlu0 %8957
    %8959 = vrot.lane.b32.xlu0 %v8886, 96
    %v8960 = vpop.permute.xlu0 %8959
    %8961 = vrot.lane.b32.xlu0 %v8887, 96
    %v8962 = vpop.permute.xlu0 %8961
    %8963 = vrot.lane.b32.xlu0 %v8888, 96
    %v8964 = vpop.permute.xlu0 %8963
    %8965 = vrot.lane.b32.xlu0 %v8889, 96
    %v8966 = vpop.permute.xlu0 %8965
    %8967 = vrot.lane.b32.xlu0 %v8890, 96
    %v8968 = vpop.permute.xlu0 %8967
    %8969 = vrot.lane.b32.xlu0 %v8891, 96
    %v8970 = vpop.permute.xlu0 %8969
    %8971 = vrot.lane.b32.xlu0 %v8892, 96
    %v8972 = vpop.permute.xlu0 %8971
    %8973 = vrot.lane.b32.xlu0 %v8893, 96
    %v8974 = vpop.permute.xlu0 %8973
    %8975 = vrot.lane.b32.xlu0 %v8894, 96
    %v8976 = vpop.permute.xlu0 %8975
    %8977 = vrot.lane.b32.xlu0 %v8895, 96
    %v8978 = vpop.permute.xlu0 %8977
    %8979 = vrot.lane.b32.xlu0 %v8896, 96
    %v8980 = vpop.permute.xlu0 %8979
    %8981 = vrot.lane.b32.xlu0 %v8897, 96
    %v8982 = vpop.permute.xlu0 %8981
    %8983 = vrot.lane.b32.xlu0 %v8898, 96
    %v8984 = vpop.permute.xlu0 %8983
    %8985 = vrot.lane.b32.xlu0 %v8899, 96
    %v8986 = vpop.permute.xlu0 %8985
    %8987 = vrot.lane.b32.xlu0 %v8900, 96
    %v8988 = vpop.permute.xlu0 %8987
    %8989 = vrot.lane.b32.xlu0 %v8901, 96
    %v8990 = vpop.permute.xlu0 %8989
    %8991 = vrot.lane.b32.xlu0 %v8902, 96
    %v8992 = vpop.permute.xlu0 %8991
    %8993 = vrot.lane.b32.xlu0 %v8903, 96
    %v8994 = vpop.permute.xlu0 %8993
    %8995 = vrot.lane.b32.xlu0 %v8904, 96
    %v8996 = vpop.permute.xlu0 %8995
    %8997 = vrot.lane.b32.xlu0 %v8905, 96
    %v8998 = vpop.permute.xlu0 %8997
    %8999 = vrot.lane.b32.xlu0 %v8906, 96
    %v9000 = vpop.permute.xlu0 %8999
    %9001 = vrot.lane.b32.xlu0 %v8907, 96
    %v9002 = vpop.permute.xlu0 %9001
    %9003 = vrot.lane.b32.xlu0 %v8908, 96
    %v9004 = vpop.permute.xlu0 %9003
    %v9037 = vadd.f32 %v8877, %v8942
    %v9038 = vadd.f32 %v8878, %v8944
    %v9039 = vadd.f32 %v8879, %v8946
    %v9040 = vadd.f32 %v8880, %v8948
    %v9041 = vadd.f32 %v8881, %v8950
    %v9042 = vadd.f32 %v8882, %v8952
    %v9043 = vadd.f32 %v8883, %v8954
    %v9044 = vadd.f32 %v8884, %v8956
    %v9045 = vadd.f32 %v8885, %v8958
    %v9046 = vadd.f32 %v8886, %v8960
    %v9047 = vadd.f32 %v8887, %v8962
    %v9048 = vadd.f32 %v8888, %v8964
    %v9049 = vadd.f32 %v8889, %v8966
    %v9050 = vadd.f32 %v8890, %v8968
    %v9051 = vadd.f32 %v8891, %v8970
    %v9052 = vadd.f32 %v8892, %v8972
    %v9053 = vadd.f32 %v8893, %v8974
    %v9054 = vadd.f32 %v8894, %v8976
    %v9055 = vadd.f32 %v8895, %v8978
    %v9056 = vadd.f32 %v8896, %v8980
    %v9057 = vadd.f32 %v8897, %v8982
    %v9058 = vadd.f32 %v8898, %v8984
    %v9059 = vadd.f32 %v8899, %v8986
    %v9060 = vadd.f32 %v8900, %v8988
    %v9061 = vadd.f32 %v8901, %v8990
    %v9062 = vadd.f32 %v8902, %v8992
    %v9063 = vadd.f32 %v8903, %v8994
    %v9064 = vadd.f32 %v8904, %v8996
    %v9065 = vadd.f32 %v8905, %v8998
    %v9066 = vadd.f32 %v8906, %v9000
    %v9067 = vadd.f32 %v8907, %v9002
    %v9068 = vadd.f32 %v8908, %v9004
    %v9069 = vrot.slane %v9037, 7
    %v9070 = vrot.slane %v9038, 7
    %v9071 = vrot.slane %v9039, 7
    %v9072 = vrot.slane %v9040, 7
    %v9073 = vrot.slane %v9041, 7
    %v9074 = vrot.slane %v9042, 7
    %v9075 = vrot.slane %v9043, 7
    %v9076 = vrot.slane %v9044, 7
    %v9077 = vrot.slane %v9045, 7
    %v9078 = vrot.slane %v9046, 7
    %v9079 = vrot.slane %v9047, 7
    %v9080 = vrot.slane %v9048, 7
    %v9081 = vrot.slane %v9049, 7
    %v9082 = vrot.slane %v9050, 7
    %v9083 = vrot.slane %v9051, 7
    %v9084 = vrot.slane %v9052, 7
    %v9085 = vrot.slane %v9053, 7
    %v9086 = vrot.slane %v9054, 7
    %v9087 = vrot.slane %v9055, 7
    %v9088 = vrot.slane %v9056, 7
    %v9089 = vrot.slane %v9057, 7
    %v9090 = vrot.slane %v9058, 7
    %v9091 = vrot.slane %v9059, 7
    %v9092 = vrot.slane %v9060, 7
    %v9093 = vrot.slane %v9061, 7
    %v9094 = vrot.slane %v9062, 7
    %v9095 = vrot.slane %v9063, 7
    %v9096 = vrot.slane %v9064, 7
    %v9097 = vrot.slane %v9065, 7
    %v9098 = vrot.slane %v9066, 7
    %v9099 = vrot.slane %v9067, 7
    %v9100 = vrot.slane %v9068, 7
    %v9101 = vsel %vm727, %v9099, %v9100
    %v9102 = vsel %vm727, %v9098, %v9099
    %v9103 = vsel %vm727, %v9097, %v9098
    %v9104 = vsel %vm727, %v9096, %v9097
    %v9105 = vsel %vm727, %v9095, %v9096
    %v9106 = vsel %vm727, %v9094, %v9095
    %v9107 = vsel %vm727, %v9093, %v9094
    %v9108 = vsel %vm727, %v9092, %v9093
    %v9109 = vsel %vm727, %v9091, %v9092
    %v9110 = vsel %vm727, %v9090, %v9091
    %v9111 = vsel %vm727, %v9089, %v9090
    %v9112 = vsel %vm727, %v9088, %v9089
    %v9113 = vsel %vm727, %v9087, %v9088
    %v9114 = vsel %vm727, %v9086, %v9087
    %v9115 = vsel %vm727, %v9085, %v9086
    %v9116 = vsel %vm727, %v9084, %v9085
    %v9117 = vsel %vm727, %v9083, %v9084
    %v9118 = vsel %vm727, %v9082, %v9083
    %v9119 = vsel %vm727, %v9081, %v9082
    %v9120 = vsel %vm727, %v9080, %v9081
    %v9121 = vsel %vm727, %v9079, %v9080
    %v9122 = vsel %vm727, %v9078, %v9079
    %v9123 = vsel %vm727, %v9077, %v9078
    %v9124 = vsel %vm727, %v9076, %v9077
    %v9125 = vsel %vm727, %v9075, %v9076
    %v9126 = vsel %vm727, %v9074, %v9075
    %v9127 = vsel %vm727, %v9073, %v9074
    %v9128 = vsel %vm727, %v9072, %v9073
    %v9129 = vsel %vm727, %v9071, %v9072
    %v9130 = vsel %vm727, %v9070, %v9071
    %v9131 = vsel %vm727, %v9069, %v9070
    %v9132 = vsel %vm727, %v9100, %v9069
    %v9133 = vsel %vm792, %v9132, 0.0
    %v9134 = vsel %vm793, %v9131, 0.0
    %v9135 = vsel %vm794, %v9130, 0.0
    %v9136 = vsel %vm795, %v9129, 0.0
    %v9137 = vsel %vm796, %v9128, 0.0
    %v9138 = vsel %vm797, %v9127, 0.0
    %v9139 = vsel %vm798, %v9126, 0.0
    %v9140 = vsel %vm799, %v9125, 0.0
    %v9141 = vsel %vm800, %v9124, 0.0
    %v9142 = vsel %vm801, %v9123, 0.0
    %v9143 = vsel %vm802, %v9122, 0.0
    %v9144 = vsel %vm803, %v9121, 0.0
    %v9145 = vsel %vm804, %v9120, 0.0
    %v9146 = vsel %vm805, %v9119, 0.0
    %v9147 = vsel %vm806, %v9118, 0.0
    %v9148 = vsel %vm807, %v9117, 0.0
    %v9149 = vsel %vm808, %v9116, 0.0
    %v9150 = vsel %vm809, %v9115, 0.0
    %v9151 = vsel %vm810, %v9114, 0.0
    %v9152 = vsel %vm811, %v9113, 0.0
    %v9153 = vsel %vm812, %v9112, 0.0
    %v9154 = vsel %vm813, %v9111, 0.0
    %v9155 = vsel %vm814, %v9110, 0.0
    %v9156 = vsel %vm815, %v9109, 0.0
    %v9157 = vsel %vm816, %v9108, 0.0
    %v9158 = vsel %vm817, %v9107, 0.0
    %v9159 = vsel %vm818, %v9106, 0.0
    %v9160 = vsel %vm819, %v9105, 0.0
    %v9161 = vsel %vm820, %v9104, 0.0
    %v9162 = vsel %vm821, %v9103, 0.0
    %v9163 = vsel %vm822, %v9102, 0.0
    %v9164 = vsel %vm823, %v9101, 0.0
    %v9165 = vld [vmem:[%s2 + $0x1d8] sm:$0xff]
    %v9166 = vld [vmem:[%s2 + $0x1e0] sm:$0xff]
    %v9167 = vld [vmem:[%s2 + $0x1e8] sm:$0xff]
    %v9168 = vld [vmem:[%s2 + $0x1f0] sm:$0xff]
    %v9169 = vld [vmem:[%s2 + $0x1f8] sm:$0xff]
    %v9170 = vld [vmem:[%s2 + $0x200] sm:$0xff]
    %v9171 = vld [vmem:[%s2 + $0x208] sm:$0xff]
    %v9172 = vld [vmem:[%s2 + $0x210] sm:$0xff]
    %v9174 = vsel %vm4913, %v9037, 0
    %v9177 = vsel %vm4913, %v9038, 0
    %v9180 = vsel %vm4913, %v9039, 0
    %v9183 = vsel %vm4913, %v9040, 0
    %v9186 = vsel %vm4913, %v9041, 0
    %v9189 = vsel %vm4913, %v9042, 0
    %v9192 = vsel %vm4913, %v9043, 0
    %v9195 = vsel %vm4913, %v9044, 0
    %v9198 = vsel %vm4913, %v9045, 0
    %v9201 = vsel %vm4913, %v9046, 0
    %v9204 = vsel %vm4913, %v9047, 0
    %v9207 = vsel %vm4913, %v9048, 0
    %v9210 = vsel %vm4913, %v9049, 0
    %v9213 = vsel %vm4913, %v9050, 0
    %v9216 = vsel %vm4913, %v9051, 0
    %v9219 = vsel %vm4913, %v9052, 0
    %v9222 = vsel %vm4913, %v9053, 0
    %v9225 = vsel %vm4913, %v9054, 0
    %v9228 = vsel %vm4913, %v9055, 0
    %v9231 = vsel %vm4913, %v9056, 0
    %v9234 = vsel %vm4913, %v9057, 0
    %v9237 = vsel %vm4913, %v9058, 0
    %v9240 = vsel %vm4913, %v9059, 0
    %v9243 = vsel %vm4913, %v9060, 0
    %v9246 = vsel %vm4913, %v9061, 0
    %v9249 = vsel %vm4913, %v9062, 0
    %v9252 = vsel %vm4913, %v9063, 0
    %v9255 = vsel %vm4913, %v9064, 0
    %v9258 = vsel %vm4913, %v9065, 0
    %v9261 = vsel %vm4913, %v9066, 0
    %v9264 = vsel %vm4913, %v9067, 0
    %v9267 = vsel %vm4913, %v9068, 0
    %9269 = vmatprep.subr.mxu0 0.0
    %9270 = vmatpush1.msra.mxu0 %v9169
    %9271 = vmatprep.subr.mxu0 0.0
    %9272 = vmatpush1.msra.mxu0 %v9170
    %9273 = vmatprep.subr.mxu0 0.0
    %9274 = vmatpush1.msra.mxu0 %v9171
    %9275 = vmatprep.subr.mxu0 0.0
    %9276 = vmatpush1.msra.mxu0 %v9172
    %9277 = vmatprep.subr.mxu0 0.0
    %9278 = vmatpush1.msra.mxu0 0.0
    %9279 = vmatprep.subr.mxu0 0.0
    %9280 = vmatpush1.msra.mxu0 0.0
    %9281 = vmatprep.subr.mxu0 0.0
    %9282 = vmatpush1.msra.mxu0 0.0
    %9283 = vmatprep.subr.mxu0 0.0
    %9284 = vmatpush1.msra.mxu0 0.0
    %9285 = vmatprep.subr.mxu0 0.0
    %9286 = vmatpush1.msra.mxu0 0.0
    %9287 = vmatprep.subr.mxu0 0.0
    %9288 = vmatpush1.msra.mxu0 0.0
    %9289 = vmatprep.subr.mxu0 0.0
    %9290 = vmatpush1.msra.mxu0 0.0
    %9291 = vmatprep.subr.mxu0 0.0
    %9292 = vmatpush1.msra.mxu0 0.0
    %9293 = vmatprep.subr.mxu0 0.0
    %9294 = vmatpush1.msra.mxu0 0.0
    %9295 = vmatprep.subr.mxu0 0.0
    %9296 = vmatpush1.msra.mxu0 0.0
    %9297 = vmatprep.subr.mxu0 0.0
    %9298 = vmatpush1.msra.mxu0 0.0
    %9299 = vmatprep.subr.mxu0 0.0
    %9300 = vmatpush1.msra.mxu0 0.0
    %9301 = vmatprep.subr.mxu0 0.0
    %9302 = vmatpush1.msra.mxu0 0.0
    %9303 = vmatprep.subr.mxu0 0.0
    %9304 = vmatpush1.msra.mxu0 0.0
    %9305 = vmatprep.subr.mxu0 0.0
    %9306 = vmatpush1.msra.mxu0 0.0
    %9307 = vmatprep.subr.mxu0 0.0
    %9308 = vmatpush1.msra.mxu0 0.0
    %9309 = vmatprep.subr.mxu0 0.0
    %9310 = vmatpush1.msra.mxu0 0.0
    %9311 = vmatprep.subr.mxu0 0.0
    %9312 = vmatpush1.msra.mxu0 0.0
    %9313 = vmatprep.subr.mxu0 0.0
    %9314 = vmatpush1.msra.mxu0 0.0
    %9315 = vmatprep.subr.mxu0 0.0
    %9316 = vmatpush1.msra.mxu0 0.0
    %9317 = vmatprep.subr.mxu0 0.0
    %9318 = vmatpush1.msra.mxu0 0.0
    %9319 = vmatprep.subr.mxu0 0.0
    %9320 = vmatpush1.msra.mxu0 0.0
    %9321 = vmatprep.subr.mxu0 0.0
    %9322 = vmatpush1.msra.mxu0 0.0
    %9323 = vmatprep.subr.mxu0 0.0
    %9324 = vmatpush1.msra.mxu0 0.0
    %9325 = vmatprep.subr.mxu0 0.0
    %9326 = vmatpush1.msra.mxu0 0.0
    %9327 = vmatprep.subr.mxu0 0.0
    %9328 = vmatpush1.msra.mxu0 0.0
    %9329 = vmatprep.subr.mxu0 0.0
    %9330 = vmatpush1.msra.mxu0 0.0
    %9331 = vmatprep.subr.mxu0 0.0
    %9332 = vmatpush1.msra.mxu0 0.0
    %9333 = vmatprep.mubr.f32.mxu0 0.0
    %9334 = vmatmul.mubr.f32.gmra.mrb[0].mxu0 %v9174
    %v9335 = vpop.f32.mrb[0].mxu0
    %v9336 = vadd.f32 0.0, %v9335
    %v9337 = vpop.f32.mrb[0].mxu0
    %9338 = vmatprep.mubr.f32.mxu0 0.0
    %9339 = vmatmul.mubr.f32.gmra.mrb[0].mxu0 %v9177
    %v9340 = vpop.f32.mrb[0].mxu0
    %v9341 = vadd.f32 0.0, %v9340
    %v9342 = vpop.f32.mrb[0].mxu0
    %9343 = vmatprep.mubr.f32.mxu0 0.0
    %9344 = vmatmul.mubr.f32.gmra.mrb[0].mxu0 %v9180
    %v9345 = vpop.f32.mrb[0].mxu0
    %v9346 = vadd.f32 0.0, %v9345
    %v9347 = vpop.f32.mrb[0].mxu0
    %9348 = vmatprep.mubr.f32.mxu0 0.0
    %9349 = vmatmul.mubr.f32.gmra.mrb[0].mxu0 %v9183
    %v9350 = vpop.f32.mrb[0].mxu0
    %v9351 = vadd.f32 0.0, %v9350
    %v9352 = vpop.f32.mrb[0].mxu0
    %9353 = vmatprep.mubr.f32.mxu0 0.0
    %9354 = vmatmul.mubr.f32.gmra.mrb[0].mxu0 %v9186
    %v9355 = vpop.f32.mrb[0].mxu0
    %v9356 = vadd.f32 0.0, %v9355
    %v9357 = vpop.f32.mrb[0].mxu0
    %9358 = vmatprep.mubr.f32.mxu0 0.0
    %9359 = vmatmul.mubr.f32.gmra.mrb[0].mxu0 %v9189
    %v9360 = vpop.f32.mrb[0].mxu0
    %v9361 = vadd.f32 0.0, %v9360
    %v9362 = vpop.f32.mrb[0].mxu0
    %9363 = vmatprep.mubr.f32.mxu0 0.0
    %9364 = vmatmul.mubr.f32.gmra.mrb[0].mxu0 %v9192
    %v9365 = vpop.f32.mrb[0].mxu0
    %v9366 = vadd.f32 0.0, %v9365
    %v9367 = vpop.f32.mrb[0].mxu0
    %9368 = vmatprep.mubr.f32.mxu0 0.0
    %9369 = vmatmul.mubr.f32.gmra.mrb[0].mxu0 %v9195
    %v9370 = vpop.f32.mrb[0].mxu0
    %v9371 = vadd.f32 0.0, %v9370
    %v9372 = vpop.f32.mrb[0].mxu0
    %9373 = vmatprep.mubr.f32.mxu0 0.0
    %9374 = vmatmul.mubr.f32.gmra.mrb[0].mxu0 %v9198
    %v9375 = vpop.f32.mrb[0].mxu0
    %v9376 = vadd.f32 0.0, %v9375
    %v9377 = vpop.f32.mrb[0].mxu0
    %9378 = vmatprep.mubr.f32.mxu0 0.0
    %9379 = vmatmul.mubr.f32.gmra.mrb[0].mxu0 %v9201
    %v9380 = vpop.f32.mrb[0].mxu0
    %v9381 = vadd.f32 0.0, %v9380
    %v9382 = vpop.f32.mrb[0].mxu0
    %9383 = vmatprep.mubr.f32.mxu0 0.0
    %9384 = vmatmul.mubr.f32.gmra.mrb[0].mxu0 %v9204
    %v9385 = vpop.f32.mrb[0].mxu0
    %v9386 = vadd.f32 0.0, %v9385
    %v9387 = vpop.f32.mrb[0].mxu0
    %9388 = vmatprep.mubr.f32.mxu0 0.0
    %9389 = vmatmul.mubr.f32.gmra.mrb[0].mxu0 %v9207
    %v9390 = vpop.f32.mrb[0].mxu0
    %v9391 = vadd.f32 0.0, %v9390
    %v9392 = vpop.f32.mrb[0].mxu0
    %9393 = vmatprep.mubr.f32.mxu0 0.0
    %9394 = vmatmul.mubr.f32.gmra.mrb[0].mxu0 %v9210
    %v9395 = vpop.f32.mrb[0].mxu0
    %v9396 = vadd.f32 0.0, %v9395
    %v9397 = vpop.f32.mrb[0].mxu0
    %9398 = vmatprep.mubr.f32.mxu0 0.0
    %9399 = vmatmul.mubr.f32.gmra.mrb[0].mxu0 %v9213
    %v9400 = vpop.f32.mrb[0].mxu0
    %v9401 = vadd.f32 0.0, %v9400
    %v9402 = vpop.f32.mrb[0].mxu0
    %9403 = vmatprep.mubr.f32.mxu0 0.0
    %9404 = vmatmul.mubr.f32.gmra.mrb[0].mxu0 %v9216
    %v9405 = vpop.f32.mrb[0].mxu0
    %v9406 = vadd.f32 0.0, %v9405
    %v9407 = vpop.f32.mrb[0].mxu0
    %9408 = vmatprep.mubr.f32.mxu0 0.0
    %9409 = vmatmul.mubr.f32.gmra.mrb[0].mxu0 %v9219
    %v9410 = vpop.f32.mrb[0].mxu0
    %v9411 = vadd.f32 0.0, %v9410
    %v9412 = vpop.f32.mrb[0].mxu0
    %9413 = vmatprep.mubr.f32.mxu0 0.0
    %9414 = vmatmul.mubr.f32.gmra.mrb[0].mxu0 %v9222
    %v9415 = vpop.f32.mrb[0].mxu0
    %v9416 = vadd.f32 0.0, %v9415
    %v9417 = vpop.f32.mrb[0].mxu0
    %9418 = vmatprep.mubr.f32.mxu0 0.0
    %9419 = vmatmul.mubr.f32.gmra.mrb[0].mxu0 %v9225
    %v9420 = vpop.f32.mrb[0].mxu0
    %v9421 = vadd.f32 0.0, %v9420
    %v9422 = vpop.f32.mrb[0].mxu0
    %9423 = vmatprep.mubr.f32.mxu0 0.0
    %9424 = vmatmul.mubr.f32.gmra.mrb[0].mxu0 %v9228
    %v9425 = vpop.f32.mrb[0].mxu0
    %v9426 = vadd.f32 0.0, %v9425
    %v9427 = vpop.f32.mrb[0].mxu0
    %9428 = vmatprep.mubr.f32.mxu0 0.0
    %9429 = vmatmul.mubr.f32.gmra.mrb[0].mxu0 %v9231
    %v9430 = vpop.f32.mrb[0].mxu0
    %v9431 = vadd.f32 0.0, %v9430
    %v9432 = vpop.f32.mrb[0].mxu0
    %9433 = vmatprep.mubr.f32.mxu0 0.0
    %9434 = vmatmul.mubr.f32.gmra.mrb[0].mxu0 %v9234
    %v9435 = vpop.f32.mrb[0].mxu0
    %v9436 = vadd.f32 0.0, %v9435
    %v9437 = vpop.f32.mrb[0].mxu0
    %9438 = vmatprep.mubr.f32.mxu0 0.0
    %9439 = vmatmul.mubr.f32.gmra.mrb[0].mxu0 %v9237
    %v9440 = vpop.f32.mrb[0].mxu0
    %v9441 = vadd.f32 0.0, %v9440
    %v9442 = vpop.f32.mrb[0].mxu0
    %9443 = vmatprep.mubr.f32.mxu0 0.0
    %9444 = vmatmul.mubr.f32.gmra.mrb[0].mxu0 %v9240
    %v9445 = vpop.f32.mrb[0].mxu0
    %v9446 = vadd.f32 0.0, %v9445
    %v9447 = vpop.f32.mrb[0].mxu0
    %9448 = vmatprep.mubr.f32.mxu0 0.0
    %9449 = vmatmul.mubr.f32.gmra.mrb[0].mxu0 %v9243
    %v9450 = vpop.f32.mrb[0].mxu0
    %v9451 = vadd.f32 0.0, %v9450
    %v9452 = vpop.f32.mrb[0].mxu0
    %9453 = vmatprep.mubr.f32.mxu0 0.0
    %9454 = vmatmul.mubr.f32.gmra.mrb[0].mxu0 %v9246
    %v9455 = vpop.f32.mrb[0].mxu0
    %v9456 = vadd.f32 0.0, %v9455
    %v9457 = vpop.f32.mrb[0].mxu0
    %9458 = vmatprep.mubr.f32.mxu0 0.0
    %9459 = vmatmul.mubr.f32.gmra.mrb[0].mxu0 %v9249
    %v9460 = vpop.f32.mrb[0].mxu0
    %v9461 = vadd.f32 0.0, %v9460
    %v9462 = vpop.f32.mrb[0].mxu0
    %9463 = vmatprep.mubr.f32.mxu0 0.0
    %9464 = vmatmul.mubr.f32.gmra.mrb[0].mxu0 %v9252
    %v9465 = vpop.f32.mrb[0].mxu0
    %v9466 = vadd.f32 0.0, %v9465
    %v9467 = vpop.f32.mrb[0].mxu0
    %9468 = vmatprep.mubr.f32.mxu0 0.0
    %9469 = vmatmul.mubr.f32.gmra.mrb[0].mxu0 %v9255
    %v9470 = vpop.f32.mrb[0].mxu0
    %v9471 = vadd.f32 0.0, %v9470
    %v9472 = vpop.f32.mrb[0].mxu0
    %9473 = vmatprep.mubr.f32.mxu0 0.0
    %9474 = vmatmul.mubr.f32.gmra.mrb[0].mxu0 %v9258
    %v9475 = vpop.f32.mrb[0].mxu0
    %v9476 = vadd.f32 0.0, %v9475
    %v9477 = vpop.f32.mrb[0].mxu0
    %9478 = vmatprep.mubr.f32.mxu0 0.0
    %9479 = vmatmul.mubr.f32.gmra.mrb[0].mxu0 %v9261
    %v9480 = vpop.f32.mrb[0].mxu0
    %v9481 = vadd.f32 0.0, %v9480
    %v9482 = vpop.f32.mrb[0].mxu0
    %9483 = vmatprep.mubr.f32.mxu0 0.0
    %9484 = vmatmul.mubr.f32.gmra.mrb[0].mxu0 %v9264
    %v9485 = vpop.f32.mrb[0].mxu0
    %v9486 = vadd.f32 0.0, %v9485
    %v9487 = vpop.f32.mrb[0].mxu0
    %9488 = vmatprep.mubr.f32.mxu0 0.0
    %9489 = vmatmul.mubr.f32.gmra.mrb[0].mxu0 %v9267
    %v9490 = vpop.f32.mrb[0].mxu0
    %v9491 = vadd.f32 0.0, %v9490
    %v9492 = vpop.f32.mrb[0].mxu0
    %9493 = vdwg.mxu0
    %v9495 = vsel %vm4913, %v9133, 0
    %v9498 = vsel %vm4913, %v9134, 0
    %v9501 = vsel %vm4913, %v9135, 0
    %v9504 = vsel %vm4913, %v9136, 0
    %v9507 = vsel %vm4913, %v9137, 0
    %v9510 = vsel %vm4913, %v9138, 0
    %v9513 = vsel %vm4913, %v9139, 0
    %v9516 = vsel %vm4913, %v9140, 0
    %v9519 = vsel %vm4913, %v9141, 0
    %v9522 = vsel %vm4913, %v9142, 0
    %v9525 = vsel %vm4913, %v9143, 0
    %v9528 = vsel %vm4913, %v9144, 0
    %v9531 = vsel %vm4913, %v9145, 0
    %v9534 = vsel %vm4913, %v9146, 0
    %v9537 = vsel %vm4913, %v9147, 0
    %v9540 = vsel %vm4913, %v9148, 0
    %v9543 = vsel %vm4913, %v9149, 0
    %v9546 = vsel %vm4913, %v9150, 0
    %v9549 = vsel %vm4913, %v9151, 0
    %v9552 = vsel %vm4913, %v9152, 0
    %v9555 = vsel %vm4913, %v9153, 0
    %v9558 = vsel %vm4913, %v9154, 0
    %v9561 = vsel %vm4913, %v9155, 0
    %v9564 = vsel %vm4913, %v9156, 0
    %v9567 = vsel %vm4913, %v9157, 0
    %v9570 = vsel %vm4913, %v9158, 0
    %v9573 = vsel %vm4913, %v9159, 0
    %v9576 = vsel %vm4913, %v9160, 0
    %v9579 = vsel %vm4913, %v9161, 0
    %v9582 = vsel %vm4913, %v9162, 0
    %v9585 = vsel %vm4913, %v9163, 0
    %v9588 = vsel %vm4913, %v9164, 0
    %9590 = vmatprep.subr.mxu0 0.0
    %9591 = vmatpush1.msra.mxu0 %v9165
    %9592 = vmatprep.subr.mxu0 0.0
    %9593 = vmatpush1.msra.mxu0 %v9166
    %9594 = vmatprep.subr.mxu0 0.0
    %9595 = vmatpush1.msra.mxu0 %v9167
    %9596 = vmatprep.subr.mxu0 0.0
    %9597 = vmatpush1.msra.mxu0 %v9168
    %9598 = vmatprep.subr.mxu0 0.0
    %9599 = vmatpush1.msra.mxu0 0.0
    %9600 = vmatprep.subr.mxu0 0.0
    %9601 = vmatpush1.msra.mxu0 0.0
    %9602 = vmatprep.subr.mxu0 0.0
    %9603 = vmatpush1.msra.mxu0 0.0
    %9604 = vmatprep.subr.mxu0 0.0
    %9605 = vmatpush1.msra.mxu0 0.0
    %9606 = vmatprep.subr.mxu0 0.0
    %9607 = vmatpush1.msra.mxu0 0.0
    %9608 = vmatprep.subr.mxu0 0.0
    %9609 = vmatpush1.msra.mxu0 0.0
    %9610 = vmatprep.subr.mxu0 0.0
    %9611 = vmatpush1.msra.mxu0 0.0
    %9612 = vmatprep.subr.mxu0 0.0
    %9613 = vmatpush1.msra.mxu0 0.0
    %9614 = vmatprep.subr.mxu0 0.0
    %9615 = vmatpush1.msra.mxu0 0.0
    %9616 = vmatprep.subr.mxu0 0.0
    %9617 = vmatpush1.msra.mxu0 0.0
    %9618 = vmatprep.subr.mxu0 0.0
    %9619 = vmatpush1.msra.mxu0 0.0
    %9620 = vmatprep.subr.mxu0 0.0
    %9621 = vmatpush1.msra.mxu0 0.0
    %9622 = vmatprep.subr.mxu0 0.0
    %9623 = vmatpush1.msra.mxu0 0.0
    %9624 = vmatprep.subr.mxu0 0.0
    %9625 = vmatpush1.msra.mxu0 0.0
    %9626 = vmatprep.subr.mxu0 0.0
    %9627 = vmatpush1.msra.mxu0 0.0
    %9628 = vmatprep.subr.mxu0 0.0
    %9629 = vmatpush1.msra.mxu0 0.0
    %9630 = vmatprep.subr.mxu0 0.0
    %9631 = vmatpush1.msra.mxu0 0.0
    %9632 = vmatprep.subr.mxu0 0.0
    %9633 = vmatpush1.msra.mxu0 0.0
    %9634 = vmatprep.subr.mxu0 0.0
    %9635 = vmatpush1.msra.mxu0 0.0
    %9636 = vmatprep.subr.mxu0 0.0
    %9637 = vmatpush1.msra.mxu0 0.0
    %9638 = vmatprep.subr.mxu0 0.0
    %9639 = vmatpush1.msra.mxu0 0.0
    %9640 = vmatprep.subr.mxu0 0.0
    %9641 = vmatpush1.msra.mxu0 0.0
    %9642 = vmatprep.subr.mxu0 0.0
    %9643 = vmatpush1.msra.mxu0 0.0
    %9644 = vmatprep.subr.mxu0 0.0
    %9645 = vmatpush1.msra.mxu0 0.0
    %9646 = vmatprep.subr.mxu0 0.0
    %9647 = vmatpush1.msra.mxu0 0.0
    %9648 = vmatprep.subr.mxu0 0.0
    %9649 = vmatpush1.msra.mxu0 0.0
    %9650 = vmatprep.subr.mxu0 0.0
    %9651 = vmatpush1.msra.mxu0 0.0
    %9652 = vmatprep.subr.mxu0 0.0
    %9653 = vmatpush1.msra.mxu0 0.0
    %9654 = vmatprep.mubr.f32.mxu0 0.0
    %9655 = vmatmul.mubr.f32.gmra.mrb[0].mxu0 %v9495
    %v9656 = vpop.f32.mrb[0].mxu0
    %v9657 = vadd.f32 %v9336, %v9656
    %v9658 = vpop.f32.mrb[0].mxu0
    %9659 = vmatprep.mubr.f32.mxu0 0.0
    %9660 = vmatmul.mubr.f32.gmra.mrb[0].mxu0 %v9498
    %v9661 = vpop.f32.mrb[0].mxu0
    %v9662 = vadd.f32 %v9341, %v9661
    %v9663 = vpop.f32.mrb[0].mxu0
    %9664 = vmatprep.mubr.f32.mxu0 0.0
    %9665 = vmatmul.mubr.f32.gmra.mrb[0].mxu0 %v9501
    %v9666 = vpop.f32.mrb[0].mxu0
    %v9667 = vadd.f32 %v9346, %v9666
    %v9668 = vpop.f32.mrb[0].mxu0
    %9669 = vmatprep.mubr.f32.mxu0 0.0
    %9670 = vmatmul.mubr.f32.gmra.mrb[0].mxu0 %v9504
    %v9671 = vpop.f32.mrb[0].mxu0
    %v9672 = vadd.f32 %v9351, %v9671
    %v9673 = vpop.f32.mrb[0].mxu0
    %9674 = vmatprep.mubr.f32.mxu0 0.0
    %9675 = vmatmul.mubr.f32.gmra.mrb[0].mxu0 %v9507
    %v9676 = vpop.f32.mrb[0].mxu0
    %v9677 = vadd.f32 %v9356, %v9676
    %v9678 = vpop.f32.mrb[0].mxu0
    %9679 = vmatprep.mubr.f32.mxu0 0.0
    %9680 = vmatmul.mubr.f32.gmra.mrb[0].mxu0 %v9510
    %v9681 = vpop.f32.mrb[0].mxu0
    %v9682 = vadd.f32 %v9361, %v9681
    %v9683 = vpop.f32.mrb[0].mxu0
    %9684 = vmatprep.mubr.f32.mxu0 0.0
    %9685 = vmatmul.mubr.f32.gmra.mrb[0].mxu0 %v9513
    %v9686 = vpop.f32.mrb[0].mxu0
    %v9687 = vadd.f32 %v9366, %v9686
    %v9688 = vpop.f32.mrb[0].mxu0
    %9689 = vmatprep.mubr.f32.mxu0 0.0
    %9690 = vmatmul.mubr.f32.gmra.mrb[0].mxu0 %v9516
    %v9691 = vpop.f32.mrb[0].mxu0
    %v9692 = vadd.f32 %v9371, %v9691
    %v9693 = vpop.f32.mrb[0].mxu0
    %9694 = vmatprep.mubr.f32.mxu0 0.0
    %9695 = vmatmul.mubr.f32.gmra.mrb[0].mxu0 %v9519
    %v9696 = vpop.f32.mrb[0].mxu0
    %v9697 = vadd.f32 %v9376, %v9696
    %v9698 = vpop.f32.mrb[0].mxu0
    %9699 = vmatprep.mubr.f32.mxu0 0.0
    %9700 = vmatmul.mubr.f32.gmra.mrb[0].mxu0 %v9522
    %v9701 = vpop.f32.mrb[0].mxu0
    %v9702 = vadd.f32 %v9381, %v9701
    %v9703 = vpop.f32.mrb[0].mxu0
    %9704 = vmatprep.mubr.f32.mxu0 0.0
    %9705 = vmatmul.mubr.f32.gmra.mrb[0].mxu0 %v9525
    %v9706 = vpop.f32.mrb[0].mxu0
    %v9707 = vadd.f32 %v9386, %v9706
    %v9708 = vpop.f32.mrb[0].mxu0
    %9709 = vmatprep.mubr.f32.mxu0 0.0
    %9710 = vmatmul.mubr.f32.gmra.mrb[0].mxu0 %v9528
    %v9711 = vpop.f32.mrb[0].mxu0
    %v9712 = vadd.f32 %v9391, %v9711
    %v9713 = vpop.f32.mrb[0].mxu0
    %9714 = vmatprep.mubr.f32.mxu0 0.0
    %9715 = vmatmul.mubr.f32.gmra.mrb[0].mxu0 %v9531
    %v9716 = vpop.f32.mrb[0].mxu0
    %v9717 = vadd.f32 %v9396, %v9716
    %v9718 = vpop.f32.mrb[0].mxu0
    %9719 = vmatprep.mubr.f32.mxu0 0.0
    %9720 = vmatmul.mubr.f32.gmra.mrb[0].mxu0 %v9534
    %v9721 = vpop.f32.mrb[0].mxu0
    %v9722 = vadd.f32 %v9401, %v9721
    %v9723 = vpop.f32.mrb[0].mxu0
    %9724 = vmatprep.mubr.f32.mxu0 0.0
    %9725 = vmatmul.mubr.f32.gmra.mrb[0].mxu0 %v9537
    %v9726 = vpop.f32.mrb[0].mxu0
    %v9727 = vadd.f32 %v9406, %v9726
    %v9728 = vpop.f32.mrb[0].mxu0
    %9729 = vmatprep.mubr.f32.mxu0 0.0
    %9730 = vmatmul.mubr.f32.gmra.mrb[0].mxu0 %v9540
    %v9731 = vpop.f32.mrb[0].mxu0
    %v9732 = vadd.f32 %v9411, %v9731
    %v9733 = vpop.f32.mrb[0].mxu0
    %9734 = vmatprep.mubr.f32.mxu0 0.0
    %9735 = vmatmul.mubr.f32.gmra.mrb[0].mxu0 %v9543
    %v9736 = vpop.f32.mrb[0].mxu0
    %v9737 = vadd.f32 %v9416, %v9736
    %v9738 = vpop.f32.mrb[0].mxu0
    %9739 = vmatprep.mubr.f32.mxu0 0.0
    %9740 = vmatmul.mubr.f32.gmra.mrb[0].mxu0 %v9546
    %v9741 = vpop.f32.mrb[0].mxu0
    %v9742 = vadd.f32 %v9421, %v9741
    %v9743 = vpop.f32.mrb[0].mxu0
    %9744 = vmatprep.mubr.f32.mxu0 0.0
    %9745 = vmatmul.mubr.f32.gmra.mrb[0].mxu0 %v9549
    %v9746 = vpop.f32.mrb[0].mxu0
    %v9747 = vadd.f32 %v9426, %v9746
    %v9748 = vpop.f32.mrb[0].mxu0
    %9749 = vmatprep.mubr.f32.mxu0 0.0
    %9750 = vmatmul.mubr.f32.gmra.mrb[0].mxu0 %v9552
    %v9751 = vpop.f32.mrb[0].mxu0
    %v9752 = vadd.f32 %v9431, %v9751
    %v9753 = vpop.f32.mrb[0].mxu0
    %9754 = vmatprep.mubr.f32.mxu0 0.0
    %9755 = vmatmul.mubr.f32.gmra.mrb[0].mxu0 %v9555
    %v9756 = vpop.f32.mrb[0].mxu0
    %v9757 = vadd.f32 %v9436, %v9756
    %v9758 = vpop.f32.mrb[0].mxu0
    %9759 = vmatprep.mubr.f32.mxu0 0.0
    %9760 = vmatmul.mubr.f32.gmra.mrb[0].mxu0 %v9558
    %v9761 = vpop.f32.mrb[0].mxu0
    %v9762 = vadd.f32 %v9441, %v9761
    %v9763 = vpop.f32.mrb[0].mxu0
    %9764 = vmatprep.mubr.f32.mxu0 0.0
    %9765 = vmatmul.mubr.f32.gmra.mrb[0].mxu0 %v9561
    %v9766 = vpop.f32.mrb[0].mxu0
    %v9767 = vadd.f32 %v9446, %v9766
    %v9768 = vpop.f32.mrb[0].mxu0
    %9769 = vmatprep.mubr.f32.mxu0 0.0
    %9770 = vmatmul.mubr.f32.gmra.mrb[0].mxu0 %v9564
    %v9771 = vpop.f32.mrb[0].mxu0
    %v9772 = vadd.f32 %v9451, %v9771
    %v9773 = vpop.f32.mrb[0].mxu0
    %9774 = vmatprep.mubr.f32.mxu0 0.0
    %9775 = vmatmul.mubr.f32.gmra.mrb[0].mxu0 %v9567
    %v9776 = vpop.f32.mrb[0].mxu0
    %v9777 = vadd.f32 %v9456, %v9776
    %v9778 = vpop.f32.mrb[0].mxu0
    %9779 = vmatprep.mubr.f32.mxu0 0.0
    %9780 = vmatmul.mubr.f32.gmra.mrb[0].mxu0 %v9570
    %v9781 = vpop.f32.mrb[0].mxu0
    %v9782 = vadd.f32 %v9461, %v9781
    %v9783 = vpop.f32.mrb[0].mxu0
    %9784 = vmatprep.mubr.f32.mxu0 0.0
    %9785 = vmatmul.mubr.f32.gmra.mrb[0].mxu0 %v9573
    %v9786 = vpop.f32.mrb[0].mxu0
    %v9787 = vadd.f32 %v9466, %v9786
    %v9788 = vpop.f32.mrb[0].mxu0
    %9789 = vmatprep.mubr.f32.mxu0 0.0
    %9790 = vmatmul.mubr.f32.gmra.mrb[0].mxu0 %v9576
    %v9791 = vpop.f32.mrb[0].mxu0
    %v9792 = vadd.f32 %v9471, %v9791
    %v9793 = vpop.f32.mrb[0].mxu0
    %9794 = vmatprep.mubr.f32.mxu0 0.0
    %9795 = vmatmul.mubr.f32.gmra.mrb[0].mxu0 %v9579
    %v9796 = vpop.f32.mrb[0].mxu0
    %v9797 = vadd.f32 %v9476, %v9796
    %v9798 = vpop.f32.mrb[0].mxu0
    %9799 = vmatprep.mubr.f32.mxu0 0.0
    %9800 = vmatmul.mubr.f32.gmra.mrb[0].mxu0 %v9582
    %v9801 = vpop.f32.mrb[0].mxu0
    %v9802 = vadd.f32 %v9481, %v9801
    %v9803 = vpop.f32.mrb[0].mxu0
    %9804 = vmatprep.mubr.f32.mxu0 0.0
    %9805 = vmatmul.mubr.f32.gmra.mrb[0].mxu0 %v9585
    %v9806 = vpop.f32.mrb[0].mxu0
    %v9807 = vadd.f32 %v9486, %v9806
    %v9808 = vpop.f32.mrb[0].mxu0
    %9809 = vmatprep.mubr.f32.mxu0 0.0
    %9810 = vmatmul.mubr.f32.gmra.mrb[0].mxu0 %v9588
    %v9811 = vpop.f32.mrb[0].mxu0
    %v9812 = vadd.f32 %v9491, %v9811
    %v9813 = vpop.f32.mrb[0].mxu0
    %9814 = vdwg.mxu0
    %v9815 = vrot.slane %v9037, 1
    %v9816 = vrot.slane %v9038, 1
    %v9817 = vrot.slane %v9039, 1
    %v9818 = vrot.slane %v9040, 1
    %v9819 = vrot.slane %v9041, 1
    %v9820 = vrot.slane %v9042, 1
    %v9821 = vrot.slane %v9043, 1
    %v9822 = vrot.slane %v9044, 1
    %v9823 = vrot.slane %v9045, 1
    %v9824 = vrot.slane %v9046, 1
    %v9825 = vrot.slane %v9047, 1
    %v9826 = vrot.slane %v9048, 1
    %v9827 = vrot.slane %v9049, 1
    %v9828 = vrot.slane %v9050, 1
    %v9829 = vrot.slane %v9051, 1
    %v9830 = vrot.slane %v9052, 1
    %v9831 = vrot.slane %v9053, 1
    %v9832 = vrot.slane %v9054, 1
    %v9833 = vrot.slane %v9055, 1
    %v9834 = vrot.slane %v9056, 1
    %v9835 = vrot.slane %v9057, 1
    %v9836 = vrot.slane %v9058, 1
    %v9837 = vrot.slane %v9059, 1
    %v9838 = vrot.slane %v9060, 1
    %v9839 = vrot.slane %v9061, 1
    %v9840 = vrot.slane %v9062, 1
    %v9841 = vrot.slane %v9063, 1
    %v9842 = vrot.slane %v9064, 1
    %v9843 = vrot.slane %v9065, 1
    %v9844 = vrot.slane %v9066, 1
    %v9845 = vrot.slane %v9067, 1
    %v9846 = vrot.slane %v9068, 1
    %v9847 = vsel %vm920, %v9845, %v9846
    %v9848 = vsel %vm920, %v9844, %v9845
    %v9849 = vsel %vm920, %v9843, %v9844
    %v9850 = vsel %vm920, %v9842, %v9843
    %v9851 = vsel %vm920, %v9841, %v9842
    %v9852 = vsel %vm920, %v9840, %v9841
    %v9853 = vsel %vm920, %v9839, %v9840
    %v9854 = vsel %vm920, %v9838, %v9839
    %v9855 = vsel %vm920, %v9837, %v9838
    %v9856 = vsel %vm920, %v9836, %v9837
    %v9857 = vsel %vm920, %v9835, %v9836
    %v9858 = vsel %vm920, %v9834, %v9835
    %v9859 = vsel %vm920, %v9833, %v9834
    %v9860 = vsel %vm920, %v9832, %v9833
    %v9861 = vsel %vm920, %v9831, %v9832
    %v9862 = vsel %vm920, %v9830, %v9831
    %v9863 = vsel %vm920, %v9829, %v9830
    %v9864 = vsel %vm920, %v9828, %v9829
    %v9865 = vsel %vm920, %v9827, %v9828
    %v9866 = vsel %vm920, %v9826, %v9827
    %v9867 = vsel %vm920, %v9825, %v9826
    %v9868 = vsel %vm920, %v9824, %v9825
    %v9869 = vsel %vm920, %v9823, %v9824
    %v9870 = vsel %vm920, %v9822, %v9823
    %v9871 = vsel %vm920, %v9821, %v9822
    %v9872 = vsel %vm920, %v9820, %v9821
    %v9873 = vsel %vm920, %v9819, %v9820
    %v9874 = vsel %vm920, %v9818, %v9819
    %v9875 = vsel %vm920, %v9817, %v9818
    %v9876 = vsel %vm920, %v9816, %v9817
    %v9877 = vsel %vm920, %v9815, %v9816
    %v9878 = vsel %vm920, %v9846, %v9815
    %v9879 = vsel %vm985, %v9877, 0.0
    %v9880 = vsel %vm986, %v9876, 0.0
    %v9881 = vsel %vm987, %v9875, 0.0
    %v9882 = vsel %vm988, %v9874, 0.0
    %v9883 = vsel %vm989, %v9873, 0.0
    %v9884 = vsel %vm990, %v9872, 0.0
    %v9885 = vsel %vm991, %v9871, 0.0
    %v9886 = vsel %vm992, %v9870, 0.0
    %v9887 = vsel %vm993, %v9869, 0.0
    %v9888 = vsel %vm994, %v9868, 0.0
    %v9889 = vsel %vm995, %v9867, 0.0
    %v9890 = vsel %vm996, %v9866, 0.0
    %v9891 = vsel %vm997, %v9865, 0.0
    %v9892 = vsel %vm998, %v9864, 0.0
    %v9893 = vsel %vm999, %v9863, 0.0
    %v9894 = vsel %vm1000, %v9862, 0.0
    %v9895 = vsel %vm1001, %v9861, 0.0
    %v9896 = vsel %vm1002, %v9860, 0.0
    %v9897 = vsel %vm1003, %v9859, 0.0
    %v9898 = vsel %vm1004, %v9858, 0.0
    %v9899 = vsel %vm1005, %v9857, 0.0
    %v9900 = vsel %vm1006, %v9856, 0.0
    %v9901 = vsel %vm1007, %v9855, 0.0
    %v9902 = vsel %vm1008, %v9854, 0.0
    %v9903 = vsel %vm1009, %v9853, 0.0
    %v9904 = vsel %vm1010, %v9852, 0.0
    %v9905 = vsel %vm1011, %v9851, 0.0
    %v9906 = vsel %vm1012, %v9850, 0.0
    %v9907 = vsel %vm1013, %v9849, 0.0
    %v9908 = vsel %vm1014, %v9848, 0.0
    %v9909 = vsel %vm1015, %v9847, 0.0
    %v9910 = vsel %vm1016, %v9878, 0.0
    %v9911 = vld [vmem:[%s2 + $0x218] sm:$0xff]
    %v9912 = vld [vmem:[%s2 + $0x220] sm:$0xff]
    %v9913 = vld [vmem:[%s2 + $0x228] sm:$0xff]
    %v9914 = vld [vmem:[%s2 + $0x230] sm:$0xff]
    %v9916 = vsel %vm4913, %v9879, 0
    %v9919 = vsel %vm4913, %v9880, 0
    %v9922 = vsel %vm4913, %v9881, 0
    %v9925 = vsel %vm4913, %v9882, 0
    %v9928 = vsel %vm4913, %v9883, 0
    %v9931 = vsel %vm4913, %v9884, 0
    %v9934 = vsel %vm4913, %v9885, 0
    %v9937 = vsel %vm4913, %v9886, 0
    %v9940 = vsel %vm4913, %v9887, 0
    %v9943 = vsel %vm4913, %v9888, 0
    %v9946 = vsel %vm4913, %v9889, 0
    %v9949 = vsel %vm4913, %v9890, 0
    %v9952 = vsel %vm4913, %v9891, 0
    %v9955 = vsel %vm4913, %v9892, 0
    %v9958 = vsel %vm4913, %v9893, 0
    %v9961 = vsel %vm4913, %v9894, 0
    %v9964 = vsel %vm4913, %v9895, 0
    %v9967 = vsel %vm4913, %v9896, 0
    %v9970 = vsel %vm4913, %v9897, 0
    %v9973 = vsel %vm4913, %v9898, 0
    %v9976 = vsel %vm4913, %v9899, 0
    %v9979 = vsel %vm4913, %v9900, 0
    %v9982 = vsel %vm4913, %v9901, 0
    %v9985 = vsel %vm4913, %v9902, 0
    %v9988 = vsel %vm4913, %v9903, 0
    %v9991 = vsel %vm4913, %v9904, 0
    %v9994 = vsel %vm4913, %v9905, 0
    %v9997 = vsel %vm4913, %v9906, 0
    %v10000 = vsel %vm4913, %v9907, 0
    %v10003 = vsel %vm4913, %v9908, 0
    %v10006 = vsel %vm4913, %v9909, 0
    %v10009 = vsel %vm4913, %v9910, 0
    %10011 = vmatprep.subr.mxu0 0.0
    %10012 = vmatpush1.msra.mxu0 %v9911
    %10013 = vmatprep.subr.mxu0 0.0
    %10014 = vmatpush1.msra.mxu0 %v9912
    %10015 = vmatprep.subr.mxu0 0.0
    %10016 = vmatpush1.msra.mxu0 %v9913
    %10017 = vmatprep.subr.mxu0 0.0
    %10018 = vmatpush1.msra.mxu0 %v9914
    %10019 = vmatprep.subr.mxu0 0.0
    %10020 = vmatpush1.msra.mxu0 0.0
    %10021 = vmatprep.subr.mxu0 0.0
    %10022 = vmatpush1.msra.mxu0 0.0
    %10023 = vmatprep.subr.mxu0 0.0
    %10024 = vmatpush1.msra.mxu0 0.0
    %10025 = vmatprep.subr.mxu0 0.0
    %10026 = vmatpush1.msra.mxu0 0.0
    %10027 = vmatprep.subr.mxu0 0.0
    %10028 = vmatpush1.msra.mxu0 0.0
    %10029 = vmatprep.subr.mxu0 0.0
    %10030 = vmatpush1.msra.mxu0 0.0
    %10031 = vmatprep.subr.mxu0 0.0
    %10032 = vmatpush1.msra.mxu0 0.0
    %10033 = vmatprep.subr.mxu0 0.0
    %10034 = vmatpush1.msra.mxu0 0.0
    %10035 = vmatprep.subr.mxu0 0.0
    %10036 = vmatpush1.msra.mxu0 0.0
    %10037 = vmatprep.subr.mxu0 0.0
    %10038 = vmatpush1.msra.mxu0 0.0
    %10039 = vmatprep.subr.mxu0 0.0
    %10040 = vmatpush1.msra.mxu0 0.0
    %10041 = vmatprep.subr.mxu0 0.0
    %10042 = vmatpush1.msra.mxu0 0.0
    %10043 = vmatprep.subr.mxu0 0.0
    %10044 = vmatpush1.msra.mxu0 0.0
    %10045 = vmatprep.subr.mxu0 0.0
    %10046 = vmatpush1.msra.mxu0 0.0
    %10047 = vmatprep.subr.mxu0 0.0
    %10048 = vmatpush1.msra.mxu0 0.0
    %10049 = vmatprep.subr.mxu0 0.0
    %10050 = vmatpush1.msra.mxu0 0.0
    %10051 = vmatprep.subr.mxu0 0.0
    %10052 = vmatpush1.msra.mxu0 0.0
    %10053 = vmatprep.subr.mxu0 0.0
    %10054 = vmatpush1.msra.mxu0 0.0
    %10055 = vmatprep.subr.mxu0 0.0
    %10056 = vmatpush1.msra.mxu0 0.0
    %10057 = vmatprep.subr.mxu0 0.0
    %10058 = vmatpush1.msra.mxu0 0.0
    %10059 = vmatprep.subr.mxu0 0.0
    %10060 = vmatpush1.msra.mxu0 0.0
    %10061 = vmatprep.subr.mxu0 0.0
    %10062 = vmatpush1.msra.mxu0 0.0
    %10063 = vmatprep.subr.mxu0 0.0
    %10064 = vmatpush1.msra.mxu0 0.0
    %10065 = vmatprep.subr.mxu0 0.0
    %10066 = vmatpush1.msra.mxu0 0.0
    %10067 = vmatprep.subr.mxu0 0.0
    %10068 = vmatpush1.msra.mxu0 0.0
    %10069 = vmatprep.subr.mxu0 0.0
    %10070 = vmatpush1.msra.mxu0 0.0
    %10071 = vmatprep.subr.mxu0 0.0
    %10072 = vmatpush1.msra.mxu0 0.0
    %10073 = vmatprep.subr.mxu0 0.0
    %10074 = vmatpush1.msra.mxu0 0.0
    %10075 = vmatprep.mubr.f32.mxu0 0.0
    %10076 = vmatmul.mubr.f32.gmra.mrb[0].mxu0 %v9916
    %v10077 = vpop.f32.mrb[0].mxu0
    %v10078 = vadd.f32 0.0, %v10077
    %v10079 = vpop.f32.mrb[0].mxu0
    %10080 = vmatprep.mubr.f32.mxu0 0.0
    %10081 = vmatmul.mubr.f32.gmra.mrb[0].mxu0 %v9919
    %v10082 = vpop.f32.mrb[0].mxu0
    %v10083 = vadd.f32 0.0, %v10082
    %v10084 = vpop.f32.mrb[0].mxu0
    %10085 = vmatprep.mubr.f32.mxu0 0.0
    %10086 = vmatmul.mubr.f32.gmra.mrb[0].mxu0 %v9922
    %v10087 = vpop.f32.mrb[0].mxu0
    %v10088 = vadd.f32 0.0, %v10087
    %v10089 = vpop.f32.mrb[0].mxu0
    %10090 = vmatprep.mubr.f32.mxu0 0.0
    %10091 = vmatmul.mubr.f32.gmra.mrb[0].mxu0 %v9925
    %v10092 = vpop.f32.mrb[0].mxu0
    %v10093 = vadd.f32 0.0, %v10092
    %v10094 = vpop.f32.mrb[0].mxu0
    %10095 = vmatprep.mubr.f32.mxu0 0.0
    %10096 = vmatmul.mubr.f32.gmra.mrb[0].mxu0 %v9928
    %v10097 = vpop.f32.mrb[0].mxu0
    %v10098 = vadd.f32 0.0, %v10097
    %v10099 = vpop.f32.mrb[0].mxu0
    %10100 = vmatprep.mubr.f32.mxu0 0.0
    %10101 = vmatmul.mubr.f32.gmra.mrb[0].mxu0 %v9931
    %v10102 = vpop.f32.mrb[0].mxu0
    %v10103 = vadd.f32 0.0, %v10102
    %v10104 = vpop.f32.mrb[0].mxu0
    %10105 = vmatprep.mubr.f32.mxu0 0.0
    %10106 = vmatmul.mubr.f32.gmra.mrb[0].mxu0 %v9934
    %v10107 = vpop.f32.mrb[0].mxu0
    %v10108 = vadd.f32 0.0, %v10107
    %v10109 = vpop.f32.mrb[0].mxu0
    %10110 = vmatprep.mubr.f32.mxu0 0.0
    %10111 = vmatmul.mubr.f32.gmra.mrb[0].mxu0 %v9937
    %v10112 = vpop.f32.mrb[0].mxu0
    %v10113 = vadd.f32 0.0, %v10112
    %v10114 = vpop.f32.mrb[0].mxu0
    %10115 = vmatprep.mubr.f32.mxu0 0.0
    %10116 = vmatmul.mubr.f32.gmra.mrb[0].mxu0 %v9940
    %v10117 = vpop.f32.mrb[0].mxu0
    %v10118 = vadd.f32 0.0, %v10117
    %v10119 = vpop.f32.mrb[0].mxu0
    %10120 = vmatprep.mubr.f32.mxu0 0.0
    %10121 = vmatmul.mubr.f32.gmra.mrb[0].mxu0 %v9943
    %v10122 = vpop.f32.mrb[0].mxu0
    %v10123 = vadd.f32 0.0, %v10122
    %v10124 = vpop.f32.mrb[0].mxu0
    %10125 = vmatprep.mubr.f32.mxu0 0.0
    %10126 = vmatmul.mubr.f32.gmra.mrb[0].mxu0 %v9946
    %v10127 = vpop.f32.mrb[0].mxu0
    %v10128 = vadd.f32 0.0, %v10127
    %v10129 = vpop.f32.mrb[0].mxu0
    %10130 = vmatprep.mubr.f32.mxu0 0.0
    %10131 = vmatmul.mubr.f32.gmra.mrb[0].mxu0 %v9949
    %v10132 = vpop.f32.mrb[0].mxu0
    %v10133 = vadd.f32 0.0, %v10132
    %v10134 = vpop.f32.mrb[0].mxu0
    %10135 = vmatprep.mubr.f32.mxu0 0.0
    %10136 = vmatmul.mubr.f32.gmra.mrb[0].mxu0 %v9952
    %v10137 = vpop.f32.mrb[0].mxu0
    %v10138 = vadd.f32 0.0, %v10137
    %v10139 = vpop.f32.mrb[0].mxu0
    %10140 = vmatprep.mubr.f32.mxu0 0.0
    %10141 = vmatmul.mubr.f32.gmra.mrb[0].mxu0 %v9955
    %v10142 = vpop.f32.mrb[0].mxu0
    %v10143 = vadd.f32 0.0, %v10142
    %v10144 = vpop.f32.mrb[0].mxu0
    %10145 = vmatprep.mubr.f32.mxu0 0.0
    %10146 = vmatmul.mubr.f32.gmra.mrb[0].mxu0 %v9958
    %v10147 = vpop.f32.mrb[0].mxu0
    %v10148 = vadd.f32 0.0, %v10147
    %v10149 = vpop.f32.mrb[0].mxu0
    %10150 = vmatprep.mubr.f32.mxu0 0.0
    %10151 = vmatmul.mubr.f32.gmra.mrb[0].mxu0 %v9961
    %v10152 = vpop.f32.mrb[0].mxu0
    %v10153 = vadd.f32 0.0, %v10152
    %v10154 = vpop.f32.mrb[0].mxu0
    %10155 = vmatprep.mubr.f32.mxu0 0.0
    %10156 = vmatmul.mubr.f32.gmra.mrb[0].mxu0 %v9964
    %v10157 = vpop.f32.mrb[0].mxu0
    %v10158 = vadd.f32 0.0, %v10157
    %v10159 = vpop.f32.mrb[0].mxu0
    %10160 = vmatprep.mubr.f32.mxu0 0.0
    %10161 = vmatmul.mubr.f32.gmra.mrb[0].mxu0 %v9967
    %v10162 = vpop.f32.mrb[0].mxu0
    %v10163 = vadd.f32 0.0, %v10162
    %v10164 = vpop.f32.mrb[0].mxu0
    %10165 = vmatprep.mubr.f32.mxu0 0.0
    %10166 = vmatmul.mubr.f32.gmra.mrb[0].mxu0 %v9970
    %v10167 = vpop.f32.mrb[0].mxu0
    %v10168 = vadd.f32 0.0, %v10167
    %v10169 = vpop.f32.mrb[0].mxu0
    %10170 = vmatprep.mubr.f32.mxu0 0.0
    %10171 = vmatmul.mubr.f32.gmra.mrb[0].mxu0 %v9973
    %v10172 = vpop.f32.mrb[0].mxu0
    %v10173 = vadd.f32 0.0, %v10172
    %v10174 = vpop.f32.mrb[0].mxu0
    %10175 = vmatprep.mubr.f32.mxu0 0.0
    %10176 = vmatmul.mubr.f32.gmra.mrb[0].mxu0 %v9976
    %v10177 = vpop.f32.mrb[0].mxu0
    %v10178 = vadd.f32 0.0, %v10177
    %v10179 = vpop.f32.mrb[0].mxu0
    %10180 = vmatprep.mubr.f32.mxu0 0.0
    %10181 = vmatmul.mubr.f32.gmra.mrb[0].mxu0 %v9979
    %v10182 = vpop.f32.mrb[0].mxu0
    %v10183 = vadd.f32 0.0, %v10182
    %v10184 = vpop.f32.mrb[0].mxu0
    %10185 = vmatprep.mubr.f32.mxu0 0.0
    %10186 = vmatmul.mubr.f32.gmra.mrb[0].mxu0 %v9982
    %v10187 = vpop.f32.mrb[0].mxu0
    %v10188 = vadd.f32 0.0, %v10187
    %v10189 = vpop.f32.mrb[0].mxu0
    %10190 = vmatprep.mubr.f32.mxu0 0.0
    %10191 = vmatmul.mubr.f32.gmra.mrb[0].mxu0 %v9985
    %v10192 = vpop.f32.mrb[0].mxu0
    %v10193 = vadd.f32 0.0, %v10192
    %v10194 = vpop.f32.mrb[0].mxu0
    %10195 = vmatprep.mubr.f32.mxu0 0.0
    %10196 = vmatmul.mubr.f32.gmra.mrb[0].mxu0 %v9988
    %v10197 = vpop.f32.mrb[0].mxu0
    %v10198 = vadd.f32 0.0, %v10197
    %v10199 = vpop.f32.mrb[0].mxu0
    %10200 = vmatprep.mubr.f32.mxu0 0.0
    %10201 = vmatmul.mubr.f32.gmra.mrb[0].mxu0 %v9991
    %v10202 = vpop.f32.mrb[0].mxu0
    %v10203 = vadd.f32 0.0, %v10202
    %v10204 = vpop.f32.mrb[0].mxu0
    %10205 = vmatprep.mubr.f32.mxu0 0.0
    %10206 = vmatmul.mubr.f32.gmra.mrb[0].mxu0 %v9994
    %v10207 = vpop.f32.mrb[0].mxu0
    %v10208 = vadd.f32 0.0, %v10207
    %v10209 = vpop.f32.mrb[0].mxu0
    %10210 = vmatprep.mubr.f32.mxu0 0.0
    %10211 = vmatmul.mubr.f32.gmra.mrb[0].mxu0 %v9997
    %v10212 = vpop.f32.mrb[0].mxu0
    %v10213 = vadd.f32 0.0, %v10212
    %v10214 = vpop.f32.mrb[0].mxu0
    %10215 = vmatprep.mubr.f32.mxu0 0.0
    %10216 = vmatmul.mubr.f32.gmra.mrb[0].mxu0 %v10000
    %v10217 = vpop.f32.mrb[0].mxu0
    %v10218 = vadd.f32 0.0, %v10217
    %v10219 = vpop.f32.mrb[0].mxu0
    %10220 = vmatprep.mubr.f32.mxu0 0.0
    %10221 = vmatmul.mubr.f32.gmra.mrb[0].mxu0 %v10003
    %v10222 = vpop.f32.mrb[0].mxu0
    %v10223 = vadd.f32 0.0, %v10222
    %v10224 = vpop.f32.mrb[0].mxu0
    %10225 = vmatprep.mubr.f32.mxu0 0.0
    %10226 = vmatmul.mubr.f32.gmra.mrb[0].mxu0 %v10006
    %v10227 = vpop.f32.mrb[0].mxu0
    %v10228 = vadd.f32 0.0, %v10227
    %v10229 = vpop.f32.mrb[0].mxu0
    %10230 = vmatprep.mubr.f32.mxu0 0.0
    %10231 = vmatmul.mubr.f32.gmra.mrb[0].mxu0 %v10009
    %v10232 = vpop.f32.mrb[0].mxu0
    %v10233 = vadd.f32 0.0, %v10232
    %v10234 = vpop.f32.mrb[0].mxu0
    %10235 = vdwg.mxu0
    %v10236 = vadd.f32 %v9657, %v10078
    %v10237 = vadd.f32 %v9662, %v10083
    %v10238 = vadd.f32 %v9667, %v10088
    %v10239 = vadd.f32 %v9672, %v10093
    %v10240 = vadd.f32 %v9677, %v10098
    %v10241 = vadd.f32 %v9682, %v10103
    %v10242 = vadd.f32 %v9687, %v10108
    %v10243 = vadd.f32 %v9692, %v10113
    %v10244 = vadd.f32 %v9697, %v10118
    %v10245 = vadd.f32 %v9702, %v10123
    %v10246 = vadd.f32 %v9707, %v10128
    %v10247 = vadd.f32 %v9712, %v10133
    %v10248 = vadd.f32 %v9717, %v10138
    %v10249 = vadd.f32 %v9722, %v10143
    %v10250 = vadd.f32 %v9727, %v10148
    %v10251 = vadd.f32 %v9732, %v10153
    %v10252 = vadd.f32 %v9737, %v10158
    %v10253 = vadd.f32 %v9742, %v10163
    %v10254 = vadd.f32 %v9747, %v10168
    %v10255 = vadd.f32 %v9752, %v10173
    %v10256 = vadd.f32 %v9757, %v10178
    %v10257 = vadd.f32 %v9762, %v10183
    %v10258 = vadd.f32 %v9767, %v10188
    %v10259 = vadd.f32 %v9772, %v10193
    %v10260 = vadd.f32 %v9777, %v10198
    %v10261 = vadd.f32 %v9782, %v10203
    %v10262 = vadd.f32 %v9787, %v10208
    %v10263 = vadd.f32 %v9792, %v10213
    %v10264 = vadd.f32 %v9797, %v10218
    %v10265 = vadd.f32 %v9802, %v10223
    %v10266 = vadd.f32 %v9807, %v10228
    %v10267 = vadd.f32 %v9812, %v10233
    %v10268 = vld [vmem:[%s4 + $0x6] ss:$0 sm:$0xff]
    %v10269 = vadd.f32 %v10236, %v10268
    %v10270 = vadd.f32 %v10237, %v10268
    %v10271 = vadd.f32 %v10238, %v10268
    %v10272 = vadd.f32 %v10239, %v10268
    %v10273 = vadd.f32 %v10240, %v10268
    %v10274 = vadd.f32 %v10241, %v10268
    %v10275 = vadd.f32 %v10242, %v10268
    %v10276 = vadd.f32 %v10243, %v10268
    %v10277 = vadd.f32 %v10244, %v10268
    %v10278 = vadd.f32 %v10245, %v10268
    %v10279 = vadd.f32 %v10246, %v10268
    %v10280 = vadd.f32 %v10247, %v10268
    %v10281 = vadd.f32 %v10248, %v10268
    %v10282 = vadd.f32 %v10249, %v10268
    %v10283 = vadd.f32 %v10250, %v10268
    %v10284 = vadd.f32 %v10251, %v10268
    %v10285 = vadd.f32 %v10252, %v10268
    %v10286 = vadd.f32 %v10253, %v10268
    %v10287 = vadd.f32 %v10254, %v10268
    %v10288 = vadd.f32 %v10255, %v10268
    %v10289 = vadd.f32 %v10256, %v10268
    %v10290 = vadd.f32 %v10257, %v10268
    %v10291 = vadd.f32 %v10258, %v10268
    %v10292 = vadd.f32 %v10259, %v10268
    %v10293 = vadd.f32 %v10260, %v10268
    %v10294 = vadd.f32 %v10261, %v10268
    %v10295 = vadd.f32 %v10262, %v10268
    %v10296 = vadd.f32 %v10263, %v10268
    %v10297 = vadd.f32 %v10264, %v10268
    %v10298 = vadd.f32 %v10265, %v10268
    %v10299 = vadd.f32 %v10266, %v10268
    %v10300 = vadd.f32 %v10267, %v10268
    %v10301 = vmax.f32 %v10269, 0.0
    %v10302 = vmax.f32 %v10270, 0.0
    %v10303 = vmax.f32 %v10271, 0.0
    %v10304 = vmax.f32 %v10272, 0.0
    %v10305 = vmax.f32 %v10273, 0.0
    %v10306 = vmax.f32 %v10274, 0.0
    %v10307 = vmax.f32 %v10275, 0.0
    %v10308 = vmax.f32 %v10276, 0.0
    %v10309 = vmax.f32 %v10277, 0.0
    %v10310 = vmax.f32 %v10278, 0.0
    %v10311 = vmax.f32 %v10279, 0.0
    %v10312 = vmax.f32 %v10280, 0.0
    %v10313 = vmax.f32 %v10281, 0.0
    %v10314 = vmax.f32 %v10282, 0.0
    %v10315 = vmax.f32 %v10283, 0.0
    %v10316 = vmax.f32 %v10284, 0.0
    %v10317 = vmax.f32 %v10285, 0.0
    %v10318 = vmax.f32 %v10286, 0.0
    %v10319 = vmax.f32 %v10287, 0.0
    %v10320 = vmax.f32 %v10288, 0.0
    %v10321 = vmax.f32 %v10289, 0.0
    %v10322 = vmax.f32 %v10290, 0.0
    %v10323 = vmax.f32 %v10291, 0.0
    %v10324 = vmax.f32 %v10292, 0.0
    %v10325 = vmax.f32 %v10293, 0.0
    %v10326 = vmax.f32 %v10294, 0.0
    %v10327 = vmax.f32 %v10295, 0.0
    %v10328 = vmax.f32 %v10296, 0.0
    %v10329 = vmax.f32 %v10297, 0.0
    %v10330 = vmax.f32 %v10298, 0.0
    %v10331 = vmax.f32 %v10299, 0.0
    %v10332 = vmax.f32 %v10300, 0.0
    %v10333 = vld [vmem:[%s1] sm:$0xff]
    %v10334 = vld [vmem:[%s1 + $0x8] sm:$0xff]
    %v10335 = vld [vmem:[%s1 + $0x10] sm:$0xff]
    %v10336 = vld [vmem:[%s1 + $0x18] sm:$0xff]
    %v10337 = vld [vmem:[%s1 + $0x20] sm:$0xff]
    %v10338 = vld [vmem:[%s1 + $0x28] sm:$0xff]
    %v10339 = vld [vmem:[%s1 + $0x30] sm:$0xff]
    %v10340 = vld [vmem:[%s1 + $0x38] sm:$0xff]
    %10341 = vmatprep.subr.mxu0 0.0
    %10342 = vmatpush1.msra.mxu0 %v10301
    %10343 = vmatprep.subr.mxu0 0.0
    %10344 = vmatpush1.msra.mxu0 %v10302
    %10345 = vmatprep.subr.mxu0 0.0
    %10346 = vmatpush1.msra.mxu0 %v10303
    %10347 = vmatprep.subr.mxu0 0.0
    %10348 = vmatpush1.msra.mxu0 %v10304
    %10349 = vmatprep.subr.mxu0 0.0
    %10350 = vmatpush1.msra.mxu0 %v10305
    %10351 = vmatprep.subr.mxu0 0.0
    %10352 = vmatpush1.msra.mxu0 %v10306
    %10353 = vmatprep.subr.mxu0 0.0
    %10354 = vmatpush1.msra.mxu0 %v10307
    %10355 = vmatprep.subr.mxu0 0.0
    %10356 = vmatpush1.msra.mxu0 %v10308
    %10357 = vmatprep.subr.mxu0 0.0
    %10358 = vmatpush1.msra.mxu0 %v10309
    %10359 = vmatprep.subr.mxu0 0.0
    %10360 = vmatpush1.msra.mxu0 %v10310
    %10361 = vmatprep.subr.mxu0 0.0
    %10362 = vmatpush1.msra.mxu0 %v10311
    %10363 = vmatprep.subr.mxu0 0.0
    %10364 = vmatpush1.msra.mxu0 %v10312
    %10365 = vmatprep.subr.mxu0 0.0
    %10366 = vmatpush1.msra.mxu0 %v10313
    %10367 = vmatprep.subr.mxu0 0.0
    %10368 = vmatpush1.msra.mxu0 %v10314
    %10369 = vmatprep.subr.mxu0 0.0
    %10370 = vmatpush1.msra.mxu0 %v10315
    %10371 = vmatprep.subr.mxu0 0.0
    %10372 = vmatpush1.msra.mxu0 %v10316
    %10373 = vmatprep.subr.mxu0 0.0
    %10374 = vmatpush1.msra.mxu0 %v10317
    %10375 = vmatprep.subr.mxu0 0.0
    %10376 = vmatpush1.msra.mxu0 %v10318
    %10377 = vmatprep.subr.mxu0 0.0
    %10378 = vmatpush1.msra.mxu0 %v10319
    %10379 = vmatprep.subr.mxu0 0.0
    %10380 = vmatpush1.msra.mxu0 %v10320
    %10381 = vmatprep.subr.mxu0 0.0
    %10382 = vmatpush1.msra.mxu0 %v10321
    %10383 = vmatprep.subr.mxu0 0.0
    %10384 = vmatpush1.msra.mxu0 %v10322
    %10385 = vmatprep.subr.mxu0 0.0
    %10386 = vmatpush1.msra.mxu0 %v10323
    %10387 = vmatprep.subr.mxu0 0.0
    %10388 = vmatpush1.msra.mxu0 %v10324
    %10389 = vmatprep.subr.mxu0 0.0
    %10390 = vmatpush1.msra.mxu0 %v10325
    %10391 = vmatprep.subr.mxu0 0.0
    %10392 = vmatpush1.msra.mxu0 %v10326
    %10393 = vmatprep.subr.mxu0 0.0
    %10394 = vmatpush1.msra.mxu0 %v10327
    %10395 = vmatprep.subr.mxu0 0.0
    %10396 = vmatpush1.msra.mxu0 %v10328
    %10397 = vmatprep.subr.mxu0 0.0
    %10398 = vmatpush1.msra.mxu0 %v10329
    %10399 = vmatprep.subr.mxu0 0.0
    %10400 = vmatpush1.msra.mxu0 %v10330
    %10401 = vmatprep.subr.mxu0 0.0
    %10402 = vmatpush1.msra.mxu0 %v10331
    %10403 = vmatprep.subr.mxu0 0.0
    %10404 = vmatpush1.msra.mxu0 %v10332
    %10405 = vmatprep.mubr.f32.mxu0 %v10334
    %10406 = vmatmul.mubr.f32.gmra.mrb[0].mxu0 %v10333
    %v10407 = vpop.f32.mrb[0].mxu0
    %v10408 = vadd.f32 0.0, %v10407
    %v10409 = vpop.f32.mrb[0].mxu0
    %10410 = vmatprep.mubr.f32.mxu0 %v10336
    %10411 = vmatmul.mubr.f32.gmra.mrb[0].mxu0 %v10335
    %v10412 = vpop.f32.mrb[0].mxu0
    %v10413 = vadd.f32 0.0, %v10412
    %v10414 = vpop.f32.mrb[0].mxu0
    %10415 = vmatprep.mubr.f32.mxu0 %v10338
    %10416 = vmatmul.mubr.f32.gmra.mrb[0].mxu0 %v10337
    %v10417 = vpop.f32.mrb[0].mxu0
    %v10418 = vadd.f32 0.0, %v10417
    %v10419 = vpop.f32.mrb[0].mxu0
    %10420 = vmatprep.mubr.f32.mxu0 %v10340
    %10421 = vmatmul.mubr.f32.gmra.mrb[0].mxu0 %v10339
    %v10422 = vpop.f32.mrb[0].mxu0
    %v10423 = vadd.f32 0.0, %v10422
    %v10424 = vpop.f32.mrb[0].mxu0
    %10425 = vdwg.mxu0
    %s10426 = scalar_lea.vmem %s4, 7
    %v10427 = vld [vmem:[%s10426] ss:$8 sm:$0x3]
    %v10428 = vld [vmem:[%s3] sm:$0xff]
    %v10429 = vld [vmem:[%s3 + $0x8] sm:$0xff]
    %v10430 = vld [vmem:[%s3 + $0x10] sm:$0xff]
    %v10431 = vld [vmem:[%s3 + $0x18] sm:$0xff]
    %v10432 = vld [vmem:[%s3 + $0x20] sm:$0xff]
    %v10433 = vld [vmem:[%s3 + $0x28] sm:$0xff]
    %v10434 = vld [vmem:[%s3 + $0x30] sm:$0xff]
    %v10435 = vld [vmem:[%s3 + $0x38] sm:$0xff]
    %v10437 = vsel %vm4913, %v10408, 0
    %10439 = vmatprep.subr.mxu0 %v10429
    %10440 = vmatpush1.msra.mxu0 %v10428
    %10441 = vmatprep.subr.mxu0 %v10431
    %10442 = vmatpush1.msra.mxu0 %v10430
    %10443 = vmatprep.subr.mxu0 %v10433
    %10444 = vmatpush1.msra.mxu0 %v10432
    %10445 = vmatprep.subr.mxu0 %v10435
    %10446 = vmatpush1.msra.mxu0 %v10434
    %10447 = vmatprep.subr.mxu0 0.0
    %10448 = vmatpush1.msra.mxu0 0.0
    %10449 = vmatprep.subr.mxu0 0.0
    %10450 = vmatpush1.msra.mxu0 0.0
    %10451 = vmatprep.subr.mxu0 0.0
    %10452 = vmatpush1.msra.mxu0 0.0
    %10453 = vmatprep.subr.mxu0 0.0
    %10454 = vmatpush1.msra.mxu0 0.0
    %10455 = vmatprep.subr.mxu0 0.0
    %10456 = vmatpush1.msra.mxu0 0.0
    %10457 = vmatprep.subr.mxu0 0.0
    %10458 = vmatpush1.msra.mxu0 0.0
    %10459 = vmatprep.subr.mxu0 0.0
    %10460 = vmatpush1.msra.mxu0 0.0
    %10461 = vmatprep.subr.mxu0 0.0
    %10462 = vmatpush1.msra.mxu0 0.0
    %10463 = vmatprep.subr.mxu0 0.0
    %10464 = vmatpush1.msra.mxu0 0.0
    %10465 = vmatprep.subr.mxu0 0.0
    %10466 = vmatpush1.msra.mxu0 0.0
    %10467 = vmatprep.subr.mxu0 0.0
    %10468 = vmatpush1.msra.mxu0 0.0
    %10469 = vmatprep.subr.mxu0 0.0
    %10470 = vmatpush1.msra.mxu0 0.0
    %10471 = vmatprep.subr.mxu0 0.0
    %10472 = vmatpush1.msra.mxu0 0.0
    %10473 = vmatprep.subr.mxu0 0.0
    %10474 = vmatpush1.msra.mxu0 0.0
    %10475 = vmatprep.subr.mxu0 0.0
    %10476 = vmatpush1.msra.mxu0 0.0
    %10477 = vmatprep.subr.mxu0 0.0
    %10478 = vmatpush1.msra.mxu0 0.0
    %10479 = vmatprep.subr.mxu0 0.0
    %10480 = vmatpush1.msra.mxu0 0.0
    %10481 = vmatprep.subr.mxu0 0.0
    %10482 = vmatpush1.msra.mxu0 0.0
    %10483 = vmatprep.subr.mxu0 0.0
    %10484 = vmatpush1.msra.mxu0 0.0
    %10485 = vmatprep.subr.mxu0 0.0
    %10486 = vmatpush1.msra.mxu0 0.0
    %10487 = vmatprep.subr.mxu0 0.0
    %10488 = vmatpush1.msra.mxu0 0.0
    %10489 = vmatprep.subr.mxu0 0.0
    %10490 = vmatpush1.msra.mxu0 0.0
    %10491 = vmatprep.subr.mxu0 0.0
    %10492 = vmatpush1.msra.mxu0 0.0
    %10493 = vmatprep.subr.mxu0 0.0
    %10494 = vmatpush1.msra.mxu0 0.0
    %10495 = vmatprep.subr.mxu0 0.0
    %10496 = vmatpush1.msra.mxu0 0.0
    %10497 = vmatprep.subr.mxu0 0.0
    %10498 = vmatpush1.msra.mxu0 0.0
    %10499 = vmatprep.subr.mxu0 0.0
    %10500 = vmatpush1.msra.mxu0 0.0
    %10501 = vmatprep.subr.mxu0 0.0
    %10502 = vmatpush1.msra.mxu0 0.0
    %10503 = vmatprep.mubr.f32.mxu0 0.0
    %10504 = vmatmul.mubr.f32.gmra.mrb[0].mxu0 %v10437
    %v10505 = vpop.f32.mrb[0].mxu0
    %v10506 = vadd.f32 0.0, %v10505
    %v10507 = vpop.f32.mrb[0].mxu0
    %v10508 = vadd.f32 0.0, %v10507
    %10509 = vdwg.mxu0
    %v10511 = vlaneseq
    %v10512 = vshrl.u32 %v10511, 7
    %v10513 = vsub.s32 0, %v10512
    %v10514 = vrot.slane %v10427, %v10513
    %v10515 = vlaneseq
    %v10516 = vshrl.u32 %v10515, 7
    %v10517 = vsub.s32 1, %v10516
    %v10518 = vrot.slane %v10427, %v10517
    %v10521 = vadd.f32 %v10514, %v10506
    %v10522 = vadd.f32 %v10518, %v10508
    %v10523 = vld [vmem:[%s3 + $0x40] sm:$0xff]
    %v10524 = vld [vmem:[%s3 + $0x48] sm:$0xff]
    %v10525 = vld [vmem:[%s3 + $0x50] sm:$0xff]
    %v10526 = vld [vmem:[%s3 + $0x58] sm:$0xff]
    %v10527 = vld [vmem:[%s3 + $0x60] sm:$0xff]
    %v10528 = vld [vmem:[%s3 + $0x68] sm:$0xff]
    %v10529 = vld [vmem:[%s3 + $0x70] sm:$0xff]
    %v10530 = vld [vmem:[%s3 + $0x78] sm:$0xff]
    %v10532 = vsel %vm4913, %v10413, 0
    %10534 = vmatprep.subr.mxu0 %v10524
    %10535 = vmatpush1.msra.mxu0 %v10523
    %10536 = vmatprep.subr.mxu0 %v10526
    %10537 = vmatpush1.msra.mxu0 %v10525
    %10538 = vmatprep.subr.mxu0 %v10528
    %10539 = vmatpush1.msra.mxu0 %v10527
    %10540 = vmatprep.subr.mxu0 %v10530
    %10541 = vmatpush1.msra.mxu0 %v10529
    %10542 = vmatprep.subr.mxu0 0.0
    %10543 = vmatpush1.msra.mxu0 0.0
    %10544 = vmatprep.subr.mxu0 0.0
    %10545 = vmatpush1.msra.mxu0 0.0
    %10546 = vmatprep.subr.mxu0 0.0
    %10547 = vmatpush1.msra.mxu0 0.0
    %10548 = vmatprep.subr.mxu0 0.0
    %10549 = vmatpush1.msra.mxu0 0.0
    %10550 = vmatprep.subr.mxu0 0.0
    %10551 = vmatpush1.msra.mxu0 0.0
    %10552 = vmatprep.subr.mxu0 0.0
    %10553 = vmatpush1.msra.mxu0 0.0
    %10554 = vmatprep.subr.mxu0 0.0
    %10555 = vmatpush1.msra.mxu0 0.0
    %10556 = vmatprep.subr.mxu0 0.0
    %10557 = vmatpush1.msra.mxu0 0.0
    %10558 = vmatprep.subr.mxu0 0.0
    %10559 = vmatpush1.msra.mxu0 0.0
    %10560 = vmatprep.subr.mxu0 0.0
    %10561 = vmatpush1.msra.mxu0 0.0
    %10562 = vmatprep.subr.mxu0 0.0
    %10563 = vmatpush1.msra.mxu0 0.0
    %10564 = vmatprep.subr.mxu0 0.0
    %10565 = vmatpush1.msra.mxu0 0.0
    %10566 = vmatprep.subr.mxu0 0.0
    %10567 = vmatpush1.msra.mxu0 0.0
    %10568 = vmatprep.subr.mxu0 0.0
    %10569 = vmatpush1.msra.mxu0 0.0
    %10570 = vmatprep.subr.mxu0 0.0
    %10571 = vmatpush1.msra.mxu0 0.0
    %10572 = vmatprep.subr.mxu0 0.0
    %10573 = vmatpush1.msra.mxu0 0.0
    %10574 = vmatprep.subr.mxu0 0.0
    %10575 = vmatpush1.msra.mxu0 0.0
    %10576 = vmatprep.subr.mxu0 0.0
    %10577 = vmatpush1.msra.mxu0 0.0
    %10578 = vmatprep.subr.mxu0 0.0
    %10579 = vmatpush1.msra.mxu0 0.0
    %10580 = vmatprep.subr.mxu0 0.0
    %10581 = vmatpush1.msra.mxu0 0.0
    %10582 = vmatprep.subr.mxu0 0.0
    %10583 = vmatpush1.msra.mxu0 0.0
    %10584 = vmatprep.subr.mxu0 0.0
    %10585 = vmatpush1.msra.mxu0 0.0
    %10586 = vmatprep.subr.mxu0 0.0
    %10587 = vmatpush1.msra.mxu0 0.0
    %10588 = vmatprep.subr.mxu0 0.0
    %10589 = vmatpush1.msra.mxu0 0.0
    %10590 = vmatprep.subr.mxu0 0.0
    %10591 = vmatpush1.msra.mxu0 0.0
    %10592 = vmatprep.subr.mxu0 0.0
    %10593 = vmatpush1.msra.mxu0 0.0
    %10594 = vmatprep.subr.mxu0 0.0
    %10595 = vmatpush1.msra.mxu0 0.0
    %10596 = vmatprep.subr.mxu0 0.0
    %10597 = vmatpush1.msra.mxu0 0.0
    %10598 = vmatprep.mubr.f32.mxu0 0.0
    %10599 = vmatmul.mubr.f32.gmra.mrb[0].mxu0 %v10532
    %v10600 = vpop.f32.mrb[0].mxu0
    %v10601 = vadd.f32 0.0, %v10600
    %v10602 = vpop.f32.mrb[0].mxu0
    %v10603 = vadd.f32 0.0, %v10602
    %10604 = vdwg.mxu0
    %v10605 = vadd.f32 %v10521, %v10601
    %v10606 = vadd.f32 %v10522, %v10603
    %v10607 = vld [vmem:[%s3 + $0x80] sm:$0xff]
    %v10608 = vld [vmem:[%s3 + $0x88] sm:$0xff]
    %v10609 = vld [vmem:[%s3 + $0x90] sm:$0xff]
    %v10610 = vld [vmem:[%s3 + $0x98] sm:$0xff]
    %v10611 = vld [vmem:[%s3 + $0xa0] sm:$0xff]
    %v10612 = vld [vmem:[%s3 + $0xa8] sm:$0xff]
    %v10613 = vld [vmem:[%s3 + $0xb0] sm:$0xff]
    %v10614 = vld [vmem:[%s3 + $0xb8] sm:$0xff]
    %v10616 = vsel %vm4913, %v10418, 0
    %10618 = vmatprep.subr.mxu0 %v10608
    %10619 = vmatpush1.msra.mxu0 %v10607
    %10620 = vmatprep.subr.mxu0 %v10610
    %10621 = vmatpush1.msra.mxu0 %v10609
    %10622 = vmatprep.subr.mxu0 %v10612
    %10623 = vmatpush1.msra.mxu0 %v10611
    %10624 = vmatprep.subr.mxu0 %v10614
    %10625 = vmatpush1.msra.mxu0 %v10613
    %10626 = vmatprep.subr.mxu0 0.0
    %10627 = vmatpush1.msra.mxu0 0.0
    %10628 = vmatprep.subr.mxu0 0.0
    %10629 = vmatpush1.msra.mxu0 0.0
    %10630 = vmatprep.subr.mxu0 0.0
    %10631 = vmatpush1.msra.mxu0 0.0
    %10632 = vmatprep.subr.mxu0 0.0
    %10633 = vmatpush1.msra.mxu0 0.0
    %10634 = vmatprep.subr.mxu0 0.0
    %10635 = vmatpush1.msra.mxu0 0.0
    %10636 = vmatprep.subr.mxu0 0.0
    %10637 = vmatpush1.msra.mxu0 0.0
    %10638 = vmatprep.subr.mxu0 0.0
    %10639 = vmatpush1.msra.mxu0 0.0
    %10640 = vmatprep.subr.mxu0 0.0
    %10641 = vmatpush1.msra.mxu0 0.0
    %10642 = vmatprep.subr.mxu0 0.0
    %10643 = vmatpush1.msra.mxu0 0.0
    %10644 = vmatprep.subr.mxu0 0.0
    %10645 = vmatpush1.msra.mxu0 0.0
    %10646 = vmatprep.subr.mxu0 0.0
    %10647 = vmatpush1.msra.mxu0 0.0
    %10648 = vmatprep.subr.mxu0 0.0
    %10649 = vmatpush1.msra.mxu0 0.0
    %10650 = vmatprep.subr.mxu0 0.0
    %10651 = vmatpush1.msra.mxu0 0.0
    %10652 = vmatprep.subr.mxu0 0.0
    %10653 = vmatpush1.msra.mxu0 0.0
    %10654 = vmatprep.subr.mxu0 0.0
    %10655 = vmatpush1.msra.mxu0 0.0
    %10656 = vmatprep.subr.mxu0 0.0
    %10657 = vmatpush1.msra.mxu0 0.0
    %10658 = vmatprep.subr.mxu0 0.0
    %10659 = vmatpush1.msra.mxu0 0.0
    %10660 = vmatprep.subr.mxu0 0.0
    %10661 = vmatpush1.msra.mxu0 0.0
    %10662 = vmatprep.subr.mxu0 0.0
    %10663 = vmatpush1.msra.mxu0 0.0
    %10664 = vmatprep.subr.mxu0 0.0
    %10665 = vmatpush1.msra.mxu0 0.0
    %10666 = vmatprep.subr.mxu0 0.0
    %10667 = vmatpush1.msra.mxu0 0.0
    %10668 = vmatprep.subr.mxu0 0.0
    %10669 = vmatpush1.msra.mxu0 0.0
    %10670 = vmatprep.subr.mxu0 0.0
    %10671 = vmatpush1.msra.mxu0 0.0
    %10672 = vmatprep.subr.mxu0 0.0
    %10673 = vmatpush1.msra.mxu0 0.0
    %10674 = vmatprep.subr.mxu0 0.0
    %10675 = vmatpush1.msra.mxu0 0.0
    %10676 = vmatprep.subr.mxu0 0.0
    %10677 = vmatpush1.msra.mxu0 0.0
    %10678 = vmatprep.subr.mxu0 0.0
    %10679 = vmatpush1.msra.mxu0 0.0
    %10680 = vmatprep.subr.mxu0 0.0
    %10681 = vmatpush1.msra.mxu0 0.0
    %10682 = vmatprep.mubr.f32.mxu0 0.0
    %10683 = vmatmul.mubr.f32.gmra.mrb[0].mxu0 %v10616
    %v10684 = vpop.f32.mrb[0].mxu0
    %v10685 = vadd.f32 0.0, %v10684
    %v10686 = vpop.f32.mrb[0].mxu0
    %v10687 = vadd.f32 0.0, %v10686
    %10688 = vdwg.mxu0
    %v10689 = vadd.f32 %v10605, %v10685
    %v10690 = vadd.f32 %v10606, %v10687
    %v10691 = vld [vmem:[%s3 + $0xc0] sm:$0xff]
    %v10692 = vld [vmem:[%s3 + $0xc8] sm:$0xff]
    %v10693 = vld [vmem:[%s3 + $0xd0] sm:$0xff]
    %v10694 = vld [vmem:[%s3 + $0xd8] sm:$0xff]
    %v10695 = vld [vmem:[%s3 + $0xe0] sm:$0xff]
    %v10696 = vld [vmem:[%s3 + $0xe8] sm:$0xff]
    %v10697 = vld [vmem:[%s3 + $0xf0] sm:$0xff]
    %v10698 = vld [vmem:[%s3 + $0xf8] sm:$0xff]
    %v10700 = vsel %vm4913, %v10423, 0
    %10702 = vmatprep.subr.mxu0 %v10692
    %10703 = vmatpush1.msra.mxu0 %v10691
    %10704 = vmatprep.subr.mxu0 %v10694
    %10705 = vmatpush1.msra.mxu0 %v10693
    %10706 = vmatprep.subr.mxu0 %v10696
    %10707 = vmatpush1.msra.mxu0 %v10695
    %10708 = vmatprep.subr.mxu0 %v10698
    %10709 = vmatpush1.msra.mxu0 %v10697
    %10710 = vmatprep.subr.mxu0 0.0
    %10711 = vmatpush1.msra.mxu0 0.0
    %10712 = vmatprep.subr.mxu0 0.0
    %10713 = vmatpush1.msra.mxu0 0.0
    %10714 = vmatprep.subr.mxu0 0.0
    %10715 = vmatpush1.msra.mxu0 0.0
    %10716 = vmatprep.subr.mxu0 0.0
    %10717 = vmatpush1.msra.mxu0 0.0
    %10718 = vmatprep.subr.mxu0 0.0
    %10719 = vmatpush1.msra.mxu0 0.0
    %10720 = vmatprep.subr.mxu0 0.0
    %10721 = vmatpush1.msra.mxu0 0.0
    %10722 = vmatprep.subr.mxu0 0.0
    %10723 = vmatpush1.msra.mxu0 0.0
    %10724 = vmatprep.subr.mxu0 0.0
    %10725 = vmatpush1.msra.mxu0 0.0
    %10726 = vmatprep.subr.mxu0 0.0
    %10727 = vmatpush1.msra.mxu0 0.0
    %10728 = vmatprep.subr.mxu0 0.0
    %10729 = vmatpush1.msra.mxu0 0.0
    %10730 = vmatprep.subr.mxu0 0.0
    %10731 = vmatpush1.msra.mxu0 0.0
    %10732 = vmatprep.subr.mxu0 0.0
    %10733 = vmatpush1.msra.mxu0 0.0
    %10734 = vmatprep.subr.mxu0 0.0
    %10735 = vmatpush1.msra.mxu0 0.0
    %10736 = vmatprep.subr.mxu0 0.0
    %10737 = vmatpush1.msra.mxu0 0.0
    %10738 = vmatprep.subr.mxu0 0.0
    %10739 = vmatpush1.msra.mxu0 0.0
    %10740 = vmatprep.subr.mxu0 0.0
    %10741 = vmatpush1.msra.mxu0 0.0
    %10742 = vmatprep.subr.mxu0 0.0
    %10743 = vmatpush1.msra.mxu0 0.0
    %10744 = vmatprep.subr.mxu0 0.0
    %10745 = vmatpush1.msra.mxu0 0.0
    %10746 = vmatprep.subr.mxu0 0.0
    %10747 = vmatpush1.msra.mxu0 0.0
    %10748 = vmatprep.subr.mxu0 0.0
    %10749 = vmatpush1.msra.mxu0 0.0
    %10750 = vmatprep.subr.mxu0 0.0
    %10751 = vmatpush1.msra.mxu0 0.0
    %10752 = vmatprep.subr.mxu0 0.0
    %10753 = vmatpush1.msra.mxu0 0.0
    %10754 = vmatprep.subr.mxu0 0.0
    %10755 = vmatpush1.msra.mxu0 0.0
    %10756 = vmatprep.subr.mxu0 0.0
    %10757 = vmatpush1.msra.mxu0 0.0
    %10758 = vmatprep.subr.mxu0 0.0
    %10759 = vmatpush1.msra.mxu0 0.0
    %10760 = vmatprep.subr.mxu0 0.0
    %10761 = vmatpush1.msra.mxu0 0.0
    %10762 = vmatprep.subr.mxu0 0.0
    %10763 = vmatpush1.msra.mxu0 0.0
    %10764 = vmatprep.subr.mxu0 0.0
    %10765 = vmatpush1.msra.mxu0 0.0
    %10766 = vmatprep.mubr.f32.mxu0 0.0
    %10767 = vmatmul.mubr.f32.gmra.mrb[0].mxu0 %v10700
    %v10768 = vpop.f32.mrb[0].mxu0
    %v10769 = vadd.f32 0.0, %v10768
    %v10770 = vpop.f32.mrb[0].mxu0
    %v10771 = vadd.f32 0.0, %v10770
    %10772 = vdwg.mxu0
    %v10773 = vadd.f32 %v10689, %v10769
    %v10774 = vadd.f32 %v10690, %v10771
    %v10775 = vld [vmem:[%s3 + $0x100] sm:$0xff]
    %v10776 = vld [vmem:[%s3 + $0x110] sm:$0xff]
    %v10777 = vld [vmem:[%s3 + $0x120] sm:$0xff]
    %v10778 = vld [vmem:[%s3 + $0x130] sm:$0xff]
    %v10779 = vld [vmem:[%s3 + $0x140] sm:$0xff]
    %v10780 = vld [vmem:[%s3 + $0x150] sm:$0xff]
    %v10781 = vld [vmem:[%s3 + $0x160] sm:$0xff]
    %v10782 = vld [vmem:[%s3 + $0x170] sm:$0xff]
    %v10783 = vld [vmem:[%s3 + $0x180] sm:$0xff]
    %v10784 = vld [vmem:[%s3 + $0x190] sm:$0xff]
    %v10785 = vld [vmem:[%s3 + $0x1a0] sm:$0xff]
    %v10786 = vld [vmem:[%s3 + $0x1b0] sm:$0xff]
    %v10787 = vld [vmem:[%s3 + $0x1c0] sm:$0xff]
    %v10788 = vld [vmem:[%s3 + $0x1d0] sm:$0xff]
    %v10789 = vld [vmem:[%s3 + $0x1e0] sm:$0xff]
    %v10790 = vld [vmem:[%s3 + $0x1f0] sm:$0xff]
    %v10791 = vld [vmem:[%s3 + $0x200] sm:$0xff]
    %v10792 = vld [vmem:[%s3 + $0x210] sm:$0xff]
    %v10793 = vld [vmem:[%s3 + $0x220] sm:$0xff]
    %v10794 = vld [vmem:[%s3 + $0x230] sm:$0xff]
    %v10795 = vld [vmem:[%s3 + $0x240] sm:$0xff]
    %v10796 = vld [vmem:[%s3 + $0x250] sm:$0xff]
    %v10797 = vld [vmem:[%s3 + $0x260] sm:$0xff]
    %v10798 = vld [vmem:[%s3 + $0x270] sm:$0xff]
    %v10799 = vld [vmem:[%s3 + $0x280] sm:$0xff]
    %v10800 = vld [vmem:[%s3 + $0x290] sm:$0xff]
    %v10801 = vld [vmem:[%s3 + $0x2a0] sm:$0xff]
    %v10802 = vld [vmem:[%s3 + $0x2b0] sm:$0xff]
    %v10803 = vld [vmem:[%s3 + $0x2c0] sm:$0xff]
    %v10804 = vld [vmem:[%s3 + $0x2d0] sm:$0xff]
    %v10805 = vld [vmem:[%s3 + $0x2e0] sm:$0xff]
    %v10806 = vld [vmem:[%s3 + $0x2f0] sm:$0xff]
    %v10807 = vld [vmem:[%s4 + $0x10] ss:$0 sm:$0xff]
    %10808 = vmatprep.subr.mxu0 0.0
    %10809 = vmatpush1.msra.mxu0 %v10775
    %10810 = vmatprep.subr.mxu0 0.0
    %10811 = vmatpush1.msra.mxu0 %v10776
    %10812 = vmatprep.subr.mxu0 0.0
    %10813 = vmatpush1.msra.mxu0 %v10777
    %10814 = vmatprep.subr.mxu0 0.0
    %10815 = vmatpush1.msra.mxu0 %v10778
    %10816 = vmatprep.subr.mxu0 0.0
    %10817 = vmatpush1.msra.mxu0 %v10779
    %10818 = vmatprep.subr.mxu0 0.0
    %10819 = vmatpush1.msra.mxu0 %v10780
    %10820 = vmatprep.subr.mxu0 0.0
    %10821 = vmatpush1.msra.mxu0 %v10781
    %10822 = vmatprep.subr.mxu0 0.0
    %10823 = vmatpush1.msra.mxu0 %v10782
    %10824 = vmatprep.subr.mxu0 0.0
    %10825 = vmatpush1.msra.mxu0 %v10783
    %10826 = vmatprep.subr.mxu0 0.0
    %10827 = vmatpush1.msra.mxu0 %v10784
    %10828 = vmatprep.subr.mxu0 0.0
    %10829 = vmatpush1.msra.mxu0 %v10785
    %10830 = vmatprep.subr.mxu0 0.0
    %10831 = vmatpush1.msra.mxu0 %v10786
    %10832 = vmatprep.subr.mxu0 0.0
    %10833 = vmatpush1.msra.mxu0 %v10787
    %10834 = vmatprep.subr.mxu0 0.0
    %10835 = vmatpush1.msra.mxu0 %v10788
    %10836 = vmatprep.subr.mxu0 0.0
    %10837 = vmatpush1.msra.mxu0 %v10789
    %10838 = vmatprep.subr.mxu0 0.0
    %10839 = vmatpush1.msra.mxu0 %v10790
    %10840 = vmatprep.subr.mxu0 0.0
    %10841 = vmatpush1.msra.mxu0 %v10791
    %10842 = vmatprep.subr.mxu0 0.0
    %10843 = vmatpush1.msra.mxu0 %v10792
    %10844 = vmatprep.subr.mxu0 0.0
    %10845 = vmatpush1.msra.mxu0 %v10793
    %10846 = vmatprep.subr.mxu0 0.0
    %10847 = vmatpush1.msra.mxu0 %v10794
    %10848 = vmatprep.subr.mxu0 0.0
    %10849 = vmatpush1.msra.mxu0 %v10795
    %10850 = vmatprep.subr.mxu0 0.0
    %10851 = vmatpush1.msra.mxu0 %v10796
    %10852 = vmatprep.subr.mxu0 0.0
    %10853 = vmatpush1.msra.mxu0 %v10797
    %10854 = vmatprep.subr.mxu0 0.0
    %10855 = vmatpush1.msra.mxu0 %v10798
    %10856 = vmatprep.subr.mxu0 0.0
    %10857 = vmatpush1.msra.mxu0 %v10799
    %10858 = vmatprep.subr.mxu0 0.0
    %10859 = vmatpush1.msra.mxu0 %v10800
    %10860 = vmatprep.subr.mxu0 0.0
    %10861 = vmatpush1.msra.mxu0 %v10801
    %10862 = vmatprep.subr.mxu0 0.0
    %10863 = vmatpush1.msra.mxu0 %v10802
    %10864 = vmatprep.subr.mxu0 0.0
    %10865 = vmatpush1.msra.mxu0 %v10803
    %10866 = vmatprep.subr.mxu0 0.0
    %10867 = vmatpush1.msra.mxu0 %v10804
    %10868 = vmatprep.subr.mxu0 0.0
    %10869 = vmatpush1.msra.mxu0 %v10805
    %10870 = vmatprep.subr.mxu0 0.0
    %10871 = vmatpush1.msra.mxu0 %v10806
    %10872 = vmatprep.mubr.f32.mxu0 %v10774
    %10873 = vmatmul.mubr.f32.gmra.mrb[0].mxu0 %v10773
    %v10874 = vpop.f32.mrb[0].mxu0
    %v10875 = vadd.f32 %v10807, %v10874
    %v10876 = vpop.f32.mrb[0].mxu0
    %10877 = vdwg.mxu0
    %10878 = vst [vmem:[#allocation2] sm:$0xff] %v10875
    // Predicated region
    $region22: #{ecg_spatiotemporalnet1d_forward.1} parent=1 // pred_check
      _
    $region23: #{ecg_spatiotemporalnet1d_forward.1} parent=1 // pred_check_branch
      %10880 = sbr.rel (0) target = $region25
    $region24: #{ecg_spatiotemporalnet1d_forward.1} parent=1 // pred_region
      %s10882 = ssub.s32 128, 128
      %10883 = vsyncadd [#allocation3], %s10882
      %s10885 = sshll.u32 [#allocation2], 4
      %s10886 = int_to_ptr.vmem [resolvable:$true] %s10885
      %10888 = dma.vmem_to_hbm [thread:$0]  %s10886, 128, %s5, [#allocation3]
    $region25: #{ecg_spatiotemporalnet1d_forward.1} parent=1 // pred_fallthru
      _
    // Predicated region
    $region26: #{ecg_spatiotemporalnet1d_forward.1} parent=1 // pred_check
      _
    $region27: #{ecg_spatiotemporalnet1d_forward.1} parent=1 // pred_check_branch
      %10890 = sbr.rel (0) target = $region29
    $region28: #{ecg_spatiotemporalnet1d_forward.1} parent=1 // pred_region
      %10891 = dma.done [#allocation3], 128
    $region29: #{ecg_spatiotemporalnet1d_forward.1} parent=1 // pred_fallthru
      _
    %10892 = vsyncpa [#allocation3], 1

</llo_original>
